<compile_context>
chip_gen: v7x
topology: tpu7x:2x2x1
jax: 0.10.0
libtpu: 0.0.40
codegen_flags: <defaults>
</compile_context>

<pallas_src>
import functools

import jax
import jax.numpy as jnp
from jax import lax
from jax.experimental import pallas as pl
from jax.experimental.pallas import tpu as pltpu

EPS = 1e-5                 # nn.BatchNorm1d default eps
MAX_TILE_ROWS = 2048       # default row-tile target; mem-bound layers near HBM roofline
# "parallel" lets Mosaic shard batches across v7x's two TensorCores; switch to
# pltpu.CORE_PARALLEL if a v7x profile shows one idle TC.
BATCH_AXIS_SEMANTICS = "parallel"


@functools.lru_cache(maxsize=1)
def _vmem_limit_bytes():
    """Per-generation scoped-VMEM budget (64 MiB on 128-MiB chips, 32 MiB on v7x)."""
    try:
        cap = int(pltpu.get_tpu_info().vmem_capacity_bytes)
    except Exception:          # no TPU visible / older jax: conservative fallback
        cap = 64 << 20
    return int(max(32 << 20, min(cap // 2, 64 << 20)))


def _pick_tile(n, cap):
    """Row tile: ~cap rows, multiple of 8; the tail tile is zero-padded + masked."""
    cap = max(8, cap - cap % 8)
    nt = (n + cap - 1) // cap            # row tiles per point cloud
    tile = ((n + nt - 1) // nt + 7) // 8 * 8
    return tile, nt, nt * tile


# ---------------------------------------------------------------------------
# Streaming conv-stage kernel: grid = (batch, row_tile)
# ---------------------------------------------------------------------------
def conv_stage_kernel(*refs, fused_first, last_layer, n_valid, tile, needs_mask):
    i = 0
    a_ref = refs[i]; i += 1
    if fused_first:
        w_pre_ref = refs[i]; i += 1
    sc_ref, sh_ref = refs[i], refs[i + 1]; i += 2
    w_ref = refs[i]; i += 1
    if last_layer:
        sum_ref, ssq_ref, max_ref, min_ref = refs[i:i + 4]
    else:
        z_ref, sum_ref, ssq_ref = refs[i:i + 3]

    t = pl.program_id(1)

    # --- activation entering this layer's matmul (f32 elementwise; v5e-safe) -------
    # TODO(synk): on v6e/v7x this scale/shift+ReLU could run in bf16 to halve VALU
    # work; kept f32 so one kernel is correct + fast on v5e (no bf16 VPU).
    if fused_first:
        # conv1 recomputed inline (K<=8 matmul, negligible), then folded BN1 + ReLU.
        z_pre = jnp.dot(a_ref[...].astype(jnp.bfloat16), w_pre_ref[...],
                        preferred_element_type=jnp.float32)
        h = jnp.maximum(z_pre * sc_ref[...] + sh_ref[...], 0.0)
    else:
        h = jnp.maximum(a_ref[...].astype(jnp.float32) * sc_ref[...] + sh_ref[...], 0.0)
    hb = h.astype(jnp.bfloat16)

    # --- row-validity mask for the zero-padded tail tile (compile-time no-op when
    #     the point count divides the tile) ------------------------------------------
    if needs_mask:
        rid = t * tile + lax.broadcasted_iota(jnp.int32, (tile, 1), 0)
        valid = rid < n_valid
        fmask = valid.astype(jnp.float32)

    @pl.when(t == 0)
    def _init():
        sum_ref[...] = jnp.zeros(sum_ref.shape, sum_ref.dtype)
        ssq_ref[...] = jnp.zeros(ssq_ref.shape, ssq_ref.dtype)
        if last_layer:
            max_ref[...] = jnp.full(max_ref.shape, -jnp.inf, max_ref.dtype)
            min_ref[...] = jnp.full(min_ref.shape, jnp.inf, min_ref.dtype)

    if last_layer:
        # Single fused pass over 128-lane output slabs: each slab is produced on the
        # MXU, reduced (sum/ssq/max/min) and discarded, so the full (tile, 512) f32
        # activation is never materialized or re-traversed.
        cout = w_ref.shape[1]
        s_p, q_p, mx_p, mn_p = [], [], [], []
        for s in range(cout // 128):
            sl = slice(s * 128, (s + 1) * 128)
            zs = jnp.dot(hb, w_ref[:, sl], preferred_element_type=jnp.float32)
            if needs_mask:
                zsum = zs * fmask
                zmax = jnp.where(valid, zs, -jnp.inf)
                zmin = jnp.where(valid, zs, jnp.inf)
            else:
                zsum = zmax = zmin = zs
            s_p.append(jnp.sum(zsum, axis=0, keepdims=True))
            q_p.append(jnp.sum(zsum * zs, axis=0, keepdims=True))
            mx_p.append(jnp.max(zmax, axis=0, keepdims=True))
            mn_p.append(jnp.min(zmin, axis=0, keepdims=True))
        sum_ref[...] += jnp.concatenate(s_p, axis=-1)[None]
        ssq_ref[...] += jnp.concatenate(q_p, axis=-1)[None]
        max_ref[...] = jnp.maximum(max_ref[...], jnp.concatenate(mx_p, axis=-1)[None])
        min_ref[...] = jnp.minimum(min_ref[...], jnp.concatenate(mn_p, axis=-1)[None])
    else:
        z = jnp.dot(hb, w_ref[...], preferred_element_type=jnp.float32)
        z_ref[...] = z.astype(z_ref.dtype)               # stream bf16 to HBM
        zm = z * fmask if needs_mask else z
        # NOTE: E[z^2]-E[z]^2 in f32, clamped >= 0 in the fold; fine at these row
        # counts.  For very large B*N switch to shifted/Welford accumulation.
        sum_ref[...] += jnp.sum(zm, axis=0, keepdims=True)[None]
        ssq_ref[...] += jnp.sum(zm * z, axis=0, keepdims=True)[None]


def _conv_stage(a, scale, shift, w, *, w_pre=None, last_layer=False,
                batch, nt, tile, n_valid, needs_mask):
    """One streamed conv stage.  Returns (z, sum, ssq) or (sum, ssq, max, min)."""
    rows_p, cin = a.shape
    cout = w.shape[1]

    def row_block(c):
        return pl.BlockSpec((tile, c), lambda b, t: (b * nt + t, 0))

    def const(shp):
        return pl.BlockSpec(shp, lambda b, t: (0,) * len(shp))

    stat_spec = pl.BlockSpec((1, 1, cout), lambda b, t: (b, 0, 0))
    stat_shape = jax.ShapeDtypeStruct((batch, 1, cout), jnp.float32)

    in_specs, args = [row_block(cin)], [a]
    if w_pre is not None:
        in_specs.append(const(w_pre.shape)); args.append(w_pre)
    in_specs += [const(scale.shape), const(shift.shape), const(w.shape)]
    args += [scale, shift, w]

    if last_layer:
        out_shape = (stat_shape,) * 4                      # sum, ssq, max, min
        out_specs = (stat_spec,) * 4
    else:
        out_shape = (jax.ShapeDtypeStruct((rows_p, cout), jnp.bfloat16),
                     stat_shape, stat_shape)
        out_specs = (row_block(cout), stat_spec, stat_spec)

    kernel = functools.partial(conv_stage_kernel,
                               fused_first=w_pre is not None, last_layer=last_layer,
                               n_valid=n_valid, tile=tile, needs_mask=needs_mask)
    return pl.pallas_call(
        kernel,
        grid=(batch, nt),
        in_specs=in_specs,
        out_specs=out_specs,
        out_shape=out_shape,
        compiler_params=pltpu.CompilerParams(
            dimension_semantics=(BATCH_AXIS_SEMANTICS, "arbitrary"),
            vmem_limit_bytes=_vmem_limit_bytes()),
    )(*args)


# ---------------------------------------------------------------------------
# Tiny FC head kernel (B rows), fully VMEM resident, f32.
# ---------------------------------------------------------------------------
def _bn_rows(h, gamma, beta):
    # Training-mode BatchNorm1d over rows, biased variance (PyTorch .train()).
    mean = jnp.mean(h, axis=0, keepdims=True)
    var = jnp.mean(jnp.square(h - mean), axis=0, keepdims=True)
    return (h - mean) * lax.rsqrt(var + EPS) * gamma + beta


def head_kernel(zmax_ref, zmin_ref, sc4_ref,
                fw1_ref, fg1_ref, fbe1_ref,
                fw2_ref, fg2_ref, fbe2_ref,
                fw3_ref, fb3_ref, out_ref):
    # Exact streamed max-pool of bn4(conv4(x)): max(s*z+t) = s*max(z)+t for s>=0,
    # s*min(z)+t otherwise.  The scale s (sc4) is pre-folded into fw1; the shift t
    # and the fc1/fc2 biases are per-channel constants cancelled by the next BN.
    p = jnp.where(sc4_ref[...] >= 0.0, zmax_ref[...], zmin_ref[...])
    h = jnp.dot(p, fw1_ref[...], preferred_element_type=jnp.float32)
    h = jnp.maximum(_bn_rows(h, fg1_ref[...], fbe1_ref[...]), 0.0)
    h = jnp.dot(h, fw2_ref[...], preferred_element_type=jnp.float32)
    h = jnp.maximum(_bn_rows(h, fg2_ref[...], fbe2_ref[...]), 0.0)
    out_ref[...] = jnp.dot(h, fw3_ref[...],
                           preferred_element_type=jnp.float32) + fb3_ref[...]


# ---------------------------------------------------------------------------
# Glue helpers
# ---------------------------------------------------------------------------
def _fold_bn(psum, pssq, gamma, beta, count):
    """Fold training-mode BatchNorm1d stats into per-channel scale/shift."""
    mean = jnp.sum(psum, axis=0) / count                              # (1, C)
    var = jnp.maximum(jnp.sum(pssq, axis=0) / count - mean * mean, 0.0)
    scale = gamma * lax.rsqrt(var + EPS)
    return scale, beta - mean * scale


# ---------------------------------------------------------------------------
# Public forward
# ---------------------------------------------------------------------------
@functools.partial(jax.jit, static_argnames=("max_tile_rows",))
def encoder_forward(x, params, max_tile_rows=MAX_TILE_ROWS):
    """x: (B, N, input_dim) f32 point cloud.  Returns (m, v) with v == 0."""
    B, N, cin = x.shape
    rows = B * N                                      # true row count for BN stats
    tile, nt, n_pad = _pick_tile(N, max_tile_rows)
    needs_mask = n_pad != N

    # ---- analytic BN1 stats (exact, plain JAX): conv1's activation never touches
    #      HBM.  mean1 = (sum_x @ W1)/rows, E[z1^2] = diag(W1^T Gram W1)/rows.
    hi = lax.Precision.HIGHEST
    x2d = x.reshape(rows, cin).astype(jnp.float32)
    w1 = params["w1"]
    xs = jnp.sum(x2d, axis=0)                                        # (cin,)
    gram = jnp.dot(x2d.T, x2d, precision=hi)                         # (cin, cin)
    mean1 = jnp.dot(xs, w1, precision=hi) / rows                     # (C1,)
    ez1sq = jnp.sum(w1 * jnp.dot(gram, w1, precision=hi), axis=0) / rows
    var1 = jnp.maximum(ez1sq - mean1 * mean1, 0.0)
    sc1 = params["g1"] * lax.rsqrt(var1 + EPS)                       # (1, C1)
    sh1 = params["be1"] - mean1 * sc1

    # ---- lane/row padding; bf16 weights for the MXU ----
    cin_p = max(8, -(-cin // 8) * 8)
    xp = jnp.pad(x, ((0, 0), (0, n_pad - N), (0, cin_p - cin)))
    x_flat = xp.reshape(B * n_pad, cin_p).astype(jnp.float32)
    w1p = jnp.pad(w1, ((0, cin_p - cin), (0, 0))).astype(jnp.bfloat16)
    w2 = params["w2"].astype(jnp.bfloat16)
    w3 = params["w3"].astype(jnp.bfloat16)
    w4 = params["w4"].astype(jnp.bfloat16)

    common = dict(batch=B, nt=nt, tile=tile, n_valid=N, needs_mask=needs_mask)

    # ---- streamed conv stack: conv1+conv2 fused, then conv3, conv4 ----
    z2, s2, q2 = _conv_stage(x_flat, sc1, sh1, w2, w_pre=w1p, **common)
    sc2, sh2 = _fold_bn(s2, q2, params["g2"], params["be2"], rows)

    z3, s3, q3 = _conv_stage(z2, sc2, sh2, w3, **common)
    sc3, sh3 = _fold_bn(s3, q3, params["g3"], params["be3"], rows)

    s4, q4, zmax, zmin = _conv_stage(z3, sc3, sh3, w4, last_layer=True, **common)
    sc4, sh4 = _fold_bn(s4, q4, params["g4"], params["be4"], rows)
    del sh4  # per-channel constant -> cancelled by fc_bn1's mean subtraction

    # ---- tiny FC head: bn4-pooled (B, 512) -> zdim (lane padded to 128) ----
    zdim = params["fw3"].shape[1]
    zpad = -(-zdim // 128) * 128
    fw1f = params["fw1"] * jnp.reshape(sc4, (-1, 1))       # fold bn4 scale into fc1
    fw3p = jnp.pad(params["fw3"], ((0, 0), (0, zpad - zdim)))
    fb3p = jnp.pad(params["fb3"], ((0, 0), (0, zpad - zdim)))

    vmem = pl.BlockSpec(memory_space=pltpu.MemorySpace.VMEM)
    m_pad = pl.pallas_call(
        head_kernel,
        out_shape=jax.ShapeDtypeStruct((B, zpad), jnp.float32),
        in_specs=[vmem] * 11,
        out_specs=vmem,
        compiler_params=pltpu.CompilerParams(vmem_limit_bytes=_vmem_limit_bytes()),
    )(zmax[:, 0, :], zmin[:, 0, :], sc4,
      fw1f, params["fg1"], params["fbe1"],
      params["fw2"], params["fg2"], params["fbe2"],
      fw3p, fb3p)
    return m_pad[:, :zdim], 0


# ---------------------------------------------------------------------------
# Synthetic parameters + pure-JAX f32 reference
# ---------------------------------------------------------------------------
def init_params(key, zdim=32, input_dim=3):
    """Weights stored as (C_in, C_out) so kernels compute X @ W.
    (Porting real PyTorch Conv1d/Linear weights would require a transpose.)
    BN gammas/betas are randomized (g4 with mixed signs) to exercise the folding
    and the max/min pooled-affine paths."""
    keys = iter(jax.random.split(key, 32))
    nk = lambda: next(keys)
    params = {}

    def linear(cin, cout):
        bound = 1.0 / (cin ** 0.5)
        w = jax.random.uniform(nk(), (cin, cout), jnp.float32, -bound, bound)
        b = jax.random.uniform(nk(), (1, cout), jnp.float32, -bound, bound)
        return w, b

    conv_dims = [(input_dim, 128), (128, 128), (128, 256), (256, 512)]
    for i, (cin, cout) in enumerate(conv_dims, start=1):
        w, b = linear(cin, cout)
        params[f"w{i}"] = w
        params[f"b{i}"] = b            # used by the reference; cancelled by BN in kernels
        if i < 4:
            params[f"g{i}"] = jax.random.uniform(nk(), (1, cout), jnp.float32, 0.5, 1.5)
        else:                          # mixed signs -> exercises the min-pool path
            params[f"g{i}"] = jax.random.normal(nk(), (1, cout), jnp.float32)
        params[f"be{i}"] = 0.2 * jax.random.normal(nk(), (1, cout), jnp.float32)

    fc_dims = [(512, 256), (256, 128), (128, zdim)]
    for i, (cin, cout) in enumerate(fc_dims, start=1):
        w, b = linear(cin, cout)
        params[f"fw{i}"] = w
        params[f"fb{i}"] = b
        if i < 3:
            params[f"fg{i}"] = jax.random.uniform(nk(), (1, cout), jnp.float32, 0.5, 1.5)
            params[f"fbe{i}"] = 0.2 * jax.random.normal(nk(), (1, cout), jnp.float32)
    return params


def encoder_reference(x, params):
    """Pure-JAX f32 reference mirroring the PyTorch module exactly."""
    def bn(h, g, b):
        mean = jnp.mean(h, axis=0, keepdims=True)
        var = jnp.mean(jnp.square(h - mean), axis=0, keepdims=True)
        return (h - mean) * lax.rsqrt(var + EPS) * g + b

    B, N, _ = x.shape
    h = x.reshape(B * N, -1)
    for i in (1, 2, 3, 4):
        h = h @ params[f"w{i}"] + params[f"b{i}"]
        h = bn(h, params[f"g{i}"], params[f"be{i}"])
        if i < 4:
            h = jnp.maximum(h, 0.0)
    pooled = jnp.max(h.reshape(B, N, -1), axis=1)
    m = pooled @ params["fw1"] + params["fb1"]
    m = jnp.maximum(bn(m, params["fg1"], params["fbe1"]), 0.0)
    m = m @ params["fw2"] + params["fb2"]
    m = jnp.maximum(bn(m, params["fg2"], params["fbe2"]), 0.0)
    return m @ params["fw3"] + params["fb3"]


if __name__ == "__main__":
    key = jax.random.PRNGKey(0)
    kp, kx = jax.random.split(key)

    ZDIM, INPUT_DIM = 32, 3
    params = init_params(kp, zdim=ZDIM, input_dim=INPUT_DIM)

    def run_case(k, batch, n_points):
        x = jax.random.normal(k, (batch, n_points, INPUT_DIM), jnp.float32)
        # Make the point clouds statistically distinct per batch so the tiny-row
        # FC BatchNorms are well conditioned for the bf16-vs-f32 comparison.
        x = (x * jnp.linspace(0.6, 1.6, batch).reshape(batch, 1, 1)
             + jnp.linspace(-0.8, 0.8, batch).reshape(batch, 1, 1))
        m, v = encoder_forward(x, params)
        m = jax.block_until_ready(m)
        assert m.shape == (batch, ZDIM) and int(v) == 0
        assert bool(jnp.all(jnp.isfinite(m)))
        ref = encoder_reference(x, params)
        rel = float(jnp.linalg.norm(m - ref) / (jnp.linalg.norm(ref) + 1e-12))
        assert rel < 0.1, f"relative error too large: {rel}"

    k1, k2 = jax.random.split(kx)
    run_case(k1, batch=4, n_points=512)   # point count divides the row tile (no mask)
    run_case(k2, batch=4, n_points=203)   # non-divisible -> padded + masked tail tile
    print("KERNEL_OK")
</pallas_src>

<mosaic_0001>
module attributes {stable_mosaic.version = 11 : i64} {
  func.func @conv_stage_kernel(%arg0: i32, %arg1: i32, %arg2: memref<512x8xf32, #tpu.memory_space<vmem>>, %arg3: memref<8x128xbf16, #tpu.memory_space<vmem>>, %arg4: memref<1x128xf32, #tpu.memory_space<vmem>>, %arg5: memref<1x128xf32, #tpu.memory_space<vmem>>, %arg6: memref<128x128xbf16, #tpu.memory_space<vmem>>, %arg7: memref<512x128xbf16, #tpu.memory_space<vmem>>, %arg8: memref<1x1x128xf32, #tpu.memory_space<vmem>>, %arg9: memref<1x1x128xf32, #tpu.memory_space<vmem>>) attributes {dimension_semantics = [#tpu.dimension_semantics<parallel>, #tpu.dimension_semantics<arbitrary>], iteration_bounds = array<i64: 4, 1>, scalar_prefetch = 0 : i64, scratch_operands = 0 : i64, tpu.core_type = #tpu.core_type<tc>, window_params = [{transform_indices = @transform_0, window_bounds = array<i64: 512, 8>}, {pipeline_mode = #tpu.pipeline_mode<synchronous>, transform_indices = @transform_1, window_bounds = array<i64: 8, 128>}, {pipeline_mode = #tpu.pipeline_mode<synchronous>, transform_indices = @transform_2, window_bounds = array<i64: 1, 128>}, {pipeline_mode = #tpu.pipeline_mode<synchronous>, transform_indices = @transform_3, window_bounds = array<i64: 1, 128>}, {pipeline_mode = #tpu.pipeline_mode<synchronous>, transform_indices = @transform_4, window_bounds = array<i64: 128, 128>}, {transform_indices = @transform_5, window_bounds = array<i64: 512, 128>}, {transform_indices = @transform_6, window_bounds = array<i64: 1, 1, 128>}, {transform_indices = @transform_7, window_bounds = array<i64: 1, 1, 128>}]} {
    %c0 = arith.constant 0 : index
    %c0_0 = arith.constant 0 : index
    %0 = vector.load %arg2[%c0, %c0_0] : memref<512x8xf32, #tpu.memory_space<vmem>>, vector<512x8xf32>
    %1 = arith.truncf %0 : vector<512x8xf32> to vector<512x8xbf16>
    %c0_1 = arith.constant 0 : index
    %c0_2 = arith.constant 0 : index
    %2 = vector.load %arg3[%c0_1, %c0_2] : memref<8x128xbf16, #tpu.memory_space<vmem>>, vector<8x128xbf16>
    %cst = arith.constant dense<0.000000e+00> : vector<512x128xf32>
    %3 = tpu.matmul %1, %2, %cst {dimension_numbers = #tpu.dot_dimension_numbers<[1], [0], [0], [1], [0, 0, 1, 1], [], []>} : vector<512x8xbf16>, vector<8x128xbf16>, vector<512x128xf32> -> vector<512x128xf32>
    %c0_3 = arith.constant 0 : index
    %c0_4 = arith.constant 0 : index
    %4 = vector.load %arg4[%c0_3, %c0_4] : memref<1x128xf32, #tpu.memory_space<vmem>>, vector<1x128xf32>
    %5 = vector.broadcast %4 : vector<1x128xf32> to vector<512x128xf32>
    %6 = arith.mulf %3, %5 : vector<512x128xf32>
    %c0_5 = arith.constant 0 : index
    %c0_6 = arith.constant 0 : index
    %7 = vector.load %arg5[%c0_5, %c0_6] : memref<1x128xf32, #tpu.memory_space<vmem>>, vector<1x128xf32>
    %8 = vector.broadcast %7 : vector<1x128xf32> to vector<512x128xf32>
    %9 = arith.addf %6, %8 : vector<512x128xf32>
    %cst_7 = arith.constant 0.000000e+00 : f32
    %10 = vector.broadcast %cst_7 : f32 to vector<512x128xf32>
    %11 = arith.maximumf %9, %10 : vector<512x128xf32>
    %12 = arith.truncf %11 : vector<512x128xf32> to vector<512x128xbf16>
    %c0_i32 = arith.constant 0 : i32
    %13 = arith.cmpi eq, %arg1, %c0_i32 : i32
    %14 = arith.extui %13 : i1 to i32
    %c0_i32_8 = arith.constant 0 : i32
    %15 = arith.cmpi ne, %14, %c0_i32_8 : i32
    scf.if %15 {
      %cst_28 = arith.constant 0.000000e+00 : f32
      %33 = vector.broadcast %cst_28 : f32 to vector<1x1x128xf32>
      %c0_29 = arith.constant 0 : index
      %c0_30 = arith.constant 0 : index
      %c0_31 = arith.constant 0 : index
      %34 = vector.load %arg8[%c0_29, %c0_30, %c0_31] : memref<1x1x128xf32, #tpu.memory_space<vmem>>, vector<1x1x128xf32>
      tpu.vector_store %arg8[%c0_29, %c0_30, %c0_31], %33 {strides = array<i32>} : memref<1x1x128xf32, #tpu.memory_space<vmem>>, vector<1x1x128xf32>,
      %cst_32 = arith.constant 0.000000e+00 : f32
      %35 = vector.broadcast %cst_32 : f32 to vector<1x1x128xf32>
      %c0_33 = arith.constant 0 : index
      %c0_34 = arith.constant 0 : index
      %c0_35 = arith.constant 0 : index
      %36 = vector.load %arg9[%c0_33, %c0_34, %c0_35] : memref<1x1x128xf32, #tpu.memory_space<vmem>>, vector<1x1x128xf32>
      tpu.vector_store %arg9[%c0_33, %c0_34, %c0_35], %35 {strides = array<i32>} : memref<1x1x128xf32, #tpu.memory_space<vmem>>, vector<1x1x128xf32>,
    } else {
    }
    %c0_9 = arith.constant 0 : index
    %c0_10 = arith.constant 0 : index
    %16 = vector.load %arg6[%c0_9, %c0_10] : memref<128x128xbf16, #tpu.memory_space<vmem>>, vector<128x128xbf16>
    %cst_11 = arith.constant dense<0.000000e+00> : vector<512x128xf32>
    %17 = tpu.matmul %12, %16, %cst_11 {dimension_numbers = #tpu.dot_dimension_numbers<[1], [0], [0], [1], [0, 0, 1, 1], [], []>} : vector<512x128xbf16>, vector<128x128xbf16>, vector<512x128xf32> -> vector<512x128xf32>
    %18 = arith.truncf %17 : vector<512x128xf32> to vector<512x128xbf16>
    %c0_12 = arith.constant 0 : index
    %c0_13 = arith.constant 0 : index
    %19 = vector.load %arg7[%c0_12, %c0_13] : memref<512x128xbf16, #tpu.memory_space<vmem>>, vector<512x128xbf16>
    tpu.vector_store %arg7[%c0_12, %c0_13], %18 {strides = array<i32>} : memref<512x128xbf16, #tpu.memory_space<vmem>>, vector<512x128xbf16>,
    %c0_14 = arith.constant 0 : index
    %c0_15 = arith.constant 0 : index
    %c0_16 = arith.constant 0 : index
    %20 = vector.load %arg8[%c0_14, %c0_15, %c0_16] : memref<1x1x128xf32, #tpu.memory_space<vmem>>, vector<1x1x128xf32>
    %cst_17 = arith.constant dense<0.000000e+00> : vector<128xf32>
    %21 = vector.multi_reduction <add>, %17, %cst_17 [0] : vector<512x128xf32> to vector<128xf32>
    %22 = vector.shape_cast %21 : vector<128xf32> to vector<1x128xf32>
    %23 = vector.shape_cast %22 : vector<1x128xf32> to vector<1x1x128xf32>
    %24 = arith.addf %20, %23 : vector<1x1x128xf32>
    %c0_18 = arith.constant 0 : index
    %c0_19 = arith.constant 0 : index
    %c0_20 = arith.constant 0 : index
    %25 = vector.load %arg8[%c0_18, %c0_19, %c0_20] : memref<1x1x128xf32, #tpu.memory_space<vmem>>, vector<1x1x128xf32>
    tpu.vector_store %arg8[%c0_18, %c0_19, %c0_20], %24 {strides = array<i32>} : memref<1x1x128xf32, #tpu.memory_space<vmem>>, vector<1x1x128xf32>,
    %c0_21 = arith.constant 0 : index
    %c0_22 = arith.constant 0 : index
    %c0_23 = arith.constant 0 : index
    %26 = vector.load %arg9[%c0_21, %c0_22, %c0_23] : memref<1x1x128xf32, #tpu.memory_space<vmem>>, vector<1x1x128xf32>
    %27 = arith.mulf %17, %17 : vector<512x128xf32>
    %cst_24 = arith.constant dense<0.000000e+00> : vector<128xf32>
    %28 = vector.multi_reduction <add>, %27, %cst_24 [0] : vector<512x128xf32> to vector<128xf32>
    %29 = vector.shape_cast %28 : vector<128xf32> to vector<1x128xf32>
    %30 = vector.shape_cast %29 : vector<1x128xf32> to vector<1x1x128xf32>
    %31 = arith.addf %26, %30 : vector<1x1x128xf32>
    %c0_25 = arith.constant 0 : index
    %c0_26 = arith.constant 0 : index
    %c0_27 = arith.constant 0 : index
    %32 = vector.load %arg9[%c0_25, %c0_26, %c0_27] : memref<1x1x128xf32, #tpu.memory_space<vmem>>, vector<1x1x128xf32>
    tpu.vector_store %arg9[%c0_25, %c0_26, %c0_27], %31 {strides = array<i32>} : memref<1x1x128xf32, #tpu.memory_space<vmem>>, vector<1x1x128xf32>,
    return
  }
  func.func @transform_0(%arg0: i32, %arg1: i32) -> (i32, i32) {
    %c1_i32 = arith.constant 1 : i32
    %0 = arith.muli %arg0, %c1_i32 : i32
    %1 = arith.addi %0, %arg1 : i32
    %c0_i32 = arith.constant 0 : i32
    %c0_i32_0 = arith.constant 0 : i32
    return %1, %c0_i32 : i32, i32
  }
  func.func @transform_1(%arg0: i32, %arg1: i32) -> (i32, i32) {
    %c0_i32 = arith.constant 0 : i32
    %c0_i32_0 = arith.constant 0 : i32
    %c0_i32_1 = arith.constant 0 : i32
    return %c0_i32, %c0_i32_0 : i32, i32
  }
  func.func @transform_2(%arg0: i32, %arg1: i32) -> (i32, i32) {
    %c0_i32 = arith.constant 0 : i32
    %c0_i32_0 = arith.constant 0 : i32
    %c0_i32_1 = arith.constant 0 : i32
    return %c0_i32, %c0_i32_0 : i32, i32
  }
  func.func @transform_3(%arg0: i32, %arg1: i32) -> (i32, i32) {
    %c0_i32 = arith.constant 0 : i32
    %c0_i32_0 = arith.constant 0 : i32
    %c0_i32_1 = arith.constant 0 : i32
    return %c0_i32, %c0_i32_0 : i32, i32
  }
  func.func @transform_4(%arg0: i32, %arg1: i32) -> (i32, i32) {
    %c0_i32 = arith.constant 0 : i32
    %c0_i32_0 = arith.constant 0 : i32
    %c0_i32_1 = arith.constant 0 : i32
    return %c0_i32, %c0_i32_0 : i32, i32
  }
  func.func @transform_5(%arg0: i32, %arg1: i32) -> (i32, i32) {
    %c1_i32 = arith.constant 1 : i32
    %0 = arith.muli %arg0, %c1_i32 : i32
    %1 = arith.addi %0, %arg1 : i32
    %c0_i32 = arith.constant 0 : i32
    %c0_i32_0 = arith.constant 0 : i32
    return %1, %c0_i32 : i32, i32
  }
  func.func @transform_6(%arg0: i32, %arg1: i32) -> (i32, i32, i32) {
    %c0_i32 = arith.constant 0 : i32
    %c0_i32_0 = arith.constant 0 : i32
    %c0_i32_1 = arith.constant 0 : i32
    return %arg0, %c0_i32, %c0_i32_0 : i32, i32, i32
  }
  func.func @transform_7(%arg0: i32, %arg1: i32) -> (i32, i32, i32) {
    %c0_i32 = arith.constant 0 : i32
    %c0_i32_0 = arith.constant 0 : i32
    %c0_i32_1 = arith.constant 0 : i32
    return %arg0, %c0_i32, %c0_i32_0 : i32, i32, i32
  }
}

module attributes {stable_mosaic.version = 11 : i64} {
  func.func @conv_stage_kernel(%arg0: i32, %arg1: i32, %arg2: memref<512x128xbf16, #tpu.memory_space<vmem>>, %arg3: memref<1x128xf32, #tpu.memory_space<vmem>>, %arg4: memref<1x128xf32, #tpu.memory_space<vmem>>, %arg5: memref<128x256xbf16, #tpu.memory_space<vmem>>, %arg6: memref<512x256xbf16, #tpu.memory_space<vmem>>, %arg7: memref<1x1x256xf32, #tpu.memory_space<vmem>>, %arg8: memref<1x1x256xf32, #tpu.memory_space<vmem>>) attributes {dimension_semantics = [#tpu.dimension_semantics<parallel>, #tpu.dimension_semantics<arbitrary>], iteration_bounds = array<i64: 4, 1>, scalar_prefetch = 0 : i64, scratch_operands = 0 : i64, tpu.core_type = #tpu.core_type<tc>, window_params = [{transform_indices = @transform_0, window_bounds = array<i64: 512, 128>}, {pipeline_mode = #tpu.pipeline_mode<synchronous>, transform_indices = @transform_1, window_bounds = array<i64: 1, 128>}, {pipeline_mode = #tpu.pipeline_mode<synchronous>, transform_indices = @transform_2, window_bounds = array<i64: 1, 128>}, {pipeline_mode = #tpu.pipeline_mode<synchronous>, transform_indices = @transform_3, window_bounds = array<i64: 128, 256>}, {transform_indices = @transform_4, window_bounds = array<i64: 512, 256>}, {transform_indices = @transform_5, window_bounds = array<i64: 1, 1, 256>}, {transform_indices = @transform_6, window_bounds = array<i64: 1, 1, 256>}]} {
    %c0 = arith.constant 0 : index
    %c0_0 = arith.constant 0 : index
    %0 = vector.load %arg2[%c0, %c0_0] : memref<512x128xbf16, #tpu.memory_space<vmem>>, vector<512x128xbf16>
    %1 = arith.extf %0 : vector<512x128xbf16> to vector<512x128xf32>
    %c0_1 = arith.constant 0 : index
    %c0_2 = arith.constant 0 : index
    %2 = vector.load %arg3[%c0_1, %c0_2] : memref<1x128xf32, #tpu.memory_space<vmem>>, vector<1x128xf32>
    %3 = vector.broadcast %2 : vector<1x128xf32> to vector<512x128xf32>
    %4 = arith.mulf %1, %3 : vector<512x128xf32>
    %c0_3 = arith.constant 0 : index
    %c0_4 = arith.constant 0 : index
    %5 = vector.load %arg4[%c0_3, %c0_4] : memref<1x128xf32, #tpu.memory_space<vmem>>, vector<1x128xf32>
    %6 = vector.broadcast %5 : vector<1x128xf32> to vector<512x128xf32>
    %7 = arith.addf %4, %6 : vector<512x128xf32>
    %cst = arith.constant 0.000000e+00 : f32
    %8 = vector.broadcast %cst : f32 to vector<512x128xf32>
    %9 = arith.maximumf %7, %8 : vector<512x128xf32>
    %10 = arith.truncf %9 : vector<512x128xf32> to vector<512x128xbf16>
    %c0_i32 = arith.constant 0 : i32
    %11 = arith.cmpi eq, %arg1, %c0_i32 : i32
    %12 = arith.extui %11 : i1 to i32
    %c0_i32_5 = arith.constant 0 : i32
    %13 = arith.cmpi ne, %12, %c0_i32_5 : i32
    scf.if %13 {
      %cst_25 = arith.constant 0.000000e+00 : f32
      %31 = vector.broadcast %cst_25 : f32 to vector<1x1x256xf32>
      %c0_26 = arith.constant 0 : index
      %c0_27 = arith.constant 0 : index
      %c0_28 = arith.constant 0 : index
      %32 = vector.load %arg7[%c0_26, %c0_27, %c0_28] : memref<1x1x256xf32, #tpu.memory_space<vmem>>, vector<1x1x256xf32>
      tpu.vector_store %arg7[%c0_26, %c0_27, %c0_28], %31 {strides = array<i32>} : memref<1x1x256xf32, #tpu.memory_space<vmem>>, vector<1x1x256xf32>,
      %cst_29 = arith.constant 0.000000e+00 : f32
      %33 = vector.broadcast %cst_29 : f32 to vector<1x1x256xf32>
      %c0_30 = arith.constant 0 : index
      %c0_31 = arith.constant 0 : index
      %c0_32 = arith.constant 0 : index
      %34 = vector.load %arg8[%c0_30, %c0_31, %c0_32] : memref<1x1x256xf32, #tpu.memory_space<vmem>>, vector<1x1x256xf32>
      tpu.vector_store %arg8[%c0_30, %c0_31, %c0_32], %33 {strides = array<i32>} : memref<1x1x256xf32, #tpu.memory_space<vmem>>, vector<1x1x256xf32>,
    } else {
    }
    %c0_6 = arith.constant 0 : index
    %c0_7 = arith.constant 0 : index
    %14 = vector.load %arg5[%c0_6, %c0_7] : memref<128x256xbf16, #tpu.memory_space<vmem>>, vector<128x256xbf16>
    %cst_8 = arith.constant dense<0.000000e+00> : vector<512x256xf32>
    %15 = tpu.matmul %10, %14, %cst_8 {dimension_numbers = #tpu.dot_dimension_numbers<[1], [0], [0], [1], [0, 0, 1, 1], [], []>} : vector<512x128xbf16>, vector<128x256xbf16>, vector<512x256xf32> -> vector<512x256xf32>
    %16 = arith.truncf %15 : vector<512x256xf32> to vector<512x256xbf16>
    %c0_9 = arith.constant 0 : index
    %c0_10 = arith.constant 0 : index
    %17 = vector.load %arg6[%c0_9, %c0_10] : memref<512x256xbf16, #tpu.memory_space<vmem>>, vector<512x256xbf16>
    tpu.vector_store %arg6[%c0_9, %c0_10], %16 {strides = array<i32>} : memref<512x256xbf16, #tpu.memory_space<vmem>>, vector<512x256xbf16>,
    %c0_11 = arith.constant 0 : index
    %c0_12 = arith.constant 0 : index
    %c0_13 = arith.constant 0 : index
    %18 = vector.load %arg7[%c0_11, %c0_12, %c0_13] : memref<1x1x256xf32, #tpu.memory_space<vmem>>, vector<1x1x256xf32>
    %cst_14 = arith.constant dense<0.000000e+00> : vector<256xf32>
    %19 = vector.multi_reduction <add>, %15, %cst_14 [0] : vector<512x256xf32> to vector<256xf32>
    %20 = vector.shape_cast %19 : vector<256xf32> to vector<1x256xf32>
    %21 = vector.shape_cast %20 : vector<1x256xf32> to vector<1x1x256xf32>
    %22 = arith.addf %18, %21 : vector<1x1x256xf32>
    %c0_15 = arith.constant 0 : index
    %c0_16 = arith.constant 0 : index
    %c0_17 = arith.constant 0 : index
    %23 = vector.load %arg7[%c0_15, %c0_16, %c0_17] : memref<1x1x256xf32, #tpu.memory_space<vmem>>, vector<1x1x256xf32>
    tpu.vector_store %arg7[%c0_15, %c0_16, %c0_17], %22 {strides = array<i32>} : memref<1x1x256xf32, #tpu.memory_space<vmem>>, vector<1x1x256xf32>,
    %c0_18 = arith.constant 0 : index
    %c0_19 = arith.constant 0 : index
    %c0_20 = arith.constant 0 : index
    %24 = vector.load %arg8[%c0_18, %c0_19, %c0_20] : memref<1x1x256xf32, #tpu.memory_space<vmem>>, vector<1x1x256xf32>
    %25 = arith.mulf %15, %15 : vector<512x256xf32>
    %cst_21 = arith.constant dense<0.000000e+00> : vector<256xf32>
    %26 = vector.multi_reduction <add>, %25, %cst_21 [0] : vector<512x256xf32> to vector<256xf32>
    %27 = vector.shape_cast %26 : vector<256xf32> to vector<1x256xf32>
    %28 = vector.shape_cast %27 : vector<1x256xf32> to vector<1x1x256xf32>
    %29 = arith.addf %24, %28 : vector<1x1x256xf32>
    %c0_22 = arith.constant 0 : index
    %c0_23 = arith.constant 0 : index
    %c0_24 = arith.constant 0 : index
    %30 = vector.load %arg8[%c0_22, %c0_23, %c0_24] : memref<1x1x256xf32, #tpu.memory_space<vmem>>, vector<1x1x256xf32>
    tpu.vector_store %arg8[%c0_22, %c0_23, %c0_24], %29 {strides = array<i32>} : memref<1x1x256xf32, #tpu.memory_space<vmem>>, vector<1x1x256xf32>,
    return
  }
  func.func @transform_0(%arg0: i32, %arg1: i32) -> (i32, i32) {
    %c1_i32 = arith.constant 1 : i32
    %0 = arith.muli %arg0, %c1_i32 : i32
    %1 = arith.addi %0, %arg1 : i32
    %c0_i32 = arith.constant 0 : i32
    %c0_i32_0 = arith.constant 0 : i32
    return %1, %c0_i32 : i32, i32
  }
  func.func @transform_1(%arg0: i32, %arg1: i32) -> (i32, i32) {
    %c0_i32 = arith.constant 0 : i32
    %c0_i32_0 = arith.constant 0 : i32
    %c0_i32_1 = arith.constant 0 : i32
    return %c0_i32, %c0_i32_0 : i32, i32
  }
  func.func @transform_2(%arg0: i32, %arg1: i32) -> (i32, i32) {
    %c0_i32 = arith.constant 0 : i32
    %c0_i32_0 = arith.constant 0 : i32
    %c0_i32_1 = arith.constant 0 : i32
    return %c0_i32, %c0_i32_0 : i32, i32
  }
  func.func @transform_3(%arg0: i32, %arg1: i32) -> (i32, i32) {
    %c0_i32 = arith.constant 0 : i32
    %c0_i32_0 = arith.constant 0 : i32
    %c0_i32_1 = arith.constant 0 : i32
    return %c0_i32, %c0_i32_0 : i32, i32
  }
  func.func @transform_4(%arg0: i32, %arg1: i32) -> (i32, i32) {
    %c1_i32 = arith.constant 1 : i32
    %0 = arith.muli %arg0, %c1_i32 : i32
    %1 = arith.addi %0, %arg1 : i32
    %c0_i32 = arith.constant 0 : i32
    %c0_i32_0 = arith.constant 0 : i32
    return %1, %c0_i32 : i32, i32
  }
  func.func @transform_5(%arg0: i32, %arg1: i32) -> (i32, i32, i32) {
    %c0_i32 = arith.constant 0 : i32
    %c0_i32_0 = arith.constant 0 : i32
    %c0_i32_1 = arith.constant 0 : i32
    return %arg0, %c0_i32, %c0_i32_0 : i32, i32, i32
  }
  func.func @transform_6(%arg0: i32, %arg1: i32) -> (i32, i32, i32) {
    %c0_i32 = arith.constant 0 : i32
    %c0_i32_0 = arith.constant 0 : i32
    %c0_i32_1 = arith.constant 0 : i32
    return %arg0, %c0_i32, %c0_i32_0 : i32, i32, i32
  }
}

module attributes {stable_mosaic.version = 11 : i64} {
  func.func @conv_stage_kernel(%arg0: i32, %arg1: i32, %arg2: memref<512x256xbf16, #tpu.memory_space<vmem>>, %arg3: memref<1x256xf32, #tpu.memory_space<vmem>>, %arg4: memref<1x256xf32, #tpu.memory_space<vmem>>, %arg5: memref<256x512xbf16, #tpu.memory_space<vmem>>, %arg6: memref<1x1x512xf32, #tpu.memory_space<vmem>>, %arg7: memref<1x1x512xf32, #tpu.memory_space<vmem>>, %arg8: memref<1x1x512xf32, #tpu.memory_space<vmem>>, %arg9: memref<1x1x512xf32, #tpu.memory_space<vmem>>) attributes {dimension_semantics = [#tpu.dimension_semantics<parallel>, #tpu.dimension_semantics<arbitrary>], iteration_bounds = array<i64: 4, 1>, scalar_prefetch = 0 : i64, scratch_operands = 0 : i64, tpu.core_type = #tpu.core_type<tc>, window_params = [{transform_indices = @transform_0, window_bounds = array<i64: 512, 256>}, {pipeline_mode = #tpu.pipeline_mode<synchronous>, transform_indices = @transform_1, window_bounds = array<i64: 1, 256>}, {pipeline_mode = #tpu.pipeline_mode<synchronous>, transform_indices = @transform_2, window_bounds = array<i64: 1, 256>}, {pipeline_mode = #tpu.pipeline_mode<synchronous>, transform_indices = @transform_3, window_bounds = array<i64: 256, 512>}, {transform_indices = @transform_4, window_bounds = array<i64: 1, 1, 512>}, {transform_indices = @transform_5, window_bounds = array<i64: 1, 1, 512>}, {transform_indices = @transform_6, window_bounds = array<i64: 1, 1, 512>}, {transform_indices = @transform_7, window_bounds = array<i64: 1, 1, 512>}]} {
    %c0 = arith.constant 0 : index
    %c0_0 = arith.constant 0 : index
    %0 = vector.load %arg2[%c0, %c0_0] : memref<512x256xbf16, #tpu.memory_space<vmem>>, vector<512x256xbf16>
    %1 = arith.extf %0 : vector<512x256xbf16> to vector<512x256xf32>
    %c0_1 = arith.constant 0 : index
    %c0_2 = arith.constant 0 : index
    %2 = vector.load %arg3[%c0_1, %c0_2] : memref<1x256xf32, #tpu.memory_space<vmem>>, vector<1x256xf32>
    %3 = vector.broadcast %2 : vector<1x256xf32> to vector<512x256xf32>
    %4 = arith.mulf %1, %3 : vector<512x256xf32>
    %c0_3 = arith.constant 0 : index
    %c0_4 = arith.constant 0 : index
    %5 = vector.load %arg4[%c0_3, %c0_4] : memref<1x256xf32, #tpu.memory_space<vmem>>, vector<1x256xf32>
    %6 = vector.broadcast %5 : vector<1x256xf32> to vector<512x256xf32>
    %7 = arith.addf %4, %6 : vector<512x256xf32>
    %cst = arith.constant 0.000000e+00 : f32
    %8 = vector.broadcast %cst : f32 to vector<512x256xf32>
    %9 = arith.maximumf %7, %8 : vector<512x256xf32>
    %10 = arith.truncf %9 : vector<512x256xf32> to vector<512x256xbf16>
    %c0_i32 = arith.constant 0 : i32
    %11 = arith.cmpi eq, %arg1, %c0_i32 : i32
    %12 = arith.extui %11 : i1 to i32
    %c0_i32_5 = arith.constant 0 : i32
    %13 = arith.cmpi ne, %12, %c0_i32_5 : i32
    scf.if %13 {
      %cst_55 = arith.constant 0.000000e+00 : f32
      %78 = vector.broadcast %cst_55 : f32 to vector<1x1x512xf32>
      %c0_56 = arith.constant 0 : index
      %c0_57 = arith.constant 0 : index
      %c0_58 = arith.constant 0 : index
      %79 = vector.load %arg6[%c0_56, %c0_57, %c0_58] : memref<1x1x512xf32, #tpu.memory_space<vmem>>, vector<1x1x512xf32>
      tpu.vector_store %arg6[%c0_56, %c0_57, %c0_58], %78 {strides = array<i32>} : memref<1x1x512xf32, #tpu.memory_space<vmem>>, vector<1x1x512xf32>,
      %cst_59 = arith.constant 0.000000e+00 : f32
      %80 = vector.broadcast %cst_59 : f32 to vector<1x1x512xf32>
      %c0_60 = arith.constant 0 : index
      %c0_61 = arith.constant 0 : index
      %c0_62 = arith.constant 0 : index
      %81 = vector.load %arg7[%c0_60, %c0_61, %c0_62] : memref<1x1x512xf32, #tpu.memory_space<vmem>>, vector<1x1x512xf32>
      tpu.vector_store %arg7[%c0_60, %c0_61, %c0_62], %80 {strides = array<i32>} : memref<1x1x512xf32, #tpu.memory_space<vmem>>, vector<1x1x512xf32>,
      %cst_63 = arith.constant 0xFF800000 : f32
      %82 = vector.broadcast %cst_63 : f32 to vector<1x1x512xf32>
      %c0_64 = arith.constant 0 : index
      %c0_65 = arith.constant 0 : index
      %c0_66 = arith.constant 0 : index
      %83 = vector.load %arg8[%c0_64, %c0_65, %c0_66] : memref<1x1x512xf32, #tpu.memory_space<vmem>>, vector<1x1x512xf32>
      tpu.vector_store %arg8[%c0_64, %c0_65, %c0_66], %82 {strides = array<i32>} : memref<1x1x512xf32, #tpu.memory_space<vmem>>, vector<1x1x512xf32>,
      %cst_67 = arith.constant 0x7F800000 : f32
      %84 = vector.broadcast %cst_67 : f32 to vector<1x1x512xf32>
      %c0_68 = arith.constant 0 : index
      %c0_69 = arith.constant 0 : index
      %c0_70 = arith.constant 0 : index
      %85 = vector.load %arg9[%c0_68, %c0_69, %c0_70] : memref<1x1x512xf32, #tpu.memory_space<vmem>>, vector<1x1x512xf32>
      tpu.vector_store %arg9[%c0_68, %c0_69, %c0_70], %84 {strides = array<i32>} : memref<1x1x512xf32, #tpu.memory_space<vmem>>, vector<1x1x512xf32>,
    } else {
    }
    %c0_6 = arith.constant 0 : index
    %c0_7 = arith.constant 0 : index
    %14 = vector.load %arg5[%c0_6, %c0_7] : memref<256x512xbf16, #tpu.memory_space<vmem>>, vector<256x128xbf16>
    %cst_8 = arith.constant dense<0.000000e+00> : vector<512x128xf32>
    %15 = tpu.matmul %10, %14, %cst_8 {dimension_numbers = #tpu.dot_dimension_numbers<[1], [0], [0], [1], [0, 0, 1, 1], [], []>} : vector<512x256xbf16>, vector<256x128xbf16>, vector<512x128xf32> -> vector<512x128xf32>
    %cst_9 = arith.constant dense<0.000000e+00> : vector<128xf32>
    %16 = vector.multi_reduction <add>, %15, %cst_9 [0] : vector<512x128xf32> to vector<128xf32>
    %17 = vector.shape_cast %16 : vector<128xf32> to vector<1x128xf32>
    %18 = arith.mulf %15, %15 : vector<512x128xf32>
    %cst_10 = arith.constant dense<0.000000e+00> : vector<128xf32>
    %19 = vector.multi_reduction <add>, %18, %cst_10 [0] : vector<512x128xf32> to vector<128xf32>
    %20 = vector.shape_cast %19 : vector<128xf32> to vector<1x128xf32>
    %cst_11 = arith.constant dense<0xFF800000> : vector<128xf32>
    %21 = vector.multi_reduction <maximumf>, %15, %cst_11 [0] : vector<512x128xf32> to vector<128xf32>
    %22 = vector.shape_cast %21 : vector<128xf32> to vector<1x128xf32>
    %cst_12 = arith.constant dense<0x7F800000> : vector<128xf32>
    %23 = vector.multi_reduction <minimumf>, %15, %cst_12 [0] : vector<512x128xf32> to vector<128xf32>
    %24 = vector.shape_cast %23 : vector<128xf32> to vector<1x128xf32>
    %c0_13 = arith.constant 0 : index
    %c128 = arith.constant 128 : index
    %25 = vector.load %arg5[%c0_13, %c128] : memref<256x512xbf16, #tpu.memory_space<vmem>>, vector<256x128xbf16>
    %cst_14 = arith.constant dense<0.000000e+00> : vector<512x128xf32>
    %26 = tpu.matmul %10, %25, %cst_14 {dimension_numbers = #tpu.dot_dimension_numbers<[1], [0], [0], [1], [0, 0, 1, 1], [], []>} : vector<512x256xbf16>, vector<256x128xbf16>, vector<512x128xf32> -> vector<512x128xf32>
    %cst_15 = arith.constant dense<0.000000e+00> : vector<128xf32>
    %27 = vector.multi_reduction <add>, %26, %cst_15 [0] : vector<512x128xf32> to vector<128xf32>
    %28 = vector.shape_cast %27 : vector<128xf32> to vector<1x128xf32>
    %29 = arith.mulf %26, %26 : vector<512x128xf32>
    %cst_16 = arith.constant dense<0.000000e+00> : vector<128xf32>
    %30 = vector.multi_reduction <add>, %29, %cst_16 [0] : vector<512x128xf32> to vector<128xf32>
    %31 = vector.shape_cast %30 : vector<128xf32> to vector<1x128xf32>
    %cst_17 = arith.constant dense<0xFF800000> : vector<128xf32>
    %32 = vector.multi_reduction <maximumf>, %26, %cst_17 [0] : vector<512x128xf32> to vector<128xf32>
    %33 = vector.shape_cast %32 : vector<128xf32> to vector<1x128xf32>
    %cst_18 = arith.constant dense<0x7F800000> : vector<128xf32>
    %34 = vector.multi_reduction <minimumf>, %26, %cst_18 [0] : vector<512x128xf32> to vector<128xf32>
    %35 = vector.shape_cast %34 : vector<128xf32> to vector<1x128xf32>
    %c0_19 = arith.constant 0 : index
    %c256 = arith.constant 256 : index
    %36 = vector.load %arg5[%c0_19, %c256] : memref<256x512xbf16, #tpu.memory_space<vmem>>, vector<256x128xbf16>
    %cst_20 = arith.constant dense<0.000000e+00> : vector<512x128xf32>
    %37 = tpu.matmul %10, %36, %cst_20 {dimension_numbers = #tpu.dot_dimension_numbers<[1], [0], [0], [1], [0, 0, 1, 1], [], []>} : vector<512x256xbf16>, vector<256x128xbf16>, vector<512x128xf32> -> vector<512x128xf32>
    %cst_21 = arith.constant dense<0.000000e+00> : vector<128xf32>
    %38 = vector.multi_reduction <add>, %37, %cst_21 [0] : vector<512x128xf32> to vector<128xf32>
    %39 = vector.shape_cast %38 : vector<128xf32> to vector<1x128xf32>
    %40 = arith.mulf %37, %37 : vector<512x128xf32>
    %cst_22 = arith.constant dense<0.000000e+00> : vector<128xf32>
    %41 = vector.multi_reduction <add>, %40, %cst_22 [0] : vector<512x128xf32> to vector<128xf32>
    %42 = vector.shape_cast %41 : vector<128xf32> to vector<1x128xf32>
    %cst_23 = arith.constant dense<0xFF800000> : vector<128xf32>
    %43 = vector.multi_reduction <maximumf>, %37, %cst_23 [0] : vector<512x128xf32> to vector<128xf32>
    %44 = vector.shape_cast %43 : vector<128xf32> to vector<1x128xf32>
    %cst_24 = arith.constant dense<0x7F800000> : vector<128xf32>
    %45 = vector.multi_reduction <minimumf>, %37, %cst_24 [0] : vector<512x128xf32> to vector<128xf32>
    %46 = vector.shape_cast %45 : vector<128xf32> to vector<1x128xf32>
    %c0_25 = arith.constant 0 : index
    %c384 = arith.constant 384 : index
    %47 = vector.load %arg5[%c0_25, %c384] : memref<256x512xbf16, #tpu.memory_space<vmem>>, vector<256x128xbf16>
    %cst_26 = arith.constant dense<0.000000e+00> : vector<512x128xf32>
    %48 = tpu.matmul %10, %47, %cst_26 {dimension_numbers = #tpu.dot_dimension_numbers<[1], [0], [0], [1], [0, 0, 1, 1], [], []>} : vector<512x256xbf16>, vector<256x128xbf16>, vector<512x128xf32> -> vector<512x128xf32>
    %cst_27 = arith.constant dense<0.000000e+00> : vector<128xf32>
    %49 = vector.multi_reduction <add>, %48, %cst_27 [0] : vector<512x128xf32> to vector<128xf32>
    %50 = vector.shape_cast %49 : vector<128xf32> to vector<1x128xf32>
    %51 = arith.mulf %48, %48 : vector<512x128xf32>
    %cst_28 = arith.constant dense<0.000000e+00> : vector<128xf32>
    %52 = vector.multi_reduction <add>, %51, %cst_28 [0] : vector<512x128xf32> to vector<128xf32>
    %53 = vector.shape_cast %52 : vector<128xf32> to vector<1x128xf32>
    %cst_29 = arith.constant dense<0xFF800000> : vector<128xf32>
    %54 = vector.multi_reduction <maximumf>, %48, %cst_29 [0] : vector<512x128xf32> to vector<128xf32>
    %55 = vector.shape_cast %54 : vector<128xf32> to vector<1x128xf32>
    %cst_30 = arith.constant dense<0x7F800000> : vector<128xf32>
    %56 = vector.multi_reduction <minimumf>, %48, %cst_30 [0] : vector<512x128xf32> to vector<128xf32>
    %57 = vector.shape_cast %56 : vector<128xf32> to vector<1x128xf32>
    %c0_31 = arith.constant 0 : index
    %c0_32 = arith.constant 0 : index
    %c0_33 = arith.constant 0 : index
    %58 = vector.load %arg6[%c0_31, %c0_32, %c0_33] : memref<1x1x512xf32, #tpu.memory_space<vmem>>, vector<1x1x512xf32>
    %59 = tpu.concatenate %17, %28, %39, %50 in 1 : vector<1x128xf32>, vector<1x128xf32>, vector<1x128xf32>, vector<1x128xf32> -> vector<1x512xf32>
    %60 = vector.shape_cast %59 : vector<1x512xf32> to vector<1x1x512xf32>
    %61 = arith.addf %58, %60 : vector<1x1x512xf32>
    %c0_34 = arith.constant 0 : index
    %c0_35 = arith.constant 0 : index
    %c0_36 = arith.constant 0 : index
    %62 = vector.load %arg6[%c0_34, %c0_35, %c0_36] : memref<1x1x512xf32, #tpu.memory_space<vmem>>, vector<1x1x512xf32>
    tpu.vector_store %arg6[%c0_34, %c0_35, %c0_36], %61 {strides = array<i32>} : memref<1x1x512xf32, #tpu.memory_space<vmem>>, vector<1x1x512xf32>,
    %c0_37 = arith.constant 0 : index
    %c0_38 = arith.constant 0 : index
    %c0_39 = arith.constant 0 : index
    %63 = vector.load %arg7[%c0_37, %c0_38, %c0_39] : memref<1x1x512xf32, #tpu.memory_space<vmem>>, vector<1x1x512xf32>
    %64 = tpu.concatenate %20, %31, %42, %53 in 1 : vector<1x128xf32>, vector<1x128xf32>, vector<1x128xf32>, vector<1x128xf32> -> vector<1x512xf32>
    %65 = vector.shape_cast %64 : vector<1x512xf32> to vector<1x1x512xf32>
    %66 = arith.addf %63, %65 : vector<1x1x512xf32>
    %c0_40 = arith.constant 0 : index
    %c0_41 = arith.constant 0 : index
    %c0_42 = arith.constant 0 : index
    %67 = vector.load %arg7[%c0_40, %c0_41, %c0_42] : memref<1x1x512xf32, #tpu.memory_space<vmem>>, vector<1x1x512xf32>
    tpu.vector_store %arg7[%c0_40, %c0_41, %c0_42], %66 {strides = array<i32>} : memref<1x1x512xf32, #tpu.memory_space<vmem>>, vector<1x1x512xf32>,
    %c0_43 = arith.constant 0 : index
    %c0_44 = arith.constant 0 : index
    %c0_45 = arith.constant 0 : index
    %68 = vector.load %arg8[%c0_43, %c0_44, %c0_45] : memref<1x1x512xf32, #tpu.memory_space<vmem>>, vector<1x1x512xf32>
    %69 = tpu.concatenate %22, %33, %44, %55 in 1 : vector<1x128xf32>, vector<1x128xf32>, vector<1x128xf32>, vector<1x128xf32> -> vector<1x512xf32>
    %70 = vector.shape_cast %69 : vector<1x512xf32> to vector<1x1x512xf32>
    %71 = arith.maximumf %68, %70 : vector<1x1x512xf32>
    %c0_46 = arith.constant 0 : index
    %c0_47 = arith.constant 0 : index
    %c0_48 = arith.constant 0 : index
    %72 = vector.load %arg8[%c0_46, %c0_47, %c0_48] : memref<1x1x512xf32, #tpu.memory_space<vmem>>, vector<1x1x512xf32>
    tpu.vector_store %arg8[%c0_46, %c0_47, %c0_48], %71 {strides = array<i32>} : memref<1x1x512xf32, #tpu.memory_space<vmem>>, vector<1x1x512xf32>,
    %c0_49 = arith.constant 0 : index
    %c0_50 = arith.constant 0 : index
    %c0_51 = arith.constant 0 : index
    %73 = vector.load %arg9[%c0_49, %c0_50, %c0_51] : memref<1x1x512xf32, #tpu.memory_space<vmem>>, vector<1x1x512xf32>
    %74 = tpu.concatenate %24, %35, %46, %57 in 1 : vector<1x128xf32>, vector<1x128xf32>, vector<1x128xf32>, vector<1x128xf32> -> vector<1x512xf32>
    %75 = vector.shape_cast %74 : vector<1x512xf32> to vector<1x1x512xf32>
    %76 = arith.minimumf %73, %75 : vector<1x1x512xf32>
    %c0_52 = arith.constant 0 : index
    %c0_53 = arith.constant 0 : index
    %c0_54 = arith.constant 0 : index
    %77 = vector.load %arg9[%c0_52, %c0_53, %c0_54] : memref<1x1x512xf32, #tpu.memory_space<vmem>>, vector<1x1x512xf32>
    tpu.vector_store %arg9[%c0_52, %c0_53, %c0_54], %76 {strides = array<i32>} : memref<1x1x512xf32, #tpu.memory_space<vmem>>, vector<1x1x512xf32>,
    return
  }
  func.func @transform_0(%arg0: i32, %arg1: i32) -> (i32, i32) {
    %c1_i32 = arith.constant 1 : i32
    %0 = arith.muli %arg0, %c1_i32 : i32
    %1 = arith.addi %0, %arg1 : i32
    %c0_i32 = arith.constant 0 : i32
    %c0_i32_0 = arith.constant 0 : i32
    return %1, %c0_i32 : i32, i32
  }
  func.func @transform_1(%arg0: i32, %arg1: i32) -> (i32, i32) {
    %c0_i32 = arith.constant 0 : i32
    %c0_i32_0 = arith.constant 0 : i32
    %c0_i32_1 = arith.constant 0 : i32
    return %c0_i32, %c0_i32_0 : i32, i32
  }
  func.func @transform_2(%arg0: i32, %arg1: i32) -> (i32, i32) {
    %c0_i32 = arith.constant 0 : i32
    %c0_i32_0 = arith.constant 0 : i32
    %c0_i32_1 = arith.constant 0 : i32
    return %c0_i32, %c0_i32_0 : i32, i32
  }
  func.func @transform_3(%arg0: i32, %arg1: i32) -> (i32, i32) {
    %c0_i32 = arith.constant 0 : i32
    %c0_i32_0 = arith.constant 0 : i32
    %c0_i32_1 = arith.constant 0 : i32
    return %c0_i32, %c0_i32_0 : i32, i32
  }
  func.func @transform_4(%arg0: i32, %arg1: i32) -> (i32, i32, i32) {
    %c0_i32 = arith.constant 0 : i32
    %c0_i32_0 = arith.constant 0 : i32
    %c0_i32_1 = arith.constant 0 : i32
    return %arg0, %c0_i32, %c0_i32_0 : i32, i32, i32
  }
  func.func @transform_5(%arg0: i32, %arg1: i32) -> (i32, i32, i32) {
    %c0_i32 = arith.constant 0 : i32
    %c0_i32_0 = arith.constant 0 : i32
    %c0_i32_1 = arith.constant 0 : i32
    return %arg0, %c0_i32, %c0_i32_0 : i32, i32, i32
  }
  func.func @transform_6(%arg0: i32, %arg1: i32) -> (i32, i32, i32) {
    %c0_i32 = arith.constant 0 : i32
    %c0_i32_0 = arith.constant 0 : i32
    %c0_i32_1 = arith.constant 0 : i32
    return %arg0, %c0_i32, %c0_i32_0 : i32, i32, i32
  }
  func.func @transform_7(%arg0: i32, %arg1: i32) -> (i32, i32, i32) {
    %c0_i32 = arith.constant 0 : i32
    %c0_i32_0 = arith.constant 0 : i32
    %c0_i32_1 = arith.constant 0 : i32
    return %arg0, %c0_i32, %c0_i32_0 : i32, i32, i32
  }
}

module attributes {stable_mosaic.version = 11 : i64} {
  func.func @head_kernel(%arg0: memref<4x512xf32, #tpu.memory_space<vmem>>, %arg1: memref<4x512xf32, #tpu.memory_space<vmem>>, %arg2: memref<1x512xf32, #tpu.memory_space<vmem>>, %arg3: memref<512x256xf32, #tpu.memory_space<vmem>>, %arg4: memref<1x256xf32, #tpu.memory_space<vmem>>, %arg5: memref<1x256xf32, #tpu.memory_space<vmem>>, %arg6: memref<256x128xf32, #tpu.memory_space<vmem>>, %arg7: memref<1x128xf32, #tpu.memory_space<vmem>>, %arg8: memref<1x128xf32, #tpu.memory_space<vmem>>, %arg9: memref<128x128xf32, #tpu.memory_space<vmem>>, %arg10: memref<1x128xf32, #tpu.memory_space<vmem>>, %arg11: memref<4x128xf32, #tpu.memory_space<vmem>>) attributes {dimension_semantics = [], scalar_prefetch = 0 : i64, scratch_operands = 0 : i64, tpu.core_type = #tpu.core_type<tc>} {
    %c0 = arith.constant 0 : index
    %c0_0 = arith.constant 0 : index
    %0 = vector.load %arg2[%c0, %c0_0] : memref<1x512xf32, #tpu.memory_space<vmem>>, vector<1x512xf32>
    %cst = arith.constant 0.000000e+00 : f32
    %1 = vector.broadcast %cst : f32 to vector<1x512xf32>
    %2 = arith.cmpf oge, %0, %1 : vector<1x512xf32>
    %c0_1 = arith.constant 0 : index
    %c0_2 = arith.constant 0 : index
    %3 = vector.load %arg0[%c0_1, %c0_2] : memref<4x512xf32, #tpu.memory_space<vmem>>, vector<4x512xf32>
    %c0_3 = arith.constant 0 : index
    %c0_4 = arith.constant 0 : index
    %4 = vector.load %arg1[%c0_3, %c0_4] : memref<4x512xf32, #tpu.memory_space<vmem>>, vector<4x512xf32>
    %5 = vector.shape_cast %2 : vector<1x512xi1> to vector<1x512xi1>
    %6 = vector.broadcast %5 : vector<1x512xi1> to vector<4x512xi1>
    %7 = arith.select %6, %3, %4 : vector<4x512xi1>, vector<4x512xf32>
    %c0_5 = arith.constant 0 : index
    %c0_6 = arith.constant 0 : index
    %8 = vector.load %arg3[%c0_5, %c0_6] : memref<512x256xf32, #tpu.memory_space<vmem>>, vector<512x256xf32>
    %cst_7 = arith.constant dense<0.000000e+00> : vector<4x256xf32>
    %9 = tpu.matmul %7, %8, %cst_7 {dimension_numbers = #tpu.dot_dimension_numbers<[1], [0], [0], [1], [0, 0, 1, 1], [], []>} : vector<4x512xf32>, vector<512x256xf32>, vector<4x256xf32> -> vector<4x256xf32>
    %c0_8 = arith.constant 0 : index
    %c0_9 = arith.constant 0 : index
    %10 = vector.load %arg4[%c0_8, %c0_9] : memref<1x256xf32, #tpu.memory_space<vmem>>, vector<1x256xf32>
    %c0_10 = arith.constant 0 : index
    %c0_11 = arith.constant 0 : index
    %11 = vector.load %arg5[%c0_10, %c0_11] : memref<1x256xf32, #tpu.memory_space<vmem>>, vector<1x256xf32>
    %cst_12 = arith.constant dense<0.000000e+00> : vector<256xf32>
    %12 = vector.multi_reduction <add>, %9, %cst_12 [0] : vector<4x256xf32> to vector<256xf32>
    %13 = vector.shape_cast %12 : vector<256xf32> to vector<1x256xf32>
    %cst_13 = arith.constant 4.000000e+00 : f32
    %14 = vector.broadcast %cst_13 : f32 to vector<1x256xf32>
    %15 = arith.divf %13, %14 : vector<1x256xf32>
    %16 = vector.broadcast %15 : vector<1x256xf32> to vector<4x256xf32>
    %17 = arith.subf %9, %16 : vector<4x256xf32>
    %18 = arith.mulf %17, %17 : vector<4x256xf32>
    %cst_14 = arith.constant dense<0.000000e+00> : vector<256xf32>
    %19 = vector.multi_reduction <add>, %18, %cst_14 [0] : vector<4x256xf32> to vector<256xf32>
    %20 = vector.shape_cast %19 : vector<256xf32> to vector<1x256xf32>
    %cst_15 = arith.constant 4.000000e+00 : f32
    %21 = vector.broadcast %cst_15 : f32 to vector<1x256xf32>
    %22 = arith.divf %20, %21 : vector<1x256xf32>
    %23 = vector.broadcast %15 : vector<1x256xf32> to vector<4x256xf32>
    %24 = arith.subf %9, %23 : vector<4x256xf32>
    %cst_16 = arith.constant 9.99999974E-6 : f32
    %25 = vector.broadcast %cst_16 : f32 to vector<1x256xf32>
    %26 = arith.addf %22, %25 : vector<1x256xf32>
    %27 = math.rsqrt %26 : vector<1x256xf32>
    %28 = vector.broadcast %27 : vector<1x256xf32> to vector<4x256xf32>
    %29 = arith.mulf %24, %28 : vector<4x256xf32>
    %30 = vector.broadcast %10 : vector<1x256xf32> to vector<4x256xf32>
    %31 = arith.mulf %29, %30 : vector<4x256xf32>
    %32 = vector.broadcast %11 : vector<1x256xf32> to vector<4x256xf32>
    %33 = arith.addf %31, %32 : vector<4x256xf32>
    %cst_17 = arith.constant 0.000000e+00 : f32
    %34 = vector.broadcast %cst_17 : f32 to vector<4x256xf32>
    %35 = arith.maximumf %33, %34 : vector<4x256xf32>
    %c0_18 = arith.constant 0 : index
    %c0_19 = arith.constant 0 : index
    %36 = vector.load %arg6[%c0_18, %c0_19] : memref<256x128xf32, #tpu.memory_space<vmem>>, vector<256x128xf32>
    %cst_20 = arith.constant dense<0.000000e+00> : vector<4x128xf32>
    %37 = tpu.matmul %35, %36, %cst_20 {dimension_numbers = #tpu.dot_dimension_numbers<[1], [0], [0], [1], [0, 0, 1, 1], [], []>} : vector<4x256xf32>, vector<256x128xf32>, vector<4x128xf32> -> vector<4x128xf32>
    %c0_21 = arith.constant 0 : index
    %c0_22 = arith.constant 0 : index
    %38 = vector.load %arg7[%c0_21, %c0_22] : memref<1x128xf32, #tpu.memory_space<vmem>>, vector<1x128xf32>
    %c0_23 = arith.constant 0 : index
    %c0_24 = arith.constant 0 : index
    %39 = vector.load %arg8[%c0_23, %c0_24] : memref<1x128xf32, #tpu.memory_space<vmem>>, vector<1x128xf32>
    %cst_25 = arith.constant dense<0.000000e+00> : vector<128xf32>
    %40 = vector.multi_reduction <add>, %37, %cst_25 [0] : vector<4x128xf32> to vector<128xf32>
    %41 = vector.shape_cast %40 : vector<128xf32> to vector<1x128xf32>
    %cst_26 = arith.constant 4.000000e+00 : f32
    %42 = vector.broadcast %cst_26 : f32 to vector<1x128xf32>
    %43 = arith.divf %41, %42 : vector<1x128xf32>
    %44 = vector.broadcast %43 : vector<1x128xf32> to vector<4x128xf32>
    %45 = arith.subf %37, %44 : vector<4x128xf32>
    %46 = arith.mulf %45, %45 : vector<4x128xf32>
    %cst_27 = arith.constant dense<0.000000e+00> : vector<128xf32>
    %47 = vector.multi_reduction <add>, %46, %cst_27 [0] : vector<4x128xf32> to vector<128xf32>
    %48 = vector.shape_cast %47 : vector<128xf32> to vector<1x128xf32>
    %cst_28 = arith.constant 4.000000e+00 : f32
    %49 = vector.broadcast %cst_28 : f32 to vector<1x128xf32>
    %50 = arith.divf %48, %49 : vector<1x128xf32>
    %51 = vector.broadcast %43 : vector<1x128xf32> to vector<4x128xf32>
    %52 = arith.subf %37, %51 : vector<4x128xf32>
    %cst_29 = arith.constant 9.99999974E-6 : f32
    %53 = vector.broadcast %cst_29 : f32 to vector<1x128xf32>
    %54 = arith.addf %50, %53 : vector<1x128xf32>
    %55 = math.rsqrt %54 : vector<1x128xf32>
    %56 = vector.broadcast %55 : vector<1x128xf32> to vector<4x128xf32>
    %57 = arith.mulf %52, %56 : vector<4x128xf32>
    %58 = vector.broadcast %38 : vector<1x128xf32> to vector<4x128xf32>
    %59 = arith.mulf %57, %58 : vector<4x128xf32>
    %60 = vector.broadcast %39 : vector<1x128xf32> to vector<4x128xf32>
    %61 = arith.addf %59, %60 : vector<4x128xf32>
    %cst_30 = arith.constant 0.000000e+00 : f32
    %62 = vector.broadcast %cst_30 : f32 to vector<4x128xf32>
    %63 = arith.maximumf %61, %62 : vector<4x128xf32>
    %c0_31 = arith.constant 0 : index
    %c0_32 = arith.constant 0 : index
    %64 = vector.load %arg9[%c0_31, %c0_32] : memref<128x128xf32, #tpu.memory_space<vmem>>, vector<128x128xf32>
    %cst_33 = arith.constant dense<0.000000e+00> : vector<4x128xf32>
    %65 = tpu.matmul %63, %64, %cst_33 {dimension_numbers = #tpu.dot_dimension_numbers<[1], [0], [0], [1], [0, 0, 1, 1], [], []>} : vector<4x128xf32>, vector<128x128xf32>, vector<4x128xf32> -> vector<4x128xf32>
    %c0_34 = arith.constant 0 : index
    %c0_35 = arith.constant 0 : index
    %66 = vector.load %arg10[%c0_34, %c0_35] : memref<1x128xf32, #tpu.memory_space<vmem>>, vector<1x128xf32>
    %67 = vector.broadcast %66 : vector<1x128xf32> to vector<4x128xf32>
    %68 = arith.addf %65, %67 : vector<4x128xf32>
    %c0_36 = arith.constant 0 : index
    %c0_37 = arith.constant 0 : index
    %69 = vector.load %arg11[%c0_36, %c0_37] : memref<4x128xf32, #tpu.memory_space<vmem>>, vector<4x128xf32>
    tpu.vector_store %arg11[%c0_36, %c0_37], %68 {strides = array<i32>} : memref<4x128xf32, #tpu.memory_space<vmem>>, vector<4x128xf32>,
    return
  }
}

</mosaic_0001>

<llo_original>
// kernel: encoder_forward.4
$region0: #{encoder_forward.4}
  #allocation0 [shape = 'u32[]', space=smem, size = 0x4, offset = 0x4, fixed_abs, tag = 'smem constant byte address 0x4 - core index']
  #allocation1 [shape = 'u32[144,128]{1,0:T(1,128)}', space=vmem, size = 0x12000, scoped, tag = 'internal scratch']
  %s0 = inlined_call_operand.vmem [shape: f32[2048,8], index: 0, kind: input, shape index: {}]
  %s1 = inlined_call_operand.vmem [shape: bf16[8,128], index: 1, kind: input, shape index: {}]
  %s2 = inlined_call_operand.vmem [shape: f32[1,128], index: 2, kind: input, shape index: {}]
  %s3 = inlined_call_operand.vmem [shape: f32[1,128], index: 3, kind: input, shape index: {}]
  %s4 = inlined_call_operand.vmem [shape: bf16[128,128], index: 4, kind: input, shape index: {}]
  %s5 = inlined_call_operand.vmem [shape: bf16[2048,128], index: 5, kind: output, shape index: {0}]
  %s6 = inlined_call_operand.vmem [shape: f32[4,1,128], index: 6, kind: output, shape index: {1}]
  %s7 = inlined_call_operand.vmem [shape: f32[4,1,128], index: 7, kind: output, shape index: {2}]
  %8 = xla_tuple %s5, %s6, %s7
  %s9 = sld [smem:[#allocation0]]
  $region73: #{encoder_forward.4} parent=0
    _
  %s11 = ssub.s32 1, %s9
  %s12 = scalar_select 0, %s11, %s9
  loop: start=0, step=1, limit=6
  $region2: #{encoder_forward.4} parent=0 // loop_pre_header
    _
  $region3: #{encoder_forward.4} parent=0 // loop_header
    %s14 = sphi 0, %s18
    %p15 = scmp.ge.s32.totalorder %s14, 6
    %s21 = sphi 0, %s33
    %s22 = sphi 0, %s29
    %s23 = sphi 0, %s21
    %s24 = sphi 0, %s22
    %s25 = sphi 0, %s23
    %s26 = sphi 0, %s24
    %s38 = sphi 0, %s40
    %s41 = sphi 0, %s38
    %s42 = sphi 0, %s41
    %s58 = sphi 0, %s42
    %s62 = sphi 0, %s62
    %s64 = sphi 0, %s62
    %s65 = sphi 0, %s64
    %s79 = sphi 0, %s65
    %s83 = sphi 0, %s83
    %s85 = sphi 0, %s83
    %s86 = sphi 0, %s85
    %s100 = sphi 0, %s86
    %s104 = sphi 0, %s104
    %s106 = sphi 0, %s104
    %s107 = sphi 0, %s106
    %s121 = sphi 0, %s107
    %s125 = sphi 0, %s125
    %s127 = sphi 0, %s125
    %s128 = sphi 0, %s127
    %s142 = sphi 0, %s128
    %s150 = sphi 0, %s152
    %s153 = sphi 0, %s150
    %s154 = sphi 0, %s153
    %s170 = sphi 0, %s154
    %s176 = sphi 0, %s178
    %s179 = sphi 0, %s176
    %s180 = sphi 0, %s179
    %s196 = sphi 0, %s180
    %s202 = sphi 0, %s204
    %s205 = sphi 0, %s202
    %s206 = sphi 0, %s205
    %s222 = sphi 0, %s206
  $region4: #{encoder_forward.4} parent=0 // loop_header_branch
    %17 = sbr.rel (%p15) target = $region8
  $region5: #{encoder_forward.4} parent=0 // loop_body
    %s19 = ssub.s32 %s14, 1
    %s20 = ssub.s32 %s14, 2
    %s27 = sadd.s32 1, %s22
    %p28 = scmp.ge.s32.totalorder %s27, 1
    %s29 = scalar_select %p28, 0, %s27
    %s30 = sadd.s32 1, %s21
    %s31 = scalar_select %p28, %s30, %s21
    %p32 = scmp.ge.s32.totalorder %s31, 4
    %s33 = scalar_select %p32, 0, %s31
    %s34 = sadd.s32 %s21, %s22
    %s35 = sadd.s32 %s33, %s29
    %s36 = ssub.s32 %s34, %s35
    %p37 = scmp.eq.s32.totalorder %s36, 0
    %s39 = sadd.s32 %s38, 1
    %s40 = scalar_select %p37, %s38, %s39
    %p43 = pneg %p37
    %p44 = scmp.eq.s32.totalorder %s14, 3
    %p45 = por %p43, %p44
    %p46 = scmp.ne.s32.totalorder %s38, %s41
    %p47 = scmp.eq.s32.totalorder %s14, 0
    %p48 = por %p46, %p47
    %p49 = scmp.ne.s32.totalorder %s38, %s41
    %p50 = scmp.eq.s32.totalorder %s19, 3
    %p51 = por %p49, %p50
    %p52 = scmp.ne.s32.totalorder %s41, %s42
    %p53 = scmp.eq.s32.totalorder %s19, 0
    %p54 = por %p52, %p53
    %p55 = scmp.ne.s32.totalorder %s41, %s42
    %p56 = scmp.eq.s32.totalorder %s20, 3
    %p57 = por %p55, %p56
    %p59 = scmp.ne.s32.totalorder %s42, %s58
    %p60 = scmp.eq.s32.totalorder %s20, 0
    %p61 = por %p59, %p60
    %s63 = sadd.s32 %s62, 1
    %p66 = scmp.eq.s32.totalorder %s14, 3
    %p67 = scmp.ne.s32.totalorder %s62, %s64
    %p68 = scmp.eq.s32.totalorder %s14, 0
    %p69 = por %p67, %p68
    %p70 = scmp.ne.s32.totalorder %s62, %s64
    %p71 = scmp.eq.s32.totalorder %s19, 3
    %p72 = por %p70, %p71
    %p73 = scmp.ne.s32.totalorder %s64, %s65
    %p74 = scmp.eq.s32.totalorder %s19, 0
    %p75 = por %p73, %p74
    %p76 = scmp.ne.s32.totalorder %s64, %s65
    %p77 = scmp.eq.s32.totalorder %s20, 3
    %p78 = por %p76, %p77
    %p80 = scmp.ne.s32.totalorder %s65, %s79
    %p81 = scmp.eq.s32.totalorder %s20, 0
    %p82 = por %p80, %p81
    %s84 = sadd.s32 %s83, 1
    %p87 = scmp.eq.s32.totalorder %s14, 3
    %p88 = scmp.ne.s32.totalorder %s83, %s85
    %p89 = scmp.eq.s32.totalorder %s14, 0
    %p90 = por %p88, %p89
    %p91 = scmp.ne.s32.totalorder %s83, %s85
    %p92 = scmp.eq.s32.totalorder %s19, 3
    %p93 = por %p91, %p92
    %p94 = scmp.ne.s32.totalorder %s85, %s86
    %p95 = scmp.eq.s32.totalorder %s19, 0
    %p96 = por %p94, %p95
    %p97 = scmp.ne.s32.totalorder %s85, %s86
    %p98 = scmp.eq.s32.totalorder %s20, 3
    %p99 = por %p97, %p98
    %p101 = scmp.ne.s32.totalorder %s86, %s100
    %p102 = scmp.eq.s32.totalorder %s20, 0
    %p103 = por %p101, %p102
    %s105 = sadd.s32 %s104, 1
    %p108 = scmp.eq.s32.totalorder %s14, 3
    %p109 = scmp.ne.s32.totalorder %s104, %s106
    %p110 = scmp.eq.s32.totalorder %s14, 0
    %p111 = por %p109, %p110
    %p112 = scmp.ne.s32.totalorder %s104, %s106
    %p113 = scmp.eq.s32.totalorder %s19, 3
    %p114 = por %p112, %p113
    %p115 = scmp.ne.s32.totalorder %s106, %s107
    %p116 = scmp.eq.s32.totalorder %s19, 0
    %p117 = por %p115, %p116
    %p118 = scmp.ne.s32.totalorder %s106, %s107
    %p119 = scmp.eq.s32.totalorder %s20, 3
    %p120 = por %p118, %p119
    %p122 = scmp.ne.s32.totalorder %s107, %s121
    %p123 = scmp.eq.s32.totalorder %s20, 0
    %p124 = por %p122, %p123
    %s126 = sadd.s32 %s125, 1
    %p129 = scmp.eq.s32.totalorder %s14, 3
    %p130 = scmp.ne.s32.totalorder %s125, %s127
    %p131 = scmp.eq.s32.totalorder %s14, 0
    %p132 = por %p130, %p131
    %p133 = scmp.ne.s32.totalorder %s125, %s127
    %p134 = scmp.eq.s32.totalorder %s19, 3
    %p135 = por %p133, %p134
    %p136 = scmp.ne.s32.totalorder %s127, %s128
    %p137 = scmp.eq.s32.totalorder %s19, 0
    %p138 = por %p136, %p137
    %p139 = scmp.ne.s32.totalorder %s127, %s128
    %p140 = scmp.eq.s32.totalorder %s20, 3
    %p141 = por %p139, %p140
    %p143 = scmp.ne.s32.totalorder %s128, %s142
    %p144 = scmp.eq.s32.totalorder %s20, 0
    %p145 = por %p143, %p144
    %s146 = sadd.s32 %s21, %s22
    %s147 = sadd.s32 %s33, %s29
    %s148 = ssub.s32 %s146, %s147
    %p149 = scmp.eq.s32.totalorder %s148, 0
    %s151 = sadd.s32 %s150, 1
    %s152 = scalar_select %p149, %s150, %s151
    %p155 = pneg %p149
    %p156 = scmp.eq.s32.totalorder %s14, 3
    %p157 = por %p155, %p156
    %p158 = scmp.ne.s32.totalorder %s150, %s153
    %p159 = scmp.eq.s32.totalorder %s14, 0
    %p160 = por %p158, %p159
    %p161 = scmp.ne.s32.totalorder %s150, %s153
    %p162 = scmp.eq.s32.totalorder %s19, 3
    %p163 = por %p161, %p162
    %p164 = scmp.ne.s32.totalorder %s153, %s154
    %p165 = scmp.eq.s32.totalorder %s19, 0
    %p166 = por %p164, %p165
    %p167 = scmp.ne.s32.totalorder %s153, %s154
    %p168 = scmp.eq.s32.totalorder %s20, 3
    %p169 = por %p167, %p168
    %p171 = scmp.ne.s32.totalorder %s154, %s170
    %p172 = scmp.eq.s32.totalorder %s20, 0
    %p173 = por %p171, %p172
    %s174 = ssub.s32 %s21, %s33
    %p175 = scmp.eq.s32.totalorder %s174, 0
    %s177 = sadd.s32 %s176, 1
    %s178 = scalar_select %p175, %s176, %s177
    %p181 = pneg %p175
    %p182 = scmp.eq.s32.totalorder %s14, 3
    %p183 = por %p181, %p182
    %p184 = scmp.ne.s32.totalorder %s176, %s179
    %p185 = scmp.eq.s32.totalorder %s14, 0
    %p186 = por %p184, %p185
    %p187 = scmp.ne.s32.totalorder %s176, %s179
    %p188 = scmp.eq.s32.totalorder %s19, 3
    %p189 = por %p187, %p188
    %p190 = scmp.ne.s32.totalorder %s179, %s180
    %p191 = scmp.eq.s32.totalorder %s19, 0
    %p192 = por %p190, %p191
    %p193 = scmp.ne.s32.totalorder %s179, %s180
    %p194 = scmp.eq.s32.totalorder %s20, 3
    %p195 = por %p193, %p194
    %p197 = scmp.ne.s32.totalorder %s180, %s196
    %p198 = scmp.eq.s32.totalorder %s20, 0
    %p199 = por %p197, %p198
    %s200 = ssub.s32 %s21, %s33
    %p201 = scmp.eq.s32.totalorder %s200, 0
    %s203 = sadd.s32 %s202, 1
    %s204 = scalar_select %p201, %s202, %s203
    %p207 = pneg %p201
    %p208 = scmp.eq.s32.totalorder %s14, 3
    %p209 = por %p207, %p208
    %p210 = scmp.ne.s32.totalorder %s202, %s205
    %p211 = scmp.eq.s32.totalorder %s14, 0
    %p212 = por %p210, %p211
    %p213 = scmp.ne.s32.totalorder %s202, %s205
    %p214 = scmp.eq.s32.totalorder %s19, 3
    %p215 = por %p213, %p214
    %p216 = scmp.ne.s32.totalorder %s205, %s206
    %p217 = scmp.eq.s32.totalorder %s19, 0
    %p218 = por %p216, %p217
    %p219 = scmp.ne.s32.totalorder %s205, %s206
    %p220 = scmp.eq.s32.totalorder %s20, 3
    %p221 = por %p219, %p220
    %p223 = scmp.ne.s32.totalorder %s206, %s222
    %p224 = scmp.eq.s32.totalorder %s20, 0
    %p225 = por %p223, %p224
    %p226 = scmp.le.s32.totalorder 1, %s14
    %p227 = scmp.lt.s32.totalorder %s14, 5
    %p228 = pnand %p226, %p227
    %p229 = pneg %p228
    // Predicated region
    $region9: #{encoder_forward.4} parent=5 // pred_check
      _
    $region10: #{encoder_forward.4} parent=5 // pred_check_branch
      %231 = sbr.rel (%p228) target = $region12
    $region11: #{encoder_forward.4} parent=5 // pred_region
      %s232 = ssub.s32 %s14, 1
      // Predicated region
      $region13: #{encoder_forward.4} parent=11 // pred_check
        %p233 = pneg %p75
      $region14: #{encoder_forward.4} parent=11 // pred_check_branch
        %235 = sbr.rel (%p233) target = $region16
      $region15: #{encoder_forward.4} parent=11 // pred_region
        _
      $region16: #{encoder_forward.4} parent=11 // pred_fallthru
        _
      // Predicated region
      $region17: #{encoder_forward.4} parent=11 // pred_check
        %p236 = pneg %p96
      $region18: #{encoder_forward.4} parent=11 // pred_check_branch
        %238 = sbr.rel (%p236) target = $region20
      $region19: #{encoder_forward.4} parent=11 // pred_region
        _
      $region20: #{encoder_forward.4} parent=11 // pred_fallthru
        _
      // Predicated region
      $region21: #{encoder_forward.4} parent=11 // pred_check
        %p239 = pneg %p117
      $region22: #{encoder_forward.4} parent=11 // pred_check_branch
        %241 = sbr.rel (%p239) target = $region24
      $region23: #{encoder_forward.4} parent=11 // pred_region
        _
      $region24: #{encoder_forward.4} parent=11 // pred_fallthru
        _
      // Predicated region
      $region25: #{encoder_forward.4} parent=11 // pred_check
        %p242 = pneg %p138
      $region26: #{encoder_forward.4} parent=11 // pred_check_branch
        %244 = sbr.rel (%p242) target = $region28
      $region27: #{encoder_forward.4} parent=11 // pred_region
        _
      $region28: #{encoder_forward.4} parent=11 // pred_fallthru
        _
    $region12: #{encoder_forward.4} parent=5 // pred_fallthru
      _
    %p245 = scmp.lt.s32.totalorder %s14, 4
    // Predicated region
    $region29: #{encoder_forward.4} parent=5 // pred_check
      %p246 = pneg %p245
    $region30: #{encoder_forward.4} parent=5 // pred_check_branch
      %248 = sbr.rel (%p246) target = $region32
    $region31: #{encoder_forward.4} parent=5 // pred_region
      // Predicated region
      $region33: #{encoder_forward.4} parent=31 // pred_check
        %p249 = pneg %p48
      $region34: #{encoder_forward.4} parent=31 // pred_check_branch
        %251 = sbr.rel (%p249) target = $region36
      $region35: #{encoder_forward.4} parent=31 // pred_region
        %s252 = sadd.s32 %s21, %s22
        %s253 = smul.u32 64, %s252
        %p254 = scmp.lt.s32.totalorder %s253, 255
        %s255 = scalar_select %p254, %s253, 255
        %s256 = smul.addr %s255, 8
        %s257 = scalar_lea.vmem %s0, %s256
        %s258 = sadd.s32 %s21, %s22
        %s259 = smul.u32 64, %s258
      $region36: #{encoder_forward.4} parent=31 // pred_fallthru
        _
    $region32: #{encoder_forward.4} parent=5 // pred_fallthru
      _
    %p260 = scmp.le.s32.totalorder 1, %s14
    %p261 = scmp.lt.s32.totalorder %s14, 5
    %p262 = pnand %p260, %p261
    %p263 = pneg %p262
    // Predicated region
    $region37: #{encoder_forward.4} parent=5 // pred_check
      _
    $region38: #{encoder_forward.4} parent=5 // pred_check_branch
      %265 = sbr.rel (%p262) target = $region40
    $region39: #{encoder_forward.4} parent=5 // pred_region
      %s266 = ssub.s32 %s14, 1
      %s267 = sadd.s32 %s23, %s24
      %s268 = smul.u32 64, %s267
      %p269 = scmp.lt.s32.totalorder %s268, 255
      %s270 = scalar_select %p269, %s268, 255
      %s271 = smul.addr %s270, 8
      %s272 = scalar_lea.vmem %s0, %s271
      %p273 = pneg %p54
      %p274 = pneg %p51
      %p275 = pneg %p75
      %p276 = pneg %p72
      %p277 = pneg %p96
      %p278 = pneg %p93
      %p279 = pneg %p117
      %p280 = pneg %p114
      %p281 = pneg %p138
      %p282 = pneg %p135
      %p283 = pneg %p166
      %p284 = pneg %p163
      %s285 = sadd.s32 %s23, %s24
      %s286 = smul.u32 64, %s285
      %p287 = scmp.lt.s32.totalorder %s286, 255
      %s288 = scalar_select %p287, %s286, 255
      %s289 = smul.addr %s288, 4
      %s290 = scalar_lea.vmem %s5, %s289
      %p291 = pneg %p192
      %p292 = pneg %p189
      %p293 = scmp.lt.s32.totalorder %s23, 3
      %s294 = scalar_select %p293, %s23, 3
      %s295 = scalar_lea.vmem %s6, %s294
      %p296 = pneg %p218
      %p297 = pneg %p215
      %p298 = scmp.lt.s32.totalorder %s23, 3
      %s299 = scalar_select %p298, %s23, 3
      %s300 = scalar_lea.vmem %s7, %s299
      %s301 = sadd.s32 %s23, %s24
      %s302 = smul.u32 64, %s301
      %p303 = scmp.lt.s32.totalorder %s302, 255
      %s304 = scalar_select %p303, %s302, 255
      %s305 = smul.addr %s304, 8
      %s306 = scalar_lea.vmem %s0, %s305
      %s307 = sadd.s32 %s23, %s24
      %s308 = smul.u32 64, %s307
      %s309 = sadd.s32 %s23, %s24
      %s310 = smul.u32 64, %s309
      %p311 = scmp.lt.s32.totalorder %s310, 255
      %s312 = scalar_select %p311, %s310, 255
      %s313 = smul.addr %s312, 4
      %s314 = scalar_lea.vmem %s5, %s313
      %s315 = sadd.s32 %s23, %s24
      %s316 = smul.u32 64, %s315
      %p317 = scmp.lt.s32.totalorder %s23, 3
      %s318 = scalar_select %p317, %s23, 3
      %s319 = scalar_lea.vmem %s6, %s318
      %p320 = scmp.lt.s32.totalorder %s23, 3
      %s321 = scalar_select %p320, %s23, 3
      %s322 = scalar_lea.vmem %s7, %s321
      %v324 = vld [vmem:[%s306] sm:$0xff]
      %v325 = vld [vmem:[%s306 + $0x8] sm:$0xff]
      %v326 = vld [vmem:[%s306 + $0x10] sm:$0xff]
      %v327 = vld [vmem:[%s306 + $0x18] sm:$0xff]
      %v328 = vld [vmem:[%s306 + $0x20] sm:$0xff]
      %v329 = vld [vmem:[%s306 + $0x28] sm:$0xff]
      %v330 = vld [vmem:[%s306 + $0x30] sm:$0xff]
      %v331 = vld [vmem:[%s306 + $0x38] sm:$0xff]
      %v332 = vld [vmem:[%s306 + $0x40] sm:$0xff]
      %v333 = vld [vmem:[%s306 + $0x48] sm:$0xff]
      %v334 = vld [vmem:[%s306 + $0x50] sm:$0xff]
      %v335 = vld [vmem:[%s306 + $0x58] sm:$0xff]
      %v336 = vld [vmem:[%s306 + $0x60] sm:$0xff]
      %v337 = vld [vmem:[%s306 + $0x68] sm:$0xff]
      %v338 = vld [vmem:[%s306 + $0x70] sm:$0xff]
      %v339 = vld [vmem:[%s306 + $0x78] sm:$0xff]
      %v340 = vld [vmem:[%s306 + $0x80] sm:$0xff]
      %v341 = vld [vmem:[%s306 + $0x88] sm:$0xff]
      %v342 = vld [vmem:[%s306 + $0x90] sm:$0xff]
      %v343 = vld [vmem:[%s306 + $0x98] sm:$0xff]
      %v344 = vld [vmem:[%s306 + $0xa0] sm:$0xff]
      %v345 = vld [vmem:[%s306 + $0xa8] sm:$0xff]
      %v346 = vld [vmem:[%s306 + $0xb0] sm:$0xff]
      %v347 = vld [vmem:[%s306 + $0xb8] sm:$0xff]
      %v348 = vld [vmem:[%s306 + $0xc0] sm:$0xff]
      %v349 = vld [vmem:[%s306 + $0xc8] sm:$0xff]
      %v350 = vld [vmem:[%s306 + $0xd0] sm:$0xff]
      %v351 = vld [vmem:[%s306 + $0xd8] sm:$0xff]
      %v352 = vld [vmem:[%s306 + $0xe0] sm:$0xff]
      %v353 = vld [vmem:[%s306 + $0xe8] sm:$0xff]
      %v354 = vld [vmem:[%s306 + $0xf0] sm:$0xff]
      %v355 = vld [vmem:[%s306 + $0xf8] sm:$0xff]
      %v356 = vld [vmem:[%s306 + $0x100] sm:$0xff]
      %v357 = vld [vmem:[%s306 + $0x108] sm:$0xff]
      %v358 = vld [vmem:[%s306 + $0x110] sm:$0xff]
      %v359 = vld [vmem:[%s306 + $0x118] sm:$0xff]
      %v360 = vld [vmem:[%s306 + $0x120] sm:$0xff]
      %v361 = vld [vmem:[%s306 + $0x128] sm:$0xff]
      %v362 = vld [vmem:[%s306 + $0x130] sm:$0xff]
      %v363 = vld [vmem:[%s306 + $0x138] sm:$0xff]
      %v364 = vld [vmem:[%s306 + $0x140] sm:$0xff]
      %v365 = vld [vmem:[%s306 + $0x148] sm:$0xff]
      %v366 = vld [vmem:[%s306 + $0x150] sm:$0xff]
      %v367 = vld [vmem:[%s306 + $0x158] sm:$0xff]
      %v368 = vld [vmem:[%s306 + $0x160] sm:$0xff]
      %v369 = vld [vmem:[%s306 + $0x168] sm:$0xff]
      %v370 = vld [vmem:[%s306 + $0x170] sm:$0xff]
      %v371 = vld [vmem:[%s306 + $0x178] sm:$0xff]
      %v372 = vld [vmem:[%s306 + $0x180] sm:$0xff]
      %v373 = vld [vmem:[%s306 + $0x188] sm:$0xff]
      %v374 = vld [vmem:[%s306 + $0x190] sm:$0xff]
      %v375 = vld [vmem:[%s306 + $0x198] sm:$0xff]
      %v376 = vld [vmem:[%s306 + $0x1a0] sm:$0xff]
      %v377 = vld [vmem:[%s306 + $0x1a8] sm:$0xff]
      %v378 = vld [vmem:[%s306 + $0x1b0] sm:$0xff]
      %v379 = vld [vmem:[%s306 + $0x1b8] sm:$0xff]
      %v380 = vld [vmem:[%s306 + $0x1c0] sm:$0xff]
      %v381 = vld [vmem:[%s306 + $0x1c8] sm:$0xff]
      %v382 = vld [vmem:[%s306 + $0x1d0] sm:$0xff]
      %v383 = vld [vmem:[%s306 + $0x1d8] sm:$0xff]
      %v384 = vld [vmem:[%s306 + $0x1e0] sm:$0xff]
      %v385 = vld [vmem:[%s306 + $0x1e8] sm:$0xff]
      %v386 = vld [vmem:[%s306 + $0x1f0] sm:$0xff]
      %v387 = vld [vmem:[%s306 + $0x1f8] sm:$0xff]
      %v388 = vpack.c.bf16 %v325, %v324
      %v389 = vpack.c.bf16 %v327, %v326
      %v390 = vpack.c.bf16 %v329, %v328
      %v391 = vpack.c.bf16 %v331, %v330
      %v392 = vpack.c.bf16 %v333, %v332
      %v393 = vpack.c.bf16 %v335, %v334
      %v394 = vpack.c.bf16 %v337, %v336
      %v395 = vpack.c.bf16 %v339, %v338
      %v396 = vpack.c.bf16 %v341, %v340
      %v397 = vpack.c.bf16 %v343, %v342
      %v398 = vpack.c.bf16 %v345, %v344
      %v399 = vpack.c.bf16 %v347, %v346
      %v400 = vpack.c.bf16 %v349, %v348
      %v401 = vpack.c.bf16 %v351, %v350
      %v402 = vpack.c.bf16 %v353, %v352
      %v403 = vpack.c.bf16 %v355, %v354
      %v404 = vpack.c.bf16 %v357, %v356
      %v405 = vpack.c.bf16 %v359, %v358
      %v406 = vpack.c.bf16 %v361, %v360
      %v407 = vpack.c.bf16 %v363, %v362
      %v408 = vpack.c.bf16 %v365, %v364
      %v409 = vpack.c.bf16 %v367, %v366
      %v410 = vpack.c.bf16 %v369, %v368
      %v411 = vpack.c.bf16 %v371, %v370
      %v412 = vpack.c.bf16 %v373, %v372
      %v413 = vpack.c.bf16 %v375, %v374
      %v414 = vpack.c.bf16 %v377, %v376
      %v415 = vpack.c.bf16 %v379, %v378
      %v416 = vpack.c.bf16 %v381, %v380
      %v417 = vpack.c.bf16 %v383, %v382
      %v418 = vpack.c.bf16 %v385, %v384
      %v419 = vpack.c.bf16 %v387, %v386
      %v420 = vld [vmem:[%s1] sm:$0xf]
      %vm421 = vcmask 64512
      %v423 = vsel %vm421, %v388, 0
      %v426 = vsel %vm421, %v389, 0
      %v429 = vsel %vm421, %v390, 0
      %v432 = vsel %vm421, %v391, 0
      %v435 = vsel %vm421, %v392, 0
      %v438 = vsel %vm421, %v393, 0
      %v441 = vsel %vm421, %v394, 0
      %v444 = vsel %vm421, %v395, 0
      %v447 = vsel %vm421, %v396, 0
      %v450 = vsel %vm421, %v397, 0
      %v453 = vsel %vm421, %v398, 0
      %v456 = vsel %vm421, %v399, 0
      %v459 = vsel %vm421, %v400, 0
      %v462 = vsel %vm421, %v401, 0
      %v465 = vsel %vm421, %v402, 0
      %v468 = vsel %vm421, %v403, 0
      %v471 = vsel %vm421, %v404, 0
      %v474 = vsel %vm421, %v405, 0
      %v477 = vsel %vm421, %v406, 0
      %v480 = vsel %vm421, %v407, 0
      %v483 = vsel %vm421, %v408, 0
      %v486 = vsel %vm421, %v409, 0
      %v489 = vsel %vm421, %v410, 0
      %v492 = vsel %vm421, %v411, 0
      %v495 = vsel %vm421, %v412, 0
      %v498 = vsel %vm421, %v413, 0
      %v501 = vsel %vm421, %v414, 0
      %v504 = vsel %vm421, %v415, 0
      %v507 = vsel %vm421, %v416, 0
      %v510 = vsel %vm421, %v417, 0
      %v513 = vsel %vm421, %v418, 0
      %v516 = vsel %vm421, %v419, 0
      %vm518 = vcmask 1043456
      %v520 = vsel %vm518, %v420, 0
      %522 = vmatprep.subr.bf16.mxu0 0
      %523 = vmatpush1.bf16.msra.mxu0 %v520
      %524 = vmatprep.subr.bf16.mxu0 0
      %525 = vmatpush1.bf16.msra.mxu0 0
      %526 = vmatprep.subr.bf16.mxu0 0
      %527 = vmatpush1.bf16.msra.mxu0 0
      %528 = vmatprep.subr.bf16.mxu0 0
      %529 = vmatpush1.bf16.msra.mxu0 0
      %530 = vmatprep.subr.bf16.mxu0 0
      %531 = vmatpush1.bf16.msra.mxu0 0
      %532 = vmatprep.subr.bf16.mxu0 0
      %533 = vmatpush1.bf16.msra.mxu0 0
      %534 = vmatprep.subr.bf16.mxu0 0
      %535 = vmatpush1.bf16.msra.mxu0 0
      %536 = vmatprep.subr.bf16.mxu0 0
      %537 = vmatpush1.bf16.msra.mxu0 0
      %538 = vmatprep.subr.bf16.mxu0 0
      %539 = vmatpush1.bf16.msra.mxu0 0
      %540 = vmatprep.subr.bf16.mxu0 0
      %541 = vmatpush1.bf16.msra.mxu0 0
      %542 = vmatprep.subr.bf16.mxu0 0
      %543 = vmatpush1.bf16.msra.mxu0 0
      %544 = vmatprep.subr.bf16.mxu0 0
      %545 = vmatpush1.bf16.msra.mxu0 0
      %546 = vmatprep.subr.bf16.mxu0 0
      %547 = vmatpush1.bf16.msra.mxu0 0
      %548 = vmatprep.subr.bf16.mxu0 0
      %549 = vmatpush1.bf16.msra.mxu0 0
      %550 = vmatprep.subr.bf16.mxu0 0
      %551 = vmatpush1.bf16.msra.mxu0 0
      %552 = vmatprep.subr.bf16.mxu0 0
      %553 = vmatpush1.bf16.msra.mxu0 0
      %554 = vmatprep.mubr.bf16.mxu0 0
      %555 = vmatmul.mubr.bf16.gmra.mrb[0].mxu0 %v423
      %v556 = vpop.f32.mrb[0].mxu0
      %v557 = vadd.f32 0.0, %v556
      %v558 = vpop.f32.mrb[0].mxu0
      %v559 = vpop.f32.mrb[0].mxu0
      %v560 = vadd.f32 0.0, %v559
      %v561 = vpop.f32.mrb[0].mxu0
      %562 = vmatprep.mubr.bf16.mxu0 0
      %563 = vmatmul.mubr.bf16.gmra.mrb[0].mxu0 %v426
      %v564 = vpop.f32.mrb[0].mxu0
      %v565 = vadd.f32 0.0, %v564
      %v566 = vpop.f32.mrb[0].mxu0
      %v567 = vpop.f32.mrb[0].mxu0
      %v568 = vadd.f32 0.0, %v567
      %v569 = vpop.f32.mrb[0].mxu0
      %570 = vmatprep.mubr.bf16.mxu0 0
      %571 = vmatmul.mubr.bf16.gmra.mrb[0].mxu0 %v429
      %v572 = vpop.f32.mrb[0].mxu0
      %v573 = vadd.f32 0.0, %v572
      %v574 = vpop.f32.mrb[0].mxu0
      %v575 = vpop.f32.mrb[0].mxu0
      %v576 = vadd.f32 0.0, %v575
      %v577 = vpop.f32.mrb[0].mxu0
      %578 = vmatprep.mubr.bf16.mxu0 0
      %579 = vmatmul.mubr.bf16.gmra.mrb[0].mxu0 %v432
      %v580 = vpop.f32.mrb[0].mxu0
      %v581 = vadd.f32 0.0, %v580
      %v582 = vpop.f32.mrb[0].mxu0
      %v583 = vpop.f32.mrb[0].mxu0
      %v584 = vadd.f32 0.0, %v583
      %v585 = vpop.f32.mrb[0].mxu0
      %586 = vmatprep.mubr.bf16.mxu0 0
      %587 = vmatmul.mubr.bf16.gmra.mrb[0].mxu0 %v435
      %v588 = vpop.f32.mrb[0].mxu0
      %v589 = vadd.f32 0.0, %v588
      %v590 = vpop.f32.mrb[0].mxu0
      %v591 = vpop.f32.mrb[0].mxu0
      %v592 = vadd.f32 0.0, %v591
      %v593 = vpop.f32.mrb[0].mxu0
      %594 = vmatprep.mubr.bf16.mxu0 0
      %595 = vmatmul.mubr.bf16.gmra.mrb[0].mxu0 %v438
      %v596 = vpop.f32.mrb[0].mxu0
      %v597 = vadd.f32 0.0, %v596
      %v598 = vpop.f32.mrb[0].mxu0
      %v599 = vpop.f32.mrb[0].mxu0
      %v600 = vadd.f32 0.0, %v599
      %v601 = vpop.f32.mrb[0].mxu0
      %602 = vmatprep.mubr.bf16.mxu0 0
      %603 = vmatmul.mubr.bf16.gmra.mrb[0].mxu0 %v441
      %v604 = vpop.f32.mrb[0].mxu0
      %v605 = vadd.f32 0.0, %v604
      %v606 = vpop.f32.mrb[0].mxu0
      %v607 = vpop.f32.mrb[0].mxu0
      %v608 = vadd.f32 0.0, %v607
      %v609 = vpop.f32.mrb[0].mxu0
      %610 = vmatprep.mubr.bf16.mxu0 0
      %611 = vmatmul.mubr.bf16.gmra.mrb[0].mxu0 %v444
      %v612 = vpop.f32.mrb[0].mxu0
      %v613 = vadd.f32 0.0, %v612
      %v614 = vpop.f32.mrb[0].mxu0
      %v615 = vpop.f32.mrb[0].mxu0
      %v616 = vadd.f32 0.0, %v615
      %v617 = vpop.f32.mrb[0].mxu0
      %618 = vmatprep.mubr.bf16.mxu0 0
      %619 = vmatmul.mubr.bf16.gmra.mrb[0].mxu0 %v447
      %v620 = vpop.f32.mrb[0].mxu0
      %v621 = vadd.f32 0.0, %v620
      %v622 = vpop.f32.mrb[0].mxu0
      %v623 = vpop.f32.mrb[0].mxu0
      %v624 = vadd.f32 0.0, %v623
      %v625 = vpop.f32.mrb[0].mxu0
      %626 = vmatprep.mubr.bf16.mxu0 0
      %627 = vmatmul.mubr.bf16.gmra.mrb[0].mxu0 %v450
      %v628 = vpop.f32.mrb[0].mxu0
      %v629 = vadd.f32 0.0, %v628
      %v630 = vpop.f32.mrb[0].mxu0
      %v631 = vpop.f32.mrb[0].mxu0
      %v632 = vadd.f32 0.0, %v631
      %v633 = vpop.f32.mrb[0].mxu0
      %634 = vmatprep.mubr.bf16.mxu0 0
      %635 = vmatmul.mubr.bf16.gmra.mrb[0].mxu0 %v453
      %v636 = vpop.f32.mrb[0].mxu0
      %v637 = vadd.f32 0.0, %v636
      %v638 = vpop.f32.mrb[0].mxu0
      %v639 = vpop.f32.mrb[0].mxu0
      %v640 = vadd.f32 0.0, %v639
      %v641 = vpop.f32.mrb[0].mxu0
      %642 = vmatprep.mubr.bf16.mxu0 0
      %643 = vmatmul.mubr.bf16.gmra.mrb[0].mxu0 %v456
      %v644 = vpop.f32.mrb[0].mxu0
      %v645 = vadd.f32 0.0, %v644
      %v646 = vpop.f32.mrb[0].mxu0
      %v647 = vpop.f32.mrb[0].mxu0
      %v648 = vadd.f32 0.0, %v647
      %v649 = vpop.f32.mrb[0].mxu0
      %650 = vmatprep.mubr.bf16.mxu0 0
      %651 = vmatmul.mubr.bf16.gmra.mrb[0].mxu0 %v459
      %v652 = vpop.f32.mrb[0].mxu0
      %v653 = vadd.f32 0.0, %v652
      %v654 = vpop.f32.mrb[0].mxu0
      %v655 = vpop.f32.mrb[0].mxu0
      %v656 = vadd.f32 0.0, %v655
      %v657 = vpop.f32.mrb[0].mxu0
      %658 = vmatprep.mubr.bf16.mxu0 0
      %659 = vmatmul.mubr.bf16.gmra.mrb[0].mxu0 %v462
      %v660 = vpop.f32.mrb[0].mxu0
      %v661 = vadd.f32 0.0, %v660
      %v662 = vpop.f32.mrb[0].mxu0
      %v663 = vpop.f32.mrb[0].mxu0
      %v664 = vadd.f32 0.0, %v663
      %v665 = vpop.f32.mrb[0].mxu0
      %666 = vmatprep.mubr.bf16.mxu0 0
      %667 = vmatmul.mubr.bf16.gmra.mrb[0].mxu0 %v465
      %v668 = vpop.f32.mrb[0].mxu0
      %v669 = vadd.f32 0.0, %v668
      %v670 = vpop.f32.mrb[0].mxu0
      %v671 = vpop.f32.mrb[0].mxu0
      %v672 = vadd.f32 0.0, %v671
      %v673 = vpop.f32.mrb[0].mxu0
      %674 = vmatprep.mubr.bf16.mxu0 0
      %675 = vmatmul.mubr.bf16.gmra.mrb[0].mxu0 %v468
      %v676 = vpop.f32.mrb[0].mxu0
      %v677 = vadd.f32 0.0, %v676
      %v678 = vpop.f32.mrb[0].mxu0
      %v679 = vpop.f32.mrb[0].mxu0
      %v680 = vadd.f32 0.0, %v679
      %v681 = vpop.f32.mrb[0].mxu0
      %682 = vmatprep.mubr.bf16.mxu0 0
      %683 = vmatmul.mubr.bf16.gmra.mrb[0].mxu0 %v471
      %v684 = vpop.f32.mrb[0].mxu0
      %v685 = vadd.f32 0.0, %v684
      %v686 = vpop.f32.mrb[0].mxu0
      %v687 = vpop.f32.mrb[0].mxu0
      %v688 = vadd.f32 0.0, %v687
      %v689 = vpop.f32.mrb[0].mxu0
      %690 = vmatprep.mubr.bf16.mxu0 0
      %691 = vmatmul.mubr.bf16.gmra.mrb[0].mxu0 %v474
      %v692 = vpop.f32.mrb[0].mxu0
      %v693 = vadd.f32 0.0, %v692
      %v694 = vpop.f32.mrb[0].mxu0
      %v695 = vpop.f32.mrb[0].mxu0
      %v696 = vadd.f32 0.0, %v695
      %v697 = vpop.f32.mrb[0].mxu0
      %698 = vmatprep.mubr.bf16.mxu0 0
      %699 = vmatmul.mubr.bf16.gmra.mrb[0].mxu0 %v477
      %v700 = vpop.f32.mrb[0].mxu0
      %v701 = vadd.f32 0.0, %v700
      %v702 = vpop.f32.mrb[0].mxu0
      %v703 = vpop.f32.mrb[0].mxu0
      %v704 = vadd.f32 0.0, %v703
      %v705 = vpop.f32.mrb[0].mxu0
      %706 = vmatprep.mubr.bf16.mxu0 0
      %707 = vmatmul.mubr.bf16.gmra.mrb[0].mxu0 %v480
      %v708 = vpop.f32.mrb[0].mxu0
      %v709 = vadd.f32 0.0, %v708
      %v710 = vpop.f32.mrb[0].mxu0
      %v711 = vpop.f32.mrb[0].mxu0
      %v712 = vadd.f32 0.0, %v711
      %v713 = vpop.f32.mrb[0].mxu0
      %714 = vmatprep.mubr.bf16.mxu0 0
      %715 = vmatmul.mubr.bf16.gmra.mrb[0].mxu0 %v483
      %v716 = vpop.f32.mrb[0].mxu0
      %v717 = vadd.f32 0.0, %v716
      %v718 = vpop.f32.mrb[0].mxu0
      %v719 = vpop.f32.mrb[0].mxu0
      %v720 = vadd.f32 0.0, %v719
      %v721 = vpop.f32.mrb[0].mxu0
      %722 = vmatprep.mubr.bf16.mxu0 0
      %723 = vmatmul.mubr.bf16.gmra.mrb[0].mxu0 %v486
      %v724 = vpop.f32.mrb[0].mxu0
      %v725 = vadd.f32 0.0, %v724
      %v726 = vpop.f32.mrb[0].mxu0
      %v727 = vpop.f32.mrb[0].mxu0
      %v728 = vadd.f32 0.0, %v727
      %v729 = vpop.f32.mrb[0].mxu0
      %730 = vmatprep.mubr.bf16.mxu0 0
      %731 = vmatmul.mubr.bf16.gmra.mrb[0].mxu0 %v489
      %v732 = vpop.f32.mrb[0].mxu0
      %v733 = vadd.f32 0.0, %v732
      %v734 = vpop.f32.mrb[0].mxu0
      %v735 = vpop.f32.mrb[0].mxu0
      %v736 = vadd.f32 0.0, %v735
      %v737 = vpop.f32.mrb[0].mxu0
      %738 = vmatprep.mubr.bf16.mxu0 0
      %739 = vmatmul.mubr.bf16.gmra.mrb[0].mxu0 %v492
      %v740 = vpop.f32.mrb[0].mxu0
      %v741 = vadd.f32 0.0, %v740
      %v742 = vpop.f32.mrb[0].mxu0
      %v743 = vpop.f32.mrb[0].mxu0
      %v744 = vadd.f32 0.0, %v743
      %v745 = vpop.f32.mrb[0].mxu0
      %746 = vmatprep.mubr.bf16.mxu0 0
      %747 = vmatmul.mubr.bf16.gmra.mrb[0].mxu0 %v495
      %v748 = vpop.f32.mrb[0].mxu0
      %v749 = vadd.f32 0.0, %v748
      %v750 = vpop.f32.mrb[0].mxu0
      %v751 = vpop.f32.mrb[0].mxu0
      %v752 = vadd.f32 0.0, %v751
      %v753 = vpop.f32.mrb[0].mxu0
      %754 = vmatprep.mubr.bf16.mxu0 0
      %755 = vmatmul.mubr.bf16.gmra.mrb[0].mxu0 %v498
      %v756 = vpop.f32.mrb[0].mxu0
      %v757 = vadd.f32 0.0, %v756
      %v758 = vpop.f32.mrb[0].mxu0
      %v759 = vpop.f32.mrb[0].mxu0
      %v760 = vadd.f32 0.0, %v759
      %v761 = vpop.f32.mrb[0].mxu0
      %762 = vmatprep.mubr.bf16.mxu0 0
      %763 = vmatmul.mubr.bf16.gmra.mrb[0].mxu0 %v501
      %v764 = vpop.f32.mrb[0].mxu0
      %v765 = vadd.f32 0.0, %v764
      %v766 = vpop.f32.mrb[0].mxu0
      %v767 = vpop.f32.mrb[0].mxu0
      %v768 = vadd.f32 0.0, %v767
      %v769 = vpop.f32.mrb[0].mxu0
      %770 = vmatprep.mubr.bf16.mxu0 0
      %771 = vmatmul.mubr.bf16.gmra.mrb[0].mxu0 %v504
      %v772 = vpop.f32.mrb[0].mxu0
      %v773 = vadd.f32 0.0, %v772
      %v774 = vpop.f32.mrb[0].mxu0
      %v775 = vpop.f32.mrb[0].mxu0
      %v776 = vadd.f32 0.0, %v775
      %v777 = vpop.f32.mrb[0].mxu0
      %778 = vmatprep.mubr.bf16.mxu0 0
      %779 = vmatmul.mubr.bf16.gmra.mrb[0].mxu0 %v507
      %v780 = vpop.f32.mrb[0].mxu0
      %v781 = vadd.f32 0.0, %v780
      %v782 = vpop.f32.mrb[0].mxu0
      %v783 = vpop.f32.mrb[0].mxu0
      %v784 = vadd.f32 0.0, %v783
      %v785 = vpop.f32.mrb[0].mxu0
      %786 = vmatprep.mubr.bf16.mxu0 0
      %787 = vmatmul.mubr.bf16.gmra.mrb[0].mxu0 %v510
      %v788 = vpop.f32.mrb[0].mxu0
      %v789 = vadd.f32 0.0, %v788
      %v790 = vpop.f32.mrb[0].mxu0
      %v791 = vpop.f32.mrb[0].mxu0
      %v792 = vadd.f32 0.0, %v791
      %v793 = vpop.f32.mrb[0].mxu0
      %794 = vmatprep.mubr.bf16.mxu0 0
      %795 = vmatmul.mubr.bf16.gmra.mrb[0].mxu0 %v513
      %v796 = vpop.f32.mrb[0].mxu0
      %v797 = vadd.f32 0.0, %v796
      %v798 = vpop.f32.mrb[0].mxu0
      %v799 = vpop.f32.mrb[0].mxu0
      %v800 = vadd.f32 0.0, %v799
      %v801 = vpop.f32.mrb[0].mxu0
      %802 = vmatprep.mubr.bf16.mxu0 0
      %803 = vmatmul.mubr.bf16.gmra.mrb[0].mxu0 %v516
      %v804 = vpop.f32.mrb[0].mxu0
      %v805 = vadd.f32 0.0, %v804
      %v806 = vpop.f32.mrb[0].mxu0
      %v807 = vpop.f32.mrb[0].mxu0
      %v808 = vadd.f32 0.0, %v807
      %v809 = vpop.f32.mrb[0].mxu0
      %810 = vdwg.mxu0
      %v811 = vld [vmem:[%s2] sm:$0x1]
      %v813 = vlaneseq
      %v814 = vshrl.u32 %v813, 7
      %v815 = vsub.s32 0, %v814
      %v816 = vrot.slane %v811, %v815
      %v818 = vmul.f32 %v557, %v816
      %v819 = vmul.f32 %v560, %v816
      %v820 = vmul.f32 %v565, %v816
      %v821 = vmul.f32 %v568, %v816
      %v822 = vmul.f32 %v573, %v816
      %v823 = vmul.f32 %v576, %v816
      %v824 = vmul.f32 %v581, %v816
      %v825 = vmul.f32 %v584, %v816
      %v826 = vmul.f32 %v589, %v816
      %v827 = vmul.f32 %v592, %v816
      %v828 = vmul.f32 %v597, %v816
      %v829 = vmul.f32 %v600, %v816
      %v830 = vmul.f32 %v605, %v816
      %v831 = vmul.f32 %v608, %v816
      %v832 = vmul.f32 %v613, %v816
      %v833 = vmul.f32 %v616, %v816
      %v834 = vmul.f32 %v621, %v816
      %v835 = vmul.f32 %v624, %v816
      %v836 = vmul.f32 %v629, %v816
      %v837 = vmul.f32 %v632, %v816
      %v838 = vmul.f32 %v637, %v816
      %v839 = vmul.f32 %v640, %v816
      %v840 = vmul.f32 %v645, %v816
      %v841 = vmul.f32 %v648, %v816
      %v842 = vmul.f32 %v653, %v816
      %v843 = vmul.f32 %v656, %v816
      %v844 = vmul.f32 %v661, %v816
      %v845 = vmul.f32 %v664, %v816
      %v846 = vmul.f32 %v669, %v816
      %v847 = vmul.f32 %v672, %v816
      %v848 = vmul.f32 %v677, %v816
      %v849 = vmul.f32 %v680, %v816
      %v850 = vmul.f32 %v685, %v816
      %v851 = vmul.f32 %v688, %v816
      %v852 = vmul.f32 %v693, %v816
      %v853 = vmul.f32 %v696, %v816
      %v854 = vmul.f32 %v701, %v816
      %v855 = vmul.f32 %v704, %v816
      %v856 = vmul.f32 %v709, %v816
      %v857 = vmul.f32 %v712, %v816
      %v858 = vmul.f32 %v717, %v816
      %v859 = vmul.f32 %v720, %v816
      %v860 = vmul.f32 %v725, %v816
      %v861 = vmul.f32 %v728, %v816
      %v862 = vmul.f32 %v733, %v816
      %v863 = vmul.f32 %v736, %v816
      %v864 = vmul.f32 %v741, %v816
      %v865 = vmul.f32 %v744, %v816
      %v866 = vmul.f32 %v749, %v816
      %v867 = vmul.f32 %v752, %v816
      %v868 = vmul.f32 %v757, %v816
      %v869 = vmul.f32 %v760, %v816
      %v870 = vmul.f32 %v765, %v816
      %v871 = vmul.f32 %v768, %v816
      %v872 = vmul.f32 %v773, %v816
      %v873 = vmul.f32 %v776, %v816
      %v874 = vmul.f32 %v781, %v816
      %v875 = vmul.f32 %v784, %v816
      %v876 = vmul.f32 %v789, %v816
      %v877 = vmul.f32 %v792, %v816
      %v878 = vmul.f32 %v797, %v816
      %v879 = vmul.f32 %v800, %v816
      %v880 = vmul.f32 %v805, %v816
      %v881 = vmul.f32 %v808, %v816
      %v882 = vld [vmem:[%s3] sm:$0x1]
      %v884 = vlaneseq
      %v885 = vshrl.u32 %v884, 7
      %v886 = vsub.s32 0, %v885
      %v887 = vrot.slane %v882, %v886
      %v889 = vadd.f32 %v818, %v887
      %v890 = vadd.f32 %v819, %v887
      %v891 = vadd.f32 %v820, %v887
      %v892 = vadd.f32 %v821, %v887
      %v893 = vadd.f32 %v822, %v887
      %v894 = vadd.f32 %v823, %v887
      %v895 = vadd.f32 %v824, %v887
      %v896 = vadd.f32 %v825, %v887
      %v897 = vadd.f32 %v826, %v887
      %v898 = vadd.f32 %v827, %v887
      %v899 = vadd.f32 %v828, %v887
      %v900 = vadd.f32 %v829, %v887
      %v901 = vadd.f32 %v830, %v887
      %v902 = vadd.f32 %v831, %v887
      %v903 = vadd.f32 %v832, %v887
      %v904 = vadd.f32 %v833, %v887
      %v905 = vadd.f32 %v834, %v887
      %v906 = vadd.f32 %v835, %v887
      %v907 = vadd.f32 %v836, %v887
      %v908 = vadd.f32 %v837, %v887
      %v909 = vadd.f32 %v838, %v887
      %v910 = vadd.f32 %v839, %v887
      %v911 = vadd.f32 %v840, %v887
      %v912 = vadd.f32 %v841, %v887
      %v913 = vadd.f32 %v842, %v887
      %v914 = vadd.f32 %v843, %v887
      %v915 = vadd.f32 %v844, %v887
      %v916 = vadd.f32 %v845, %v887
      %v917 = vadd.f32 %v846, %v887
      %v918 = vadd.f32 %v847, %v887
      %v919 = vadd.f32 %v848, %v887
      %v920 = vadd.f32 %v849, %v887
      %v921 = vadd.f32 %v850, %v887
      %v922 = vadd.f32 %v851, %v887
      %v923 = vadd.f32 %v852, %v887
      %v924 = vadd.f32 %v853, %v887
      %v925 = vadd.f32 %v854, %v887
      %v926 = vadd.f32 %v855, %v887
      %v927 = vadd.f32 %v856, %v887
      %v928 = vadd.f32 %v857, %v887
      %v929 = vadd.f32 %v858, %v887
      %v930 = vadd.f32 %v859, %v887
      %v931 = vadd.f32 %v860, %v887
      %v932 = vadd.f32 %v861, %v887
      %v933 = vadd.f32 %v862, %v887
      %v934 = vadd.f32 %v863, %v887
      %v935 = vadd.f32 %v864, %v887
      %v936 = vadd.f32 %v865, %v887
      %v937 = vadd.f32 %v866, %v887
      %v938 = vadd.f32 %v867, %v887
      %v939 = vadd.f32 %v868, %v887
      %v940 = vadd.f32 %v869, %v887
      %v941 = vadd.f32 %v870, %v887
      %v942 = vadd.f32 %v871, %v887
      %v943 = vadd.f32 %v872, %v887
      %v944 = vadd.f32 %v873, %v887
      %v945 = vadd.f32 %v874, %v887
      %v946 = vadd.f32 %v875, %v887
      %v947 = vadd.f32 %v876, %v887
      %v948 = vadd.f32 %v877, %v887
      %v949 = vadd.f32 %v878, %v887
      %v950 = vadd.f32 %v879, %v887
      %v951 = vadd.f32 %v880, %v887
      %v952 = vadd.f32 %v881, %v887
      %v953 = vmax.f32 %v889, 0.0
      %v954 = vmax.f32 %v890, 0.0
      %v955 = vmax.f32 %v891, 0.0
      %v956 = vmax.f32 %v892, 0.0
      %v957 = vmax.f32 %v893, 0.0
      %v958 = vmax.f32 %v894, 0.0
      %v959 = vmax.f32 %v895, 0.0
      %v960 = vmax.f32 %v896, 0.0
      %v961 = vmax.f32 %v897, 0.0
      %v962 = vmax.f32 %v898, 0.0
      %v963 = vmax.f32 %v899, 0.0
      %v964 = vmax.f32 %v900, 0.0
      %v965 = vmax.f32 %v901, 0.0
      %v966 = vmax.f32 %v902, 0.0
      %v967 = vmax.f32 %v903, 0.0
      %v968 = vmax.f32 %v904, 0.0
      %v969 = vmax.f32 %v905, 0.0
      %v970 = vmax.f32 %v906, 0.0
      %v971 = vmax.f32 %v907, 0.0
      %v972 = vmax.f32 %v908, 0.0
      %v973 = vmax.f32 %v909, 0.0
      %v974 = vmax.f32 %v910, 0.0
      %v975 = vmax.f32 %v911, 0.0
      %v976 = vmax.f32 %v912, 0.0
      %v977 = vmax.f32 %v913, 0.0
      %v978 = vmax.f32 %v914, 0.0
      %v979 = vmax.f32 %v915, 0.0
      %v980 = vmax.f32 %v916, 0.0
      %v981 = vmax.f32 %v917, 0.0
      %v982 = vmax.f32 %v918, 0.0
      %v983 = vmax.f32 %v919, 0.0
      %v984 = vmax.f32 %v920, 0.0
      %v985 = vmax.f32 %v921, 0.0
      %v986 = vmax.f32 %v922, 0.0
      %v987 = vmax.f32 %v923, 0.0
      %v988 = vmax.f32 %v924, 0.0
      %v989 = vmax.f32 %v925, 0.0
      %v990 = vmax.f32 %v926, 0.0
      %v991 = vmax.f32 %v927, 0.0
      %v992 = vmax.f32 %v928, 0.0
      %v993 = vmax.f32 %v929, 0.0
      %v994 = vmax.f32 %v930, 0.0
      %v995 = vmax.f32 %v931, 0.0
      %v996 = vmax.f32 %v932, 0.0
      %v997 = vmax.f32 %v933, 0.0
      %v998 = vmax.f32 %v934, 0.0
      %v999 = vmax.f32 %v935, 0.0
      %v1000 = vmax.f32 %v936, 0.0
      %v1001 = vmax.f32 %v937, 0.0
      %v1002 = vmax.f32 %v938, 0.0
      %v1003 = vmax.f32 %v939, 0.0
      %v1004 = vmax.f32 %v940, 0.0
      %v1005 = vmax.f32 %v941, 0.0
      %v1006 = vmax.f32 %v942, 0.0
      %v1007 = vmax.f32 %v943, 0.0
      %v1008 = vmax.f32 %v944, 0.0
      %v1009 = vmax.f32 %v945, 0.0
      %v1010 = vmax.f32 %v946, 0.0
      %v1011 = vmax.f32 %v947, 0.0
      %v1012 = vmax.f32 %v948, 0.0
      %v1013 = vmax.f32 %v949, 0.0
      %v1014 = vmax.f32 %v950, 0.0
      %v1015 = vmax.f32 %v951, 0.0
      %v1016 = vmax.f32 %v952, 0.0
      %v1017 = vpack.c.bf16 %v954, %v953
      %v1018 = vpack.c.bf16 %v956, %v955
      %v1019 = vpack.c.bf16 %v958, %v957
      %v1020 = vpack.c.bf16 %v960, %v959
      %v1021 = vpack.c.bf16 %v962, %v961
      %v1022 = vpack.c.bf16 %v964, %v963
      %v1023 = vpack.c.bf16 %v966, %v965
      %v1024 = vpack.c.bf16 %v968, %v967
      %v1025 = vpack.c.bf16 %v970, %v969
      %v1026 = vpack.c.bf16 %v972, %v971
      %v1027 = vpack.c.bf16 %v974, %v973
      %v1028 = vpack.c.bf16 %v976, %v975
      %v1029 = vpack.c.bf16 %v978, %v977
      %v1030 = vpack.c.bf16 %v980, %v979
      %v1031 = vpack.c.bf16 %v982, %v981
      %v1032 = vpack.c.bf16 %v984, %v983
      %v1033 = vpack.c.bf16 %v986, %v985
      %v1034 = vpack.c.bf16 %v988, %v987
      %v1035 = vpack.c.bf16 %v990, %v989
      %v1036 = vpack.c.bf16 %v992, %v991
      %v1037 = vpack.c.bf16 %v994, %v993
      %v1038 = vpack.c.bf16 %v996, %v995
      %v1039 = vpack.c.bf16 %v998, %v997
      %v1040 = vpack.c.bf16 %v1000, %v999
      %v1041 = vpack.c.bf16 %v1002, %v1001
      %v1042 = vpack.c.bf16 %v1004, %v1003
      %v1043 = vpack.c.bf16 %v1006, %v1005
      %v1044 = vpack.c.bf16 %v1008, %v1007
      %v1045 = vpack.c.bf16 %v1010, %v1009
      %v1046 = vpack.c.bf16 %v1012, %v1011
      %v1047 = vpack.c.bf16 %v1014, %v1013
      %v1048 = vpack.c.bf16 %v1016, %v1015
      %p1049 = scmp.eq.s32.totalorder %s24, 0
      // Predicated region
      $region41: #{encoder_forward.4} parent=39 // pred_check
        %p1050 = pneg %p1049
      $region42: #{encoder_forward.4} parent=39 // pred_check_branch
        %1052 = sbr.rel (%p1050) target = $region44
      $region43: #{encoder_forward.4} parent=39 // pred_region
        %1053 = vst [vmem:[%s319] sm:$0x1] 0.0
        %1054 = vst [vmem:[%s322] sm:$0x1] 0.0
      $region44: #{encoder_forward.4} parent=39 // pred_fallthru
        _
      %v1055 = vld [vmem:[%s4] sm:$0xf]
      %v1056 = vld [vmem:[%s4 + $0x4] sm:$0xf]
      %v1057 = vld [vmem:[%s4 + $0x8] sm:$0xf]
      %v1058 = vld [vmem:[%s4 + $0xc] sm:$0xf]
      %v1059 = vld [vmem:[%s4 + $0x10] sm:$0xf]
      %v1060 = vld [vmem:[%s4 + $0x14] sm:$0xf]
      %v1061 = vld [vmem:[%s4 + $0x18] sm:$0xf]
      %v1062 = vld [vmem:[%s4 + $0x1c] sm:$0xf]
      %v1063 = vld [vmem:[%s4 + $0x20] sm:$0xf]
      %v1064 = vld [vmem:[%s4 + $0x24] sm:$0xf]
      %v1065 = vld [vmem:[%s4 + $0x28] sm:$0xf]
      %v1066 = vld [vmem:[%s4 + $0x2c] sm:$0xf]
      %v1067 = vld [vmem:[%s4 + $0x30] sm:$0xf]
      %v1068 = vld [vmem:[%s4 + $0x34] sm:$0xf]
      %v1069 = vld [vmem:[%s4 + $0x38] sm:$0xf]
      %v1070 = vld [vmem:[%s4 + $0x3c] sm:$0xf]
      %v1087 = vunpack.c.l.b16 %v1055
      %v1088 = vunpack.c.l.b16 %v1056
      %v1089 = vunpack.c.l.b16 %v1057
      %v1090 = vunpack.c.l.b16 %v1058
      %v1091 = vunpack.c.l.b16 %v1059
      %v1092 = vunpack.c.l.b16 %v1060
      %v1093 = vunpack.c.l.b16 %v1061
      %v1094 = vunpack.c.l.b16 %v1062
      %v1095 = vunpack.c.l.b16 %v1063
      %v1096 = vunpack.c.l.b16 %v1064
      %v1097 = vunpack.c.l.b16 %v1065
      %v1098 = vunpack.c.l.b16 %v1066
      %v1099 = vunpack.c.l.b16 %v1067
      %v1100 = vunpack.c.l.b16 %v1068
      %v1101 = vunpack.c.l.b16 %v1069
      %v1102 = vunpack.c.l.b16 %v1070
      %v1103 = vpack.c.b16 %v1088, %v1087
      %v1104 = vpack.c.b16 %v1090, %v1089
      %v1105 = vpack.c.b16 %v1092, %v1091
      %v1106 = vpack.c.b16 %v1094, %v1093
      %v1107 = vpack.c.b16 %v1096, %v1095
      %v1108 = vpack.c.b16 %v1098, %v1097
      %v1109 = vpack.c.b16 %v1100, %v1099
      %v1110 = vpack.c.b16 %v1102, %v1101
      %1119 = vmatprep.subr.bf16.mxu0 0
      %1120 = vmatpush1.bf16.msra.mxu0 %v1103
      %1121 = vmatprep.subr.bf16.mxu0 0
      %1122 = vmatpush1.bf16.msra.mxu0 %v1104
      %1123 = vmatprep.subr.bf16.mxu0 0
      %1124 = vmatpush1.bf16.msra.mxu0 %v1105
      %1125 = vmatprep.subr.bf16.mxu0 0
      %1126 = vmatpush1.bf16.msra.mxu0 %v1106
      %1127 = vmatprep.subr.bf16.mxu0 0
      %1128 = vmatpush1.bf16.msra.mxu0 %v1107
      %1129 = vmatprep.subr.bf16.mxu0 0
      %1130 = vmatpush1.bf16.msra.mxu0 %v1108
      %1131 = vmatprep.subr.bf16.mxu0 0
      %1132 = vmatpush1.bf16.msra.mxu0 %v1109
      %1133 = vmatprep.subr.bf16.mxu0 0
      %1134 = vmatpush1.bf16.msra.mxu0 %v1110
      %1135 = vmatprep.subr.bf16.mxu0 0
      %1136 = vmatpush1.bf16.msra.mxu0 0
      %1137 = vmatprep.subr.bf16.mxu0 0
      %1138 = vmatpush1.bf16.msra.mxu0 0
      %1139 = vmatprep.subr.bf16.mxu0 0
      %1140 = vmatpush1.bf16.msra.mxu0 0
      %1141 = vmatprep.subr.bf16.mxu0 0
      %1142 = vmatpush1.bf16.msra.mxu0 0
      %1143 = vmatprep.subr.bf16.mxu0 0
      %1144 = vmatpush1.bf16.msra.mxu0 0
      %1145 = vmatprep.subr.bf16.mxu0 0
      %1146 = vmatpush1.bf16.msra.mxu0 0
      %1147 = vmatprep.subr.bf16.mxu0 0
      %1148 = vmatpush1.bf16.msra.mxu0 0
      %1149 = vmatprep.subr.bf16.mxu0 0
      %1150 = vmatpush1.bf16.msra.mxu0 0
      %1151 = vmatprep.mubr.bf16.mxu0 0
      %1152 = vmatmul.mubr.bf16.gmra.mrb[0].mxu0 %v1017
      %v1153 = vpop.f32.mrb[0].mxu0
      %v1154 = vadd.f32 0.0, %v1153
      %v1155 = vpop.f32.mrb[0].mxu0
      %v1156 = vpop.f32.mrb[0].mxu0
      %v1157 = vadd.f32 0.0, %v1156
      %v1158 = vpop.f32.mrb[0].mxu0
      %1159 = vmatprep.mubr.bf16.mxu0 0
      %1160 = vmatmul.mubr.bf16.gmra.mrb[0].mxu0 %v1018
      %v1161 = vpop.f32.mrb[0].mxu0
      %v1162 = vadd.f32 0.0, %v1161
      %v1163 = vpop.f32.mrb[0].mxu0
      %v1164 = vpop.f32.mrb[0].mxu0
      %v1165 = vadd.f32 0.0, %v1164
      %v1166 = vpop.f32.mrb[0].mxu0
      %1167 = vmatprep.mubr.bf16.mxu0 0
      %1168 = vmatmul.mubr.bf16.gmra.mrb[0].mxu0 %v1019
      %v1169 = vpop.f32.mrb[0].mxu0
      %v1170 = vadd.f32 0.0, %v1169
      %v1171 = vpop.f32.mrb[0].mxu0
      %v1172 = vpop.f32.mrb[0].mxu0
      %v1173 = vadd.f32 0.0, %v1172
      %v1174 = vpop.f32.mrb[0].mxu0
      %1175 = vmatprep.mubr.bf16.mxu0 0
      %1176 = vmatmul.mubr.bf16.gmra.mrb[0].mxu0 %v1020
      %v1177 = vpop.f32.mrb[0].mxu0
      %v1178 = vadd.f32 0.0, %v1177
      %v1179 = vpop.f32.mrb[0].mxu0
      %v1180 = vpop.f32.mrb[0].mxu0
      %v1181 = vadd.f32 0.0, %v1180
      %v1182 = vpop.f32.mrb[0].mxu0
      %1183 = vmatprep.mubr.bf16.mxu0 0
      %1184 = vmatmul.mubr.bf16.gmra.mrb[0].mxu0 %v1021
      %v1185 = vpop.f32.mrb[0].mxu0
      %v1186 = vadd.f32 0.0, %v1185
      %v1187 = vpop.f32.mrb[0].mxu0
      %v1188 = vpop.f32.mrb[0].mxu0
      %v1189 = vadd.f32 0.0, %v1188
      %v1190 = vpop.f32.mrb[0].mxu0
      %1191 = vmatprep.mubr.bf16.mxu0 0
      %1192 = vmatmul.mubr.bf16.gmra.mrb[0].mxu0 %v1022
      %v1193 = vpop.f32.mrb[0].mxu0
      %v1194 = vadd.f32 0.0, %v1193
      %v1195 = vpop.f32.mrb[0].mxu0
      %v1196 = vpop.f32.mrb[0].mxu0
      %v1197 = vadd.f32 0.0, %v1196
      %v1198 = vpop.f32.mrb[0].mxu0
      %1199 = vmatprep.mubr.bf16.mxu0 0
      %1200 = vmatmul.mubr.bf16.gmra.mrb[0].mxu0 %v1023
      %v1201 = vpop.f32.mrb[0].mxu0
      %v1202 = vadd.f32 0.0, %v1201
      %v1203 = vpop.f32.mrb[0].mxu0
      %v1204 = vpop.f32.mrb[0].mxu0
      %v1205 = vadd.f32 0.0, %v1204
      %v1206 = vpop.f32.mrb[0].mxu0
      %1207 = vmatprep.mubr.bf16.mxu0 0
      %1208 = vmatmul.mubr.bf16.gmra.mrb[0].mxu0 %v1024
      %v1209 = vpop.f32.mrb[0].mxu0
      %v1210 = vadd.f32 0.0, %v1209
      %v1211 = vpop.f32.mrb[0].mxu0
      %v1212 = vpop.f32.mrb[0].mxu0
      %v1213 = vadd.f32 0.0, %v1212
      %v1214 = vpop.f32.mrb[0].mxu0
      %1215 = vmatprep.mubr.bf16.mxu0 0
      %1216 = vmatmul.mubr.bf16.gmra.mrb[0].mxu0 %v1025
      %v1217 = vpop.f32.mrb[0].mxu0
      %v1218 = vadd.f32 0.0, %v1217
      %v1219 = vpop.f32.mrb[0].mxu0
      %v1220 = vpop.f32.mrb[0].mxu0
      %v1221 = vadd.f32 0.0, %v1220
      %v1222 = vpop.f32.mrb[0].mxu0
      %1223 = vmatprep.mubr.bf16.mxu0 0
      %1224 = vmatmul.mubr.bf16.gmra.mrb[0].mxu0 %v1026
      %v1225 = vpop.f32.mrb[0].mxu0
      %v1226 = vadd.f32 0.0, %v1225
      %v1227 = vpop.f32.mrb[0].mxu0
      %v1228 = vpop.f32.mrb[0].mxu0
      %v1229 = vadd.f32 0.0, %v1228
      %v1230 = vpop.f32.mrb[0].mxu0
      %1231 = vmatprep.mubr.bf16.mxu0 0
      %1232 = vmatmul.mubr.bf16.gmra.mrb[0].mxu0 %v1027
      %v1233 = vpop.f32.mrb[0].mxu0
      %v1234 = vadd.f32 0.0, %v1233
      %v1235 = vpop.f32.mrb[0].mxu0
      %v1236 = vpop.f32.mrb[0].mxu0
      %v1237 = vadd.f32 0.0, %v1236
      %v1238 = vpop.f32.mrb[0].mxu0
      %1239 = vmatprep.mubr.bf16.mxu0 0
      %1240 = vmatmul.mubr.bf16.gmra.mrb[0].mxu0 %v1028
      %v1241 = vpop.f32.mrb[0].mxu0
      %v1242 = vadd.f32 0.0, %v1241
      %v1243 = vpop.f32.mrb[0].mxu0
      %v1244 = vpop.f32.mrb[0].mxu0
      %v1245 = vadd.f32 0.0, %v1244
      %v1246 = vpop.f32.mrb[0].mxu0
      %1247 = vmatprep.mubr.bf16.mxu0 0
      %1248 = vmatmul.mubr.bf16.gmra.mrb[0].mxu0 %v1029
      %v1249 = vpop.f32.mrb[0].mxu0
      %v1250 = vadd.f32 0.0, %v1249
      %v1251 = vpop.f32.mrb[0].mxu0
      %v1252 = vpop.f32.mrb[0].mxu0
      %v1253 = vadd.f32 0.0, %v1252
      %v1254 = vpop.f32.mrb[0].mxu0
      %1255 = vmatprep.mubr.bf16.mxu0 0
      %1256 = vmatmul.mubr.bf16.gmra.mrb[0].mxu0 %v1030
      %v1257 = vpop.f32.mrb[0].mxu0
      %v1258 = vadd.f32 0.0, %v1257
      %v1259 = vpop.f32.mrb[0].mxu0
      %v1260 = vpop.f32.mrb[0].mxu0
      %v1261 = vadd.f32 0.0, %v1260
      %v1262 = vpop.f32.mrb[0].mxu0
      %1263 = vmatprep.mubr.bf16.mxu0 0
      %1264 = vmatmul.mubr.bf16.gmra.mrb[0].mxu0 %v1031
      %v1265 = vpop.f32.mrb[0].mxu0
      %v1266 = vadd.f32 0.0, %v1265
      %v1267 = vpop.f32.mrb[0].mxu0
      %v1268 = vpop.f32.mrb[0].mxu0
      %v1269 = vadd.f32 0.0, %v1268
      %v1270 = vpop.f32.mrb[0].mxu0
      %1271 = vmatprep.mubr.bf16.mxu0 0
      %1272 = vmatmul.mubr.bf16.gmra.mrb[0].mxu0 %v1032
      %v1273 = vpop.f32.mrb[0].mxu0
      %v1274 = vadd.f32 0.0, %v1273
      %v1275 = vpop.f32.mrb[0].mxu0
      %v1276 = vpop.f32.mrb[0].mxu0
      %v1277 = vadd.f32 0.0, %v1276
      %v1278 = vpop.f32.mrb[0].mxu0
      %1279 = vmatprep.mubr.bf16.mxu0 0
      %1280 = vmatmul.mubr.bf16.gmra.mrb[0].mxu0 %v1033
      %v1281 = vpop.f32.mrb[0].mxu0
      %v1282 = vadd.f32 0.0, %v1281
      %v1283 = vpop.f32.mrb[0].mxu0
      %v1284 = vpop.f32.mrb[0].mxu0
      %v1285 = vadd.f32 0.0, %v1284
      %v1286 = vpop.f32.mrb[0].mxu0
      %1287 = vmatprep.mubr.bf16.mxu0 0
      %1288 = vmatmul.mubr.bf16.gmra.mrb[0].mxu0 %v1034
      %v1289 = vpop.f32.mrb[0].mxu0
      %v1290 = vadd.f32 0.0, %v1289
      %v1291 = vpop.f32.mrb[0].mxu0
      %v1292 = vpop.f32.mrb[0].mxu0
      %v1293 = vadd.f32 0.0, %v1292
      %v1294 = vpop.f32.mrb[0].mxu0
      %1295 = vmatprep.mubr.bf16.mxu0 0
      %1296 = vmatmul.mubr.bf16.gmra.mrb[0].mxu0 %v1035
      %v1297 = vpop.f32.mrb[0].mxu0
      %v1298 = vadd.f32 0.0, %v1297
      %v1299 = vpop.f32.mrb[0].mxu0
      %v1300 = vpop.f32.mrb[0].mxu0
      %v1301 = vadd.f32 0.0, %v1300
      %v1302 = vpop.f32.mrb[0].mxu0
      %1303 = vmatprep.mubr.bf16.mxu0 0
      %1304 = vmatmul.mubr.bf16.gmra.mrb[0].mxu0 %v1036
      %v1305 = vpop.f32.mrb[0].mxu0
      %v1306 = vadd.f32 0.0, %v1305
      %v1307 = vpop.f32.mrb[0].mxu0
      %v1308 = vpop.f32.mrb[0].mxu0
      %v1309 = vadd.f32 0.0, %v1308
      %v1310 = vpop.f32.mrb[0].mxu0
      %1311 = vmatprep.mubr.bf16.mxu0 0
      %1312 = vmatmul.mubr.bf16.gmra.mrb[0].mxu0 %v1037
      %v1313 = vpop.f32.mrb[0].mxu0
      %v1314 = vadd.f32 0.0, %v1313
      %v1315 = vpop.f32.mrb[0].mxu0
      %v1316 = vpop.f32.mrb[0].mxu0
      %v1317 = vadd.f32 0.0, %v1316
      %v1318 = vpop.f32.mrb[0].mxu0
      %1319 = vmatprep.mubr.bf16.mxu0 0
      %1320 = vmatmul.mubr.bf16.gmra.mrb[0].mxu0 %v1038
      %v1321 = vpop.f32.mrb[0].mxu0
      %v1322 = vadd.f32 0.0, %v1321
      %v1323 = vpop.f32.mrb[0].mxu0
      %v1324 = vpop.f32.mrb[0].mxu0
      %v1325 = vadd.f32 0.0, %v1324
      %v1326 = vpop.f32.mrb[0].mxu0
      %1327 = vmatprep.mubr.bf16.mxu0 0
      %1328 = vmatmul.mubr.bf16.gmra.mrb[0].mxu0 %v1039
      %v1329 = vpop.f32.mrb[0].mxu0
      %v1330 = vadd.f32 0.0, %v1329
      %v1331 = vpop.f32.mrb[0].mxu0
      %v1332 = vpop.f32.mrb[0].mxu0
      %v1333 = vadd.f32 0.0, %v1332
      %v1334 = vpop.f32.mrb[0].mxu0
      %1335 = vmatprep.mubr.bf16.mxu0 0
      %1336 = vmatmul.mubr.bf16.gmra.mrb[0].mxu0 %v1040
      %v1337 = vpop.f32.mrb[0].mxu0
      %v1338 = vadd.f32 0.0, %v1337
      %v1339 = vpop.f32.mrb[0].mxu0
      %v1340 = vpop.f32.mrb[0].mxu0
      %v1341 = vadd.f32 0.0, %v1340
      %v1342 = vpop.f32.mrb[0].mxu0
      %1343 = vmatprep.mubr.bf16.mxu0 0
      %1344 = vmatmul.mubr.bf16.gmra.mrb[0].mxu0 %v1041
      %v1345 = vpop.f32.mrb[0].mxu0
      %v1346 = vadd.f32 0.0, %v1345
      %v1347 = vpop.f32.mrb[0].mxu0
      %v1348 = vpop.f32.mrb[0].mxu0
      %v1349 = vadd.f32 0.0, %v1348
      %v1350 = vpop.f32.mrb[0].mxu0
      %1351 = vmatprep.mubr.bf16.mxu0 0
      %1352 = vmatmul.mubr.bf16.gmra.mrb[0].mxu0 %v1042
      %v1353 = vpop.f32.mrb[0].mxu0
      %v1354 = vadd.f32 0.0, %v1353
      %v1355 = vpop.f32.mrb[0].mxu0
      %v1356 = vpop.f32.mrb[0].mxu0
      %v1357 = vadd.f32 0.0, %v1356
      %v1358 = vpop.f32.mrb[0].mxu0
      %1359 = vmatprep.mubr.bf16.mxu0 0
      %1360 = vmatmul.mubr.bf16.gmra.mrb[0].mxu0 %v1043
      %v1361 = vpop.f32.mrb[0].mxu0
      %v1362 = vadd.f32 0.0, %v1361
      %v1363 = vpop.f32.mrb[0].mxu0
      %v1364 = vpop.f32.mrb[0].mxu0
      %v1365 = vadd.f32 0.0, %v1364
      %v1366 = vpop.f32.mrb[0].mxu0
      %1367 = vmatprep.mubr.bf16.mxu0 0
      %1368 = vmatmul.mubr.bf16.gmra.mrb[0].mxu0 %v1044
      %v1369 = vpop.f32.mrb[0].mxu0
      %v1370 = vadd.f32 0.0, %v1369
      %v1371 = vpop.f32.mrb[0].mxu0
      %v1372 = vpop.f32.mrb[0].mxu0
      %v1373 = vadd.f32 0.0, %v1372
      %v1374 = vpop.f32.mrb[0].mxu0
      %1375 = vmatprep.mubr.bf16.mxu0 0
      %1376 = vmatmul.mubr.bf16.gmra.mrb[0].mxu0 %v1045
      %v1377 = vpop.f32.mrb[0].mxu0
      %v1378 = vadd.f32 0.0, %v1377
      %v1379 = vpop.f32.mrb[0].mxu0
      %v1380 = vpop.f32.mrb[0].mxu0
      %v1381 = vadd.f32 0.0, %v1380
      %v1382 = vpop.f32.mrb[0].mxu0
      %1383 = vmatprep.mubr.bf16.mxu0 0
      %1384 = vmatmul.mubr.bf16.gmra.mrb[0].mxu0 %v1046
      %v1385 = vpop.f32.mrb[0].mxu0
      %v1386 = vadd.f32 0.0, %v1385
      %v1387 = vpop.f32.mrb[0].mxu0
      %v1388 = vpop.f32.mrb[0].mxu0
      %v1389 = vadd.f32 0.0, %v1388
      %v1390 = vpop.f32.mrb[0].mxu0
      %1391 = vmatprep.mubr.bf16.mxu0 0
      %1392 = vmatmul.mubr.bf16.gmra.mrb[0].mxu0 %v1047
      %v1393 = vpop.f32.mrb[0].mxu0
      %v1394 = vadd.f32 0.0, %v1393
      %v1395 = vpop.f32.mrb[0].mxu0
      %v1396 = vpop.f32.mrb[0].mxu0
      %v1397 = vadd.f32 0.0, %v1396
      %v1398 = vpop.f32.mrb[0].mxu0
      %1399 = vmatprep.mubr.bf16.mxu0 0
      %1400 = vmatmul.mubr.bf16.gmra.mrb[0].mxu0 %v1048
      %v1401 = vpop.f32.mrb[0].mxu0
      %v1402 = vadd.f32 0.0, %v1401
      %v1403 = vpop.f32.mrb[0].mxu0
      %v1404 = vpop.f32.mrb[0].mxu0
      %v1405 = vadd.f32 0.0, %v1404
      %v1406 = vpop.f32.mrb[0].mxu0
      %1407 = vdwg.mxu0
      %v1408 = vpack.c.bf16 %v1157, %v1154
      %v1409 = vpack.c.bf16 %v1165, %v1162
      %v1410 = vpack.c.bf16 %v1173, %v1170
      %v1411 = vpack.c.bf16 %v1181, %v1178
      %v1412 = vpack.c.bf16 %v1189, %v1186
      %v1413 = vpack.c.bf16 %v1197, %v1194
      %v1414 = vpack.c.bf16 %v1205, %v1202
      %v1415 = vpack.c.bf16 %v1213, %v1210
      %v1416 = vpack.c.bf16 %v1221, %v1218
      %v1417 = vpack.c.bf16 %v1229, %v1226
      %v1418 = vpack.c.bf16 %v1237, %v1234
      %v1419 = vpack.c.bf16 %v1245, %v1242
      %v1420 = vpack.c.bf16 %v1253, %v1250
      %v1421 = vpack.c.bf16 %v1261, %v1258
      %v1422 = vpack.c.bf16 %v1269, %v1266
      %v1423 = vpack.c.bf16 %v1277, %v1274
      %v1424 = vpack.c.bf16 %v1285, %v1282
      %v1425 = vpack.c.bf16 %v1293, %v1290
      %v1426 = vpack.c.bf16 %v1301, %v1298
      %v1427 = vpack.c.bf16 %v1309, %v1306
      %v1428 = vpack.c.bf16 %v1317, %v1314
      %v1429 = vpack.c.bf16 %v1325, %v1322
      %v1430 = vpack.c.bf16 %v1333, %v1330
      %v1431 = vpack.c.bf16 %v1341, %v1338
      %v1432 = vpack.c.bf16 %v1349, %v1346
      %v1433 = vpack.c.bf16 %v1357, %v1354
      %v1434 = vpack.c.bf16 %v1365, %v1362
      %v1435 = vpack.c.bf16 %v1373, %v1370
      %v1436 = vpack.c.bf16 %v1381, %v1378
      %v1437 = vpack.c.bf16 %v1389, %v1386
      %v1438 = vpack.c.bf16 %v1397, %v1394
      %v1439 = vpack.c.bf16 %v1405, %v1402
      %v1472 = vunpack.c.l.b16 %v1408
      %v1473 = vunpack.c.h.b16 %v1408
      %v1474 = vunpack.c.l.b16 %v1409
      %v1475 = vunpack.c.h.b16 %v1409
      %v1476 = vunpack.c.l.b16 %v1410
      %v1477 = vunpack.c.h.b16 %v1410
      %v1478 = vunpack.c.l.b16 %v1411
      %v1479 = vunpack.c.h.b16 %v1411
      %v1480 = vunpack.c.l.b16 %v1412
      %v1481 = vunpack.c.h.b16 %v1412
      %v1482 = vunpack.c.l.b16 %v1413
      %v1483 = vunpack.c.h.b16 %v1413
      %v1484 = vunpack.c.l.b16 %v1414
      %v1485 = vunpack.c.h.b16 %v1414
      %v1486 = vunpack.c.l.b16 %v1415
      %v1487 = vunpack.c.h.b16 %v1415
      %v1488 = vunpack.c.l.b16 %v1416
      %v1489 = vunpack.c.h.b16 %v1416
      %v1490 = vunpack.c.l.b16 %v1417
      %v1491 = vunpack.c.h.b16 %v1417
      %v1492 = vunpack.c.l.b16 %v1418
      %v1493 = vunpack.c.h.b16 %v1418
      %v1494 = vunpack.c.l.b16 %v1419
      %v1495 = vunpack.c.h.b16 %v1419
      %v1496 = vunpack.c.l.b16 %v1420
      %v1497 = vunpack.c.h.b16 %v1420
      %v1498 = vunpack.c.l.b16 %v1421
      %v1499 = vunpack.c.h.b16 %v1421
      %v1500 = vunpack.c.l.b16 %v1422
      %v1501 = vunpack.c.h.b16 %v1422
      %v1502 = vunpack.c.l.b16 %v1423
      %v1503 = vunpack.c.h.b16 %v1423
      %v1504 = vunpack.c.l.b16 %v1424
      %v1505 = vunpack.c.h.b16 %v1424
      %v1506 = vunpack.c.l.b16 %v1425
      %v1507 = vunpack.c.h.b16 %v1425
      %v1508 = vunpack.c.l.b16 %v1426
      %v1509 = vunpack.c.h.b16 %v1426
      %v1510 = vunpack.c.l.b16 %v1427
      %v1511 = vunpack.c.h.b16 %v1427
      %v1512 = vunpack.c.l.b16 %v1428
      %v1513 = vunpack.c.h.b16 %v1428
      %v1514 = vunpack.c.l.b16 %v1429
      %v1515 = vunpack.c.h.b16 %v1429
      %v1516 = vunpack.c.l.b16 %v1430
      %v1517 = vunpack.c.h.b16 %v1430
      %v1518 = vunpack.c.l.b16 %v1431
      %v1519 = vunpack.c.h.b16 %v1431
      %v1520 = vunpack.c.l.b16 %v1432
      %v1521 = vunpack.c.h.b16 %v1432
      %v1522 = vunpack.c.l.b16 %v1433
      %v1523 = vunpack.c.h.b16 %v1433
      %v1524 = vunpack.c.l.b16 %v1434
      %v1525 = vunpack.c.h.b16 %v1434
      %v1526 = vunpack.c.l.b16 %v1435
      %v1527 = vunpack.c.h.b16 %v1435
      %v1528 = vunpack.c.l.b16 %v1436
      %v1529 = vunpack.c.h.b16 %v1436
      %v1530 = vunpack.c.l.b16 %v1437
      %v1531 = vunpack.c.h.b16 %v1437
      %v1532 = vunpack.c.l.b16 %v1438
      %v1533 = vunpack.c.h.b16 %v1438
      %v1534 = vunpack.c.l.b16 %v1439
      %v1535 = vunpack.c.h.b16 %v1439
      %v1536 = vpack.c.b16 %v1472, %v1472
      %v1537 = vpack.c.b16 %v1473, %v1473
      %v1538 = vpack.c.b16 %v1474, %v1474
      %v1539 = vpack.c.b16 %v1475, %v1475
      %v1540 = vpack.c.b16 %v1476, %v1476
      %v1541 = vpack.c.b16 %v1477, %v1477
      %v1542 = vpack.c.b16 %v1478, %v1478
      %v1543 = vpack.c.b16 %v1479, %v1479
      %v1544 = vpack.c.b16 %v1480, %v1480
      %v1545 = vpack.c.b16 %v1481, %v1481
      %v1546 = vpack.c.b16 %v1482, %v1482
      %v1547 = vpack.c.b16 %v1483, %v1483
      %v1548 = vpack.c.b16 %v1484, %v1484
      %v1549 = vpack.c.b16 %v1485, %v1485
      %v1550 = vpack.c.b16 %v1486, %v1486
      %v1551 = vpack.c.b16 %v1487, %v1487
      %v1552 = vpack.c.b16 %v1488, %v1488
      %v1553 = vpack.c.b16 %v1489, %v1489
      %v1554 = vpack.c.b16 %v1490, %v1490
      %v1555 = vpack.c.b16 %v1491, %v1491
      %v1556 = vpack.c.b16 %v1492, %v1492
      %v1557 = vpack.c.b16 %v1493, %v1493
      %v1558 = vpack.c.b16 %v1494, %v1494
      %v1559 = vpack.c.b16 %v1495, %v1495
      %v1560 = vpack.c.b16 %v1496, %v1496
      %v1561 = vpack.c.b16 %v1497, %v1497
      %v1562 = vpack.c.b16 %v1498, %v1498
      %v1563 = vpack.c.b16 %v1499, %v1499
      %v1564 = vpack.c.b16 %v1500, %v1500
      %v1565 = vpack.c.b16 %v1501, %v1501
      %v1566 = vpack.c.b16 %v1502, %v1502
      %v1567 = vpack.c.b16 %v1503, %v1503
      %v1568 = vpack.c.b16 %v1504, %v1504
      %v1569 = vpack.c.b16 %v1505, %v1505
      %v1570 = vpack.c.b16 %v1506, %v1506
      %v1571 = vpack.c.b16 %v1507, %v1507
      %v1572 = vpack.c.b16 %v1508, %v1508
      %v1573 = vpack.c.b16 %v1509, %v1509
      %v1574 = vpack.c.b16 %v1510, %v1510
      %v1575 = vpack.c.b16 %v1511, %v1511
      %v1576 = vpack.c.b16 %v1512, %v1512
      %v1577 = vpack.c.b16 %v1513, %v1513
      %v1578 = vpack.c.b16 %v1514, %v1514
      %v1579 = vpack.c.b16 %v1515, %v1515
      %v1580 = vpack.c.b16 %v1516, %v1516
      %v1581 = vpack.c.b16 %v1517, %v1517
      %v1582 = vpack.c.b16 %v1518, %v1518
      %v1583 = vpack.c.b16 %v1519, %v1519
      %v1584 = vpack.c.b16 %v1520, %v1520
      %v1585 = vpack.c.b16 %v1521, %v1521
      %v1586 = vpack.c.b16 %v1522, %v1522
      %v1587 = vpack.c.b16 %v1523, %v1523
      %v1588 = vpack.c.b16 %v1524, %v1524
      %v1589 = vpack.c.b16 %v1525, %v1525
      %v1590 = vpack.c.b16 %v1526, %v1526
      %v1591 = vpack.c.b16 %v1527, %v1527
      %v1592 = vpack.c.b16 %v1528, %v1528
      %v1593 = vpack.c.b16 %v1529, %v1529
      %v1594 = vpack.c.b16 %v1530, %v1530
      %v1595 = vpack.c.b16 %v1531, %v1531
      %v1596 = vpack.c.b16 %v1532, %v1532
      %v1597 = vpack.c.b16 %v1533, %v1533
      %v1598 = vpack.c.b16 %v1534, %v1534
      %v1599 = vpack.c.b16 %v1535, %v1535
      %1664 = vst [vmem:[%s314] sm:$0xf] %v1536
      %1665 = vst [vmem:[%s314 + $0x4] sm:$0xf] %v1537
      %1666 = vst [vmem:[%s314 + $0x8] sm:$0xf] %v1538
      %1667 = vst [vmem:[%s314 + $0xc] sm:$0xf] %v1539
      %1668 = vst [vmem:[%s314 + $0x10] sm:$0xf] %v1540
      %1669 = vst [vmem:[%s314 + $0x14] sm:$0xf] %v1541
      %1670 = vst [vmem:[%s314 + $0x18] sm:$0xf] %v1542
      %1671 = vst [vmem:[%s314 + $0x1c] sm:$0xf] %v1543
      %1672 = vst [vmem:[%s314 + $0x20] sm:$0xf] %v1544
      %1673 = vst [vmem:[%s314 + $0x24] sm:$0xf] %v1545
      %1674 = vst [vmem:[%s314 + $0x28] sm:$0xf] %v1546
      %1675 = vst [vmem:[%s314 + $0x2c] sm:$0xf] %v1547
      %1676 = vst [vmem:[%s314 + $0x30] sm:$0xf] %v1548
      %1677 = vst [vmem:[%s314 + $0x34] sm:$0xf] %v1549
      %1678 = vst [vmem:[%s314 + $0x38] sm:$0xf] %v1550
      %1679 = vst [vmem:[%s314 + $0x3c] sm:$0xf] %v1551
      %1680 = vst [vmem:[%s314 + $0x40] sm:$0xf] %v1552
      %1681 = vst [vmem:[%s314 + $0x44] sm:$0xf] %v1553
      %1682 = vst [vmem:[%s314 + $0x48] sm:$0xf] %v1554
      %1683 = vst [vmem:[%s314 + $0x4c] sm:$0xf] %v1555
      %1684 = vst [vmem:[%s314 + $0x50] sm:$0xf] %v1556
      %1685 = vst [vmem:[%s314 + $0x54] sm:$0xf] %v1557
      %1686 = vst [vmem:[%s314 + $0x58] sm:$0xf] %v1558
      %1687 = vst [vmem:[%s314 + $0x5c] sm:$0xf] %v1559
      %1688 = vst [vmem:[%s314 + $0x60] sm:$0xf] %v1560
      %1689 = vst [vmem:[%s314 + $0x64] sm:$0xf] %v1561
      %1690 = vst [vmem:[%s314 + $0x68] sm:$0xf] %v1562
      %1691 = vst [vmem:[%s314 + $0x6c] sm:$0xf] %v1563
      %1692 = vst [vmem:[%s314 + $0x70] sm:$0xf] %v1564
      %1693 = vst [vmem:[%s314 + $0x74] sm:$0xf] %v1565
      %1694 = vst [vmem:[%s314 + $0x78] sm:$0xf] %v1566
      %1695 = vst [vmem:[%s314 + $0x7c] sm:$0xf] %v1567
      %1696 = vst [vmem:[%s314 + $0x80] sm:$0xf] %v1568
      %1697 = vst [vmem:[%s314 + $0x84] sm:$0xf] %v1569
      %1698 = vst [vmem:[%s314 + $0x88] sm:$0xf] %v1570
      %1699 = vst [vmem:[%s314 + $0x8c] sm:$0xf] %v1571
      %1700 = vst [vmem:[%s314 + $0x90] sm:$0xf] %v1572
      %1701 = vst [vmem:[%s314 + $0x94] sm:$0xf] %v1573
      %1702 = vst [vmem:[%s314 + $0x98] sm:$0xf] %v1574
      %1703 = vst [vmem:[%s314 + $0x9c] sm:$0xf] %v1575
      %1704 = vst [vmem:[%s314 + $0xa0] sm:$0xf] %v1576
      %1705 = vst [vmem:[%s314 + $0xa4] sm:$0xf] %v1577
      %1706 = vst [vmem:[%s314 + $0xa8] sm:$0xf] %v1578
      %1707 = vst [vmem:[%s314 + $0xac] sm:$0xf] %v1579
      %1708 = vst [vmem:[%s314 + $0xb0] sm:$0xf] %v1580
      %1709 = vst [vmem:[%s314 + $0xb4] sm:$0xf] %v1581
      %1710 = vst [vmem:[%s314 + $0xb8] sm:$0xf] %v1582
      %1711 = vst [vmem:[%s314 + $0xbc] sm:$0xf] %v1583
      %1712 = vst [vmem:[%s314 + $0xc0] sm:$0xf] %v1584
      %1713 = vst [vmem:[%s314 + $0xc4] sm:$0xf] %v1585
      %1714 = vst [vmem:[%s314 + $0xc8] sm:$0xf] %v1586
      %1715 = vst [vmem:[%s314 + $0xcc] sm:$0xf] %v1587
      %1716 = vst [vmem:[%s314 + $0xd0] sm:$0xf] %v1588
      %1717 = vst [vmem:[%s314 + $0xd4] sm:$0xf] %v1589
      %1718 = vst [vmem:[%s314 + $0xd8] sm:$0xf] %v1590
      %1719 = vst [vmem:[%s314 + $0xdc] sm:$0xf] %v1591
      %1720 = vst [vmem:[%s314 + $0xe0] sm:$0xf] %v1592
      %1721 = vst [vmem:[%s314 + $0xe4] sm:$0xf] %v1593
      %1722 = vst [vmem:[%s314 + $0xe8] sm:$0xf] %v1594
      %1723 = vst [vmem:[%s314 + $0xec] sm:$0xf] %v1595
      %1724 = vst [vmem:[%s314 + $0xf0] sm:$0xf] %v1596
      %1725 = vst [vmem:[%s314 + $0xf4] sm:$0xf] %v1597
      %1726 = vst [vmem:[%s314 + $0xf8] sm:$0xf] %v1598
      %1727 = vst [vmem:[%s314 + $0xfc] sm:$0xf] %v1599
      %v1728 = vld [vmem:[%s319] sm:$0x1]
      %v1729 = vadd.f32 %v1154, %v1157
      %v1730 = vadd.f32 %v1729, %v1162
      %v1731 = vadd.f32 %v1730, %v1165
      %v1732 = vadd.f32 %v1731, %v1170
      %v1733 = vadd.f32 %v1732, %v1173
      %v1734 = vadd.f32 %v1733, %v1178
      %v1735 = vadd.f32 %v1734, %v1181
      %v1736 = vadd.f32 %v1735, %v1186
      %v1737 = vadd.f32 %v1736, %v1189
      %v1738 = vadd.f32 %v1737, %v1194
      %v1739 = vadd.f32 %v1738, %v1197
      %v1740 = vadd.f32 %v1739, %v1202
      %v1741 = vadd.f32 %v1740, %v1205
      %v1742 = vadd.f32 %v1741, %v1210
      %v1743 = vadd.f32 %v1742, %v1213
      %v1744 = vadd.f32 %v1743, %v1218
      %v1745 = vadd.f32 %v1744, %v1221
      %v1746 = vadd.f32 %v1745, %v1226
      %v1747 = vadd.f32 %v1746, %v1229
      %v1748 = vadd.f32 %v1747, %v1234
      %v1749 = vadd.f32 %v1748, %v1237
      %v1750 = vadd.f32 %v1749, %v1242
      %v1751 = vadd.f32 %v1750, %v1245
      %v1752 = vadd.f32 %v1751, %v1250
      %v1753 = vadd.f32 %v1752, %v1253
      %v1754 = vadd.f32 %v1753, %v1258
      %v1755 = vadd.f32 %v1754, %v1261
      %v1756 = vadd.f32 %v1755, %v1266
      %v1757 = vadd.f32 %v1756, %v1269
      %v1758 = vadd.f32 %v1757, %v1274
      %v1759 = vadd.f32 %v1758, %v1277
      %v1760 = vadd.f32 %v1759, %v1282
      %v1761 = vadd.f32 %v1760, %v1285
      %v1762 = vadd.f32 %v1761, %v1290
      %v1763 = vadd.f32 %v1762, %v1293
      %v1764 = vadd.f32 %v1763, %v1298
      %v1765 = vadd.f32 %v1764, %v1301
      %v1766 = vadd.f32 %v1765, %v1306
      %v1767 = vadd.f32 %v1766, %v1309
      %v1768 = vadd.f32 %v1767, %v1314
      %v1769 = vadd.f32 %v1768, %v1317
      %v1770 = vadd.f32 %v1769, %v1322
      %v1771 = vadd.f32 %v1770, %v1325
      %v1772 = vadd.f32 %v1771, %v1330
      %v1773 = vadd.f32 %v1772, %v1333
      %v1774 = vadd.f32 %v1773, %v1338
      %v1775 = vadd.f32 %v1774, %v1341
      %v1776 = vadd.f32 %v1775, %v1346
      %v1777 = vadd.f32 %v1776, %v1349
      %v1778 = vadd.f32 %v1777, %v1354
      %v1779 = vadd.f32 %v1778, %v1357
      %v1780 = vadd.f32 %v1779, %v1362
      %v1781 = vadd.f32 %v1780, %v1365
      %v1782 = vadd.f32 %v1781, %v1370
      %v1783 = vadd.f32 %v1782, %v1373
      %v1784 = vadd.f32 %v1783, %v1378
      %v1785 = vadd.f32 %v1784, %v1381
      %v1786 = vadd.f32 %v1785, %v1386
      %v1787 = vadd.f32 %v1786, %v1389
      %v1788 = vadd.f32 %v1787, %v1394
      %v1789 = vadd.f32 %v1788, %v1397
      %v1790 = vadd.f32 %v1789, %v1402
      %v1791 = vadd.f32 %v1790, %v1405
      %v1792 = vrot.slane %v1791, 4
      %v1793 = vadd.f32 %v1791, %v1792
      %v1794 = vrot.slane %v1793, 2
      %v1795 = vadd.f32 %v1793, %v1794
      %v1796 = vrot.slane %v1795, 1
      %v1797 = vadd.f32 %v1795, %v1796
      %v1798 = vadd.f32 %v1728, %v1797
      %1799 = vst [vmem:[%s319] sm:$0x1] %v1798
      %v1800 = vld [vmem:[%s322] sm:$0x1]
      %v1801 = vmul.f32 %v1154, %v1154
      %v1802 = vmul.f32 %v1157, %v1157
      %v1803 = vmul.f32 %v1162, %v1162
      %v1804 = vmul.f32 %v1165, %v1165
      %v1805 = vmul.f32 %v1170, %v1170
      %v1806 = vmul.f32 %v1173, %v1173
      %v1807 = vmul.f32 %v1178, %v1178
      %v1808 = vmul.f32 %v1181, %v1181
      %v1809 = vmul.f32 %v1186, %v1186
      %v1810 = vmul.f32 %v1189, %v1189
      %v1811 = vmul.f32 %v1194, %v1194
      %v1812 = vmul.f32 %v1197, %v1197
      %v1813 = vmul.f32 %v1202, %v1202
      %v1814 = vmul.f32 %v1205, %v1205
      %v1815 = vmul.f32 %v1210, %v1210
      %v1816 = vmul.f32 %v1213, %v1213
      %v1817 = vmul.f32 %v1218, %v1218
      %v1818 = vmul.f32 %v1221, %v1221
      %v1819 = vmul.f32 %v1226, %v1226
      %v1820 = vmul.f32 %v1229, %v1229
      %v1821 = vmul.f32 %v1234, %v1234
      %v1822 = vmul.f32 %v1237, %v1237
      %v1823 = vmul.f32 %v1242, %v1242
      %v1824 = vmul.f32 %v1245, %v1245
      %v1825 = vmul.f32 %v1250, %v1250
      %v1826 = vmul.f32 %v1253, %v1253
      %v1827 = vmul.f32 %v1258, %v1258
      %v1828 = vmul.f32 %v1261, %v1261
      %v1829 = vmul.f32 %v1266, %v1266
      %v1830 = vmul.f32 %v1269, %v1269
      %v1831 = vmul.f32 %v1274, %v1274
      %v1832 = vmul.f32 %v1277, %v1277
      %v1833 = vmul.f32 %v1282, %v1282
      %v1834 = vmul.f32 %v1285, %v1285
      %v1835 = vmul.f32 %v1290, %v1290
      %v1836 = vmul.f32 %v1293, %v1293
      %v1837 = vmul.f32 %v1298, %v1298
      %v1838 = vmul.f32 %v1301, %v1301
      %v1839 = vmul.f32 %v1306, %v1306
      %v1840 = vmul.f32 %v1309, %v1309
      %v1841 = vmul.f32 %v1314, %v1314
      %v1842 = vmul.f32 %v1317, %v1317
      %v1843 = vmul.f32 %v1322, %v1322
      %v1844 = vmul.f32 %v1325, %v1325
      %v1845 = vmul.f32 %v1330, %v1330
      %v1846 = vmul.f32 %v1333, %v1333
      %v1847 = vmul.f32 %v1338, %v1338
      %v1848 = vmul.f32 %v1341, %v1341
      %v1849 = vmul.f32 %v1346, %v1346
      %v1850 = vmul.f32 %v1349, %v1349
      %v1851 = vmul.f32 %v1354, %v1354
      %v1852 = vmul.f32 %v1357, %v1357
      %v1853 = vmul.f32 %v1362, %v1362
      %v1854 = vmul.f32 %v1365, %v1365
      %v1855 = vmul.f32 %v1370, %v1370
      %v1856 = vmul.f32 %v1373, %v1373
      %v1857 = vmul.f32 %v1378, %v1378
      %v1858 = vmul.f32 %v1381, %v1381
      %v1859 = vmul.f32 %v1386, %v1386
      %v1860 = vmul.f32 %v1389, %v1389
      %v1861 = vmul.f32 %v1394, %v1394
      %v1862 = vmul.f32 %v1397, %v1397
      %v1863 = vmul.f32 %v1402, %v1402
      %v1864 = vmul.f32 %v1405, %v1405
      %v1865 = vadd.f32 %v1801, %v1802
      %v1866 = vadd.f32 %v1865, %v1803
      %v1867 = vadd.f32 %v1866, %v1804
      %v1868 = vadd.f32 %v1867, %v1805
      %v1869 = vadd.f32 %v1868, %v1806
      %v1870 = vadd.f32 %v1869, %v1807
      %v1871 = vadd.f32 %v1870, %v1808
      %v1872 = vadd.f32 %v1871, %v1809
      %v1873 = vadd.f32 %v1872, %v1810
      %v1874 = vadd.f32 %v1873, %v1811
      %v1875 = vadd.f32 %v1874, %v1812
      %v1876 = vadd.f32 %v1875, %v1813
      %v1877 = vadd.f32 %v1876, %v1814
      %v1878 = vadd.f32 %v1877, %v1815
      %v1879 = vadd.f32 %v1878, %v1816
      %v1880 = vadd.f32 %v1879, %v1817
      %v1881 = vadd.f32 %v1880, %v1818
      %v1882 = vadd.f32 %v1881, %v1819
      %v1883 = vadd.f32 %v1882, %v1820
      %v1884 = vadd.f32 %v1883, %v1821
      %v1885 = vadd.f32 %v1884, %v1822
      %v1886 = vadd.f32 %v1885, %v1823
      %v1887 = vadd.f32 %v1886, %v1824
      %v1888 = vadd.f32 %v1887, %v1825
      %v1889 = vadd.f32 %v1888, %v1826
      %v1890 = vadd.f32 %v1889, %v1827
      %v1891 = vadd.f32 %v1890, %v1828
      %v1892 = vadd.f32 %v1891, %v1829
      %v1893 = vadd.f32 %v1892, %v1830
      %v1894 = vadd.f32 %v1893, %v1831
      %v1895 = vadd.f32 %v1894, %v1832
      %v1896 = vadd.f32 %v1895, %v1833
      %v1897 = vadd.f32 %v1896, %v1834
      %v1898 = vadd.f32 %v1897, %v1835
      %v1899 = vadd.f32 %v1898, %v1836
      %v1900 = vadd.f32 %v1899, %v1837
      %v1901 = vadd.f32 %v1900, %v1838
      %v1902 = vadd.f32 %v1901, %v1839
      %v1903 = vadd.f32 %v1902, %v1840
      %v1904 = vadd.f32 %v1903, %v1841
      %v1905 = vadd.f32 %v1904, %v1842
      %v1906 = vadd.f32 %v1905, %v1843
      %v1907 = vadd.f32 %v1906, %v1844
      %v1908 = vadd.f32 %v1907, %v1845
      %v1909 = vadd.f32 %v1908, %v1846
      %v1910 = vadd.f32 %v1909, %v1847
      %v1911 = vadd.f32 %v1910, %v1848
      %v1912 = vadd.f32 %v1911, %v1849
      %v1913 = vadd.f32 %v1912, %v1850
      %v1914 = vadd.f32 %v1913, %v1851
      %v1915 = vadd.f32 %v1914, %v1852
      %v1916 = vadd.f32 %v1915, %v1853
      %v1917 = vadd.f32 %v1916, %v1854
      %v1918 = vadd.f32 %v1917, %v1855
      %v1919 = vadd.f32 %v1918, %v1856
      %v1920 = vadd.f32 %v1919, %v1857
      %v1921 = vadd.f32 %v1920, %v1858
      %v1922 = vadd.f32 %v1921, %v1859
      %v1923 = vadd.f32 %v1922, %v1860
      %v1924 = vadd.f32 %v1923, %v1861
      %v1925 = vadd.f32 %v1924, %v1862
      %v1926 = vadd.f32 %v1925, %v1863
      %v1927 = vadd.f32 %v1926, %v1864
      %v1928 = vrot.slane %v1927, 4
      %v1929 = vadd.f32 %v1927, %v1928
      %v1930 = vrot.slane %v1929, 2
      %v1931 = vadd.f32 %v1929, %v1930
      %v1932 = vrot.slane %v1931, 1
      %v1933 = vadd.f32 %v1931, %v1932
      %v1934 = vadd.f32 %v1800, %v1933
      %1935 = vst [vmem:[%s322] sm:$0x1] %v1934
      %s1936 = sadd.s32 %s23, %s24
      %s1937 = smul.u32 64, %s1936
      %p1938 = scmp.lt.s32.totalorder %s1937, 255
      %s1939 = scalar_select %p1938, %s1937, 255
      %s1940 = smul.addr %s1939, 4
      %s1941 = scalar_lea.vmem %s5, %s1940
      %p1942 = scmp.lt.s32.totalorder %s23, 3
      %s1943 = scalar_select %p1942, %s23, 3
      %s1944 = scalar_lea.vmem %s6, %s1943
      %p1945 = scmp.lt.s32.totalorder %s23, 3
      %s1946 = scalar_select %p1945, %s23, 3
      %s1947 = scalar_lea.vmem %s7, %s1946
      // Predicated region
      $region45: #{encoder_forward.4} parent=39 // pred_check
        %p1948 = pneg %p163
      $region46: #{encoder_forward.4} parent=39 // pred_check_branch
        %1950 = sbr.rel (%p1948) target = $region48
      $region47: #{encoder_forward.4} parent=39 // pred_region
        %s1951 = sadd.s32 %s23, %s24
        %s1952 = smul.u32 64, %s1951
      $region48: #{encoder_forward.4} parent=39 // pred_fallthru
        _
      // Predicated region
      $region49: #{encoder_forward.4} parent=39 // pred_check
        %p1953 = pneg %p189
      $region50: #{encoder_forward.4} parent=39 // pred_check_branch
        %1955 = sbr.rel (%p1953) target = $region52
      $region51: #{encoder_forward.4} parent=39 // pred_region
        _
      $region52: #{encoder_forward.4} parent=39 // pred_fallthru
        _
      // Predicated region
      $region53: #{encoder_forward.4} parent=39 // pred_check
        %p1956 = pneg %p215
      $region54: #{encoder_forward.4} parent=39 // pred_check_branch
        %1958 = sbr.rel (%p1956) target = $region56
      $region55: #{encoder_forward.4} parent=39 // pred_region
        _
      $region56: #{encoder_forward.4} parent=39 // pred_fallthru
        _
    $region40: #{encoder_forward.4} parent=5 // pred_fallthru
      _
    %p1959 = scmp.le.s32.totalorder 2, %s14
    // Predicated region
    $region57: #{encoder_forward.4} parent=5 // pred_check
      %p1960 = pneg %p1959
    $region58: #{encoder_forward.4} parent=5 // pred_check_branch
      %1962 = sbr.rel (%p1960) target = $region60
    $region59: #{encoder_forward.4} parent=5 // pred_region
      %s1963 = ssub.s32 %s14, 2
      // Predicated region
      $region61: #{encoder_forward.4} parent=59 // pred_check
        %p1964 = pneg %p169
      $region62: #{encoder_forward.4} parent=59 // pred_check_branch
        %1966 = sbr.rel (%p1964) target = $region64
      $region63: #{encoder_forward.4} parent=59 // pred_region
        %s1967 = sadd.s32 %s25, %s26
        %s1968 = smul.u32 64, %s1967
        %p1969 = scmp.lt.s32.totalorder %s1968, 255
        %s1970 = scalar_select %p1969, %s1968, 255
        %s1971 = smul.addr %s1970, 4
        %s1972 = scalar_lea.vmem %s5, %s1971
      $region64: #{encoder_forward.4} parent=59 // pred_fallthru
        _
      // Predicated region
      $region65: #{encoder_forward.4} parent=59 // pred_check
        %p1973 = pneg %p195
      $region66: #{encoder_forward.4} parent=59 // pred_check_branch
        %1975 = sbr.rel (%p1973) target = $region68
      $region67: #{encoder_forward.4} parent=59 // pred_region
        %p1976 = scmp.lt.s32.totalorder %s25, 3
        %s1977 = scalar_select %p1976, %s25, 3
        %s1978 = scalar_lea.vmem %s6, %s1977
      $region68: #{encoder_forward.4} parent=59 // pred_fallthru
        _
      // Predicated region
      $region69: #{encoder_forward.4} parent=59 // pred_check
        %p1979 = pneg %p221
      $region70: #{encoder_forward.4} parent=59 // pred_check_branch
        %1981 = sbr.rel (%p1979) target = $region72
      $region71: #{encoder_forward.4} parent=59 // pred_region
        %p1982 = scmp.lt.s32.totalorder %s25, 3
        %s1983 = scalar_select %p1982, %s25, 3
        %s1984 = scalar_lea.vmem %s7, %s1983
      $region72: #{encoder_forward.4} parent=59 // pred_fallthru
        _
    $region60: #{encoder_forward.4} parent=5 // pred_fallthru
      _
  $region6: #{encoder_forward.4} parent=0 // loop_footer
    %s18 = sadd.s32 1, %s14
  $region7: #{encoder_forward.4} parent=0 // loop_footer_branch
    %13 = sbr.rel target = $region3
  $region8: #{encoder_forward.4} parent=0 // loop_exit
    _

// kernel: encoder_forward.5
$region0: #{encoder_forward.5}
  #allocation0 [shape = 'u32[]', space=smem, size = 0x4, offset = 0x4, fixed_abs, tag = 'smem constant byte address 0x4 - core index']
  #allocation1 [shape = 'u32[144,128]{1,0:T(1,128)}', space=vmem, size = 0x12000, scoped, tag = 'internal scratch']
  %s0 = inlined_call_operand.vmem [shape: bf16[2048,128], index: 0, kind: input, shape index: {}]
  %s1 = inlined_call_operand.vmem [shape: f32[1,128], index: 1, kind: input, shape index: {}]
  %s2 = inlined_call_operand.vmem [shape: f32[1,128], index: 2, kind: input, shape index: {}]
  %s3 = inlined_call_operand.vmem [shape: bf16[128,256], index: 3, kind: input, shape index: {}]
  %s4 = inlined_call_operand.vmem [shape: bf16[2048,256], index: 4, kind: output, shape index: {0}]
  %s5 = inlined_call_operand.vmem [shape: f32[4,1,256], index: 5, kind: output, shape index: {1}]
  %s6 = inlined_call_operand.vmem [shape: f32[4,1,256], index: 6, kind: output, shape index: {2}]
  %7 = xla_tuple %s4, %s5, %s6
  %s8 = sld [smem:[#allocation0]]
  $region69: #{encoder_forward.5} parent=0
    _
  %s10 = ssub.s32 1, %s8
  %s11 = scalar_select 0, %s10, %s8
  loop: start=0, step=1, limit=6
  $region2: #{encoder_forward.5} parent=0 // loop_pre_header
    _
  $region3: #{encoder_forward.5} parent=0 // loop_header
    %s13 = sphi 0, %s17
    %p14 = scmp.ge.s32.totalorder %s13, 6
    %s20 = sphi 0, %s32
    %s21 = sphi 0, %s28
    %s22 = sphi 0, %s20
    %s23 = sphi 0, %s21
    %s24 = sphi 0, %s22
    %s25 = sphi 0, %s23
    %s37 = sphi 0, %s39
    %s40 = sphi 0, %s37
    %s41 = sphi 0, %s40
    %s57 = sphi 0, %s41
    %s61 = sphi 0, %s61
    %s63 = sphi 0, %s61
    %s64 = sphi 0, %s63
    %s78 = sphi 0, %s64
    %s82 = sphi 0, %s82
    %s84 = sphi 0, %s82
    %s85 = sphi 0, %s84
    %s99 = sphi 0, %s85
    %s103 = sphi 0, %s103
    %s105 = sphi 0, %s103
    %s106 = sphi 0, %s105
    %s120 = sphi 0, %s106
    %s128 = sphi 0, %s130
    %s131 = sphi 0, %s128
    %s132 = sphi 0, %s131
    %s148 = sphi 0, %s132
    %s154 = sphi 0, %s156
    %s157 = sphi 0, %s154
    %s158 = sphi 0, %s157
    %s174 = sphi 0, %s158
    %s180 = sphi 0, %s182
    %s183 = sphi 0, %s180
    %s184 = sphi 0, %s183
    %s200 = sphi 0, %s184
  $region4: #{encoder_forward.5} parent=0 // loop_header_branch
    %16 = sbr.rel (%p14) target = $region8
  $region5: #{encoder_forward.5} parent=0 // loop_body
    %s18 = ssub.s32 %s13, 1
    %s19 = ssub.s32 %s13, 2
    %s26 = sadd.s32 1, %s21
    %p27 = scmp.ge.s32.totalorder %s26, 1
    %s28 = scalar_select %p27, 0, %s26
    %s29 = sadd.s32 1, %s20
    %s30 = scalar_select %p27, %s29, %s20
    %p31 = scmp.ge.s32.totalorder %s30, 4
    %s32 = scalar_select %p31, 0, %s30
    %s33 = sadd.s32 %s20, %s21
    %s34 = sadd.s32 %s32, %s28
    %s35 = ssub.s32 %s33, %s34
    %p36 = scmp.eq.s32.totalorder %s35, 0
    %s38 = sadd.s32 %s37, 1
    %s39 = scalar_select %p36, %s37, %s38
    %p42 = pneg %p36
    %p43 = scmp.eq.s32.totalorder %s13, 3
    %p44 = por %p42, %p43
    %p45 = scmp.ne.s32.totalorder %s37, %s40
    %p46 = scmp.eq.s32.totalorder %s13, 0
    %p47 = por %p45, %p46
    %p48 = scmp.ne.s32.totalorder %s37, %s40
    %p49 = scmp.eq.s32.totalorder %s18, 3
    %p50 = por %p48, %p49
    %p51 = scmp.ne.s32.totalorder %s40, %s41
    %p52 = scmp.eq.s32.totalorder %s18, 0
    %p53 = por %p51, %p52
    %p54 = scmp.ne.s32.totalorder %s40, %s41
    %p55 = scmp.eq.s32.totalorder %s19, 3
    %p56 = por %p54, %p55
    %p58 = scmp.ne.s32.totalorder %s41, %s57
    %p59 = scmp.eq.s32.totalorder %s19, 0
    %p60 = por %p58, %p59
    %s62 = sadd.s32 %s61, 1
    %p65 = scmp.eq.s32.totalorder %s13, 3
    %p66 = scmp.ne.s32.totalorder %s61, %s63
    %p67 = scmp.eq.s32.totalorder %s13, 0
    %p68 = por %p66, %p67
    %p69 = scmp.ne.s32.totalorder %s61, %s63
    %p70 = scmp.eq.s32.totalorder %s18, 3
    %p71 = por %p69, %p70
    %p72 = scmp.ne.s32.totalorder %s63, %s64
    %p73 = scmp.eq.s32.totalorder %s18, 0
    %p74 = por %p72, %p73
    %p75 = scmp.ne.s32.totalorder %s63, %s64
    %p76 = scmp.eq.s32.totalorder %s19, 3
    %p77 = por %p75, %p76
    %p79 = scmp.ne.s32.totalorder %s64, %s78
    %p80 = scmp.eq.s32.totalorder %s19, 0
    %p81 = por %p79, %p80
    %s83 = sadd.s32 %s82, 1
    %p86 = scmp.eq.s32.totalorder %s13, 3
    %p87 = scmp.ne.s32.totalorder %s82, %s84
    %p88 = scmp.eq.s32.totalorder %s13, 0
    %p89 = por %p87, %p88
    %p90 = scmp.ne.s32.totalorder %s82, %s84
    %p91 = scmp.eq.s32.totalorder %s18, 3
    %p92 = por %p90, %p91
    %p93 = scmp.ne.s32.totalorder %s84, %s85
    %p94 = scmp.eq.s32.totalorder %s18, 0
    %p95 = por %p93, %p94
    %p96 = scmp.ne.s32.totalorder %s84, %s85
    %p97 = scmp.eq.s32.totalorder %s19, 3
    %p98 = por %p96, %p97
    %p100 = scmp.ne.s32.totalorder %s85, %s99
    %p101 = scmp.eq.s32.totalorder %s19, 0
    %p102 = por %p100, %p101
    %s104 = sadd.s32 %s103, 1
    %p107 = scmp.eq.s32.totalorder %s13, 3
    %p108 = scmp.ne.s32.totalorder %s103, %s105
    %p109 = scmp.eq.s32.totalorder %s13, 0
    %p110 = por %p108, %p109
    %p111 = scmp.ne.s32.totalorder %s103, %s105
    %p112 = scmp.eq.s32.totalorder %s18, 3
    %p113 = por %p111, %p112
    %p114 = scmp.ne.s32.totalorder %s105, %s106
    %p115 = scmp.eq.s32.totalorder %s18, 0
    %p116 = por %p114, %p115
    %p117 = scmp.ne.s32.totalorder %s105, %s106
    %p118 = scmp.eq.s32.totalorder %s19, 3
    %p119 = por %p117, %p118
    %p121 = scmp.ne.s32.totalorder %s106, %s120
    %p122 = scmp.eq.s32.totalorder %s19, 0
    %p123 = por %p121, %p122
    %s124 = sadd.s32 %s20, %s21
    %s125 = sadd.s32 %s32, %s28
    %s126 = ssub.s32 %s124, %s125
    %p127 = scmp.eq.s32.totalorder %s126, 0
    %s129 = sadd.s32 %s128, 1
    %s130 = scalar_select %p127, %s128, %s129
    %p133 = pneg %p127
    %p134 = scmp.eq.s32.totalorder %s13, 3
    %p135 = por %p133, %p134
    %p136 = scmp.ne.s32.totalorder %s128, %s131
    %p137 = scmp.eq.s32.totalorder %s13, 0
    %p138 = por %p136, %p137
    %p139 = scmp.ne.s32.totalorder %s128, %s131
    %p140 = scmp.eq.s32.totalorder %s18, 3
    %p141 = por %p139, %p140
    %p142 = scmp.ne.s32.totalorder %s131, %s132
    %p143 = scmp.eq.s32.totalorder %s18, 0
    %p144 = por %p142, %p143
    %p145 = scmp.ne.s32.totalorder %s131, %s132
    %p146 = scmp.eq.s32.totalorder %s19, 3
    %p147 = por %p145, %p146
    %p149 = scmp.ne.s32.totalorder %s132, %s148
    %p150 = scmp.eq.s32.totalorder %s19, 0
    %p151 = por %p149, %p150
    %s152 = ssub.s32 %s20, %s32
    %p153 = scmp.eq.s32.totalorder %s152, 0
    %s155 = sadd.s32 %s154, 1
    %s156 = scalar_select %p153, %s154, %s155
    %p159 = pneg %p153
    %p160 = scmp.eq.s32.totalorder %s13, 3
    %p161 = por %p159, %p160
    %p162 = scmp.ne.s32.totalorder %s154, %s157
    %p163 = scmp.eq.s32.totalorder %s13, 0
    %p164 = por %p162, %p163
    %p165 = scmp.ne.s32.totalorder %s154, %s157
    %p166 = scmp.eq.s32.totalorder %s18, 3
    %p167 = por %p165, %p166
    %p168 = scmp.ne.s32.totalorder %s157, %s158
    %p169 = scmp.eq.s32.totalorder %s18, 0
    %p170 = por %p168, %p169
    %p171 = scmp.ne.s32.totalorder %s157, %s158
    %p172 = scmp.eq.s32.totalorder %s19, 3
    %p173 = por %p171, %p172
    %p175 = scmp.ne.s32.totalorder %s158, %s174
    %p176 = scmp.eq.s32.totalorder %s19, 0
    %p177 = por %p175, %p176
    %s178 = ssub.s32 %s20, %s32
    %p179 = scmp.eq.s32.totalorder %s178, 0
    %s181 = sadd.s32 %s180, 1
    %s182 = scalar_select %p179, %s180, %s181
    %p185 = pneg %p179
    %p186 = scmp.eq.s32.totalorder %s13, 3
    %p187 = por %p185, %p186
    %p188 = scmp.ne.s32.totalorder %s180, %s183
    %p189 = scmp.eq.s32.totalorder %s13, 0
    %p190 = por %p188, %p189
    %p191 = scmp.ne.s32.totalorder %s180, %s183
    %p192 = scmp.eq.s32.totalorder %s18, 3
    %p193 = por %p191, %p192
    %p194 = scmp.ne.s32.totalorder %s183, %s184
    %p195 = scmp.eq.s32.totalorder %s18, 0
    %p196 = por %p194, %p195
    %p197 = scmp.ne.s32.totalorder %s183, %s184
    %p198 = scmp.eq.s32.totalorder %s19, 3
    %p199 = por %p197, %p198
    %p201 = scmp.ne.s32.totalorder %s184, %s200
    %p202 = scmp.eq.s32.totalorder %s19, 0
    %p203 = por %p201, %p202
    %p204 = scmp.le.s32.totalorder 1, %s13
    %p205 = scmp.lt.s32.totalorder %s13, 5
    %p206 = pnand %p204, %p205
    %p207 = pneg %p206
    // Predicated region
    $region9: #{encoder_forward.5} parent=5 // pred_check
      _
    $region10: #{encoder_forward.5} parent=5 // pred_check_branch
      %209 = sbr.rel (%p206) target = $region12
    $region11: #{encoder_forward.5} parent=5 // pred_region
      %s210 = ssub.s32 %s13, 1
      // Predicated region
      $region13: #{encoder_forward.5} parent=11 // pred_check
        %p211 = pneg %p74
      $region14: #{encoder_forward.5} parent=11 // pred_check_branch
        %213 = sbr.rel (%p211) target = $region16
      $region15: #{encoder_forward.5} parent=11 // pred_region
        _
      $region16: #{encoder_forward.5} parent=11 // pred_fallthru
        _
      // Predicated region
      $region17: #{encoder_forward.5} parent=11 // pred_check
        %p214 = pneg %p95
      $region18: #{encoder_forward.5} parent=11 // pred_check_branch
        %216 = sbr.rel (%p214) target = $region20
      $region19: #{encoder_forward.5} parent=11 // pred_region
        _
      $region20: #{encoder_forward.5} parent=11 // pred_fallthru
        _
      // Predicated region
      $region21: #{encoder_forward.5} parent=11 // pred_check
        %p217 = pneg %p116
      $region22: #{encoder_forward.5} parent=11 // pred_check_branch
        %219 = sbr.rel (%p217) target = $region24
      $region23: #{encoder_forward.5} parent=11 // pred_region
        _
      $region24: #{encoder_forward.5} parent=11 // pred_fallthru
        _
    $region12: #{encoder_forward.5} parent=5 // pred_fallthru
      _
    %p220 = scmp.lt.s32.totalorder %s13, 4
    // Predicated region
    $region25: #{encoder_forward.5} parent=5 // pred_check
      %p221 = pneg %p220
    $region26: #{encoder_forward.5} parent=5 // pred_check_branch
      %223 = sbr.rel (%p221) target = $region28
    $region27: #{encoder_forward.5} parent=5 // pred_region
      // Predicated region
      $region29: #{encoder_forward.5} parent=27 // pred_check
        %p224 = pneg %p47
      $region30: #{encoder_forward.5} parent=27 // pred_check_branch
        %226 = sbr.rel (%p224) target = $region32
      $region31: #{encoder_forward.5} parent=27 // pred_region
        %s227 = sadd.s32 %s20, %s21
        %s228 = smul.u32 64, %s227
        %p229 = scmp.lt.s32.totalorder %s228, 255
        %s230 = scalar_select %p229, %s228, 255
        %s231 = smul.addr %s230, 4
        %s232 = scalar_lea.vmem %s0, %s231
        %s233 = sadd.s32 %s20, %s21
        %s234 = smul.u32 64, %s233
      $region32: #{encoder_forward.5} parent=27 // pred_fallthru
        _
    $region28: #{encoder_forward.5} parent=5 // pred_fallthru
      _
    %p235 = scmp.le.s32.totalorder 1, %s13
    %p236 = scmp.lt.s32.totalorder %s13, 5
    %p237 = pnand %p235, %p236
    %p238 = pneg %p237
    // Predicated region
    $region33: #{encoder_forward.5} parent=5 // pred_check
      _
    $region34: #{encoder_forward.5} parent=5 // pred_check_branch
      %240 = sbr.rel (%p237) target = $region36
    $region35: #{encoder_forward.5} parent=5 // pred_region
      %s241 = ssub.s32 %s13, 1
      %s242 = sadd.s32 %s22, %s23
      %s243 = smul.u32 64, %s242
      %p244 = scmp.lt.s32.totalorder %s243, 255
      %s245 = scalar_select %p244, %s243, 255
      %s246 = smul.addr %s245, 4
      %s247 = scalar_lea.vmem %s0, %s246
      %p248 = pneg %p53
      %p249 = pneg %p50
      %p250 = pneg %p74
      %p251 = pneg %p71
      %p252 = pneg %p95
      %p253 = pneg %p92
      %p254 = pneg %p116
      %p255 = pneg %p113
      %p256 = pneg %p144
      %p257 = pneg %p141
      %s258 = sadd.s32 %s22, %s23
      %s259 = smul.u32 64, %s258
      %p260 = scmp.lt.s32.totalorder %s259, 255
      %s261 = scalar_select %p260, %s259, 255
      %s262 = smul.addr %s261, 2
      %s263 = smul.addr %s262, 4
      %s264 = scalar_lea.vmem %s4, %s263
      %p265 = pneg %p170
      %p266 = pneg %p167
      %p267 = scmp.lt.s32.totalorder %s22, 3
      %s268 = scalar_select %p267, %s22, 3
      %s269 = smul.addr %s268, 2
      %s270 = scalar_lea.vmem %s5, %s269
      %p271 = pneg %p196
      %p272 = pneg %p193
      %p273 = scmp.lt.s32.totalorder %s22, 3
      %s274 = scalar_select %p273, %s22, 3
      %s275 = smul.addr %s274, 2
      %s276 = scalar_lea.vmem %s6, %s275
      %s277 = sadd.s32 %s22, %s23
      %s278 = smul.u32 64, %s277
      %p279 = scmp.lt.s32.totalorder %s278, 255
      %s280 = scalar_select %p279, %s278, 255
      %s281 = smul.addr %s280, 4
      %s282 = scalar_lea.vmem %s0, %s281
      %s283 = sadd.s32 %s22, %s23
      %s284 = smul.u32 64, %s283
      %s285 = sadd.s32 %s22, %s23
      %s286 = smul.u32 64, %s285
      %p287 = scmp.lt.s32.totalorder %s286, 255
      %s288 = scalar_select %p287, %s286, 255
      %s289 = smul.addr %s288, 2
      %s290 = smul.addr %s289, 4
      %s291 = scalar_lea.vmem %s4, %s290
      %s292 = sadd.s32 %s22, %s23
      %s293 = smul.u32 64, %s292
      %p294 = scmp.lt.s32.totalorder %s22, 3
      %s295 = scalar_select %p294, %s22, 3
      %s296 = smul.addr %s295, 2
      %s297 = scalar_lea.vmem %s5, %s296
      %p298 = scmp.lt.s32.totalorder %s22, 3
      %s299 = scalar_select %p298, %s22, 3
      %s300 = smul.addr %s299, 2
      %s301 = scalar_lea.vmem %s6, %s300
      %v303 = vld [vmem:[%s282] sm:$0xf]
      %v304 = vld [vmem:[%s282 + $0x4] sm:$0xf]
      %v305 = vld [vmem:[%s282 + $0x8] sm:$0xf]
      %v306 = vld [vmem:[%s282 + $0xc] sm:$0xf]
      %v307 = vld [vmem:[%s282 + $0x10] sm:$0xf]
      %v308 = vld [vmem:[%s282 + $0x14] sm:$0xf]
      %v309 = vld [vmem:[%s282 + $0x18] sm:$0xf]
      %v310 = vld [vmem:[%s282 + $0x1c] sm:$0xf]
      %v311 = vld [vmem:[%s282 + $0x20] sm:$0xf]
      %v312 = vld [vmem:[%s282 + $0x24] sm:$0xf]
      %v313 = vld [vmem:[%s282 + $0x28] sm:$0xf]
      %v314 = vld [vmem:[%s282 + $0x2c] sm:$0xf]
      %v315 = vld [vmem:[%s282 + $0x30] sm:$0xf]
      %v316 = vld [vmem:[%s282 + $0x34] sm:$0xf]
      %v317 = vld [vmem:[%s282 + $0x38] sm:$0xf]
      %v318 = vld [vmem:[%s282 + $0x3c] sm:$0xf]
      %v319 = vld [vmem:[%s282 + $0x40] sm:$0xf]
      %v320 = vld [vmem:[%s282 + $0x44] sm:$0xf]
      %v321 = vld [vmem:[%s282 + $0x48] sm:$0xf]
      %v322 = vld [vmem:[%s282 + $0x4c] sm:$0xf]
      %v323 = vld [vmem:[%s282 + $0x50] sm:$0xf]
      %v324 = vld [vmem:[%s282 + $0x54] sm:$0xf]
      %v325 = vld [vmem:[%s282 + $0x58] sm:$0xf]
      %v326 = vld [vmem:[%s282 + $0x5c] sm:$0xf]
      %v327 = vld [vmem:[%s282 + $0x60] sm:$0xf]
      %v328 = vld [vmem:[%s282 + $0x64] sm:$0xf]
      %v329 = vld [vmem:[%s282 + $0x68] sm:$0xf]
      %v330 = vld [vmem:[%s282 + $0x6c] sm:$0xf]
      %v331 = vld [vmem:[%s282 + $0x70] sm:$0xf]
      %v332 = vld [vmem:[%s282 + $0x74] sm:$0xf]
      %v333 = vld [vmem:[%s282 + $0x78] sm:$0xf]
      %v334 = vld [vmem:[%s282 + $0x7c] sm:$0xf]
      %v335 = vld [vmem:[%s282 + $0x80] sm:$0xf]
      %v336 = vld [vmem:[%s282 + $0x84] sm:$0xf]
      %v337 = vld [vmem:[%s282 + $0x88] sm:$0xf]
      %v338 = vld [vmem:[%s282 + $0x8c] sm:$0xf]
      %v339 = vld [vmem:[%s282 + $0x90] sm:$0xf]
      %v340 = vld [vmem:[%s282 + $0x94] sm:$0xf]
      %v341 = vld [vmem:[%s282 + $0x98] sm:$0xf]
      %v342 = vld [vmem:[%s282 + $0x9c] sm:$0xf]
      %v343 = vld [vmem:[%s282 + $0xa0] sm:$0xf]
      %v344 = vld [vmem:[%s282 + $0xa4] sm:$0xf]
      %v345 = vld [vmem:[%s282 + $0xa8] sm:$0xf]
      %v346 = vld [vmem:[%s282 + $0xac] sm:$0xf]
      %v347 = vld [vmem:[%s282 + $0xb0] sm:$0xf]
      %v348 = vld [vmem:[%s282 + $0xb4] sm:$0xf]
      %v349 = vld [vmem:[%s282 + $0xb8] sm:$0xf]
      %v350 = vld [vmem:[%s282 + $0xbc] sm:$0xf]
      %v351 = vld [vmem:[%s282 + $0xc0] sm:$0xf]
      %v352 = vld [vmem:[%s282 + $0xc4] sm:$0xf]
      %v353 = vld [vmem:[%s282 + $0xc8] sm:$0xf]
      %v354 = vld [vmem:[%s282 + $0xcc] sm:$0xf]
      %v355 = vld [vmem:[%s282 + $0xd0] sm:$0xf]
      %v356 = vld [vmem:[%s282 + $0xd4] sm:$0xf]
      %v357 = vld [vmem:[%s282 + $0xd8] sm:$0xf]
      %v358 = vld [vmem:[%s282 + $0xdc] sm:$0xf]
      %v359 = vld [vmem:[%s282 + $0xe0] sm:$0xf]
      %v360 = vld [vmem:[%s282 + $0xe4] sm:$0xf]
      %v361 = vld [vmem:[%s282 + $0xe8] sm:$0xf]
      %v362 = vld [vmem:[%s282 + $0xec] sm:$0xf]
      %v363 = vld [vmem:[%s282 + $0xf0] sm:$0xf]
      %v364 = vld [vmem:[%s282 + $0xf4] sm:$0xf]
      %v365 = vld [vmem:[%s282 + $0xf8] sm:$0xf]
      %v366 = vld [vmem:[%s282 + $0xfc] sm:$0xf]
      %v367 = vunpack.c.l.bf16 %v303
      %v368 = vunpack.c.l.bf16 %v304
      %v369 = vunpack.c.l.bf16 %v305
      %v370 = vunpack.c.l.bf16 %v306
      %v371 = vunpack.c.l.bf16 %v307
      %v372 = vunpack.c.l.bf16 %v308
      %v373 = vunpack.c.l.bf16 %v309
      %v374 = vunpack.c.l.bf16 %v310
      %v375 = vunpack.c.l.bf16 %v311
      %v376 = vunpack.c.l.bf16 %v312
      %v377 = vunpack.c.l.bf16 %v313
      %v378 = vunpack.c.l.bf16 %v314
      %v379 = vunpack.c.l.bf16 %v315
      %v380 = vunpack.c.l.bf16 %v316
      %v381 = vunpack.c.l.bf16 %v317
      %v382 = vunpack.c.l.bf16 %v318
      %v383 = vunpack.c.l.bf16 %v319
      %v384 = vunpack.c.l.bf16 %v320
      %v385 = vunpack.c.l.bf16 %v321
      %v386 = vunpack.c.l.bf16 %v322
      %v387 = vunpack.c.l.bf16 %v323
      %v388 = vunpack.c.l.bf16 %v324
      %v389 = vunpack.c.l.bf16 %v325
      %v390 = vunpack.c.l.bf16 %v326
      %v391 = vunpack.c.l.bf16 %v327
      %v392 = vunpack.c.l.bf16 %v328
      %v393 = vunpack.c.l.bf16 %v329
      %v394 = vunpack.c.l.bf16 %v330
      %v395 = vunpack.c.l.bf16 %v331
      %v396 = vunpack.c.l.bf16 %v332
      %v397 = vunpack.c.l.bf16 %v333
      %v398 = vunpack.c.l.bf16 %v334
      %v399 = vunpack.c.l.bf16 %v335
      %v400 = vunpack.c.l.bf16 %v336
      %v401 = vunpack.c.l.bf16 %v337
      %v402 = vunpack.c.l.bf16 %v338
      %v403 = vunpack.c.l.bf16 %v339
      %v404 = vunpack.c.l.bf16 %v340
      %v405 = vunpack.c.l.bf16 %v341
      %v406 = vunpack.c.l.bf16 %v342
      %v407 = vunpack.c.l.bf16 %v343
      %v408 = vunpack.c.l.bf16 %v344
      %v409 = vunpack.c.l.bf16 %v345
      %v410 = vunpack.c.l.bf16 %v346
      %v411 = vunpack.c.l.bf16 %v347
      %v412 = vunpack.c.l.bf16 %v348
      %v413 = vunpack.c.l.bf16 %v349
      %v414 = vunpack.c.l.bf16 %v350
      %v415 = vunpack.c.l.bf16 %v351
      %v416 = vunpack.c.l.bf16 %v352
      %v417 = vunpack.c.l.bf16 %v353
      %v418 = vunpack.c.l.bf16 %v354
      %v419 = vunpack.c.l.bf16 %v355
      %v420 = vunpack.c.l.bf16 %v356
      %v421 = vunpack.c.l.bf16 %v357
      %v422 = vunpack.c.l.bf16 %v358
      %v423 = vunpack.c.l.bf16 %v359
      %v424 = vunpack.c.l.bf16 %v360
      %v425 = vunpack.c.l.bf16 %v361
      %v426 = vunpack.c.l.bf16 %v362
      %v427 = vunpack.c.l.bf16 %v363
      %v428 = vunpack.c.l.bf16 %v364
      %v429 = vunpack.c.l.bf16 %v365
      %v430 = vunpack.c.l.bf16 %v366
      %v431 = vld [vmem:[%s1] sm:$0x1]
      %v433 = vlaneseq
      %v434 = vshrl.u32 %v433, 7
      %v435 = vsub.s32 0, %v434
      %v436 = vrot.slane %v431, %v435
      %v438 = vmul.f32 %v367, %v436
      %v439 = vmul.f32 %v368, %v436
      %v440 = vmul.f32 %v369, %v436
      %v441 = vmul.f32 %v370, %v436
      %v442 = vmul.f32 %v371, %v436
      %v443 = vmul.f32 %v372, %v436
      %v444 = vmul.f32 %v373, %v436
      %v445 = vmul.f32 %v374, %v436
      %v446 = vmul.f32 %v375, %v436
      %v447 = vmul.f32 %v376, %v436
      %v448 = vmul.f32 %v377, %v436
      %v449 = vmul.f32 %v378, %v436
      %v450 = vmul.f32 %v379, %v436
      %v451 = vmul.f32 %v380, %v436
      %v452 = vmul.f32 %v381, %v436
      %v453 = vmul.f32 %v382, %v436
      %v454 = vmul.f32 %v383, %v436
      %v455 = vmul.f32 %v384, %v436
      %v456 = vmul.f32 %v385, %v436
      %v457 = vmul.f32 %v386, %v436
      %v458 = vmul.f32 %v387, %v436
      %v459 = vmul.f32 %v388, %v436
      %v460 = vmul.f32 %v389, %v436
      %v461 = vmul.f32 %v390, %v436
      %v462 = vmul.f32 %v391, %v436
      %v463 = vmul.f32 %v392, %v436
      %v464 = vmul.f32 %v393, %v436
      %v465 = vmul.f32 %v394, %v436
      %v466 = vmul.f32 %v395, %v436
      %v467 = vmul.f32 %v396, %v436
      %v468 = vmul.f32 %v397, %v436
      %v469 = vmul.f32 %v398, %v436
      %v470 = vmul.f32 %v399, %v436
      %v471 = vmul.f32 %v400, %v436
      %v472 = vmul.f32 %v401, %v436
      %v473 = vmul.f32 %v402, %v436
      %v474 = vmul.f32 %v403, %v436
      %v475 = vmul.f32 %v404, %v436
      %v476 = vmul.f32 %v405, %v436
      %v477 = vmul.f32 %v406, %v436
      %v478 = vmul.f32 %v407, %v436
      %v479 = vmul.f32 %v408, %v436
      %v480 = vmul.f32 %v409, %v436
      %v481 = vmul.f32 %v410, %v436
      %v482 = vmul.f32 %v411, %v436
      %v483 = vmul.f32 %v412, %v436
      %v484 = vmul.f32 %v413, %v436
      %v485 = vmul.f32 %v414, %v436
      %v486 = vmul.f32 %v415, %v436
      %v487 = vmul.f32 %v416, %v436
      %v488 = vmul.f32 %v417, %v436
      %v489 = vmul.f32 %v418, %v436
      %v490 = vmul.f32 %v419, %v436
      %v491 = vmul.f32 %v420, %v436
      %v492 = vmul.f32 %v421, %v436
      %v493 = vmul.f32 %v422, %v436
      %v494 = vmul.f32 %v423, %v436
      %v495 = vmul.f32 %v424, %v436
      %v496 = vmul.f32 %v425, %v436
      %v497 = vmul.f32 %v426, %v436
      %v498 = vmul.f32 %v427, %v436
      %v499 = vmul.f32 %v428, %v436
      %v500 = vmul.f32 %v429, %v436
      %v501 = vmul.f32 %v430, %v436
      %v502 = vld [vmem:[%s2] sm:$0x1]
      %v504 = vlaneseq
      %v505 = vshrl.u32 %v504, 7
      %v506 = vsub.s32 0, %v505
      %v507 = vrot.slane %v502, %v506
      %v509 = vadd.f32 %v438, %v507
      %v510 = vadd.f32 %v439, %v507
      %v511 = vadd.f32 %v440, %v507
      %v512 = vadd.f32 %v441, %v507
      %v513 = vadd.f32 %v442, %v507
      %v514 = vadd.f32 %v443, %v507
      %v515 = vadd.f32 %v444, %v507
      %v516 = vadd.f32 %v445, %v507
      %v517 = vadd.f32 %v446, %v507
      %v518 = vadd.f32 %v447, %v507
      %v519 = vadd.f32 %v448, %v507
      %v520 = vadd.f32 %v449, %v507
      %v521 = vadd.f32 %v450, %v507
      %v522 = vadd.f32 %v451, %v507
      %v523 = vadd.f32 %v452, %v507
      %v524 = vadd.f32 %v453, %v507
      %v525 = vadd.f32 %v454, %v507
      %v526 = vadd.f32 %v455, %v507
      %v527 = vadd.f32 %v456, %v507
      %v528 = vadd.f32 %v457, %v507
      %v529 = vadd.f32 %v458, %v507
      %v530 = vadd.f32 %v459, %v507
      %v531 = vadd.f32 %v460, %v507
      %v532 = vadd.f32 %v461, %v507
      %v533 = vadd.f32 %v462, %v507
      %v534 = vadd.f32 %v463, %v507
      %v535 = vadd.f32 %v464, %v507
      %v536 = vadd.f32 %v465, %v507
      %v537 = vadd.f32 %v466, %v507
      %v538 = vadd.f32 %v467, %v507
      %v539 = vadd.f32 %v468, %v507
      %v540 = vadd.f32 %v469, %v507
      %v541 = vadd.f32 %v470, %v507
      %v542 = vadd.f32 %v471, %v507
      %v543 = vadd.f32 %v472, %v507
      %v544 = vadd.f32 %v473, %v507
      %v545 = vadd.f32 %v474, %v507
      %v546 = vadd.f32 %v475, %v507
      %v547 = vadd.f32 %v476, %v507
      %v548 = vadd.f32 %v477, %v507
      %v549 = vadd.f32 %v478, %v507
      %v550 = vadd.f32 %v479, %v507
      %v551 = vadd.f32 %v480, %v507
      %v552 = vadd.f32 %v481, %v507
      %v553 = vadd.f32 %v482, %v507
      %v554 = vadd.f32 %v483, %v507
      %v555 = vadd.f32 %v484, %v507
      %v556 = vadd.f32 %v485, %v507
      %v557 = vadd.f32 %v486, %v507
      %v558 = vadd.f32 %v487, %v507
      %v559 = vadd.f32 %v488, %v507
      %v560 = vadd.f32 %v489, %v507
      %v561 = vadd.f32 %v490, %v507
      %v562 = vadd.f32 %v491, %v507
      %v563 = vadd.f32 %v492, %v507
      %v564 = vadd.f32 %v493, %v507
      %v565 = vadd.f32 %v494, %v507
      %v566 = vadd.f32 %v495, %v507
      %v567 = vadd.f32 %v496, %v507
      %v568 = vadd.f32 %v497, %v507
      %v569 = vadd.f32 %v498, %v507
      %v570 = vadd.f32 %v499, %v507
      %v571 = vadd.f32 %v500, %v507
      %v572 = vadd.f32 %v501, %v507
      %v573 = vmax.f32 %v509, 0.0
      %v574 = vmax.f32 %v510, 0.0
      %v575 = vmax.f32 %v511, 0.0
      %v576 = vmax.f32 %v512, 0.0
      %v577 = vmax.f32 %v513, 0.0
      %v578 = vmax.f32 %v514, 0.0
      %v579 = vmax.f32 %v515, 0.0
      %v580 = vmax.f32 %v516, 0.0
      %v581 = vmax.f32 %v517, 0.0
      %v582 = vmax.f32 %v518, 0.0
      %v583 = vmax.f32 %v519, 0.0
      %v584 = vmax.f32 %v520, 0.0
      %v585 = vmax.f32 %v521, 0.0
      %v586 = vmax.f32 %v522, 0.0
      %v587 = vmax.f32 %v523, 0.0
      %v588 = vmax.f32 %v524, 0.0
      %v589 = vmax.f32 %v525, 0.0
      %v590 = vmax.f32 %v526, 0.0
      %v591 = vmax.f32 %v527, 0.0
      %v592 = vmax.f32 %v528, 0.0
      %v593 = vmax.f32 %v529, 0.0
      %v594 = vmax.f32 %v530, 0.0
      %v595 = vmax.f32 %v531, 0.0
      %v596 = vmax.f32 %v532, 0.0
      %v597 = vmax.f32 %v533, 0.0
      %v598 = vmax.f32 %v534, 0.0
      %v599 = vmax.f32 %v535, 0.0
      %v600 = vmax.f32 %v536, 0.0
      %v601 = vmax.f32 %v537, 0.0
      %v602 = vmax.f32 %v538, 0.0
      %v603 = vmax.f32 %v539, 0.0
      %v604 = vmax.f32 %v540, 0.0
      %v605 = vmax.f32 %v541, 0.0
      %v606 = vmax.f32 %v542, 0.0
      %v607 = vmax.f32 %v543, 0.0
      %v608 = vmax.f32 %v544, 0.0
      %v609 = vmax.f32 %v545, 0.0
      %v610 = vmax.f32 %v546, 0.0
      %v611 = vmax.f32 %v547, 0.0
      %v612 = vmax.f32 %v548, 0.0
      %v613 = vmax.f32 %v549, 0.0
      %v614 = vmax.f32 %v550, 0.0
      %v615 = vmax.f32 %v551, 0.0
      %v616 = vmax.f32 %v552, 0.0
      %v617 = vmax.f32 %v553, 0.0
      %v618 = vmax.f32 %v554, 0.0
      %v619 = vmax.f32 %v555, 0.0
      %v620 = vmax.f32 %v556, 0.0
      %v621 = vmax.f32 %v557, 0.0
      %v622 = vmax.f32 %v558, 0.0
      %v623 = vmax.f32 %v559, 0.0
      %v624 = vmax.f32 %v560, 0.0
      %v625 = vmax.f32 %v561, 0.0
      %v626 = vmax.f32 %v562, 0.0
      %v627 = vmax.f32 %v563, 0.0
      %v628 = vmax.f32 %v564, 0.0
      %v629 = vmax.f32 %v565, 0.0
      %v630 = vmax.f32 %v566, 0.0
      %v631 = vmax.f32 %v567, 0.0
      %v632 = vmax.f32 %v568, 0.0
      %v633 = vmax.f32 %v569, 0.0
      %v634 = vmax.f32 %v570, 0.0
      %v635 = vmax.f32 %v571, 0.0
      %v636 = vmax.f32 %v572, 0.0
      %v637 = vpack.c.bf16 %v574, %v573
      %v638 = vpack.c.bf16 %v576, %v575
      %v639 = vpack.c.bf16 %v578, %v577
      %v640 = vpack.c.bf16 %v580, %v579
      %v641 = vpack.c.bf16 %v582, %v581
      %v642 = vpack.c.bf16 %v584, %v583
      %v643 = vpack.c.bf16 %v586, %v585
      %v644 = vpack.c.bf16 %v588, %v587
      %v645 = vpack.c.bf16 %v590, %v589
      %v646 = vpack.c.bf16 %v592, %v591
      %v647 = vpack.c.bf16 %v594, %v593
      %v648 = vpack.c.bf16 %v596, %v595
      %v649 = vpack.c.bf16 %v598, %v597
      %v650 = vpack.c.bf16 %v600, %v599
      %v651 = vpack.c.bf16 %v602, %v601
      %v652 = vpack.c.bf16 %v604, %v603
      %v653 = vpack.c.bf16 %v606, %v605
      %v654 = vpack.c.bf16 %v608, %v607
      %v655 = vpack.c.bf16 %v610, %v609
      %v656 = vpack.c.bf16 %v612, %v611
      %v657 = vpack.c.bf16 %v614, %v613
      %v658 = vpack.c.bf16 %v616, %v615
      %v659 = vpack.c.bf16 %v618, %v617
      %v660 = vpack.c.bf16 %v620, %v619
      %v661 = vpack.c.bf16 %v622, %v621
      %v662 = vpack.c.bf16 %v624, %v623
      %v663 = vpack.c.bf16 %v626, %v625
      %v664 = vpack.c.bf16 %v628, %v627
      %v665 = vpack.c.bf16 %v630, %v629
      %v666 = vpack.c.bf16 %v632, %v631
      %v667 = vpack.c.bf16 %v634, %v633
      %v668 = vpack.c.bf16 %v636, %v635
      %p669 = scmp.eq.s32.totalorder %s23, 0
      // Predicated region
      $region37: #{encoder_forward.5} parent=35 // pred_check
        %p670 = pneg %p669
      $region38: #{encoder_forward.5} parent=35 // pred_check_branch
        %672 = sbr.rel (%p670) target = $region40
      $region39: #{encoder_forward.5} parent=35 // pred_region
        %v673 = vlaneseq
        %vm674 = vcmp.ge.s32.totalorder %v673, 0
        %vm675 = vcmp.lt.s32.totalorder %v673, 256
        %vm676 = vmand %vm674, %vm675
        %677 = vst.msk [vmem:[%s297] sm:$0x3] %vm676, 0.0
        %678 = vst.msk [vmem:[%s301] sm:$0x3] %vm676, 0.0
      $region40: #{encoder_forward.5} parent=35 // pred_fallthru
        _
      %v679 = vld [vmem:[%s3] sm:$0xff]
      %v680 = vld [vmem:[%s3 + $0x8] sm:$0xff]
      %v681 = vld [vmem:[%s3 + $0x10] sm:$0xff]
      %v682 = vld [vmem:[%s3 + $0x18] sm:$0xff]
      %v683 = vld [vmem:[%s3 + $0x20] sm:$0xff]
      %v684 = vld [vmem:[%s3 + $0x28] sm:$0xff]
      %v685 = vld [vmem:[%s3 + $0x30] sm:$0xff]
      %v686 = vld [vmem:[%s3 + $0x38] sm:$0xff]
      %v687 = vld [vmem:[%s3 + $0x40] sm:$0xff]
      %v688 = vld [vmem:[%s3 + $0x48] sm:$0xff]
      %v689 = vld [vmem:[%s3 + $0x50] sm:$0xff]
      %v690 = vld [vmem:[%s3 + $0x58] sm:$0xff]
      %v691 = vld [vmem:[%s3 + $0x60] sm:$0xff]
      %v692 = vld [vmem:[%s3 + $0x68] sm:$0xff]
      %v693 = vld [vmem:[%s3 + $0x70] sm:$0xff]
      %v694 = vld [vmem:[%s3 + $0x78] sm:$0xff]
      %v711 = vunpack.c.l.b16 %v679
      %v712 = vunpack.c.h.b16 %v679
      %v713 = vunpack.c.l.b16 %v680
      %v714 = vunpack.c.h.b16 %v680
      %v715 = vunpack.c.l.b16 %v681
      %v716 = vunpack.c.h.b16 %v681
      %v717 = vunpack.c.l.b16 %v682
      %v718 = vunpack.c.h.b16 %v682
      %v719 = vunpack.c.l.b16 %v683
      %v720 = vunpack.c.h.b16 %v683
      %v721 = vunpack.c.l.b16 %v684
      %v722 = vunpack.c.h.b16 %v684
      %v723 = vunpack.c.l.b16 %v685
      %v724 = vunpack.c.h.b16 %v685
      %v725 = vunpack.c.l.b16 %v686
      %v726 = vunpack.c.h.b16 %v686
      %v727 = vunpack.c.l.b16 %v687
      %v728 = vunpack.c.h.b16 %v687
      %v729 = vunpack.c.l.b16 %v688
      %v730 = vunpack.c.h.b16 %v688
      %v731 = vunpack.c.l.b16 %v689
      %v732 = vunpack.c.h.b16 %v689
      %v733 = vunpack.c.l.b16 %v690
      %v734 = vunpack.c.h.b16 %v690
      %v735 = vunpack.c.l.b16 %v691
      %v736 = vunpack.c.h.b16 %v691
      %v737 = vunpack.c.l.b16 %v692
      %v738 = vunpack.c.h.b16 %v692
      %v739 = vunpack.c.l.b16 %v693
      %v740 = vunpack.c.h.b16 %v693
      %v741 = vunpack.c.l.b16 %v694
      %v742 = vunpack.c.h.b16 %v694
      %v743 = vpack.c.b16 %v713, %v711
      %v744 = vpack.c.b16 %v714, %v712
      %v745 = vpack.c.b16 %v717, %v715
      %v746 = vpack.c.b16 %v718, %v716
      %v747 = vpack.c.b16 %v721, %v719
      %v748 = vpack.c.b16 %v722, %v720
      %v749 = vpack.c.b16 %v725, %v723
      %v750 = vpack.c.b16 %v726, %v724
      %v751 = vpack.c.b16 %v729, %v727
      %v752 = vpack.c.b16 %v730, %v728
      %v753 = vpack.c.b16 %v733, %v731
      %v754 = vpack.c.b16 %v734, %v732
      %v755 = vpack.c.b16 %v737, %v735
      %v756 = vpack.c.b16 %v738, %v736
      %v757 = vpack.c.b16 %v741, %v739
      %v758 = vpack.c.b16 %v742, %v740
      %775 = vmatprep.subr.bf16.mxu0 %v744
      %776 = vmatpush1.bf16.msra.mxu0 %v743
      %777 = vmatprep.subr.bf16.mxu0 %v746
      %778 = vmatpush1.bf16.msra.mxu0 %v745
      %779 = vmatprep.subr.bf16.mxu0 %v748
      %780 = vmatpush1.bf16.msra.mxu0 %v747
      %781 = vmatprep.subr.bf16.mxu0 %v750
      %782 = vmatpush1.bf16.msra.mxu0 %v749
      %783 = vmatprep.subr.bf16.mxu0 %v752
      %784 = vmatpush1.bf16.msra.mxu0 %v751
      %785 = vmatprep.subr.bf16.mxu0 %v754
      %786 = vmatpush1.bf16.msra.mxu0 %v753
      %787 = vmatprep.subr.bf16.mxu0 %v756
      %788 = vmatpush1.bf16.msra.mxu0 %v755
      %789 = vmatprep.subr.bf16.mxu0 %v758
      %790 = vmatpush1.bf16.msra.mxu0 %v757
      %791 = vmatprep.subr.bf16.mxu0 0
      %792 = vmatpush1.bf16.msra.mxu0 0
      %793 = vmatprep.subr.bf16.mxu0 0
      %794 = vmatpush1.bf16.msra.mxu0 0
      %795 = vmatprep.subr.bf16.mxu0 0
      %796 = vmatpush1.bf16.msra.mxu0 0
      %797 = vmatprep.subr.bf16.mxu0 0
      %798 = vmatpush1.bf16.msra.mxu0 0
      %799 = vmatprep.subr.bf16.mxu0 0
      %800 = vmatpush1.bf16.msra.mxu0 0
      %801 = vmatprep.subr.bf16.mxu0 0
      %802 = vmatpush1.bf16.msra.mxu0 0
      %803 = vmatprep.subr.bf16.mxu0 0
      %804 = vmatpush1.bf16.msra.mxu0 0
      %805 = vmatprep.subr.bf16.mxu0 0
      %806 = vmatpush1.bf16.msra.mxu0 0
      %807 = vmatprep.mubr.bf16.mxu0 0
      %808 = vmatmul.mubr.bf16.gmra.mrb[0].mxu0 %v637
      %v809 = vpop.f32.mrb[0].mxu0
      %v810 = vadd.f32 0.0, %v809
      %v811 = vpop.f32.mrb[0].mxu0
      %v812 = vadd.f32 0.0, %v811
      %v813 = vpop.f32.mrb[0].mxu0
      %v814 = vadd.f32 0.0, %v813
      %v815 = vpop.f32.mrb[0].mxu0
      %v816 = vadd.f32 0.0, %v815
      %817 = vmatprep.mubr.bf16.mxu0 0
      %818 = vmatmul.mubr.bf16.gmra.mrb[0].mxu0 %v638
      %v819 = vpop.f32.mrb[0].mxu0
      %v820 = vadd.f32 0.0, %v819
      %v821 = vpop.f32.mrb[0].mxu0
      %v822 = vadd.f32 0.0, %v821
      %v823 = vpop.f32.mrb[0].mxu0
      %v824 = vadd.f32 0.0, %v823
      %v825 = vpop.f32.mrb[0].mxu0
      %v826 = vadd.f32 0.0, %v825
      %827 = vmatprep.mubr.bf16.mxu0 0
      %828 = vmatmul.mubr.bf16.gmra.mrb[0].mxu0 %v639
      %v829 = vpop.f32.mrb[0].mxu0
      %v830 = vadd.f32 0.0, %v829
      %v831 = vpop.f32.mrb[0].mxu0
      %v832 = vadd.f32 0.0, %v831
      %v833 = vpop.f32.mrb[0].mxu0
      %v834 = vadd.f32 0.0, %v833
      %v835 = vpop.f32.mrb[0].mxu0
      %v836 = vadd.f32 0.0, %v835
      %837 = vmatprep.mubr.bf16.mxu0 0
      %838 = vmatmul.mubr.bf16.gmra.mrb[0].mxu0 %v640
      %v839 = vpop.f32.mrb[0].mxu0
      %v840 = vadd.f32 0.0, %v839
      %v841 = vpop.f32.mrb[0].mxu0
      %v842 = vadd.f32 0.0, %v841
      %v843 = vpop.f32.mrb[0].mxu0
      %v844 = vadd.f32 0.0, %v843
      %v845 = vpop.f32.mrb[0].mxu0
      %v846 = vadd.f32 0.0, %v845
      %847 = vmatprep.mubr.bf16.mxu0 0
      %848 = vmatmul.mubr.bf16.gmra.mrb[0].mxu0 %v641
      %v849 = vpop.f32.mrb[0].mxu0
      %v850 = vadd.f32 0.0, %v849
      %v851 = vpop.f32.mrb[0].mxu0
      %v852 = vadd.f32 0.0, %v851
      %v853 = vpop.f32.mrb[0].mxu0
      %v854 = vadd.f32 0.0, %v853
      %v855 = vpop.f32.mrb[0].mxu0
      %v856 = vadd.f32 0.0, %v855
      %857 = vmatprep.mubr.bf16.mxu0 0
      %858 = vmatmul.mubr.bf16.gmra.mrb[0].mxu0 %v642
      %v859 = vpop.f32.mrb[0].mxu0
      %v860 = vadd.f32 0.0, %v859
      %v861 = vpop.f32.mrb[0].mxu0
      %v862 = vadd.f32 0.0, %v861
      %v863 = vpop.f32.mrb[0].mxu0
      %v864 = vadd.f32 0.0, %v863
      %v865 = vpop.f32.mrb[0].mxu0
      %v866 = vadd.f32 0.0, %v865
      %867 = vmatprep.mubr.bf16.mxu0 0
      %868 = vmatmul.mubr.bf16.gmra.mrb[0].mxu0 %v643
      %v869 = vpop.f32.mrb[0].mxu0
      %v870 = vadd.f32 0.0, %v869
      %v871 = vpop.f32.mrb[0].mxu0
      %v872 = vadd.f32 0.0, %v871
      %v873 = vpop.f32.mrb[0].mxu0
      %v874 = vadd.f32 0.0, %v873
      %v875 = vpop.f32.mrb[0].mxu0
      %v876 = vadd.f32 0.0, %v875
      %877 = vmatprep.mubr.bf16.mxu0 0
      %878 = vmatmul.mubr.bf16.gmra.mrb[0].mxu0 %v644
      %v879 = vpop.f32.mrb[0].mxu0
      %v880 = vadd.f32 0.0, %v879
      %v881 = vpop.f32.mrb[0].mxu0
      %v882 = vadd.f32 0.0, %v881
      %v883 = vpop.f32.mrb[0].mxu0
      %v884 = vadd.f32 0.0, %v883
      %v885 = vpop.f32.mrb[0].mxu0
      %v886 = vadd.f32 0.0, %v885
      %887 = vmatprep.mubr.bf16.mxu0 0
      %888 = vmatmul.mubr.bf16.gmra.mrb[0].mxu0 %v645
      %v889 = vpop.f32.mrb[0].mxu0
      %v890 = vadd.f32 0.0, %v889
      %v891 = vpop.f32.mrb[0].mxu0
      %v892 = vadd.f32 0.0, %v891
      %v893 = vpop.f32.mrb[0].mxu0
      %v894 = vadd.f32 0.0, %v893
      %v895 = vpop.f32.mrb[0].mxu0
      %v896 = vadd.f32 0.0, %v895
      %897 = vmatprep.mubr.bf16.mxu0 0
      %898 = vmatmul.mubr.bf16.gmra.mrb[0].mxu0 %v646
      %v899 = vpop.f32.mrb[0].mxu0
      %v900 = vadd.f32 0.0, %v899
      %v901 = vpop.f32.mrb[0].mxu0
      %v902 = vadd.f32 0.0, %v901
      %v903 = vpop.f32.mrb[0].mxu0
      %v904 = vadd.f32 0.0, %v903
      %v905 = vpop.f32.mrb[0].mxu0
      %v906 = vadd.f32 0.0, %v905
      %907 = vmatprep.mubr.bf16.mxu0 0
      %908 = vmatmul.mubr.bf16.gmra.mrb[0].mxu0 %v647
      %v909 = vpop.f32.mrb[0].mxu0
      %v910 = vadd.f32 0.0, %v909
      %v911 = vpop.f32.mrb[0].mxu0
      %v912 = vadd.f32 0.0, %v911
      %v913 = vpop.f32.mrb[0].mxu0
      %v914 = vadd.f32 0.0, %v913
      %v915 = vpop.f32.mrb[0].mxu0
      %v916 = vadd.f32 0.0, %v915
      %917 = vmatprep.mubr.bf16.mxu0 0
      %918 = vmatmul.mubr.bf16.gmra.mrb[0].mxu0 %v648
      %v919 = vpop.f32.mrb[0].mxu0
      %v920 = vadd.f32 0.0, %v919
      %v921 = vpop.f32.mrb[0].mxu0
      %v922 = vadd.f32 0.0, %v921
      %v923 = vpop.f32.mrb[0].mxu0
      %v924 = vadd.f32 0.0, %v923
      %v925 = vpop.f32.mrb[0].mxu0
      %v926 = vadd.f32 0.0, %v925
      %927 = vmatprep.mubr.bf16.mxu0 0
      %928 = vmatmul.mubr.bf16.gmra.mrb[0].mxu0 %v649
      %v929 = vpop.f32.mrb[0].mxu0
      %v930 = vadd.f32 0.0, %v929
      %v931 = vpop.f32.mrb[0].mxu0
      %v932 = vadd.f32 0.0, %v931
      %v933 = vpop.f32.mrb[0].mxu0
      %v934 = vadd.f32 0.0, %v933
      %v935 = vpop.f32.mrb[0].mxu0
      %v936 = vadd.f32 0.0, %v935
      %937 = vmatprep.mubr.bf16.mxu0 0
      %938 = vmatmul.mubr.bf16.gmra.mrb[0].mxu0 %v650
      %v939 = vpop.f32.mrb[0].mxu0
      %v940 = vadd.f32 0.0, %v939
      %v941 = vpop.f32.mrb[0].mxu0
      %v942 = vadd.f32 0.0, %v941
      %v943 = vpop.f32.mrb[0].mxu0
      %v944 = vadd.f32 0.0, %v943
      %v945 = vpop.f32.mrb[0].mxu0
      %v946 = vadd.f32 0.0, %v945
      %947 = vmatprep.mubr.bf16.mxu0 0
      %948 = vmatmul.mubr.bf16.gmra.mrb[0].mxu0 %v651
      %v949 = vpop.f32.mrb[0].mxu0
      %v950 = vadd.f32 0.0, %v949
      %v951 = vpop.f32.mrb[0].mxu0
      %v952 = vadd.f32 0.0, %v951
      %v953 = vpop.f32.mrb[0].mxu0
      %v954 = vadd.f32 0.0, %v953
      %v955 = vpop.f32.mrb[0].mxu0
      %v956 = vadd.f32 0.0, %v955
      %957 = vmatprep.mubr.bf16.mxu0 0
      %958 = vmatmul.mubr.bf16.gmra.mrb[0].mxu0 %v652
      %v959 = vpop.f32.mrb[0].mxu0
      %v960 = vadd.f32 0.0, %v959
      %v961 = vpop.f32.mrb[0].mxu0
      %v962 = vadd.f32 0.0, %v961
      %v963 = vpop.f32.mrb[0].mxu0
      %v964 = vadd.f32 0.0, %v963
      %v965 = vpop.f32.mrb[0].mxu0
      %v966 = vadd.f32 0.0, %v965
      %967 = vmatprep.mubr.bf16.mxu0 0
      %968 = vmatmul.mubr.bf16.gmra.mrb[0].mxu0 %v653
      %v969 = vpop.f32.mrb[0].mxu0
      %v970 = vadd.f32 0.0, %v969
      %v971 = vpop.f32.mrb[0].mxu0
      %v972 = vadd.f32 0.0, %v971
      %v973 = vpop.f32.mrb[0].mxu0
      %v974 = vadd.f32 0.0, %v973
      %v975 = vpop.f32.mrb[0].mxu0
      %v976 = vadd.f32 0.0, %v975
      %977 = vmatprep.mubr.bf16.mxu0 0
      %978 = vmatmul.mubr.bf16.gmra.mrb[0].mxu0 %v654
      %v979 = vpop.f32.mrb[0].mxu0
      %v980 = vadd.f32 0.0, %v979
      %v981 = vpop.f32.mrb[0].mxu0
      %v982 = vadd.f32 0.0, %v981
      %v983 = vpop.f32.mrb[0].mxu0
      %v984 = vadd.f32 0.0, %v983
      %v985 = vpop.f32.mrb[0].mxu0
      %v986 = vadd.f32 0.0, %v985
      %987 = vmatprep.mubr.bf16.mxu0 0
      %988 = vmatmul.mubr.bf16.gmra.mrb[0].mxu0 %v655
      %v989 = vpop.f32.mrb[0].mxu0
      %v990 = vadd.f32 0.0, %v989
      %v991 = vpop.f32.mrb[0].mxu0
      %v992 = vadd.f32 0.0, %v991
      %v993 = vpop.f32.mrb[0].mxu0
      %v994 = vadd.f32 0.0, %v993
      %v995 = vpop.f32.mrb[0].mxu0
      %v996 = vadd.f32 0.0, %v995
      %997 = vmatprep.mubr.bf16.mxu0 0
      %998 = vmatmul.mubr.bf16.gmra.mrb[0].mxu0 %v656
      %v999 = vpop.f32.mrb[0].mxu0
      %v1000 = vadd.f32 0.0, %v999
      %v1001 = vpop.f32.mrb[0].mxu0
      %v1002 = vadd.f32 0.0, %v1001
      %v1003 = vpop.f32.mrb[0].mxu0
      %v1004 = vadd.f32 0.0, %v1003
      %v1005 = vpop.f32.mrb[0].mxu0
      %v1006 = vadd.f32 0.0, %v1005
      %1007 = vmatprep.mubr.bf16.mxu0 0
      %1008 = vmatmul.mubr.bf16.gmra.mrb[0].mxu0 %v657
      %v1009 = vpop.f32.mrb[0].mxu0
      %v1010 = vadd.f32 0.0, %v1009
      %v1011 = vpop.f32.mrb[0].mxu0
      %v1012 = vadd.f32 0.0, %v1011
      %v1013 = vpop.f32.mrb[0].mxu0
      %v1014 = vadd.f32 0.0, %v1013
      %v1015 = vpop.f32.mrb[0].mxu0
      %v1016 = vadd.f32 0.0, %v1015
      %1017 = vmatprep.mubr.bf16.mxu0 0
      %1018 = vmatmul.mubr.bf16.gmra.mrb[0].mxu0 %v658
      %v1019 = vpop.f32.mrb[0].mxu0
      %v1020 = vadd.f32 0.0, %v1019
      %v1021 = vpop.f32.mrb[0].mxu0
      %v1022 = vadd.f32 0.0, %v1021
      %v1023 = vpop.f32.mrb[0].mxu0
      %v1024 = vadd.f32 0.0, %v1023
      %v1025 = vpop.f32.mrb[0].mxu0
      %v1026 = vadd.f32 0.0, %v1025
      %1027 = vmatprep.mubr.bf16.mxu0 0
      %1028 = vmatmul.mubr.bf16.gmra.mrb[0].mxu0 %v659
      %v1029 = vpop.f32.mrb[0].mxu0
      %v1030 = vadd.f32 0.0, %v1029
      %v1031 = vpop.f32.mrb[0].mxu0
      %v1032 = vadd.f32 0.0, %v1031
      %v1033 = vpop.f32.mrb[0].mxu0
      %v1034 = vadd.f32 0.0, %v1033
      %v1035 = vpop.f32.mrb[0].mxu0
      %v1036 = vadd.f32 0.0, %v1035
      %1037 = vmatprep.mubr.bf16.mxu0 0
      %1038 = vmatmul.mubr.bf16.gmra.mrb[0].mxu0 %v660
      %v1039 = vpop.f32.mrb[0].mxu0
      %v1040 = vadd.f32 0.0, %v1039
      %v1041 = vpop.f32.mrb[0].mxu0
      %v1042 = vadd.f32 0.0, %v1041
      %v1043 = vpop.f32.mrb[0].mxu0
      %v1044 = vadd.f32 0.0, %v1043
      %v1045 = vpop.f32.mrb[0].mxu0
      %v1046 = vadd.f32 0.0, %v1045
      %1047 = vmatprep.mubr.bf16.mxu0 0
      %1048 = vmatmul.mubr.bf16.gmra.mrb[0].mxu0 %v661
      %v1049 = vpop.f32.mrb[0].mxu0
      %v1050 = vadd.f32 0.0, %v1049
      %v1051 = vpop.f32.mrb[0].mxu0
      %v1052 = vadd.f32 0.0, %v1051
      %v1053 = vpop.f32.mrb[0].mxu0
      %v1054 = vadd.f32 0.0, %v1053
      %v1055 = vpop.f32.mrb[0].mxu0
      %v1056 = vadd.f32 0.0, %v1055
      %1057 = vmatprep.mubr.bf16.mxu0 0
      %1058 = vmatmul.mubr.bf16.gmra.mrb[0].mxu0 %v662
      %v1059 = vpop.f32.mrb[0].mxu0
      %v1060 = vadd.f32 0.0, %v1059
      %v1061 = vpop.f32.mrb[0].mxu0
      %v1062 = vadd.f32 0.0, %v1061
      %v1063 = vpop.f32.mrb[0].mxu0
      %v1064 = vadd.f32 0.0, %v1063
      %v1065 = vpop.f32.mrb[0].mxu0
      %v1066 = vadd.f32 0.0, %v1065
      %1067 = vmatprep.mubr.bf16.mxu0 0
      %1068 = vmatmul.mubr.bf16.gmra.mrb[0].mxu0 %v663
      %v1069 = vpop.f32.mrb[0].mxu0
      %v1070 = vadd.f32 0.0, %v1069
      %v1071 = vpop.f32.mrb[0].mxu0
      %v1072 = vadd.f32 0.0, %v1071
      %v1073 = vpop.f32.mrb[0].mxu0
      %v1074 = vadd.f32 0.0, %v1073
      %v1075 = vpop.f32.mrb[0].mxu0
      %v1076 = vadd.f32 0.0, %v1075
      %1077 = vmatprep.mubr.bf16.mxu0 0
      %1078 = vmatmul.mubr.bf16.gmra.mrb[0].mxu0 %v664
      %v1079 = vpop.f32.mrb[0].mxu0
      %v1080 = vadd.f32 0.0, %v1079
      %v1081 = vpop.f32.mrb[0].mxu0
      %v1082 = vadd.f32 0.0, %v1081
      %v1083 = vpop.f32.mrb[0].mxu0
      %v1084 = vadd.f32 0.0, %v1083
      %v1085 = vpop.f32.mrb[0].mxu0
      %v1086 = vadd.f32 0.0, %v1085
      %1087 = vmatprep.mubr.bf16.mxu0 0
      %1088 = vmatmul.mubr.bf16.gmra.mrb[0].mxu0 %v665
      %v1089 = vpop.f32.mrb[0].mxu0
      %v1090 = vadd.f32 0.0, %v1089
      %v1091 = vpop.f32.mrb[0].mxu0
      %v1092 = vadd.f32 0.0, %v1091
      %v1093 = vpop.f32.mrb[0].mxu0
      %v1094 = vadd.f32 0.0, %v1093
      %v1095 = vpop.f32.mrb[0].mxu0
      %v1096 = vadd.f32 0.0, %v1095
      %1097 = vmatprep.mubr.bf16.mxu0 0
      %1098 = vmatmul.mubr.bf16.gmra.mrb[0].mxu0 %v666
      %v1099 = vpop.f32.mrb[0].mxu0
      %v1100 = vadd.f32 0.0, %v1099
      %v1101 = vpop.f32.mrb[0].mxu0
      %v1102 = vadd.f32 0.0, %v1101
      %v1103 = vpop.f32.mrb[0].mxu0
      %v1104 = vadd.f32 0.0, %v1103
      %v1105 = vpop.f32.mrb[0].mxu0
      %v1106 = vadd.f32 0.0, %v1105
      %1107 = vmatprep.mubr.bf16.mxu0 0
      %1108 = vmatmul.mubr.bf16.gmra.mrb[0].mxu0 %v667
      %v1109 = vpop.f32.mrb[0].mxu0
      %v1110 = vadd.f32 0.0, %v1109
      %v1111 = vpop.f32.mrb[0].mxu0
      %v1112 = vadd.f32 0.0, %v1111
      %v1113 = vpop.f32.mrb[0].mxu0
      %v1114 = vadd.f32 0.0, %v1113
      %v1115 = vpop.f32.mrb[0].mxu0
      %v1116 = vadd.f32 0.0, %v1115
      %1117 = vmatprep.mubr.bf16.mxu0 0
      %1118 = vmatmul.mubr.bf16.gmra.mrb[0].mxu0 %v668
      %v1119 = vpop.f32.mrb[0].mxu0
      %v1120 = vadd.f32 0.0, %v1119
      %v1121 = vpop.f32.mrb[0].mxu0
      %v1122 = vadd.f32 0.0, %v1121
      %v1123 = vpop.f32.mrb[0].mxu0
      %v1124 = vadd.f32 0.0, %v1123
      %v1125 = vpop.f32.mrb[0].mxu0
      %v1126 = vadd.f32 0.0, %v1125
      %1127 = vdwg.mxu0
      %v1128 = vpack.c.bf16 %v814, %v810
      %v1129 = vpack.c.bf16 %v816, %v812
      %v1130 = vpack.c.bf16 %v824, %v820
      %v1131 = vpack.c.bf16 %v826, %v822
      %v1132 = vpack.c.bf16 %v834, %v830
      %v1133 = vpack.c.bf16 %v836, %v832
      %v1134 = vpack.c.bf16 %v844, %v840
      %v1135 = vpack.c.bf16 %v846, %v842
      %v1136 = vpack.c.bf16 %v854, %v850
      %v1137 = vpack.c.bf16 %v856, %v852
      %v1138 = vpack.c.bf16 %v864, %v860
      %v1139 = vpack.c.bf16 %v866, %v862
      %v1140 = vpack.c.bf16 %v874, %v870
      %v1141 = vpack.c.bf16 %v876, %v872
      %v1142 = vpack.c.bf16 %v884, %v880
      %v1143 = vpack.c.bf16 %v886, %v882
      %v1144 = vpack.c.bf16 %v894, %v890
      %v1145 = vpack.c.bf16 %v896, %v892
      %v1146 = vpack.c.bf16 %v904, %v900
      %v1147 = vpack.c.bf16 %v906, %v902
      %v1148 = vpack.c.bf16 %v914, %v910
      %v1149 = vpack.c.bf16 %v916, %v912
      %v1150 = vpack.c.bf16 %v924, %v920
      %v1151 = vpack.c.bf16 %v926, %v922
      %v1152 = vpack.c.bf16 %v934, %v930
      %v1153 = vpack.c.bf16 %v936, %v932
      %v1154 = vpack.c.bf16 %v944, %v940
      %v1155 = vpack.c.bf16 %v946, %v942
      %v1156 = vpack.c.bf16 %v954, %v950
      %v1157 = vpack.c.bf16 %v956, %v952
      %v1158 = vpack.c.bf16 %v964, %v960
      %v1159 = vpack.c.bf16 %v966, %v962
      %v1160 = vpack.c.bf16 %v974, %v970
      %v1161 = vpack.c.bf16 %v976, %v972
      %v1162 = vpack.c.bf16 %v984, %v980
      %v1163 = vpack.c.bf16 %v986, %v982
      %v1164 = vpack.c.bf16 %v994, %v990
      %v1165 = vpack.c.bf16 %v996, %v992
      %v1166 = vpack.c.bf16 %v1004, %v1000
      %v1167 = vpack.c.bf16 %v1006, %v1002
      %v1168 = vpack.c.bf16 %v1014, %v1010
      %v1169 = vpack.c.bf16 %v1016, %v1012
      %v1170 = vpack.c.bf16 %v1024, %v1020
      %v1171 = vpack.c.bf16 %v1026, %v1022
      %v1172 = vpack.c.bf16 %v1034, %v1030
      %v1173 = vpack.c.bf16 %v1036, %v1032
      %v1174 = vpack.c.bf16 %v1044, %v1040
      %v1175 = vpack.c.bf16 %v1046, %v1042
      %v1176 = vpack.c.bf16 %v1054, %v1050
      %v1177 = vpack.c.bf16 %v1056, %v1052
      %v1178 = vpack.c.bf16 %v1064, %v1060
      %v1179 = vpack.c.bf16 %v1066, %v1062
      %v1180 = vpack.c.bf16 %v1074, %v1070
      %v1181 = vpack.c.bf16 %v1076, %v1072
      %v1182 = vpack.c.bf16 %v1084, %v1080
      %v1183 = vpack.c.bf16 %v1086, %v1082
      %v1184 = vpack.c.bf16 %v1094, %v1090
      %v1185 = vpack.c.bf16 %v1096, %v1092
      %v1186 = vpack.c.bf16 %v1104, %v1100
      %v1187 = vpack.c.bf16 %v1106, %v1102
      %v1188 = vpack.c.bf16 %v1114, %v1110
      %v1189 = vpack.c.bf16 %v1116, %v1112
      %v1190 = vpack.c.bf16 %v1124, %v1120
      %v1191 = vpack.c.bf16 %v1126, %v1122
      %v1256 = vunpack.c.l.b16 %v1128
      %v1257 = vunpack.c.l.b16 %v1129
      %v1258 = vunpack.c.h.b16 %v1128
      %v1259 = vunpack.c.h.b16 %v1129
      %v1260 = vunpack.c.l.b16 %v1130
      %v1261 = vunpack.c.l.b16 %v1131
      %v1262 = vunpack.c.h.b16 %v1130
      %v1263 = vunpack.c.h.b16 %v1131
      %v1264 = vunpack.c.l.b16 %v1132
      %v1265 = vunpack.c.l.b16 %v1133
      %v1266 = vunpack.c.h.b16 %v1132
      %v1267 = vunpack.c.h.b16 %v1133
      %v1268 = vunpack.c.l.b16 %v1134
      %v1269 = vunpack.c.l.b16 %v1135
      %v1270 = vunpack.c.h.b16 %v1134
      %v1271 = vunpack.c.h.b16 %v1135
      %v1272 = vunpack.c.l.b16 %v1136
      %v1273 = vunpack.c.l.b16 %v1137
      %v1274 = vunpack.c.h.b16 %v1136
      %v1275 = vunpack.c.h.b16 %v1137
      %v1276 = vunpack.c.l.b16 %v1138
      %v1277 = vunpack.c.l.b16 %v1139
      %v1278 = vunpack.c.h.b16 %v1138
      %v1279 = vunpack.c.h.b16 %v1139
      %v1280 = vunpack.c.l.b16 %v1140
      %v1281 = vunpack.c.l.b16 %v1141
      %v1282 = vunpack.c.h.b16 %v1140
      %v1283 = vunpack.c.h.b16 %v1141
      %v1284 = vunpack.c.l.b16 %v1142
      %v1285 = vunpack.c.l.b16 %v1143
      %v1286 = vunpack.c.h.b16 %v1142
      %v1287 = vunpack.c.h.b16 %v1143
      %v1288 = vunpack.c.l.b16 %v1144
      %v1289 = vunpack.c.l.b16 %v1145
      %v1290 = vunpack.c.h.b16 %v1144
      %v1291 = vunpack.c.h.b16 %v1145
      %v1292 = vunpack.c.l.b16 %v1146
      %v1293 = vunpack.c.l.b16 %v1147
      %v1294 = vunpack.c.h.b16 %v1146
      %v1295 = vunpack.c.h.b16 %v1147
      %v1296 = vunpack.c.l.b16 %v1148
      %v1297 = vunpack.c.l.b16 %v1149
      %v1298 = vunpack.c.h.b16 %v1148
      %v1299 = vunpack.c.h.b16 %v1149
      %v1300 = vunpack.c.l.b16 %v1150
      %v1301 = vunpack.c.l.b16 %v1151
      %v1302 = vunpack.c.h.b16 %v1150
      %v1303 = vunpack.c.h.b16 %v1151
      %v1304 = vunpack.c.l.b16 %v1152
      %v1305 = vunpack.c.l.b16 %v1153
      %v1306 = vunpack.c.h.b16 %v1152
      %v1307 = vunpack.c.h.b16 %v1153
      %v1308 = vunpack.c.l.b16 %v1154
      %v1309 = vunpack.c.l.b16 %v1155
      %v1310 = vunpack.c.h.b16 %v1154
      %v1311 = vunpack.c.h.b16 %v1155
      %v1312 = vunpack.c.l.b16 %v1156
      %v1313 = vunpack.c.l.b16 %v1157
      %v1314 = vunpack.c.h.b16 %v1156
      %v1315 = vunpack.c.h.b16 %v1157
      %v1316 = vunpack.c.l.b16 %v1158
      %v1317 = vunpack.c.l.b16 %v1159
      %v1318 = vunpack.c.h.b16 %v1158
      %v1319 = vunpack.c.h.b16 %v1159
      %v1320 = vunpack.c.l.b16 %v1160
      %v1321 = vunpack.c.l.b16 %v1161
      %v1322 = vunpack.c.h.b16 %v1160
      %v1323 = vunpack.c.h.b16 %v1161
      %v1324 = vunpack.c.l.b16 %v1162
      %v1325 = vunpack.c.l.b16 %v1163
      %v1326 = vunpack.c.h.b16 %v1162
      %v1327 = vunpack.c.h.b16 %v1163
      %v1328 = vunpack.c.l.b16 %v1164
      %v1329 = vunpack.c.l.b16 %v1165
      %v1330 = vunpack.c.h.b16 %v1164
      %v1331 = vunpack.c.h.b16 %v1165
      %v1332 = vunpack.c.l.b16 %v1166
      %v1333 = vunpack.c.l.b16 %v1167
      %v1334 = vunpack.c.h.b16 %v1166
      %v1335 = vunpack.c.h.b16 %v1167
      %v1336 = vunpack.c.l.b16 %v1168
      %v1337 = vunpack.c.l.b16 %v1169
      %v1338 = vunpack.c.h.b16 %v1168
      %v1339 = vunpack.c.h.b16 %v1169
      %v1340 = vunpack.c.l.b16 %v1170
      %v1341 = vunpack.c.l.b16 %v1171
      %v1342 = vunpack.c.h.b16 %v1170
      %v1343 = vunpack.c.h.b16 %v1171
      %v1344 = vunpack.c.l.b16 %v1172
      %v1345 = vunpack.c.l.b16 %v1173
      %v1346 = vunpack.c.h.b16 %v1172
      %v1347 = vunpack.c.h.b16 %v1173
      %v1348 = vunpack.c.l.b16 %v1174
      %v1349 = vunpack.c.l.b16 %v1175
      %v1350 = vunpack.c.h.b16 %v1174
      %v1351 = vunpack.c.h.b16 %v1175
      %v1352 = vunpack.c.l.b16 %v1176
      %v1353 = vunpack.c.l.b16 %v1177
      %v1354 = vunpack.c.h.b16 %v1176
      %v1355 = vunpack.c.h.b16 %v1177
      %v1356 = vunpack.c.l.b16 %v1178
      %v1357 = vunpack.c.l.b16 %v1179
      %v1358 = vunpack.c.h.b16 %v1178
      %v1359 = vunpack.c.h.b16 %v1179
      %v1360 = vunpack.c.l.b16 %v1180
      %v1361 = vunpack.c.l.b16 %v1181
      %v1362 = vunpack.c.h.b16 %v1180
      %v1363 = vunpack.c.h.b16 %v1181
      %v1364 = vunpack.c.l.b16 %v1182
      %v1365 = vunpack.c.l.b16 %v1183
      %v1366 = vunpack.c.h.b16 %v1182
      %v1367 = vunpack.c.h.b16 %v1183
      %v1368 = vunpack.c.l.b16 %v1184
      %v1369 = vunpack.c.l.b16 %v1185
      %v1370 = vunpack.c.h.b16 %v1184
      %v1371 = vunpack.c.h.b16 %v1185
      %v1372 = vunpack.c.l.b16 %v1186
      %v1373 = vunpack.c.l.b16 %v1187
      %v1374 = vunpack.c.h.b16 %v1186
      %v1375 = vunpack.c.h.b16 %v1187
      %v1376 = vunpack.c.l.b16 %v1188
      %v1377 = vunpack.c.l.b16 %v1189
      %v1378 = vunpack.c.h.b16 %v1188
      %v1379 = vunpack.c.h.b16 %v1189
      %v1380 = vunpack.c.l.b16 %v1190
      %v1381 = vunpack.c.l.b16 %v1191
      %v1382 = vunpack.c.h.b16 %v1190
      %v1383 = vunpack.c.h.b16 %v1191
      %v1384 = vpack.c.b16 %v1257, %v1256
      %v1385 = vpack.c.b16 %v1259, %v1258
      %v1386 = vpack.c.b16 %v1261, %v1260
      %v1387 = vpack.c.b16 %v1263, %v1262
      %v1388 = vpack.c.b16 %v1265, %v1264
      %v1389 = vpack.c.b16 %v1267, %v1266
      %v1390 = vpack.c.b16 %v1269, %v1268
      %v1391 = vpack.c.b16 %v1271, %v1270
      %v1392 = vpack.c.b16 %v1273, %v1272
      %v1393 = vpack.c.b16 %v1275, %v1274
      %v1394 = vpack.c.b16 %v1277, %v1276
      %v1395 = vpack.c.b16 %v1279, %v1278
      %v1396 = vpack.c.b16 %v1281, %v1280
      %v1397 = vpack.c.b16 %v1283, %v1282
      %v1398 = vpack.c.b16 %v1285, %v1284
      %v1399 = vpack.c.b16 %v1287, %v1286
      %v1400 = vpack.c.b16 %v1289, %v1288
      %v1401 = vpack.c.b16 %v1291, %v1290
      %v1402 = vpack.c.b16 %v1293, %v1292
      %v1403 = vpack.c.b16 %v1295, %v1294
      %v1404 = vpack.c.b16 %v1297, %v1296
      %v1405 = vpack.c.b16 %v1299, %v1298
      %v1406 = vpack.c.b16 %v1301, %v1300
      %v1407 = vpack.c.b16 %v1303, %v1302
      %v1408 = vpack.c.b16 %v1305, %v1304
      %v1409 = vpack.c.b16 %v1307, %v1306
      %v1410 = vpack.c.b16 %v1309, %v1308
      %v1411 = vpack.c.b16 %v1311, %v1310
      %v1412 = vpack.c.b16 %v1313, %v1312
      %v1413 = vpack.c.b16 %v1315, %v1314
      %v1414 = vpack.c.b16 %v1317, %v1316
      %v1415 = vpack.c.b16 %v1319, %v1318
      %v1416 = vpack.c.b16 %v1321, %v1320
      %v1417 = vpack.c.b16 %v1323, %v1322
      %v1418 = vpack.c.b16 %v1325, %v1324
      %v1419 = vpack.c.b16 %v1327, %v1326
      %v1420 = vpack.c.b16 %v1329, %v1328
      %v1421 = vpack.c.b16 %v1331, %v1330
      %v1422 = vpack.c.b16 %v1333, %v1332
      %v1423 = vpack.c.b16 %v1335, %v1334
      %v1424 = vpack.c.b16 %v1337, %v1336
      %v1425 = vpack.c.b16 %v1339, %v1338
      %v1426 = vpack.c.b16 %v1341, %v1340
      %v1427 = vpack.c.b16 %v1343, %v1342
      %v1428 = vpack.c.b16 %v1345, %v1344
      %v1429 = vpack.c.b16 %v1347, %v1346
      %v1430 = vpack.c.b16 %v1349, %v1348
      %v1431 = vpack.c.b16 %v1351, %v1350
      %v1432 = vpack.c.b16 %v1353, %v1352
      %v1433 = vpack.c.b16 %v1355, %v1354
      %v1434 = vpack.c.b16 %v1357, %v1356
      %v1435 = vpack.c.b16 %v1359, %v1358
      %v1436 = vpack.c.b16 %v1361, %v1360
      %v1437 = vpack.c.b16 %v1363, %v1362
      %v1438 = vpack.c.b16 %v1365, %v1364
      %v1439 = vpack.c.b16 %v1367, %v1366
      %v1440 = vpack.c.b16 %v1369, %v1368
      %v1441 = vpack.c.b16 %v1371, %v1370
      %v1442 = vpack.c.b16 %v1373, %v1372
      %v1443 = vpack.c.b16 %v1375, %v1374
      %v1444 = vpack.c.b16 %v1377, %v1376
      %v1445 = vpack.c.b16 %v1379, %v1378
      %v1446 = vpack.c.b16 %v1381, %v1380
      %v1447 = vpack.c.b16 %v1383, %v1382
      %1512 = vst [vmem:[%s291] sm:$0xff] %v1384
      %1513 = vst [vmem:[%s291 + $0x8] sm:$0xff] %v1385
      %1514 = vst [vmem:[%s291 + $0x10] sm:$0xff] %v1386
      %1515 = vst [vmem:[%s291 + $0x18] sm:$0xff] %v1387
      %1516 = vst [vmem:[%s291 + $0x20] sm:$0xff] %v1388
      %1517 = vst [vmem:[%s291 + $0x28] sm:$0xff] %v1389
      %1518 = vst [vmem:[%s291 + $0x30] sm:$0xff] %v1390
      %1519 = vst [vmem:[%s291 + $0x38] sm:$0xff] %v1391
      %1520 = vst [vmem:[%s291 + $0x40] sm:$0xff] %v1392
      %1521 = vst [vmem:[%s291 + $0x48] sm:$0xff] %v1393
      %1522 = vst [vmem:[%s291 + $0x50] sm:$0xff] %v1394
      %1523 = vst [vmem:[%s291 + $0x58] sm:$0xff] %v1395
      %1524 = vst [vmem:[%s291 + $0x60] sm:$0xff] %v1396
      %1525 = vst [vmem:[%s291 + $0x68] sm:$0xff] %v1397
      %1526 = vst [vmem:[%s291 + $0x70] sm:$0xff] %v1398
      %1527 = vst [vmem:[%s291 + $0x78] sm:$0xff] %v1399
      %1528 = vst [vmem:[%s291 + $0x80] sm:$0xff] %v1400
      %1529 = vst [vmem:[%s291 + $0x88] sm:$0xff] %v1401
      %1530 = vst [vmem:[%s291 + $0x90] sm:$0xff] %v1402
      %1531 = vst [vmem:[%s291 + $0x98] sm:$0xff] %v1403
      %1532 = vst [vmem:[%s291 + $0xa0] sm:$0xff] %v1404
      %1533 = vst [vmem:[%s291 + $0xa8] sm:$0xff] %v1405
      %1534 = vst [vmem:[%s291 + $0xb0] sm:$0xff] %v1406
      %1535 = vst [vmem:[%s291 + $0xb8] sm:$0xff] %v1407
      %1536 = vst [vmem:[%s291 + $0xc0] sm:$0xff] %v1408
      %1537 = vst [vmem:[%s291 + $0xc8] sm:$0xff] %v1409
      %1538 = vst [vmem:[%s291 + $0xd0] sm:$0xff] %v1410
      %1539 = vst [vmem:[%s291 + $0xd8] sm:$0xff] %v1411
      %1540 = vst [vmem:[%s291 + $0xe0] sm:$0xff] %v1412
      %1541 = vst [vmem:[%s291 + $0xe8] sm:$0xff] %v1413
      %1542 = vst [vmem:[%s291 + $0xf0] sm:$0xff] %v1414
      %1543 = vst [vmem:[%s291 + $0xf8] sm:$0xff] %v1415
      %1544 = vst [vmem:[%s291 + $0x100] sm:$0xff] %v1416
      %1545 = vst [vmem:[%s291 + $0x108] sm:$0xff] %v1417
      %1546 = vst [vmem:[%s291 + $0x110] sm:$0xff] %v1418
      %1547 = vst [vmem:[%s291 + $0x118] sm:$0xff] %v1419
      %1548 = vst [vmem:[%s291 + $0x120] sm:$0xff] %v1420
      %1549 = vst [vmem:[%s291 + $0x128] sm:$0xff] %v1421
      %1550 = vst [vmem:[%s291 + $0x130] sm:$0xff] %v1422
      %1551 = vst [vmem:[%s291 + $0x138] sm:$0xff] %v1423
      %1552 = vst [vmem:[%s291 + $0x140] sm:$0xff] %v1424
      %1553 = vst [vmem:[%s291 + $0x148] sm:$0xff] %v1425
      %1554 = vst [vmem:[%s291 + $0x150] sm:$0xff] %v1426
      %1555 = vst [vmem:[%s291 + $0x158] sm:$0xff] %v1427
      %1556 = vst [vmem:[%s291 + $0x160] sm:$0xff] %v1428
      %1557 = vst [vmem:[%s291 + $0x168] sm:$0xff] %v1429
      %1558 = vst [vmem:[%s291 + $0x170] sm:$0xff] %v1430
      %1559 = vst [vmem:[%s291 + $0x178] sm:$0xff] %v1431
      %1560 = vst [vmem:[%s291 + $0x180] sm:$0xff] %v1432
      %1561 = vst [vmem:[%s291 + $0x188] sm:$0xff] %v1433
      %1562 = vst [vmem:[%s291 + $0x190] sm:$0xff] %v1434
      %1563 = vst [vmem:[%s291 + $0x198] sm:$0xff] %v1435
      %1564 = vst [vmem:[%s291 + $0x1a0] sm:$0xff] %v1436
      %1565 = vst [vmem:[%s291 + $0x1a8] sm:$0xff] %v1437
      %1566 = vst [vmem:[%s291 + $0x1b0] sm:$0xff] %v1438
      %1567 = vst [vmem:[%s291 + $0x1b8] sm:$0xff] %v1439
      %1568 = vst [vmem:[%s291 + $0x1c0] sm:$0xff] %v1440
      %1569 = vst [vmem:[%s291 + $0x1c8] sm:$0xff] %v1441
      %1570 = vst [vmem:[%s291 + $0x1d0] sm:$0xff] %v1442
      %1571 = vst [vmem:[%s291 + $0x1d8] sm:$0xff] %v1443
      %1572 = vst [vmem:[%s291 + $0x1e0] sm:$0xff] %v1444
      %1573 = vst [vmem:[%s291 + $0x1e8] sm:$0xff] %v1445
      %1574 = vst [vmem:[%s291 + $0x1f0] sm:$0xff] %v1446
      %1575 = vst [vmem:[%s291 + $0x1f8] sm:$0xff] %v1447
      %v1576 = vld [vmem:[%s297] sm:$0x3]
      %v1577 = vadd.f32 %v810, %v814
      %v1578 = vadd.f32 %v1577, %v820
      %v1579 = vadd.f32 %v1578, %v824
      %v1580 = vadd.f32 %v1579, %v830
      %v1581 = vadd.f32 %v1580, %v834
      %v1582 = vadd.f32 %v1581, %v840
      %v1583 = vadd.f32 %v1582, %v844
      %v1584 = vadd.f32 %v1583, %v850
      %v1585 = vadd.f32 %v1584, %v854
      %v1586 = vadd.f32 %v1585, %v860
      %v1587 = vadd.f32 %v1586, %v864
      %v1588 = vadd.f32 %v1587, %v870
      %v1589 = vadd.f32 %v1588, %v874
      %v1590 = vadd.f32 %v1589, %v880
      %v1591 = vadd.f32 %v1590, %v884
      %v1592 = vadd.f32 %v1591, %v890
      %v1593 = vadd.f32 %v1592, %v894
      %v1594 = vadd.f32 %v1593, %v900
      %v1595 = vadd.f32 %v1594, %v904
      %v1596 = vadd.f32 %v1595, %v910
      %v1597 = vadd.f32 %v1596, %v914
      %v1598 = vadd.f32 %v1597, %v920
      %v1599 = vadd.f32 %v1598, %v924
      %v1600 = vadd.f32 %v1599, %v930
      %v1601 = vadd.f32 %v1600, %v934
      %v1602 = vadd.f32 %v1601, %v940
      %v1603 = vadd.f32 %v1602, %v944
      %v1604 = vadd.f32 %v1603, %v950
      %v1605 = vadd.f32 %v1604, %v954
      %v1606 = vadd.f32 %v1605, %v960
      %v1607 = vadd.f32 %v1606, %v964
      %v1608 = vadd.f32 %v1607, %v970
      %v1609 = vadd.f32 %v1608, %v974
      %v1610 = vadd.f32 %v1609, %v980
      %v1611 = vadd.f32 %v1610, %v984
      %v1612 = vadd.f32 %v1611, %v990
      %v1613 = vadd.f32 %v1612, %v994
      %v1614 = vadd.f32 %v1613, %v1000
      %v1615 = vadd.f32 %v1614, %v1004
      %v1616 = vadd.f32 %v1615, %v1010
      %v1617 = vadd.f32 %v1616, %v1014
      %v1618 = vadd.f32 %v1617, %v1020
      %v1619 = vadd.f32 %v1618, %v1024
      %v1620 = vadd.f32 %v1619, %v1030
      %v1621 = vadd.f32 %v1620, %v1034
      %v1622 = vadd.f32 %v1621, %v1040
      %v1623 = vadd.f32 %v1622, %v1044
      %v1624 = vadd.f32 %v1623, %v1050
      %v1625 = vadd.f32 %v1624, %v1054
      %v1626 = vadd.f32 %v1625, %v1060
      %v1627 = vadd.f32 %v1626, %v1064
      %v1628 = vadd.f32 %v1627, %v1070
      %v1629 = vadd.f32 %v1628, %v1074
      %v1630 = vadd.f32 %v1629, %v1080
      %v1631 = vadd.f32 %v1630, %v1084
      %v1632 = vadd.f32 %v1631, %v1090
      %v1633 = vadd.f32 %v1632, %v1094
      %v1634 = vadd.f32 %v1633, %v1100
      %v1635 = vadd.f32 %v1634, %v1104
      %v1636 = vadd.f32 %v1635, %v1110
      %v1637 = vadd.f32 %v1636, %v1114
      %v1638 = vadd.f32 %v1637, %v1120
      %v1639 = vadd.f32 %v1638, %v1124
      %v1640 = vrot.slane %v1639, 4
      %v1641 = vadd.f32 %v1639, %v1640
      %v1642 = vrot.slane %v1641, 2
      %v1643 = vadd.f32 %v1641, %v1642
      %v1644 = vrot.slane %v1643, 1
      %v1645 = vadd.f32 %v1643, %v1644
      %v1646 = vadd.f32 %v812, %v816
      %v1647 = vadd.f32 %v1646, %v822
      %v1648 = vadd.f32 %v1647, %v826
      %v1649 = vadd.f32 %v1648, %v832
      %v1650 = vadd.f32 %v1649, %v836
      %v1651 = vadd.f32 %v1650, %v842
      %v1652 = vadd.f32 %v1651, %v846
      %v1653 = vadd.f32 %v1652, %v852
      %v1654 = vadd.f32 %v1653, %v856
      %v1655 = vadd.f32 %v1654, %v862
      %v1656 = vadd.f32 %v1655, %v866
      %v1657 = vadd.f32 %v1656, %v872
      %v1658 = vadd.f32 %v1657, %v876
      %v1659 = vadd.f32 %v1658, %v882
      %v1660 = vadd.f32 %v1659, %v886
      %v1661 = vadd.f32 %v1660, %v892
      %v1662 = vadd.f32 %v1661, %v896
      %v1663 = vadd.f32 %v1662, %v902
      %v1664 = vadd.f32 %v1663, %v906
      %v1665 = vadd.f32 %v1664, %v912
      %v1666 = vadd.f32 %v1665, %v916
      %v1667 = vadd.f32 %v1666, %v922
      %v1668 = vadd.f32 %v1667, %v926
      %v1669 = vadd.f32 %v1668, %v932
      %v1670 = vadd.f32 %v1669, %v936
      %v1671 = vadd.f32 %v1670, %v942
      %v1672 = vadd.f32 %v1671, %v946
      %v1673 = vadd.f32 %v1672, %v952
      %v1674 = vadd.f32 %v1673, %v956
      %v1675 = vadd.f32 %v1674, %v962
      %v1676 = vadd.f32 %v1675, %v966
      %v1677 = vadd.f32 %v1676, %v972
      %v1678 = vadd.f32 %v1677, %v976
      %v1679 = vadd.f32 %v1678, %v982
      %v1680 = vadd.f32 %v1679, %v986
      %v1681 = vadd.f32 %v1680, %v992
      %v1682 = vadd.f32 %v1681, %v996
      %v1683 = vadd.f32 %v1682, %v1002
      %v1684 = vadd.f32 %v1683, %v1006
      %v1685 = vadd.f32 %v1684, %v1012
      %v1686 = vadd.f32 %v1685, %v1016
      %v1687 = vadd.f32 %v1686, %v1022
      %v1688 = vadd.f32 %v1687, %v1026
      %v1689 = vadd.f32 %v1688, %v1032
      %v1690 = vadd.f32 %v1689, %v1036
      %v1691 = vadd.f32 %v1690, %v1042
      %v1692 = vadd.f32 %v1691, %v1046
      %v1693 = vadd.f32 %v1692, %v1052
      %v1694 = vadd.f32 %v1693, %v1056
      %v1695 = vadd.f32 %v1694, %v1062
      %v1696 = vadd.f32 %v1695, %v1066
      %v1697 = vadd.f32 %v1696, %v1072
      %v1698 = vadd.f32 %v1697, %v1076
      %v1699 = vadd.f32 %v1698, %v1082
      %v1700 = vadd.f32 %v1699, %v1086
      %v1701 = vadd.f32 %v1700, %v1092
      %v1702 = vadd.f32 %v1701, %v1096
      %v1703 = vadd.f32 %v1702, %v1102
      %v1704 = vadd.f32 %v1703, %v1106
      %v1705 = vadd.f32 %v1704, %v1112
      %v1706 = vadd.f32 %v1705, %v1116
      %v1707 = vadd.f32 %v1706, %v1122
      %v1708 = vadd.f32 %v1707, %v1126
      %v1709 = vrot.slane %v1708, 4
      %v1710 = vadd.f32 %v1708, %v1709
      %v1711 = vrot.slane %v1710, 2
      %v1712 = vadd.f32 %v1710, %v1711
      %v1713 = vrot.slane %v1712, 1
      %v1714 = vadd.f32 %v1712, %v1713
      %v1717 = vcombine.low %v1645, %v1714
      %v1719 = vunpack.c.l.s4 1966171168
      %v1720 = vunpack.c.0.s8 %v1719
      %v1721 = vlaneseq
      %v1722 = vshrl.u32 %v1721, 7
      %v1723 = vsub.s32 %v1720, %v1722
      %v1724 = vrot.slane %v1717, %v1723
      %v1726 = vunpack.c.l.s4 1966171168
      %v1727 = vunpack.c.0.s8 %v1726
      %v1728 = vlaneseq
      %v1729 = vshrl.u32 %v1728, 7
      %v1730 = vsub.s32 %v1727, %v1729
      %v1731 = vrot.slane %v1724, %v1730
      %v1733 = vadd.f32 %v1576, %v1731
      %v1734 = vlaneseq
      %vm1735 = vcmp.ge.s32.totalorder %v1734, 0
      %vm1736 = vcmp.lt.s32.totalorder %v1734, 256
      %vm1737 = vmand %vm1735, %vm1736
      %1738 = vst.msk [vmem:[%s297] sm:$0x3] %vm1737, %v1733
      %v1739 = vld [vmem:[%s301] sm:$0x3]
      %v1740 = vmul.f32 %v810, %v810
      %v1741 = vmul.f32 %v812, %v812
      %v1742 = vmul.f32 %v814, %v814
      %v1743 = vmul.f32 %v816, %v816
      %v1744 = vmul.f32 %v820, %v820
      %v1745 = vmul.f32 %v822, %v822
      %v1746 = vmul.f32 %v824, %v824
      %v1747 = vmul.f32 %v826, %v826
      %v1748 = vmul.f32 %v830, %v830
      %v1749 = vmul.f32 %v832, %v832
      %v1750 = vmul.f32 %v834, %v834
      %v1751 = vmul.f32 %v836, %v836
      %v1752 = vmul.f32 %v840, %v840
      %v1753 = vmul.f32 %v842, %v842
      %v1754 = vmul.f32 %v844, %v844
      %v1755 = vmul.f32 %v846, %v846
      %v1756 = vmul.f32 %v850, %v850
      %v1757 = vmul.f32 %v852, %v852
      %v1758 = vmul.f32 %v854, %v854
      %v1759 = vmul.f32 %v856, %v856
      %v1760 = vmul.f32 %v860, %v860
      %v1761 = vmul.f32 %v862, %v862
      %v1762 = vmul.f32 %v864, %v864
      %v1763 = vmul.f32 %v866, %v866
      %v1764 = vmul.f32 %v870, %v870
      %v1765 = vmul.f32 %v872, %v872
      %v1766 = vmul.f32 %v874, %v874
      %v1767 = vmul.f32 %v876, %v876
      %v1768 = vmul.f32 %v880, %v880
      %v1769 = vmul.f32 %v882, %v882
      %v1770 = vmul.f32 %v884, %v884
      %v1771 = vmul.f32 %v886, %v886
      %v1772 = vmul.f32 %v890, %v890
      %v1773 = vmul.f32 %v892, %v892
      %v1774 = vmul.f32 %v894, %v894
      %v1775 = vmul.f32 %v896, %v896
      %v1776 = vmul.f32 %v900, %v900
      %v1777 = vmul.f32 %v902, %v902
      %v1778 = vmul.f32 %v904, %v904
      %v1779 = vmul.f32 %v906, %v906
      %v1780 = vmul.f32 %v910, %v910
      %v1781 = vmul.f32 %v912, %v912
      %v1782 = vmul.f32 %v914, %v914
      %v1783 = vmul.f32 %v916, %v916
      %v1784 = vmul.f32 %v920, %v920
      %v1785 = vmul.f32 %v922, %v922
      %v1786 = vmul.f32 %v924, %v924
      %v1787 = vmul.f32 %v926, %v926
      %v1788 = vmul.f32 %v930, %v930
      %v1789 = vmul.f32 %v932, %v932
      %v1790 = vmul.f32 %v934, %v934
      %v1791 = vmul.f32 %v936, %v936
      %v1792 = vmul.f32 %v940, %v940
      %v1793 = vmul.f32 %v942, %v942
      %v1794 = vmul.f32 %v944, %v944
      %v1795 = vmul.f32 %v946, %v946
      %v1796 = vmul.f32 %v950, %v950
      %v1797 = vmul.f32 %v952, %v952
      %v1798 = vmul.f32 %v954, %v954
      %v1799 = vmul.f32 %v956, %v956
      %v1800 = vmul.f32 %v960, %v960
      %v1801 = vmul.f32 %v962, %v962
      %v1802 = vmul.f32 %v964, %v964
      %v1803 = vmul.f32 %v966, %v966
      %v1804 = vmul.f32 %v970, %v970
      %v1805 = vmul.f32 %v972, %v972
      %v1806 = vmul.f32 %v974, %v974
      %v1807 = vmul.f32 %v976, %v976
      %v1808 = vmul.f32 %v980, %v980
      %v1809 = vmul.f32 %v982, %v982
      %v1810 = vmul.f32 %v984, %v984
      %v1811 = vmul.f32 %v986, %v986
      %v1812 = vmul.f32 %v990, %v990
      %v1813 = vmul.f32 %v992, %v992
      %v1814 = vmul.f32 %v994, %v994
      %v1815 = vmul.f32 %v996, %v996
      %v1816 = vmul.f32 %v1000, %v1000
      %v1817 = vmul.f32 %v1002, %v1002
      %v1818 = vmul.f32 %v1004, %v1004
      %v1819 = vmul.f32 %v1006, %v1006
      %v1820 = vmul.f32 %v1010, %v1010
      %v1821 = vmul.f32 %v1012, %v1012
      %v1822 = vmul.f32 %v1014, %v1014
      %v1823 = vmul.f32 %v1016, %v1016
      %v1824 = vmul.f32 %v1020, %v1020
      %v1825 = vmul.f32 %v1022, %v1022
      %v1826 = vmul.f32 %v1024, %v1024
      %v1827 = vmul.f32 %v1026, %v1026
      %v1828 = vmul.f32 %v1030, %v1030
      %v1829 = vmul.f32 %v1032, %v1032
      %v1830 = vmul.f32 %v1034, %v1034
      %v1831 = vmul.f32 %v1036, %v1036
      %v1832 = vmul.f32 %v1040, %v1040
      %v1833 = vmul.f32 %v1042, %v1042
      %v1834 = vmul.f32 %v1044, %v1044
      %v1835 = vmul.f32 %v1046, %v1046
      %v1836 = vmul.f32 %v1050, %v1050
      %v1837 = vmul.f32 %v1052, %v1052
      %v1838 = vmul.f32 %v1054, %v1054
      %v1839 = vmul.f32 %v1056, %v1056
      %v1840 = vmul.f32 %v1060, %v1060
      %v1841 = vmul.f32 %v1062, %v1062
      %v1842 = vmul.f32 %v1064, %v1064
      %v1843 = vmul.f32 %v1066, %v1066
      %v1844 = vmul.f32 %v1070, %v1070
      %v1845 = vmul.f32 %v1072, %v1072
      %v1846 = vmul.f32 %v1074, %v1074
      %v1847 = vmul.f32 %v1076, %v1076
      %v1848 = vmul.f32 %v1080, %v1080
      %v1849 = vmul.f32 %v1082, %v1082
      %v1850 = vmul.f32 %v1084, %v1084
      %v1851 = vmul.f32 %v1086, %v1086
      %v1852 = vmul.f32 %v1090, %v1090
      %v1853 = vmul.f32 %v1092, %v1092
      %v1854 = vmul.f32 %v1094, %v1094
      %v1855 = vmul.f32 %v1096, %v1096
      %v1856 = vmul.f32 %v1100, %v1100
      %v1857 = vmul.f32 %v1102, %v1102
      %v1858 = vmul.f32 %v1104, %v1104
      %v1859 = vmul.f32 %v1106, %v1106
      %v1860 = vmul.f32 %v1110, %v1110
      %v1861 = vmul.f32 %v1112, %v1112
      %v1862 = vmul.f32 %v1114, %v1114
      %v1863 = vmul.f32 %v1116, %v1116
      %v1864 = vmul.f32 %v1120, %v1120
      %v1865 = vmul.f32 %v1122, %v1122
      %v1866 = vmul.f32 %v1124, %v1124
      %v1867 = vmul.f32 %v1126, %v1126
      %v1868 = vadd.f32 %v1740, %v1742
      %v1869 = vadd.f32 %v1868, %v1744
      %v1870 = vadd.f32 %v1869, %v1746
      %v1871 = vadd.f32 %v1870, %v1748
      %v1872 = vadd.f32 %v1871, %v1750
      %v1873 = vadd.f32 %v1872, %v1752
      %v1874 = vadd.f32 %v1873, %v1754
      %v1875 = vadd.f32 %v1874, %v1756
      %v1876 = vadd.f32 %v1875, %v1758
      %v1877 = vadd.f32 %v1876, %v1760
      %v1878 = vadd.f32 %v1877, %v1762
      %v1879 = vadd.f32 %v1878, %v1764
      %v1880 = vadd.f32 %v1879, %v1766
      %v1881 = vadd.f32 %v1880, %v1768
      %v1882 = vadd.f32 %v1881, %v1770
      %v1883 = vadd.f32 %v1882, %v1772
      %v1884 = vadd.f32 %v1883, %v1774
      %v1885 = vadd.f32 %v1884, %v1776
      %v1886 = vadd.f32 %v1885, %v1778
      %v1887 = vadd.f32 %v1886, %v1780
      %v1888 = vadd.f32 %v1887, %v1782
      %v1889 = vadd.f32 %v1888, %v1784
      %v1890 = vadd.f32 %v1889, %v1786
      %v1891 = vadd.f32 %v1890, %v1788
      %v1892 = vadd.f32 %v1891, %v1790
      %v1893 = vadd.f32 %v1892, %v1792
      %v1894 = vadd.f32 %v1893, %v1794
      %v1895 = vadd.f32 %v1894, %v1796
      %v1896 = vadd.f32 %v1895, %v1798
      %v1897 = vadd.f32 %v1896, %v1800
      %v1898 = vadd.f32 %v1897, %v1802
      %v1899 = vadd.f32 %v1898, %v1804
      %v1900 = vadd.f32 %v1899, %v1806
      %v1901 = vadd.f32 %v1900, %v1808
      %v1902 = vadd.f32 %v1901, %v1810
      %v1903 = vadd.f32 %v1902, %v1812
      %v1904 = vadd.f32 %v1903, %v1814
      %v1905 = vadd.f32 %v1904, %v1816
      %v1906 = vadd.f32 %v1905, %v1818
      %v1907 = vadd.f32 %v1906, %v1820
      %v1908 = vadd.f32 %v1907, %v1822
      %v1909 = vadd.f32 %v1908, %v1824
      %v1910 = vadd.f32 %v1909, %v1826
      %v1911 = vadd.f32 %v1910, %v1828
      %v1912 = vadd.f32 %v1911, %v1830
      %v1913 = vadd.f32 %v1912, %v1832
      %v1914 = vadd.f32 %v1913, %v1834
      %v1915 = vadd.f32 %v1914, %v1836
      %v1916 = vadd.f32 %v1915, %v1838
      %v1917 = vadd.f32 %v1916, %v1840
      %v1918 = vadd.f32 %v1917, %v1842
      %v1919 = vadd.f32 %v1918, %v1844
      %v1920 = vadd.f32 %v1919, %v1846
      %v1921 = vadd.f32 %v1920, %v1848
      %v1922 = vadd.f32 %v1921, %v1850
      %v1923 = vadd.f32 %v1922, %v1852
      %v1924 = vadd.f32 %v1923, %v1854
      %v1925 = vadd.f32 %v1924, %v1856
      %v1926 = vadd.f32 %v1925, %v1858
      %v1927 = vadd.f32 %v1926, %v1860
      %v1928 = vadd.f32 %v1927, %v1862
      %v1929 = vadd.f32 %v1928, %v1864
      %v1930 = vadd.f32 %v1929, %v1866
      %v1931 = vrot.slane %v1930, 4
      %v1932 = vadd.f32 %v1930, %v1931
      %v1933 = vrot.slane %v1932, 2
      %v1934 = vadd.f32 %v1932, %v1933
      %v1935 = vrot.slane %v1934, 1
      %v1936 = vadd.f32 %v1934, %v1935
      %v1937 = vadd.f32 %v1741, %v1743
      %v1938 = vadd.f32 %v1937, %v1745
      %v1939 = vadd.f32 %v1938, %v1747
      %v1940 = vadd.f32 %v1939, %v1749
      %v1941 = vadd.f32 %v1940, %v1751
      %v1942 = vadd.f32 %v1941, %v1753
      %v1943 = vadd.f32 %v1942, %v1755
      %v1944 = vadd.f32 %v1943, %v1757
      %v1945 = vadd.f32 %v1944, %v1759
      %v1946 = vadd.f32 %v1945, %v1761
      %v1947 = vadd.f32 %v1946, %v1763
      %v1948 = vadd.f32 %v1947, %v1765
      %v1949 = vadd.f32 %v1948, %v1767
      %v1950 = vadd.f32 %v1949, %v1769
      %v1951 = vadd.f32 %v1950, %v1771
      %v1952 = vadd.f32 %v1951, %v1773
      %v1953 = vadd.f32 %v1952, %v1775
      %v1954 = vadd.f32 %v1953, %v1777
      %v1955 = vadd.f32 %v1954, %v1779
      %v1956 = vadd.f32 %v1955, %v1781
      %v1957 = vadd.f32 %v1956, %v1783
      %v1958 = vadd.f32 %v1957, %v1785
      %v1959 = vadd.f32 %v1958, %v1787
      %v1960 = vadd.f32 %v1959, %v1789
      %v1961 = vadd.f32 %v1960, %v1791
      %v1962 = vadd.f32 %v1961, %v1793
      %v1963 = vadd.f32 %v1962, %v1795
      %v1964 = vadd.f32 %v1963, %v1797
      %v1965 = vadd.f32 %v1964, %v1799
      %v1966 = vadd.f32 %v1965, %v1801
      %v1967 = vadd.f32 %v1966, %v1803
      %v1968 = vadd.f32 %v1967, %v1805
      %v1969 = vadd.f32 %v1968, %v1807
      %v1970 = vadd.f32 %v1969, %v1809
      %v1971 = vadd.f32 %v1970, %v1811
      %v1972 = vadd.f32 %v1971, %v1813
      %v1973 = vadd.f32 %v1972, %v1815
      %v1974 = vadd.f32 %v1973, %v1817
      %v1975 = vadd.f32 %v1974, %v1819
      %v1976 = vadd.f32 %v1975, %v1821
      %v1977 = vadd.f32 %v1976, %v1823
      %v1978 = vadd.f32 %v1977, %v1825
      %v1979 = vadd.f32 %v1978, %v1827
      %v1980 = vadd.f32 %v1979, %v1829
      %v1981 = vadd.f32 %v1980, %v1831
      %v1982 = vadd.f32 %v1981, %v1833
      %v1983 = vadd.f32 %v1982, %v1835
      %v1984 = vadd.f32 %v1983, %v1837
      %v1985 = vadd.f32 %v1984, %v1839
      %v1986 = vadd.f32 %v1985, %v1841
      %v1987 = vadd.f32 %v1986, %v1843
      %v1988 = vadd.f32 %v1987, %v1845
      %v1989 = vadd.f32 %v1988, %v1847
      %v1990 = vadd.f32 %v1989, %v1849
      %v1991 = vadd.f32 %v1990, %v1851
      %v1992 = vadd.f32 %v1991, %v1853
      %v1993 = vadd.f32 %v1992, %v1855
      %v1994 = vadd.f32 %v1993, %v1857
      %v1995 = vadd.f32 %v1994, %v1859
      %v1996 = vadd.f32 %v1995, %v1861
      %v1997 = vadd.f32 %v1996, %v1863
      %v1998 = vadd.f32 %v1997, %v1865
      %v1999 = vadd.f32 %v1998, %v1867
      %v2000 = vrot.slane %v1999, 4
      %v2001 = vadd.f32 %v1999, %v2000
      %v2002 = vrot.slane %v2001, 2
      %v2003 = vadd.f32 %v2001, %v2002
      %v2004 = vrot.slane %v2003, 1
      %v2005 = vadd.f32 %v2003, %v2004
      %v2008 = vcombine.low %v1936, %v2005
      %v2010 = vunpack.c.l.s4 1966171168
      %v2011 = vunpack.c.0.s8 %v2010
      %v2012 = vlaneseq
      %v2013 = vshrl.u32 %v2012, 7
      %v2014 = vsub.s32 %v2011, %v2013
      %v2015 = vrot.slane %v2008, %v2014
      %v2017 = vunpack.c.l.s4 1966171168
      %v2018 = vunpack.c.0.s8 %v2017
      %v2019 = vlaneseq
      %v2020 = vshrl.u32 %v2019, 7
      %v2021 = vsub.s32 %v2018, %v2020
      %v2022 = vrot.slane %v2015, %v2021
      %v2024 = vadd.f32 %v1739, %v2022
      %2025 = vst.msk [vmem:[%s301] sm:$0x3] %vm1737, %v2024
      %s2026 = sadd.s32 %s22, %s23
      %s2027 = smul.u32 64, %s2026
      %p2028 = scmp.lt.s32.totalorder %s2027, 255
      %s2029 = scalar_select %p2028, %s2027, 255
      %s2030 = smul.addr %s2029, 2
      %s2031 = smul.addr %s2030, 4
      %s2032 = scalar_lea.vmem %s4, %s2031
      %p2033 = scmp.lt.s32.totalorder %s22, 3
      %s2034 = scalar_select %p2033, %s22, 3
      %s2035 = smul.addr %s2034, 2
      %s2036 = scalar_lea.vmem %s5, %s2035
      %p2037 = scmp.lt.s32.totalorder %s22, 3
      %s2038 = scalar_select %p2037, %s22, 3
      %s2039 = smul.addr %s2038, 2
      %s2040 = scalar_lea.vmem %s6, %s2039
      // Predicated region
      $region41: #{encoder_forward.5} parent=35 // pred_check
        %p2041 = pneg %p141
      $region42: #{encoder_forward.5} parent=35 // pred_check_branch
        %2043 = sbr.rel (%p2041) target = $region44
      $region43: #{encoder_forward.5} parent=35 // pred_region
        %s2044 = sadd.s32 %s22, %s23
        %s2045 = smul.u32 64, %s2044
      $region44: #{encoder_forward.5} parent=35 // pred_fallthru
        _
      // Predicated region
      $region45: #{encoder_forward.5} parent=35 // pred_check
        %p2046 = pneg %p167
      $region46: #{encoder_forward.5} parent=35 // pred_check_branch
        %2048 = sbr.rel (%p2046) target = $region48
      $region47: #{encoder_forward.5} parent=35 // pred_region
        _
      $region48: #{encoder_forward.5} parent=35 // pred_fallthru
        _
      // Predicated region
      $region49: #{encoder_forward.5} parent=35 // pred_check
        %p2049 = pneg %p193
      $region50: #{encoder_forward.5} parent=35 // pred_check_branch
        %2051 = sbr.rel (%p2049) target = $region52
      $region51: #{encoder_forward.5} parent=35 // pred_region
        _
      $region52: #{encoder_forward.5} parent=35 // pred_fallthru
        _
    $region36: #{encoder_forward.5} parent=5 // pred_fallthru
      _
    %p2052 = scmp.le.s32.totalorder 2, %s13
    // Predicated region
    $region53: #{encoder_forward.5} parent=5 // pred_check
      %p2053 = pneg %p2052
    $region54: #{encoder_forward.5} parent=5 // pred_check_branch
      %2055 = sbr.rel (%p2053) target = $region56
    $region55: #{encoder_forward.5} parent=5 // pred_region
      %s2056 = ssub.s32 %s13, 2
      // Predicated region
      $region57: #{encoder_forward.5} parent=55 // pred_check
        %p2057 = pneg %p147
      $region58: #{encoder_forward.5} parent=55 // pred_check_branch
        %2059 = sbr.rel (%p2057) target = $region60
      $region59: #{encoder_forward.5} parent=55 // pred_region
        %s2060 = sadd.s32 %s24, %s25
        %s2061 = smul.u32 64, %s2060
        %p2062 = scmp.lt.s32.totalorder %s2061, 255
        %s2063 = scalar_select %p2062, %s2061, 255
        %s2064 = smul.addr %s2063, 2
        %s2065 = smul.addr %s2064, 4
        %s2066 = scalar_lea.vmem %s4, %s2065
      $region60: #{encoder_forward.5} parent=55 // pred_fallthru
        _
      // Predicated region
      $region61: #{encoder_forward.5} parent=55 // pred_check
        %p2067 = pneg %p173
      $region62: #{encoder_forward.5} parent=55 // pred_check_branch
        %2069 = sbr.rel (%p2067) target = $region64
      $region63: #{encoder_forward.5} parent=55 // pred_region
        %p2070 = scmp.lt.s32.totalorder %s24, 3
        %s2071 = scalar_select %p2070, %s24, 3
        %s2072 = smul.addr %s2071, 2
        %s2073 = scalar_lea.vmem %s5, %s2072
      $region64: #{encoder_forward.5} parent=55 // pred_fallthru
        _
      // Predicated region
      $region65: #{encoder_forward.5} parent=55 // pred_check
        %p2074 = pneg %p199
      $region66: #{encoder_forward.5} parent=55 // pred_check_branch
        %2076 = sbr.rel (%p2074) target = $region68
      $region67: #{encoder_forward.5} parent=55 // pred_region
        %p2077 = scmp.lt.s32.totalorder %s24, 3
        %s2078 = scalar_select %p2077, %s24, 3
        %s2079 = smul.addr %s2078, 2
        %s2080 = scalar_lea.vmem %s6, %s2079
      $region68: #{encoder_forward.5} parent=55 // pred_fallthru
        _
    $region56: #{encoder_forward.5} parent=5 // pred_fallthru
      _
  $region6: #{encoder_forward.5} parent=0 // loop_footer
    %s17 = sadd.s32 1, %s13
  $region7: #{encoder_forward.5} parent=0 // loop_footer_branch
    %12 = sbr.rel target = $region3
  $region8: #{encoder_forward.5} parent=0 // loop_exit
    _

// kernel: mul.27
$region0: #{mul.27}
  #allocation0 [shape = 's32[1]{0}', space=sflag, size = 0x4, scoped, tag = 'scoped memory for mul.27']
  %s0 = inlined_call_operand.vmem [shape: f32[1,512], index: 0, kind: input, shape index: {}]
  %s1 = inlined_call_operand.vmem [shape: f32[1,512], index: 1, kind: input, shape index: {}]
  %s2 = inlined_call_operand.vmem [shape: f32[1,512], index: 2, kind: output, shape index: {}]
  %v3 = vld [vmem:[%s0] sm:$0x1]
  %v4 = vld [vmem:[%s1] sm:$0x1]
  %5 = xla_tuple %v3, %v4
  %6 = xla_tuple %5
  %v7 = vmul.f32 %v3, %v4
  %8 = xla_tuple %v7
  %9 = vst [vmem:[%s2] sm:$0x1] %v7
  %s10 = scalar_lea.vmem %s0, 1
  %v11 = vld [vmem:[%s10] sm:$0x1]
  %s12 = scalar_lea.vmem %s1, 1
  %v13 = vld [vmem:[%s12] sm:$0x1]
  %14 = xla_tuple %v11, %v13
  %15 = xla_tuple %14
  %v16 = vmul.f32 %v11, %v13
  %17 = xla_tuple %v16
  %s18 = scalar_lea.vmem %s2, 1
  %19 = vst [vmem:[%s18] sm:$0x1] %v16
  %s20 = scalar_lea.vmem %s0, 2
  %v21 = vld [vmem:[%s20] sm:$0x1]
  %s22 = scalar_lea.vmem %s1, 2
  %v23 = vld [vmem:[%s22] sm:$0x1]
  %24 = xla_tuple %v21, %v23
  %25 = xla_tuple %24
  %v26 = vmul.f32 %v21, %v23
  %27 = xla_tuple %v26
  %s28 = scalar_lea.vmem %s2, 2
  %29 = vst [vmem:[%s28] sm:$0x1] %v26
  %s30 = scalar_lea.vmem %s0, 3
  %v31 = vld [vmem:[%s30] sm:$0x1]
  %s32 = scalar_lea.vmem %s1, 3
  %v33 = vld [vmem:[%s32] sm:$0x1]
  %34 = xla_tuple %v31, %v33
  %35 = xla_tuple %34
  %v36 = vmul.f32 %v31, %v33
  %37 = xla_tuple %v36
  %s38 = scalar_lea.vmem %s2, 3
  %39 = vst [vmem:[%s38] sm:$0x1] %v36

// kernel: encoder_forward.6
$region0: #{encoder_forward.6}
  #allocation0 [shape = 'u32[]', space=smem, size = 0x4, offset = 0x4, fixed_abs, tag = 'smem constant byte address 0x4 - core index']
  #allocation1 [shape = 'u32[144,128]{1,0:T(1,128)}', space=vmem, size = 0x12000, scoped, tag = 'internal scratch']
  %s0 = inlined_call_operand.vmem [shape: bf16[2048,256], index: 0, kind: input, shape index: {}]
  %s1 = inlined_call_operand.vmem [shape: f32[1,256], index: 1, kind: input, shape index: {}]
  %s2 = inlined_call_operand.vmem [shape: f32[1,256], index: 2, kind: input, shape index: {}]
  %s3 = inlined_call_operand.vmem [shape: bf16[256,512], index: 3, kind: input, shape index: {}]
  %s4 = inlined_call_operand.vmem [shape: f32[4,1,512], index: 4, kind: output, shape index: {0}]
  %s5 = inlined_call_operand.vmem [shape: f32[4,1,512], index: 5, kind: output, shape index: {1}]
  %s6 = inlined_call_operand.vmem [shape: f32[4,1,512], index: 6, kind: output, shape index: {2}]
  %s7 = inlined_call_operand.vmem [shape: f32[4,1,512], index: 7, kind: output, shape index: {3}]
  %8 = xla_tuple %s4, %s5, %s6, %s7
  %s9 = sld [smem:[#allocation0]]
  $region77: #{encoder_forward.6} parent=0
    _
  %s11 = ssub.s32 1, %s9
  %s12 = scalar_select 0, %s11, %s9
  loop: start=0, step=1, limit=6
  $region2: #{encoder_forward.6} parent=0 // loop_pre_header
    _
  $region3: #{encoder_forward.6} parent=0 // loop_header
    %s14 = sphi 0, %s18
    %p15 = scmp.ge.s32.totalorder %s14, 6
    %s21 = sphi 0, %s33
    %s22 = sphi 0, %s29
    %s23 = sphi 0, %s21
    %s24 = sphi 0, %s22
    %s25 = sphi 0, %s23
    %s26 = sphi 0, %s24
    %s38 = sphi 0, %s40
    %s41 = sphi 0, %s38
    %s42 = sphi 0, %s41
    %s58 = sphi 0, %s42
    %s62 = sphi 0, %s62
    %s64 = sphi 0, %s62
    %s65 = sphi 0, %s64
    %s79 = sphi 0, %s65
    %s83 = sphi 0, %s83
    %s85 = sphi 0, %s83
    %s86 = sphi 0, %s85
    %s100 = sphi 0, %s86
    %s104 = sphi 0, %s104
    %s106 = sphi 0, %s104
    %s107 = sphi 0, %s106
    %s121 = sphi 0, %s107
    %s127 = sphi 0, %s129
    %s130 = sphi 0, %s127
    %s131 = sphi 0, %s130
    %s147 = sphi 0, %s131
    %s153 = sphi 0, %s155
    %s156 = sphi 0, %s153
    %s157 = sphi 0, %s156
    %s173 = sphi 0, %s157
    %s179 = sphi 0, %s181
    %s182 = sphi 0, %s179
    %s183 = sphi 0, %s182
    %s199 = sphi 0, %s183
    %s205 = sphi 0, %s207
    %s208 = sphi 0, %s205
    %s209 = sphi 0, %s208
    %s225 = sphi 0, %s209
  $region4: #{encoder_forward.6} parent=0 // loop_header_branch
    %17 = sbr.rel (%p15) target = $region8
  $region5: #{encoder_forward.6} parent=0 // loop_body
    %s19 = ssub.s32 %s14, 1
    %s20 = ssub.s32 %s14, 2
    %s27 = sadd.s32 1, %s22
    %p28 = scmp.ge.s32.totalorder %s27, 1
    %s29 = scalar_select %p28, 0, %s27
    %s30 = sadd.s32 1, %s21
    %s31 = scalar_select %p28, %s30, %s21
    %p32 = scmp.ge.s32.totalorder %s31, 4
    %s33 = scalar_select %p32, 0, %s31
    %s34 = sadd.s32 %s21, %s22
    %s35 = sadd.s32 %s33, %s29
    %s36 = ssub.s32 %s34, %s35
    %p37 = scmp.eq.s32.totalorder %s36, 0
    %s39 = sadd.s32 %s38, 1
    %s40 = scalar_select %p37, %s38, %s39
    %p43 = pneg %p37
    %p44 = scmp.eq.s32.totalorder %s14, 3
    %p45 = por %p43, %p44
    %p46 = scmp.ne.s32.totalorder %s38, %s41
    %p47 = scmp.eq.s32.totalorder %s14, 0
    %p48 = por %p46, %p47
    %p49 = scmp.ne.s32.totalorder %s38, %s41
    %p50 = scmp.eq.s32.totalorder %s19, 3
    %p51 = por %p49, %p50
    %p52 = scmp.ne.s32.totalorder %s41, %s42
    %p53 = scmp.eq.s32.totalorder %s19, 0
    %p54 = por %p52, %p53
    %p55 = scmp.ne.s32.totalorder %s41, %s42
    %p56 = scmp.eq.s32.totalorder %s20, 3
    %p57 = por %p55, %p56
    %p59 = scmp.ne.s32.totalorder %s42, %s58
    %p60 = scmp.eq.s32.totalorder %s20, 0
    %p61 = por %p59, %p60
    %s63 = sadd.s32 %s62, 1
    %p66 = scmp.eq.s32.totalorder %s14, 3
    %p67 = scmp.ne.s32.totalorder %s62, %s64
    %p68 = scmp.eq.s32.totalorder %s14, 0
    %p69 = por %p67, %p68
    %p70 = scmp.ne.s32.totalorder %s62, %s64
    %p71 = scmp.eq.s32.totalorder %s19, 3
    %p72 = por %p70, %p71
    %p73 = scmp.ne.s32.totalorder %s64, %s65
    %p74 = scmp.eq.s32.totalorder %s19, 0
    %p75 = por %p73, %p74
    %p76 = scmp.ne.s32.totalorder %s64, %s65
    %p77 = scmp.eq.s32.totalorder %s20, 3
    %p78 = por %p76, %p77
    %p80 = scmp.ne.s32.totalorder %s65, %s79
    %p81 = scmp.eq.s32.totalorder %s20, 0
    %p82 = por %p80, %p81
    %s84 = sadd.s32 %s83, 1
    %p87 = scmp.eq.s32.totalorder %s14, 3
    %p88 = scmp.ne.s32.totalorder %s83, %s85
    %p89 = scmp.eq.s32.totalorder %s14, 0
    %p90 = por %p88, %p89
    %p91 = scmp.ne.s32.totalorder %s83, %s85
    %p92 = scmp.eq.s32.totalorder %s19, 3
    %p93 = por %p91, %p92
    %p94 = scmp.ne.s32.totalorder %s85, %s86
    %p95 = scmp.eq.s32.totalorder %s19, 0
    %p96 = por %p94, %p95
    %p97 = scmp.ne.s32.totalorder %s85, %s86
    %p98 = scmp.eq.s32.totalorder %s20, 3
    %p99 = por %p97, %p98
    %p101 = scmp.ne.s32.totalorder %s86, %s100
    %p102 = scmp.eq.s32.totalorder %s20, 0
    %p103 = por %p101, %p102
    %s105 = sadd.s32 %s104, 1
    %p108 = scmp.eq.s32.totalorder %s14, 3
    %p109 = scmp.ne.s32.totalorder %s104, %s106
    %p110 = scmp.eq.s32.totalorder %s14, 0
    %p111 = por %p109, %p110
    %p112 = scmp.ne.s32.totalorder %s104, %s106
    %p113 = scmp.eq.s32.totalorder %s19, 3
    %p114 = por %p112, %p113
    %p115 = scmp.ne.s32.totalorder %s106, %s107
    %p116 = scmp.eq.s32.totalorder %s19, 0
    %p117 = por %p115, %p116
    %p118 = scmp.ne.s32.totalorder %s106, %s107
    %p119 = scmp.eq.s32.totalorder %s20, 3
    %p120 = por %p118, %p119
    %p122 = scmp.ne.s32.totalorder %s107, %s121
    %p123 = scmp.eq.s32.totalorder %s20, 0
    %p124 = por %p122, %p123
    %s125 = ssub.s32 %s21, %s33
    %p126 = scmp.eq.s32.totalorder %s125, 0
    %s128 = sadd.s32 %s127, 1
    %s129 = scalar_select %p126, %s127, %s128
    %p132 = pneg %p126
    %p133 = scmp.eq.s32.totalorder %s14, 3
    %p134 = por %p132, %p133
    %p135 = scmp.ne.s32.totalorder %s127, %s130
    %p136 = scmp.eq.s32.totalorder %s14, 0
    %p137 = por %p135, %p136
    %p138 = scmp.ne.s32.totalorder %s127, %s130
    %p139 = scmp.eq.s32.totalorder %s19, 3
    %p140 = por %p138, %p139
    %p141 = scmp.ne.s32.totalorder %s130, %s131
    %p142 = scmp.eq.s32.totalorder %s19, 0
    %p143 = por %p141, %p142
    %p144 = scmp.ne.s32.totalorder %s130, %s131
    %p145 = scmp.eq.s32.totalorder %s20, 3
    %p146 = por %p144, %p145
    %p148 = scmp.ne.s32.totalorder %s131, %s147
    %p149 = scmp.eq.s32.totalorder %s20, 0
    %p150 = por %p148, %p149
    %s151 = ssub.s32 %s21, %s33
    %p152 = scmp.eq.s32.totalorder %s151, 0
    %s154 = sadd.s32 %s153, 1
    %s155 = scalar_select %p152, %s153, %s154
    %p158 = pneg %p152
    %p159 = scmp.eq.s32.totalorder %s14, 3
    %p160 = por %p158, %p159
    %p161 = scmp.ne.s32.totalorder %s153, %s156
    %p162 = scmp.eq.s32.totalorder %s14, 0
    %p163 = por %p161, %p162
    %p164 = scmp.ne.s32.totalorder %s153, %s156
    %p165 = scmp.eq.s32.totalorder %s19, 3
    %p166 = por %p164, %p165
    %p167 = scmp.ne.s32.totalorder %s156, %s157
    %p168 = scmp.eq.s32.totalorder %s19, 0
    %p169 = por %p167, %p168
    %p170 = scmp.ne.s32.totalorder %s156, %s157
    %p171 = scmp.eq.s32.totalorder %s20, 3
    %p172 = por %p170, %p171
    %p174 = scmp.ne.s32.totalorder %s157, %s173
    %p175 = scmp.eq.s32.totalorder %s20, 0
    %p176 = por %p174, %p175
    %s177 = ssub.s32 %s21, %s33
    %p178 = scmp.eq.s32.totalorder %s177, 0
    %s180 = sadd.s32 %s179, 1
    %s181 = scalar_select %p178, %s179, %s180
    %p184 = pneg %p178
    %p185 = scmp.eq.s32.totalorder %s14, 3
    %p186 = por %p184, %p185
    %p187 = scmp.ne.s32.totalorder %s179, %s182
    %p188 = scmp.eq.s32.totalorder %s14, 0
    %p189 = por %p187, %p188
    %p190 = scmp.ne.s32.totalorder %s179, %s182
    %p191 = scmp.eq.s32.totalorder %s19, 3
    %p192 = por %p190, %p191
    %p193 = scmp.ne.s32.totalorder %s182, %s183
    %p194 = scmp.eq.s32.totalorder %s19, 0
    %p195 = por %p193, %p194
    %p196 = scmp.ne.s32.totalorder %s182, %s183
    %p197 = scmp.eq.s32.totalorder %s20, 3
    %p198 = por %p196, %p197
    %p200 = scmp.ne.s32.totalorder %s183, %s199
    %p201 = scmp.eq.s32.totalorder %s20, 0
    %p202 = por %p200, %p201
    %s203 = ssub.s32 %s21, %s33
    %p204 = scmp.eq.s32.totalorder %s203, 0
    %s206 = sadd.s32 %s205, 1
    %s207 = scalar_select %p204, %s205, %s206
    %p210 = pneg %p204
    %p211 = scmp.eq.s32.totalorder %s14, 3
    %p212 = por %p210, %p211
    %p213 = scmp.ne.s32.totalorder %s205, %s208
    %p214 = scmp.eq.s32.totalorder %s14, 0
    %p215 = por %p213, %p214
    %p216 = scmp.ne.s32.totalorder %s205, %s208
    %p217 = scmp.eq.s32.totalorder %s19, 3
    %p218 = por %p216, %p217
    %p219 = scmp.ne.s32.totalorder %s208, %s209
    %p220 = scmp.eq.s32.totalorder %s19, 0
    %p221 = por %p219, %p220
    %p222 = scmp.ne.s32.totalorder %s208, %s209
    %p223 = scmp.eq.s32.totalorder %s20, 3
    %p224 = por %p222, %p223
    %p226 = scmp.ne.s32.totalorder %s209, %s225
    %p227 = scmp.eq.s32.totalorder %s20, 0
    %p228 = por %p226, %p227
    %p229 = scmp.le.s32.totalorder 1, %s14
    %p230 = scmp.lt.s32.totalorder %s14, 5
    %p231 = pnand %p229, %p230
    %p232 = pneg %p231
    // Predicated region
    $region9: #{encoder_forward.6} parent=5 // pred_check
      _
    $region10: #{encoder_forward.6} parent=5 // pred_check_branch
      %234 = sbr.rel (%p231) target = $region12
    $region11: #{encoder_forward.6} parent=5 // pred_region
      %s235 = ssub.s32 %s14, 1
      // Predicated region
      $region13: #{encoder_forward.6} parent=11 // pred_check
        %p236 = pneg %p75
      $region14: #{encoder_forward.6} parent=11 // pred_check_branch
        %238 = sbr.rel (%p236) target = $region16
      $region15: #{encoder_forward.6} parent=11 // pred_region
        _
      $region16: #{encoder_forward.6} parent=11 // pred_fallthru
        _
      // Predicated region
      $region17: #{encoder_forward.6} parent=11 // pred_check
        %p239 = pneg %p96
      $region18: #{encoder_forward.6} parent=11 // pred_check_branch
        %241 = sbr.rel (%p239) target = $region20
      $region19: #{encoder_forward.6} parent=11 // pred_region
        _
      $region20: #{encoder_forward.6} parent=11 // pred_fallthru
        _
      // Predicated region
      $region21: #{encoder_forward.6} parent=11 // pred_check
        %p242 = pneg %p117
      $region22: #{encoder_forward.6} parent=11 // pred_check_branch
        %244 = sbr.rel (%p242) target = $region24
      $region23: #{encoder_forward.6} parent=11 // pred_region
        _
      $region24: #{encoder_forward.6} parent=11 // pred_fallthru
        _
    $region12: #{encoder_forward.6} parent=5 // pred_fallthru
      _
    %p245 = scmp.lt.s32.totalorder %s14, 4
    // Predicated region
    $region25: #{encoder_forward.6} parent=5 // pred_check
      %p246 = pneg %p245
    $region26: #{encoder_forward.6} parent=5 // pred_check_branch
      %248 = sbr.rel (%p246) target = $region28
    $region27: #{encoder_forward.6} parent=5 // pred_region
      // Predicated region
      $region29: #{encoder_forward.6} parent=27 // pred_check
        %p249 = pneg %p48
      $region30: #{encoder_forward.6} parent=27 // pred_check_branch
        %251 = sbr.rel (%p249) target = $region32
      $region31: #{encoder_forward.6} parent=27 // pred_region
        %s252 = sadd.s32 %s21, %s22
        %s253 = smul.u32 64, %s252
        %p254 = scmp.lt.s32.totalorder %s253, 255
        %s255 = scalar_select %p254, %s253, 255
        %s256 = smul.addr %s255, 2
        %s257 = smul.addr %s256, 4
        %s258 = scalar_lea.vmem %s0, %s257
        %s259 = sadd.s32 %s21, %s22
        %s260 = smul.u32 64, %s259
      $region32: #{encoder_forward.6} parent=27 // pred_fallthru
        _
    $region28: #{encoder_forward.6} parent=5 // pred_fallthru
      _
    %p261 = scmp.le.s32.totalorder 1, %s14
    %p262 = scmp.lt.s32.totalorder %s14, 5
    %p263 = pnand %p261, %p262
    %p264 = pneg %p263
    // Predicated region
    $region33: #{encoder_forward.6} parent=5 // pred_check
      _
    $region34: #{encoder_forward.6} parent=5 // pred_check_branch
      %266 = sbr.rel (%p263) target = $region36
    $region35: #{encoder_forward.6} parent=5 // pred_region
      %s267 = ssub.s32 %s14, 1
      %s268 = sadd.s32 %s23, %s24
      %s269 = smul.u32 64, %s268
      %p270 = scmp.lt.s32.totalorder %s269, 255
      %s271 = scalar_select %p270, %s269, 255
      %s272 = smul.addr %s271, 2
      %s273 = smul.addr %s272, 4
      %s274 = scalar_lea.vmem %s0, %s273
      %p275 = pneg %p54
      %p276 = pneg %p51
      %p277 = pneg %p75
      %p278 = pneg %p72
      %p279 = pneg %p96
      %p280 = pneg %p93
      %p281 = pneg %p117
      %p282 = pneg %p114
      %p283 = pneg %p143
      %p284 = pneg %p140
      %p285 = scmp.lt.s32.totalorder %s23, 3
      %s286 = scalar_select %p285, %s23, 3
      %s287 = smul.addr %s286, 4
      %s288 = scalar_lea.vmem %s4, %s287
      %p289 = pneg %p169
      %p290 = pneg %p166
      %p291 = scmp.lt.s32.totalorder %s23, 3
      %s292 = scalar_select %p291, %s23, 3
      %s293 = smul.addr %s292, 4
      %s294 = scalar_lea.vmem %s5, %s293
      %p295 = pneg %p195
      %p296 = pneg %p192
      %p297 = scmp.lt.s32.totalorder %s23, 3
      %s298 = scalar_select %p297, %s23, 3
      %s299 = smul.addr %s298, 4
      %s300 = scalar_lea.vmem %s6, %s299
      %p301 = pneg %p221
      %p302 = pneg %p218
      %p303 = scmp.lt.s32.totalorder %s23, 3
      %s304 = scalar_select %p303, %s23, 3
      %s305 = smul.addr %s304, 4
      %s306 = scalar_lea.vmem %s7, %s305
      %s307 = sadd.s32 %s23, %s24
      %s308 = smul.u32 64, %s307
      %p309 = scmp.lt.s32.totalorder %s308, 255
      %s310 = scalar_select %p309, %s308, 255
      %s311 = smul.addr %s310, 2
      %s312 = smul.addr %s311, 4
      %s313 = scalar_lea.vmem %s0, %s312
      %s314 = sadd.s32 %s23, %s24
      %s315 = smul.u32 64, %s314
      %p316 = scmp.lt.s32.totalorder %s23, 3
      %s317 = scalar_select %p316, %s23, 3
      %s318 = smul.addr %s317, 4
      %s319 = scalar_lea.vmem %s4, %s318
      %p320 = scmp.lt.s32.totalorder %s23, 3
      %s321 = scalar_select %p320, %s23, 3
      %s322 = smul.addr %s321, 4
      %s323 = scalar_lea.vmem %s5, %s322
      %p324 = scmp.lt.s32.totalorder %s23, 3
      %s325 = scalar_select %p324, %s23, 3
      %s326 = smul.addr %s325, 4
      %s327 = scalar_lea.vmem %s6, %s326
      %p328 = scmp.lt.s32.totalorder %s23, 3
      %s329 = scalar_select %p328, %s23, 3
      %s330 = smul.addr %s329, 4
      %s331 = scalar_lea.vmem %s7, %s330
      %v333 = vld [vmem:[%s313] sm:$0xff]
      %v334 = vld [vmem:[%s313 + $0x8] sm:$0xff]
      %v335 = vld [vmem:[%s313 + $0x10] sm:$0xff]
      %v336 = vld [vmem:[%s313 + $0x18] sm:$0xff]
      %v337 = vld [vmem:[%s313 + $0x20] sm:$0xff]
      %v338 = vld [vmem:[%s313 + $0x28] sm:$0xff]
      %v339 = vld [vmem:[%s313 + $0x30] sm:$0xff]
      %v340 = vld [vmem:[%s313 + $0x38] sm:$0xff]
      %v341 = vld [vmem:[%s313 + $0x40] sm:$0xff]
      %v342 = vld [vmem:[%s313 + $0x48] sm:$0xff]
      %v343 = vld [vmem:[%s313 + $0x50] sm:$0xff]
      %v344 = vld [vmem:[%s313 + $0x58] sm:$0xff]
      %v345 = vld [vmem:[%s313 + $0x60] sm:$0xff]
      %v346 = vld [vmem:[%s313 + $0x68] sm:$0xff]
      %v347 = vld [vmem:[%s313 + $0x70] sm:$0xff]
      %v348 = vld [vmem:[%s313 + $0x78] sm:$0xff]
      %v349 = vld [vmem:[%s313 + $0x80] sm:$0xff]
      %v350 = vld [vmem:[%s313 + $0x88] sm:$0xff]
      %v351 = vld [vmem:[%s313 + $0x90] sm:$0xff]
      %v352 = vld [vmem:[%s313 + $0x98] sm:$0xff]
      %v353 = vld [vmem:[%s313 + $0xa0] sm:$0xff]
      %v354 = vld [vmem:[%s313 + $0xa8] sm:$0xff]
      %v355 = vld [vmem:[%s313 + $0xb0] sm:$0xff]
      %v356 = vld [vmem:[%s313 + $0xb8] sm:$0xff]
      %v357 = vld [vmem:[%s313 + $0xc0] sm:$0xff]
      %v358 = vld [vmem:[%s313 + $0xc8] sm:$0xff]
      %v359 = vld [vmem:[%s313 + $0xd0] sm:$0xff]
      %v360 = vld [vmem:[%s313 + $0xd8] sm:$0xff]
      %v361 = vld [vmem:[%s313 + $0xe0] sm:$0xff]
      %v362 = vld [vmem:[%s313 + $0xe8] sm:$0xff]
      %v363 = vld [vmem:[%s313 + $0xf0] sm:$0xff]
      %v364 = vld [vmem:[%s313 + $0xf8] sm:$0xff]
      %v365 = vld [vmem:[%s313 + $0x100] sm:$0xff]
      %v366 = vld [vmem:[%s313 + $0x108] sm:$0xff]
      %v367 = vld [vmem:[%s313 + $0x110] sm:$0xff]
      %v368 = vld [vmem:[%s313 + $0x118] sm:$0xff]
      %v369 = vld [vmem:[%s313 + $0x120] sm:$0xff]
      %v370 = vld [vmem:[%s313 + $0x128] sm:$0xff]
      %v371 = vld [vmem:[%s313 + $0x130] sm:$0xff]
      %v372 = vld [vmem:[%s313 + $0x138] sm:$0xff]
      %v373 = vld [vmem:[%s313 + $0x140] sm:$0xff]
      %v374 = vld [vmem:[%s313 + $0x148] sm:$0xff]
      %v375 = vld [vmem:[%s313 + $0x150] sm:$0xff]
      %v376 = vld [vmem:[%s313 + $0x158] sm:$0xff]
      %v377 = vld [vmem:[%s313 + $0x160] sm:$0xff]
      %v378 = vld [vmem:[%s313 + $0x168] sm:$0xff]
      %v379 = vld [vmem:[%s313 + $0x170] sm:$0xff]
      %v380 = vld [vmem:[%s313 + $0x178] sm:$0xff]
      %v381 = vld [vmem:[%s313 + $0x180] sm:$0xff]
      %v382 = vld [vmem:[%s313 + $0x188] sm:$0xff]
      %v383 = vld [vmem:[%s313 + $0x190] sm:$0xff]
      %v384 = vld [vmem:[%s313 + $0x198] sm:$0xff]
      %v385 = vld [vmem:[%s313 + $0x1a0] sm:$0xff]
      %v386 = vld [vmem:[%s313 + $0x1a8] sm:$0xff]
      %v387 = vld [vmem:[%s313 + $0x1b0] sm:$0xff]
      %v388 = vld [vmem:[%s313 + $0x1b8] sm:$0xff]
      %v389 = vld [vmem:[%s313 + $0x1c0] sm:$0xff]
      %v390 = vld [vmem:[%s313 + $0x1c8] sm:$0xff]
      %v391 = vld [vmem:[%s313 + $0x1d0] sm:$0xff]
      %v392 = vld [vmem:[%s313 + $0x1d8] sm:$0xff]
      %v393 = vld [vmem:[%s313 + $0x1e0] sm:$0xff]
      %v394 = vld [vmem:[%s313 + $0x1e8] sm:$0xff]
      %v395 = vld [vmem:[%s313 + $0x1f0] sm:$0xff]
      %v396 = vld [vmem:[%s313 + $0x1f8] sm:$0xff]
      %v397 = vunpack.c.l.bf16 %v333
      %v398 = vunpack.c.h.bf16 %v333
      %v399 = vunpack.c.l.bf16 %v334
      %v400 = vunpack.c.h.bf16 %v334
      %v401 = vunpack.c.l.bf16 %v335
      %v402 = vunpack.c.h.bf16 %v335
      %v403 = vunpack.c.l.bf16 %v336
      %v404 = vunpack.c.h.bf16 %v336
      %v405 = vunpack.c.l.bf16 %v337
      %v406 = vunpack.c.h.bf16 %v337
      %v407 = vunpack.c.l.bf16 %v338
      %v408 = vunpack.c.h.bf16 %v338
      %v409 = vunpack.c.l.bf16 %v339
      %v410 = vunpack.c.h.bf16 %v339
      %v411 = vunpack.c.l.bf16 %v340
      %v412 = vunpack.c.h.bf16 %v340
      %v413 = vunpack.c.l.bf16 %v341
      %v414 = vunpack.c.h.bf16 %v341
      %v415 = vunpack.c.l.bf16 %v342
      %v416 = vunpack.c.h.bf16 %v342
      %v417 = vunpack.c.l.bf16 %v343
      %v418 = vunpack.c.h.bf16 %v343
      %v419 = vunpack.c.l.bf16 %v344
      %v420 = vunpack.c.h.bf16 %v344
      %v421 = vunpack.c.l.bf16 %v345
      %v422 = vunpack.c.h.bf16 %v345
      %v423 = vunpack.c.l.bf16 %v346
      %v424 = vunpack.c.h.bf16 %v346
      %v425 = vunpack.c.l.bf16 %v347
      %v426 = vunpack.c.h.bf16 %v347
      %v427 = vunpack.c.l.bf16 %v348
      %v428 = vunpack.c.h.bf16 %v348
      %v429 = vunpack.c.l.bf16 %v349
      %v430 = vunpack.c.h.bf16 %v349
      %v431 = vunpack.c.l.bf16 %v350
      %v432 = vunpack.c.h.bf16 %v350
      %v433 = vunpack.c.l.bf16 %v351
      %v434 = vunpack.c.h.bf16 %v351
      %v435 = vunpack.c.l.bf16 %v352
      %v436 = vunpack.c.h.bf16 %v352
      %v437 = vunpack.c.l.bf16 %v353
      %v438 = vunpack.c.h.bf16 %v353
      %v439 = vunpack.c.l.bf16 %v354
      %v440 = vunpack.c.h.bf16 %v354
      %v441 = vunpack.c.l.bf16 %v355
      %v442 = vunpack.c.h.bf16 %v355
      %v443 = vunpack.c.l.bf16 %v356
      %v444 = vunpack.c.h.bf16 %v356
      %v445 = vunpack.c.l.bf16 %v357
      %v446 = vunpack.c.h.bf16 %v357
      %v447 = vunpack.c.l.bf16 %v358
      %v448 = vunpack.c.h.bf16 %v358
      %v449 = vunpack.c.l.bf16 %v359
      %v450 = vunpack.c.h.bf16 %v359
      %v451 = vunpack.c.l.bf16 %v360
      %v452 = vunpack.c.h.bf16 %v360
      %v453 = vunpack.c.l.bf16 %v361
      %v454 = vunpack.c.h.bf16 %v361
      %v455 = vunpack.c.l.bf16 %v362
      %v456 = vunpack.c.h.bf16 %v362
      %v457 = vunpack.c.l.bf16 %v363
      %v458 = vunpack.c.h.bf16 %v363
      %v459 = vunpack.c.l.bf16 %v364
      %v460 = vunpack.c.h.bf16 %v364
      %v461 = vunpack.c.l.bf16 %v365
      %v462 = vunpack.c.h.bf16 %v365
      %v463 = vunpack.c.l.bf16 %v366
      %v464 = vunpack.c.h.bf16 %v366
      %v465 = vunpack.c.l.bf16 %v367
      %v466 = vunpack.c.h.bf16 %v367
      %v467 = vunpack.c.l.bf16 %v368
      %v468 = vunpack.c.h.bf16 %v368
      %v469 = vunpack.c.l.bf16 %v369
      %v470 = vunpack.c.h.bf16 %v369
      %v471 = vunpack.c.l.bf16 %v370
      %v472 = vunpack.c.h.bf16 %v370
      %v473 = vunpack.c.l.bf16 %v371
      %v474 = vunpack.c.h.bf16 %v371
      %v475 = vunpack.c.l.bf16 %v372
      %v476 = vunpack.c.h.bf16 %v372
      %v477 = vunpack.c.l.bf16 %v373
      %v478 = vunpack.c.h.bf16 %v373
      %v479 = vunpack.c.l.bf16 %v374
      %v480 = vunpack.c.h.bf16 %v374
      %v481 = vunpack.c.l.bf16 %v375
      %v482 = vunpack.c.h.bf16 %v375
      %v483 = vunpack.c.l.bf16 %v376
      %v484 = vunpack.c.h.bf16 %v376
      %v485 = vunpack.c.l.bf16 %v377
      %v486 = vunpack.c.h.bf16 %v377
      %v487 = vunpack.c.l.bf16 %v378
      %v488 = vunpack.c.h.bf16 %v378
      %v489 = vunpack.c.l.bf16 %v379
      %v490 = vunpack.c.h.bf16 %v379
      %v491 = vunpack.c.l.bf16 %v380
      %v492 = vunpack.c.h.bf16 %v380
      %v493 = vunpack.c.l.bf16 %v381
      %v494 = vunpack.c.h.bf16 %v381
      %v495 = vunpack.c.l.bf16 %v382
      %v496 = vunpack.c.h.bf16 %v382
      %v497 = vunpack.c.l.bf16 %v383
      %v498 = vunpack.c.h.bf16 %v383
      %v499 = vunpack.c.l.bf16 %v384
      %v500 = vunpack.c.h.bf16 %v384
      %v501 = vunpack.c.l.bf16 %v385
      %v502 = vunpack.c.h.bf16 %v385
      %v503 = vunpack.c.l.bf16 %v386
      %v504 = vunpack.c.h.bf16 %v386
      %v505 = vunpack.c.l.bf16 %v387
      %v506 = vunpack.c.h.bf16 %v387
      %v507 = vunpack.c.l.bf16 %v388
      %v508 = vunpack.c.h.bf16 %v388
      %v509 = vunpack.c.l.bf16 %v389
      %v510 = vunpack.c.h.bf16 %v389
      %v511 = vunpack.c.l.bf16 %v390
      %v512 = vunpack.c.h.bf16 %v390
      %v513 = vunpack.c.l.bf16 %v391
      %v514 = vunpack.c.h.bf16 %v391
      %v515 = vunpack.c.l.bf16 %v392
      %v516 = vunpack.c.h.bf16 %v392
      %v517 = vunpack.c.l.bf16 %v393
      %v518 = vunpack.c.h.bf16 %v393
      %v519 = vunpack.c.l.bf16 %v394
      %v520 = vunpack.c.h.bf16 %v394
      %v521 = vunpack.c.l.bf16 %v395
      %v522 = vunpack.c.h.bf16 %v395
      %v523 = vunpack.c.l.bf16 %v396
      %v524 = vunpack.c.h.bf16 %v396
      %v525 = vld [vmem:[%s1] sm:$0x3]
      %v527 = vlaneseq
      %v528 = vshrl.u32 %v527, 7
      %v529 = vsub.s32 0, %v528
      %v530 = vrot.slane %v525, %v529
      %v531 = vlaneseq
      %v532 = vshrl.u32 %v531, 7
      %v533 = vsub.s32 1, %v532
      %v534 = vrot.slane %v525, %v533
      %v537 = vmul.f32 %v397, %v530
      %v538 = vmul.f32 %v398, %v534
      %v539 = vmul.f32 %v399, %v530
      %v540 = vmul.f32 %v400, %v534
      %v541 = vmul.f32 %v401, %v530
      %v542 = vmul.f32 %v402, %v534
      %v543 = vmul.f32 %v403, %v530
      %v544 = vmul.f32 %v404, %v534
      %v545 = vmul.f32 %v405, %v530
      %v546 = vmul.f32 %v406, %v534
      %v547 = vmul.f32 %v407, %v530
      %v548 = vmul.f32 %v408, %v534
      %v549 = vmul.f32 %v409, %v530
      %v550 = vmul.f32 %v410, %v534
      %v551 = vmul.f32 %v411, %v530
      %v552 = vmul.f32 %v412, %v534
      %v553 = vmul.f32 %v413, %v530
      %v554 = vmul.f32 %v414, %v534
      %v555 = vmul.f32 %v415, %v530
      %v556 = vmul.f32 %v416, %v534
      %v557 = vmul.f32 %v417, %v530
      %v558 = vmul.f32 %v418, %v534
      %v559 = vmul.f32 %v419, %v530
      %v560 = vmul.f32 %v420, %v534
      %v561 = vmul.f32 %v421, %v530
      %v562 = vmul.f32 %v422, %v534
      %v563 = vmul.f32 %v423, %v530
      %v564 = vmul.f32 %v424, %v534
      %v565 = vmul.f32 %v425, %v530
      %v566 = vmul.f32 %v426, %v534
      %v567 = vmul.f32 %v427, %v530
      %v568 = vmul.f32 %v428, %v534
      %v569 = vmul.f32 %v429, %v530
      %v570 = vmul.f32 %v430, %v534
      %v571 = vmul.f32 %v431, %v530
      %v572 = vmul.f32 %v432, %v534
      %v573 = vmul.f32 %v433, %v530
      %v574 = vmul.f32 %v434, %v534
      %v575 = vmul.f32 %v435, %v530
      %v576 = vmul.f32 %v436, %v534
      %v577 = vmul.f32 %v437, %v530
      %v578 = vmul.f32 %v438, %v534
      %v579 = vmul.f32 %v439, %v530
      %v580 = vmul.f32 %v440, %v534
      %v581 = vmul.f32 %v441, %v530
      %v582 = vmul.f32 %v442, %v534
      %v583 = vmul.f32 %v443, %v530
      %v584 = vmul.f32 %v444, %v534
      %v585 = vmul.f32 %v445, %v530
      %v586 = vmul.f32 %v446, %v534
      %v587 = vmul.f32 %v447, %v530
      %v588 = vmul.f32 %v448, %v534
      %v589 = vmul.f32 %v449, %v530
      %v590 = vmul.f32 %v450, %v534
      %v591 = vmul.f32 %v451, %v530
      %v592 = vmul.f32 %v452, %v534
      %v593 = vmul.f32 %v453, %v530
      %v594 = vmul.f32 %v454, %v534
      %v595 = vmul.f32 %v455, %v530
      %v596 = vmul.f32 %v456, %v534
      %v597 = vmul.f32 %v457, %v530
      %v598 = vmul.f32 %v458, %v534
      %v599 = vmul.f32 %v459, %v530
      %v600 = vmul.f32 %v460, %v534
      %v601 = vmul.f32 %v461, %v530
      %v602 = vmul.f32 %v462, %v534
      %v603 = vmul.f32 %v463, %v530
      %v604 = vmul.f32 %v464, %v534
      %v605 = vmul.f32 %v465, %v530
      %v606 = vmul.f32 %v466, %v534
      %v607 = vmul.f32 %v467, %v530
      %v608 = vmul.f32 %v468, %v534
      %v609 = vmul.f32 %v469, %v530
      %v610 = vmul.f32 %v470, %v534
      %v611 = vmul.f32 %v471, %v530
      %v612 = vmul.f32 %v472, %v534
      %v613 = vmul.f32 %v473, %v530
      %v614 = vmul.f32 %v474, %v534
      %v615 = vmul.f32 %v475, %v530
      %v616 = vmul.f32 %v476, %v534
      %v617 = vmul.f32 %v477, %v530
      %v618 = vmul.f32 %v478, %v534
      %v619 = vmul.f32 %v479, %v530
      %v620 = vmul.f32 %v480, %v534
      %v621 = vmul.f32 %v481, %v530
      %v622 = vmul.f32 %v482, %v534
      %v623 = vmul.f32 %v483, %v530
      %v624 = vmul.f32 %v484, %v534
      %v625 = vmul.f32 %v485, %v530
      %v626 = vmul.f32 %v486, %v534
      %v627 = vmul.f32 %v487, %v530
      %v628 = vmul.f32 %v488, %v534
      %v629 = vmul.f32 %v489, %v530
      %v630 = vmul.f32 %v490, %v534
      %v631 = vmul.f32 %v491, %v530
      %v632 = vmul.f32 %v492, %v534
      %v633 = vmul.f32 %v493, %v530
      %v634 = vmul.f32 %v494, %v534
      %v635 = vmul.f32 %v495, %v530
      %v636 = vmul.f32 %v496, %v534
      %v637 = vmul.f32 %v497, %v530
      %v638 = vmul.f32 %v498, %v534
      %v639 = vmul.f32 %v499, %v530
      %v640 = vmul.f32 %v500, %v534
      %v641 = vmul.f32 %v501, %v530
      %v642 = vmul.f32 %v502, %v534
      %v643 = vmul.f32 %v503, %v530
      %v644 = vmul.f32 %v504, %v534
      %v645 = vmul.f32 %v505, %v530
      %v646 = vmul.f32 %v506, %v534
      %v647 = vmul.f32 %v507, %v530
      %v648 = vmul.f32 %v508, %v534
      %v649 = vmul.f32 %v509, %v530
      %v650 = vmul.f32 %v510, %v534
      %v651 = vmul.f32 %v511, %v530
      %v652 = vmul.f32 %v512, %v534
      %v653 = vmul.f32 %v513, %v530
      %v654 = vmul.f32 %v514, %v534
      %v655 = vmul.f32 %v515, %v530
      %v656 = vmul.f32 %v516, %v534
      %v657 = vmul.f32 %v517, %v530
      %v658 = vmul.f32 %v518, %v534
      %v659 = vmul.f32 %v519, %v530
      %v660 = vmul.f32 %v520, %v534
      %v661 = vmul.f32 %v521, %v530
      %v662 = vmul.f32 %v522, %v534
      %v663 = vmul.f32 %v523, %v530
      %v664 = vmul.f32 %v524, %v534
      %v665 = vld [vmem:[%s2] sm:$0x3]
      %v667 = vlaneseq
      %v668 = vshrl.u32 %v667, 7
      %v669 = vsub.s32 0, %v668
      %v670 = vrot.slane %v665, %v669
      %v671 = vlaneseq
      %v672 = vshrl.u32 %v671, 7
      %v673 = vsub.s32 1, %v672
      %v674 = vrot.slane %v665, %v673
      %v677 = vadd.f32 %v537, %v670
      %v678 = vadd.f32 %v538, %v674
      %v679 = vadd.f32 %v539, %v670
      %v680 = vadd.f32 %v540, %v674
      %v681 = vadd.f32 %v541, %v670
      %v682 = vadd.f32 %v542, %v674
      %v683 = vadd.f32 %v543, %v670
      %v684 = vadd.f32 %v544, %v674
      %v685 = vadd.f32 %v545, %v670
      %v686 = vadd.f32 %v546, %v674
      %v687 = vadd.f32 %v547, %v670
      %v688 = vadd.f32 %v548, %v674
      %v689 = vadd.f32 %v549, %v670
      %v690 = vadd.f32 %v550, %v674
      %v691 = vadd.f32 %v551, %v670
      %v692 = vadd.f32 %v552, %v674
      %v693 = vadd.f32 %v553, %v670
      %v694 = vadd.f32 %v554, %v674
      %v695 = vadd.f32 %v555, %v670
      %v696 = vadd.f32 %v556, %v674
      %v697 = vadd.f32 %v557, %v670
      %v698 = vadd.f32 %v558, %v674
      %v699 = vadd.f32 %v559, %v670
      %v700 = vadd.f32 %v560, %v674
      %v701 = vadd.f32 %v561, %v670
      %v702 = vadd.f32 %v562, %v674
      %v703 = vadd.f32 %v563, %v670
      %v704 = vadd.f32 %v564, %v674
      %v705 = vadd.f32 %v565, %v670
      %v706 = vadd.f32 %v566, %v674
      %v707 = vadd.f32 %v567, %v670
      %v708 = vadd.f32 %v568, %v674
      %v709 = vadd.f32 %v569, %v670
      %v710 = vadd.f32 %v570, %v674
      %v711 = vadd.f32 %v571, %v670
      %v712 = vadd.f32 %v572, %v674
      %v713 = vadd.f32 %v573, %v670
      %v714 = vadd.f32 %v574, %v674
      %v715 = vadd.f32 %v575, %v670
      %v716 = vadd.f32 %v576, %v674
      %v717 = vadd.f32 %v577, %v670
      %v718 = vadd.f32 %v578, %v674
      %v719 = vadd.f32 %v579, %v670
      %v720 = vadd.f32 %v580, %v674
      %v721 = vadd.f32 %v581, %v670
      %v722 = vadd.f32 %v582, %v674
      %v723 = vadd.f32 %v583, %v670
      %v724 = vadd.f32 %v584, %v674
      %v725 = vadd.f32 %v585, %v670
      %v726 = vadd.f32 %v586, %v674
      %v727 = vadd.f32 %v587, %v670
      %v728 = vadd.f32 %v588, %v674
      %v729 = vadd.f32 %v589, %v670
      %v730 = vadd.f32 %v590, %v674
      %v731 = vadd.f32 %v591, %v670
      %v732 = vadd.f32 %v592, %v674
      %v733 = vadd.f32 %v593, %v670
      %v734 = vadd.f32 %v594, %v674
      %v735 = vadd.f32 %v595, %v670
      %v736 = vadd.f32 %v596, %v674
      %v737 = vadd.f32 %v597, %v670
      %v738 = vadd.f32 %v598, %v674
      %v739 = vadd.f32 %v599, %v670
      %v740 = vadd.f32 %v600, %v674
      %v741 = vadd.f32 %v601, %v670
      %v742 = vadd.f32 %v602, %v674
      %v743 = vadd.f32 %v603, %v670
      %v744 = vadd.f32 %v604, %v674
      %v745 = vadd.f32 %v605, %v670
      %v746 = vadd.f32 %v606, %v674
      %v747 = vadd.f32 %v607, %v670
      %v748 = vadd.f32 %v608, %v674
      %v749 = vadd.f32 %v609, %v670
      %v750 = vadd.f32 %v610, %v674
      %v751 = vadd.f32 %v611, %v670
      %v752 = vadd.f32 %v612, %v674
      %v753 = vadd.f32 %v613, %v670
      %v754 = vadd.f32 %v614, %v674
      %v755 = vadd.f32 %v615, %v670
      %v756 = vadd.f32 %v616, %v674
      %v757 = vadd.f32 %v617, %v670
      %v758 = vadd.f32 %v618, %v674
      %v759 = vadd.f32 %v619, %v670
      %v760 = vadd.f32 %v620, %v674
      %v761 = vadd.f32 %v621, %v670
      %v762 = vadd.f32 %v622, %v674
      %v763 = vadd.f32 %v623, %v670
      %v764 = vadd.f32 %v624, %v674
      %v765 = vadd.f32 %v625, %v670
      %v766 = vadd.f32 %v626, %v674
      %v767 = vadd.f32 %v627, %v670
      %v768 = vadd.f32 %v628, %v674
      %v769 = vadd.f32 %v629, %v670
      %v770 = vadd.f32 %v630, %v674
      %v771 = vadd.f32 %v631, %v670
      %v772 = vadd.f32 %v632, %v674
      %v773 = vadd.f32 %v633, %v670
      %v774 = vadd.f32 %v634, %v674
      %v775 = vadd.f32 %v635, %v670
      %v776 = vadd.f32 %v636, %v674
      %v777 = vadd.f32 %v637, %v670
      %v778 = vadd.f32 %v638, %v674
      %v779 = vadd.f32 %v639, %v670
      %v780 = vadd.f32 %v640, %v674
      %v781 = vadd.f32 %v641, %v670
      %v782 = vadd.f32 %v642, %v674
      %v783 = vadd.f32 %v643, %v670
      %v784 = vadd.f32 %v644, %v674
      %v785 = vadd.f32 %v645, %v670
      %v786 = vadd.f32 %v646, %v674
      %v787 = vadd.f32 %v647, %v670
      %v788 = vadd.f32 %v648, %v674
      %v789 = vadd.f32 %v649, %v670
      %v790 = vadd.f32 %v650, %v674
      %v791 = vadd.f32 %v651, %v670
      %v792 = vadd.f32 %v652, %v674
      %v793 = vadd.f32 %v653, %v670
      %v794 = vadd.f32 %v654, %v674
      %v795 = vadd.f32 %v655, %v670
      %v796 = vadd.f32 %v656, %v674
      %v797 = vadd.f32 %v657, %v670
      %v798 = vadd.f32 %v658, %v674
      %v799 = vadd.f32 %v659, %v670
      %v800 = vadd.f32 %v660, %v674
      %v801 = vadd.f32 %v661, %v670
      %v802 = vadd.f32 %v662, %v674
      %v803 = vadd.f32 %v663, %v670
      %v804 = vadd.f32 %v664, %v674
      %v805 = vmax.f32 %v677, 0.0
      %v806 = vmax.f32 %v678, 0.0
      %v807 = vmax.f32 %v679, 0.0
      %v808 = vmax.f32 %v680, 0.0
      %v809 = vmax.f32 %v681, 0.0
      %v810 = vmax.f32 %v682, 0.0
      %v811 = vmax.f32 %v683, 0.0
      %v812 = vmax.f32 %v684, 0.0
      %v813 = vmax.f32 %v685, 0.0
      %v814 = vmax.f32 %v686, 0.0
      %v815 = vmax.f32 %v687, 0.0
      %v816 = vmax.f32 %v688, 0.0
      %v817 = vmax.f32 %v689, 0.0
      %v818 = vmax.f32 %v690, 0.0
      %v819 = vmax.f32 %v691, 0.0
      %v820 = vmax.f32 %v692, 0.0
      %v821 = vmax.f32 %v693, 0.0
      %v822 = vmax.f32 %v694, 0.0
      %v823 = vmax.f32 %v695, 0.0
      %v824 = vmax.f32 %v696, 0.0
      %v825 = vmax.f32 %v697, 0.0
      %v826 = vmax.f32 %v698, 0.0
      %v827 = vmax.f32 %v699, 0.0
      %v828 = vmax.f32 %v700, 0.0
      %v829 = vmax.f32 %v701, 0.0
      %v830 = vmax.f32 %v702, 0.0
      %v831 = vmax.f32 %v703, 0.0
      %v832 = vmax.f32 %v704, 0.0
      %v833 = vmax.f32 %v705, 0.0
      %v834 = vmax.f32 %v706, 0.0
      %v835 = vmax.f32 %v707, 0.0
      %v836 = vmax.f32 %v708, 0.0
      %v837 = vmax.f32 %v709, 0.0
      %v838 = vmax.f32 %v710, 0.0
      %v839 = vmax.f32 %v711, 0.0
      %v840 = vmax.f32 %v712, 0.0
      %v841 = vmax.f32 %v713, 0.0
      %v842 = vmax.f32 %v714, 0.0
      %v843 = vmax.f32 %v715, 0.0
      %v844 = vmax.f32 %v716, 0.0
      %v845 = vmax.f32 %v717, 0.0
      %v846 = vmax.f32 %v718, 0.0
      %v847 = vmax.f32 %v719, 0.0
      %v848 = vmax.f32 %v720, 0.0
      %v849 = vmax.f32 %v721, 0.0
      %v850 = vmax.f32 %v722, 0.0
      %v851 = vmax.f32 %v723, 0.0
      %v852 = vmax.f32 %v724, 0.0
      %v853 = vmax.f32 %v725, 0.0
      %v854 = vmax.f32 %v726, 0.0
      %v855 = vmax.f32 %v727, 0.0
      %v856 = vmax.f32 %v728, 0.0
      %v857 = vmax.f32 %v729, 0.0
      %v858 = vmax.f32 %v730, 0.0
      %v859 = vmax.f32 %v731, 0.0
      %v860 = vmax.f32 %v732, 0.0
      %v861 = vmax.f32 %v733, 0.0
      %v862 = vmax.f32 %v734, 0.0
      %v863 = vmax.f32 %v735, 0.0
      %v864 = vmax.f32 %v736, 0.0
      %v865 = vmax.f32 %v737, 0.0
      %v866 = vmax.f32 %v738, 0.0
      %v867 = vmax.f32 %v739, 0.0
      %v868 = vmax.f32 %v740, 0.0
      %v869 = vmax.f32 %v741, 0.0
      %v870 = vmax.f32 %v742, 0.0
      %v871 = vmax.f32 %v743, 0.0
      %v872 = vmax.f32 %v744, 0.0
      %v873 = vmax.f32 %v745, 0.0
      %v874 = vmax.f32 %v746, 0.0
      %v875 = vmax.f32 %v747, 0.0
      %v876 = vmax.f32 %v748, 0.0
      %v877 = vmax.f32 %v749, 0.0
      %v878 = vmax.f32 %v750, 0.0
      %v879 = vmax.f32 %v751, 0.0
      %v880 = vmax.f32 %v752, 0.0
      %v881 = vmax.f32 %v753, 0.0
      %v882 = vmax.f32 %v754, 0.0
      %v883 = vmax.f32 %v755, 0.0
      %v884 = vmax.f32 %v756, 0.0
      %v885 = vmax.f32 %v757, 0.0
      %v886 = vmax.f32 %v758, 0.0
      %v887 = vmax.f32 %v759, 0.0
      %v888 = vmax.f32 %v760, 0.0
      %v889 = vmax.f32 %v761, 0.0
      %v890 = vmax.f32 %v762, 0.0
      %v891 = vmax.f32 %v763, 0.0
      %v892 = vmax.f32 %v764, 0.0
      %v893 = vmax.f32 %v765, 0.0
      %v894 = vmax.f32 %v766, 0.0
      %v895 = vmax.f32 %v767, 0.0
      %v896 = vmax.f32 %v768, 0.0
      %v897 = vmax.f32 %v769, 0.0
      %v898 = vmax.f32 %v770, 0.0
      %v899 = vmax.f32 %v771, 0.0
      %v900 = vmax.f32 %v772, 0.0
      %v901 = vmax.f32 %v773, 0.0
      %v902 = vmax.f32 %v774, 0.0
      %v903 = vmax.f32 %v775, 0.0
      %v904 = vmax.f32 %v776, 0.0
      %v905 = vmax.f32 %v777, 0.0
      %v906 = vmax.f32 %v778, 0.0
      %v907 = vmax.f32 %v779, 0.0
      %v908 = vmax.f32 %v780, 0.0
      %v909 = vmax.f32 %v781, 0.0
      %v910 = vmax.f32 %v782, 0.0
      %v911 = vmax.f32 %v783, 0.0
      %v912 = vmax.f32 %v784, 0.0
      %v913 = vmax.f32 %v785, 0.0
      %v914 = vmax.f32 %v786, 0.0
      %v915 = vmax.f32 %v787, 0.0
      %v916 = vmax.f32 %v788, 0.0
      %v917 = vmax.f32 %v789, 0.0
      %v918 = vmax.f32 %v790, 0.0
      %v919 = vmax.f32 %v791, 0.0
      %v920 = vmax.f32 %v792, 0.0
      %v921 = vmax.f32 %v793, 0.0
      %v922 = vmax.f32 %v794, 0.0
      %v923 = vmax.f32 %v795, 0.0
      %v924 = vmax.f32 %v796, 0.0
      %v925 = vmax.f32 %v797, 0.0
      %v926 = vmax.f32 %v798, 0.0
      %v927 = vmax.f32 %v799, 0.0
      %v928 = vmax.f32 %v800, 0.0
      %v929 = vmax.f32 %v801, 0.0
      %v930 = vmax.f32 %v802, 0.0
      %v931 = vmax.f32 %v803, 0.0
      %v932 = vmax.f32 %v804, 0.0
      %v933 = vpack.c.bf16 %v807, %v805
      %v934 = vpack.c.bf16 %v808, %v806
      %v935 = vpack.c.bf16 %v811, %v809
      %v936 = vpack.c.bf16 %v812, %v810
      %v937 = vpack.c.bf16 %v815, %v813
      %v938 = vpack.c.bf16 %v816, %v814
      %v939 = vpack.c.bf16 %v819, %v817
      %v940 = vpack.c.bf16 %v820, %v818
      %v941 = vpack.c.bf16 %v823, %v821
      %v942 = vpack.c.bf16 %v824, %v822
      %v943 = vpack.c.bf16 %v827, %v825
      %v944 = vpack.c.bf16 %v828, %v826
      %v945 = vpack.c.bf16 %v831, %v829
      %v946 = vpack.c.bf16 %v832, %v830
      %v947 = vpack.c.bf16 %v835, %v833
      %v948 = vpack.c.bf16 %v836, %v834
      %v949 = vpack.c.bf16 %v839, %v837
      %v950 = vpack.c.bf16 %v840, %v838
      %v951 = vpack.c.bf16 %v843, %v841
      %v952 = vpack.c.bf16 %v844, %v842
      %v953 = vpack.c.bf16 %v847, %v845
      %v954 = vpack.c.bf16 %v848, %v846
      %v955 = vpack.c.bf16 %v851, %v849
      %v956 = vpack.c.bf16 %v852, %v850
      %v957 = vpack.c.bf16 %v855, %v853
      %v958 = vpack.c.bf16 %v856, %v854
      %v959 = vpack.c.bf16 %v859, %v857
      %v960 = vpack.c.bf16 %v860, %v858
      %v961 = vpack.c.bf16 %v863, %v861
      %v962 = vpack.c.bf16 %v864, %v862
      %v963 = vpack.c.bf16 %v867, %v865
      %v964 = vpack.c.bf16 %v868, %v866
      %v965 = vpack.c.bf16 %v871, %v869
      %v966 = vpack.c.bf16 %v872, %v870
      %v967 = vpack.c.bf16 %v875, %v873
      %v968 = vpack.c.bf16 %v876, %v874
      %v969 = vpack.c.bf16 %v879, %v877
      %v970 = vpack.c.bf16 %v880, %v878
      %v971 = vpack.c.bf16 %v883, %v881
      %v972 = vpack.c.bf16 %v884, %v882
      %v973 = vpack.c.bf16 %v887, %v885
      %v974 = vpack.c.bf16 %v888, %v886
      %v975 = vpack.c.bf16 %v891, %v889
      %v976 = vpack.c.bf16 %v892, %v890
      %v977 = vpack.c.bf16 %v895, %v893
      %v978 = vpack.c.bf16 %v896, %v894
      %v979 = vpack.c.bf16 %v899, %v897
      %v980 = vpack.c.bf16 %v900, %v898
      %v981 = vpack.c.bf16 %v903, %v901
      %v982 = vpack.c.bf16 %v904, %v902
      %v983 = vpack.c.bf16 %v907, %v905
      %v984 = vpack.c.bf16 %v908, %v906
      %v985 = vpack.c.bf16 %v911, %v909
      %v986 = vpack.c.bf16 %v912, %v910
      %v987 = vpack.c.bf16 %v915, %v913
      %v988 = vpack.c.bf16 %v916, %v914
      %v989 = vpack.c.bf16 %v919, %v917
      %v990 = vpack.c.bf16 %v920, %v918
      %v991 = vpack.c.bf16 %v923, %v921
      %v992 = vpack.c.bf16 %v924, %v922
      %v993 = vpack.c.bf16 %v927, %v925
      %v994 = vpack.c.bf16 %v928, %v926
      %v995 = vpack.c.bf16 %v931, %v929
      %v996 = vpack.c.bf16 %v932, %v930
      %p997 = scmp.eq.s32.totalorder %s24, 0
      // Predicated region
      $region37: #{encoder_forward.6} parent=35 // pred_check
        %p998 = pneg %p997
      $region38: #{encoder_forward.6} parent=35 // pred_check_branch
        %1000 = sbr.rel (%p998) target = $region40
      $region39: #{encoder_forward.6} parent=35 // pred_region
        %v1001 = vlaneseq
        %vm1002 = vcmp.ge.s32.totalorder %v1001, 0
        %vm1003 = vcmp.lt.s32.totalorder %v1001, 512
        %vm1004 = vmand %vm1002, %vm1003
        %1005 = vst.msk [vmem:[%s319] sm:$0xf] %vm1004, 0.0
        %1006 = vst.msk [vmem:[%s323] sm:$0xf] %vm1004, 0.0
        %1007 = vst.msk [vmem:[%s327] sm:$0xf] %vm1004, -inf
        %1008 = vst.msk [vmem:[%s331] sm:$0xf] %vm1004, inf
      $region40: #{encoder_forward.6} parent=35 // pred_fallthru
        _
      %v1009 = vld [vmem:[%s3] sm:$0xf]
      %v1010 = vld [vmem:[%s3 + $0x10] sm:$0xf]
      %v1011 = vld [vmem:[%s3 + $0x20] sm:$0xf]
      %v1012 = vld [vmem:[%s3 + $0x30] sm:$0xf]
      %v1013 = vld [vmem:[%s3 + $0x40] sm:$0xf]
      %v1014 = vld [vmem:[%s3 + $0x50] sm:$0xf]
      %v1015 = vld [vmem:[%s3 + $0x60] sm:$0xf]
      %v1016 = vld [vmem:[%s3 + $0x70] sm:$0xf]
      %v1017 = vld [vmem:[%s3 + $0x80] sm:$0xf]
      %v1018 = vld [vmem:[%s3 + $0x90] sm:$0xf]
      %v1019 = vld [vmem:[%s3 + $0xa0] sm:$0xf]
      %v1020 = vld [vmem:[%s3 + $0xb0] sm:$0xf]
      %v1021 = vld [vmem:[%s3 + $0xc0] sm:$0xf]
      %v1022 = vld [vmem:[%s3 + $0xd0] sm:$0xf]
      %v1023 = vld [vmem:[%s3 + $0xe0] sm:$0xf]
      %v1024 = vld [vmem:[%s3 + $0xf0] sm:$0xf]
      %v1025 = vld [vmem:[%s3 + $0x100] sm:$0xf]
      %v1026 = vld [vmem:[%s3 + $0x110] sm:$0xf]
      %v1027 = vld [vmem:[%s3 + $0x120] sm:$0xf]
      %v1028 = vld [vmem:[%s3 + $0x130] sm:$0xf]
      %v1029 = vld [vmem:[%s3 + $0x140] sm:$0xf]
      %v1030 = vld [vmem:[%s3 + $0x150] sm:$0xf]
      %v1031 = vld [vmem:[%s3 + $0x160] sm:$0xf]
      %v1032 = vld [vmem:[%s3 + $0x170] sm:$0xf]
      %v1033 = vld [vmem:[%s3 + $0x180] sm:$0xf]
      %v1034 = vld [vmem:[%s3 + $0x190] sm:$0xf]
      %v1035 = vld [vmem:[%s3 + $0x1a0] sm:$0xf]
      %v1036 = vld [vmem:[%s3 + $0x1b0] sm:$0xf]
      %v1037 = vld [vmem:[%s3 + $0x1c0] sm:$0xf]
      %v1038 = vld [vmem:[%s3 + $0x1d0] sm:$0xf]
      %v1039 = vld [vmem:[%s3 + $0x1e0] sm:$0xf]
      %v1040 = vld [vmem:[%s3 + $0x1f0] sm:$0xf]
      %v1073 = vunpack.c.l.b16 %v1009
      %v1074 = vunpack.c.l.b16 %v1010
      %v1075 = vunpack.c.l.b16 %v1011
      %v1076 = vunpack.c.l.b16 %v1012
      %v1077 = vunpack.c.l.b16 %v1013
      %v1078 = vunpack.c.l.b16 %v1014
      %v1079 = vunpack.c.l.b16 %v1015
      %v1080 = vunpack.c.l.b16 %v1016
      %v1081 = vunpack.c.l.b16 %v1017
      %v1082 = vunpack.c.l.b16 %v1018
      %v1083 = vunpack.c.l.b16 %v1019
      %v1084 = vunpack.c.l.b16 %v1020
      %v1085 = vunpack.c.l.b16 %v1021
      %v1086 = vunpack.c.l.b16 %v1022
      %v1087 = vunpack.c.l.b16 %v1023
      %v1088 = vunpack.c.l.b16 %v1024
      %v1089 = vunpack.c.l.b16 %v1025
      %v1090 = vunpack.c.l.b16 %v1026
      %v1091 = vunpack.c.l.b16 %v1027
      %v1092 = vunpack.c.l.b16 %v1028
      %v1093 = vunpack.c.l.b16 %v1029
      %v1094 = vunpack.c.l.b16 %v1030
      %v1095 = vunpack.c.l.b16 %v1031
      %v1096 = vunpack.c.l.b16 %v1032
      %v1097 = vunpack.c.l.b16 %v1033
      %v1098 = vunpack.c.l.b16 %v1034
      %v1099 = vunpack.c.l.b16 %v1035
      %v1100 = vunpack.c.l.b16 %v1036
      %v1101 = vunpack.c.l.b16 %v1037
      %v1102 = vunpack.c.l.b16 %v1038
      %v1103 = vunpack.c.l.b16 %v1039
      %v1104 = vunpack.c.l.b16 %v1040
      %v1105 = vpack.c.b16 %v1074, %v1073
      %v1106 = vpack.c.b16 %v1076, %v1075
      %v1107 = vpack.c.b16 %v1078, %v1077
      %v1108 = vpack.c.b16 %v1080, %v1079
      %v1109 = vpack.c.b16 %v1082, %v1081
      %v1110 = vpack.c.b16 %v1084, %v1083
      %v1111 = vpack.c.b16 %v1086, %v1085
      %v1112 = vpack.c.b16 %v1088, %v1087
      %v1113 = vpack.c.b16 %v1090, %v1089
      %v1114 = vpack.c.b16 %v1092, %v1091
      %v1115 = vpack.c.b16 %v1094, %v1093
      %v1116 = vpack.c.b16 %v1096, %v1095
      %v1117 = vpack.c.b16 %v1098, %v1097
      %v1118 = vpack.c.b16 %v1100, %v1099
      %v1119 = vpack.c.b16 %v1102, %v1101
      %v1120 = vpack.c.b16 %v1104, %v1103
      %1137 = vmatprep.subr.bf16.mxu0 0
      %1138 = vmatpush1.bf16.msra.mxu0 %v1105
      %1139 = vmatprep.subr.bf16.mxu0 0
      %1140 = vmatpush1.bf16.msra.mxu0 %v1106
      %1141 = vmatprep.subr.bf16.mxu0 0
      %1142 = vmatpush1.bf16.msra.mxu0 %v1107
      %1143 = vmatprep.subr.bf16.mxu0 0
      %1144 = vmatpush1.bf16.msra.mxu0 %v1108
      %1145 = vmatprep.subr.bf16.mxu0 0
      %1146 = vmatpush1.bf16.msra.mxu0 %v1109
      %1147 = vmatprep.subr.bf16.mxu0 0
      %1148 = vmatpush1.bf16.msra.mxu0 %v1110
      %1149 = vmatprep.subr.bf16.mxu0 0
      %1150 = vmatpush1.bf16.msra.mxu0 %v1111
      %1151 = vmatprep.subr.bf16.mxu0 0
      %1152 = vmatpush1.bf16.msra.mxu0 %v1112
      %1153 = vmatprep.subr.bf16.mxu0 0
      %1154 = vmatpush1.bf16.msra.mxu0 %v1113
      %1155 = vmatprep.subr.bf16.mxu0 0
      %1156 = vmatpush1.bf16.msra.mxu0 %v1114
      %1157 = vmatprep.subr.bf16.mxu0 0
      %1158 = vmatpush1.bf16.msra.mxu0 %v1115
      %1159 = vmatprep.subr.bf16.mxu0 0
      %1160 = vmatpush1.bf16.msra.mxu0 %v1116
      %1161 = vmatprep.subr.bf16.mxu0 0
      %1162 = vmatpush1.bf16.msra.mxu0 %v1117
      %1163 = vmatprep.subr.bf16.mxu0 0
      %1164 = vmatpush1.bf16.msra.mxu0 %v1118
      %1165 = vmatprep.subr.bf16.mxu0 0
      %1166 = vmatpush1.bf16.msra.mxu0 %v1119
      %1167 = vmatprep.subr.bf16.mxu0 0
      %1168 = vmatpush1.bf16.msra.mxu0 %v1120
      %1169 = vmatprep.mubr.bf16.mxu0 %v934
      %1170 = vmatmul.mubr.bf16.gmra.mrb[0].mxu0 %v933
      %v1171 = vpop.f32.mrb[0].mxu0
      %v1172 = vadd.f32 0.0, %v1171
      %v1173 = vpop.f32.mrb[0].mxu0
      %v1174 = vpop.f32.mrb[0].mxu0
      %v1175 = vadd.f32 0.0, %v1174
      %v1176 = vpop.f32.mrb[0].mxu0
      %1177 = vmatprep.mubr.bf16.mxu0 %v936
      %1178 = vmatmul.mubr.bf16.gmra.mrb[0].mxu0 %v935
      %v1179 = vpop.f32.mrb[0].mxu0
      %v1180 = vadd.f32 0.0, %v1179
      %v1181 = vpop.f32.mrb[0].mxu0
      %v1182 = vpop.f32.mrb[0].mxu0
      %v1183 = vadd.f32 0.0, %v1182
      %v1184 = vpop.f32.mrb[0].mxu0
      %1185 = vmatprep.mubr.bf16.mxu0 %v938
      %1186 = vmatmul.mubr.bf16.gmra.mrb[0].mxu0 %v937
      %v1187 = vpop.f32.mrb[0].mxu0
      %v1188 = vadd.f32 0.0, %v1187
      %v1189 = vpop.f32.mrb[0].mxu0
      %v1190 = vpop.f32.mrb[0].mxu0
      %v1191 = vadd.f32 0.0, %v1190
      %v1192 = vpop.f32.mrb[0].mxu0
      %1193 = vmatprep.mubr.bf16.mxu0 %v940
      %1194 = vmatmul.mubr.bf16.gmra.mrb[0].mxu0 %v939
      %v1195 = vpop.f32.mrb[0].mxu0
      %v1196 = vadd.f32 0.0, %v1195
      %v1197 = vpop.f32.mrb[0].mxu0
      %v1198 = vpop.f32.mrb[0].mxu0
      %v1199 = vadd.f32 0.0, %v1198
      %v1200 = vpop.f32.mrb[0].mxu0
      %1201 = vmatprep.mubr.bf16.mxu0 %v942
      %1202 = vmatmul.mubr.bf16.gmra.mrb[0].mxu0 %v941
      %v1203 = vpop.f32.mrb[0].mxu0
      %v1204 = vadd.f32 0.0, %v1203
      %v1205 = vpop.f32.mrb[0].mxu0
      %v1206 = vpop.f32.mrb[0].mxu0
      %v1207 = vadd.f32 0.0, %v1206
      %v1208 = vpop.f32.mrb[0].mxu0
      %1209 = vmatprep.mubr.bf16.mxu0 %v944
      %1210 = vmatmul.mubr.bf16.gmra.mrb[0].mxu0 %v943
      %v1211 = vpop.f32.mrb[0].mxu0
      %v1212 = vadd.f32 0.0, %v1211
      %v1213 = vpop.f32.mrb[0].mxu0
      %v1214 = vpop.f32.mrb[0].mxu0
      %v1215 = vadd.f32 0.0, %v1214
      %v1216 = vpop.f32.mrb[0].mxu0
      %1217 = vmatprep.mubr.bf16.mxu0 %v946
      %1218 = vmatmul.mubr.bf16.gmra.mrb[0].mxu0 %v945
      %v1219 = vpop.f32.mrb[0].mxu0
      %v1220 = vadd.f32 0.0, %v1219
      %v1221 = vpop.f32.mrb[0].mxu0
      %v1222 = vpop.f32.mrb[0].mxu0
      %v1223 = vadd.f32 0.0, %v1222
      %v1224 = vpop.f32.mrb[0].mxu0
      %1225 = vmatprep.mubr.bf16.mxu0 %v948
      %1226 = vmatmul.mubr.bf16.gmra.mrb[0].mxu0 %v947
      %v1227 = vpop.f32.mrb[0].mxu0
      %v1228 = vadd.f32 0.0, %v1227
      %v1229 = vpop.f32.mrb[0].mxu0
      %v1230 = vpop.f32.mrb[0].mxu0
      %v1231 = vadd.f32 0.0, %v1230
      %v1232 = vpop.f32.mrb[0].mxu0
      %1233 = vmatprep.mubr.bf16.mxu0 %v950
      %1234 = vmatmul.mubr.bf16.gmra.mrb[0].mxu0 %v949
      %v1235 = vpop.f32.mrb[0].mxu0
      %v1236 = vadd.f32 0.0, %v1235
      %v1237 = vpop.f32.mrb[0].mxu0
      %v1238 = vpop.f32.mrb[0].mxu0
      %v1239 = vadd.f32 0.0, %v1238
      %v1240 = vpop.f32.mrb[0].mxu0
      %1241 = vmatprep.mubr.bf16.mxu0 %v952
      %1242 = vmatmul.mubr.bf16.gmra.mrb[0].mxu0 %v951
      %v1243 = vpop.f32.mrb[0].mxu0
      %v1244 = vadd.f32 0.0, %v1243
      %v1245 = vpop.f32.mrb[0].mxu0
      %v1246 = vpop.f32.mrb[0].mxu0
      %v1247 = vadd.f32 0.0, %v1246
      %v1248 = vpop.f32.mrb[0].mxu0
      %1249 = vmatprep.mubr.bf16.mxu0 %v954
      %1250 = vmatmul.mubr.bf16.gmra.mrb[0].mxu0 %v953
      %v1251 = vpop.f32.mrb[0].mxu0
      %v1252 = vadd.f32 0.0, %v1251
      %v1253 = vpop.f32.mrb[0].mxu0
      %v1254 = vpop.f32.mrb[0].mxu0
      %v1255 = vadd.f32 0.0, %v1254
      %v1256 = vpop.f32.mrb[0].mxu0
      %1257 = vmatprep.mubr.bf16.mxu0 %v956
      %1258 = vmatmul.mubr.bf16.gmra.mrb[0].mxu0 %v955
      %v1259 = vpop.f32.mrb[0].mxu0
      %v1260 = vadd.f32 0.0, %v1259
      %v1261 = vpop.f32.mrb[0].mxu0
      %v1262 = vpop.f32.mrb[0].mxu0
      %v1263 = vadd.f32 0.0, %v1262
      %v1264 = vpop.f32.mrb[0].mxu0
      %1265 = vmatprep.mubr.bf16.mxu0 %v958
      %1266 = vmatmul.mubr.bf16.gmra.mrb[0].mxu0 %v957
      %v1267 = vpop.f32.mrb[0].mxu0
      %v1268 = vadd.f32 0.0, %v1267
      %v1269 = vpop.f32.mrb[0].mxu0
      %v1270 = vpop.f32.mrb[0].mxu0
      %v1271 = vadd.f32 0.0, %v1270
      %v1272 = vpop.f32.mrb[0].mxu0
      %1273 = vmatprep.mubr.bf16.mxu0 %v960
      %1274 = vmatmul.mubr.bf16.gmra.mrb[0].mxu0 %v959
      %v1275 = vpop.f32.mrb[0].mxu0
      %v1276 = vadd.f32 0.0, %v1275
      %v1277 = vpop.f32.mrb[0].mxu0
      %v1278 = vpop.f32.mrb[0].mxu0
      %v1279 = vadd.f32 0.0, %v1278
      %v1280 = vpop.f32.mrb[0].mxu0
      %1281 = vmatprep.mubr.bf16.mxu0 %v962
      %1282 = vmatmul.mubr.bf16.gmra.mrb[0].mxu0 %v961
      %v1283 = vpop.f32.mrb[0].mxu0
      %v1284 = vadd.f32 0.0, %v1283
      %v1285 = vpop.f32.mrb[0].mxu0
      %v1286 = vpop.f32.mrb[0].mxu0
      %v1287 = vadd.f32 0.0, %v1286
      %v1288 = vpop.f32.mrb[0].mxu0
      %1289 = vmatprep.mubr.bf16.mxu0 %v964
      %1290 = vmatmul.mubr.bf16.gmra.mrb[0].mxu0 %v963
      %v1291 = vpop.f32.mrb[0].mxu0
      %v1292 = vadd.f32 0.0, %v1291
      %v1293 = vpop.f32.mrb[0].mxu0
      %v1294 = vpop.f32.mrb[0].mxu0
      %v1295 = vadd.f32 0.0, %v1294
      %v1296 = vpop.f32.mrb[0].mxu0
      %1297 = vmatprep.mubr.bf16.mxu0 %v966
      %1298 = vmatmul.mubr.bf16.gmra.mrb[0].mxu0 %v965
      %v1299 = vpop.f32.mrb[0].mxu0
      %v1300 = vadd.f32 0.0, %v1299
      %v1301 = vpop.f32.mrb[0].mxu0
      %v1302 = vpop.f32.mrb[0].mxu0
      %v1303 = vadd.f32 0.0, %v1302
      %v1304 = vpop.f32.mrb[0].mxu0
      %1305 = vmatprep.mubr.bf16.mxu0 %v968
      %1306 = vmatmul.mubr.bf16.gmra.mrb[0].mxu0 %v967
      %v1307 = vpop.f32.mrb[0].mxu0
      %v1308 = vadd.f32 0.0, %v1307
      %v1309 = vpop.f32.mrb[0].mxu0
      %v1310 = vpop.f32.mrb[0].mxu0
      %v1311 = vadd.f32 0.0, %v1310
      %v1312 = vpop.f32.mrb[0].mxu0
      %1313 = vmatprep.mubr.bf16.mxu0 %v970
      %1314 = vmatmul.mubr.bf16.gmra.mrb[0].mxu0 %v969
      %v1315 = vpop.f32.mrb[0].mxu0
      %v1316 = vadd.f32 0.0, %v1315
      %v1317 = vpop.f32.mrb[0].mxu0
      %v1318 = vpop.f32.mrb[0].mxu0
      %v1319 = vadd.f32 0.0, %v1318
      %v1320 = vpop.f32.mrb[0].mxu0
      %1321 = vmatprep.mubr.bf16.mxu0 %v972
      %1322 = vmatmul.mubr.bf16.gmra.mrb[0].mxu0 %v971
      %v1323 = vpop.f32.mrb[0].mxu0
      %v1324 = vadd.f32 0.0, %v1323
      %v1325 = vpop.f32.mrb[0].mxu0
      %v1326 = vpop.f32.mrb[0].mxu0
      %v1327 = vadd.f32 0.0, %v1326
      %v1328 = vpop.f32.mrb[0].mxu0
      %1329 = vmatprep.mubr.bf16.mxu0 %v974
      %1330 = vmatmul.mubr.bf16.gmra.mrb[0].mxu0 %v973
      %v1331 = vpop.f32.mrb[0].mxu0
      %v1332 = vadd.f32 0.0, %v1331
      %v1333 = vpop.f32.mrb[0].mxu0
      %v1334 = vpop.f32.mrb[0].mxu0
      %v1335 = vadd.f32 0.0, %v1334
      %v1336 = vpop.f32.mrb[0].mxu0
      %1337 = vmatprep.mubr.bf16.mxu0 %v976
      %1338 = vmatmul.mubr.bf16.gmra.mrb[0].mxu0 %v975
      %v1339 = vpop.f32.mrb[0].mxu0
      %v1340 = vadd.f32 0.0, %v1339
      %v1341 = vpop.f32.mrb[0].mxu0
      %v1342 = vpop.f32.mrb[0].mxu0
      %v1343 = vadd.f32 0.0, %v1342
      %v1344 = vpop.f32.mrb[0].mxu0
      %1345 = vmatprep.mubr.bf16.mxu0 %v978
      %1346 = vmatmul.mubr.bf16.gmra.mrb[0].mxu0 %v977
      %v1347 = vpop.f32.mrb[0].mxu0
      %v1348 = vadd.f32 0.0, %v1347
      %v1349 = vpop.f32.mrb[0].mxu0
      %v1350 = vpop.f32.mrb[0].mxu0
      %v1351 = vadd.f32 0.0, %v1350
      %v1352 = vpop.f32.mrb[0].mxu0
      %1353 = vmatprep.mubr.bf16.mxu0 %v980
      %1354 = vmatmul.mubr.bf16.gmra.mrb[0].mxu0 %v979
      %v1355 = vpop.f32.mrb[0].mxu0
      %v1356 = vadd.f32 0.0, %v1355
      %v1357 = vpop.f32.mrb[0].mxu0
      %v1358 = vpop.f32.mrb[0].mxu0
      %v1359 = vadd.f32 0.0, %v1358
      %v1360 = vpop.f32.mrb[0].mxu0
      %1361 = vmatprep.mubr.bf16.mxu0 %v982
      %1362 = vmatmul.mubr.bf16.gmra.mrb[0].mxu0 %v981
      %v1363 = vpop.f32.mrb[0].mxu0
      %v1364 = vadd.f32 0.0, %v1363
      %v1365 = vpop.f32.mrb[0].mxu0
      %v1366 = vpop.f32.mrb[0].mxu0
      %v1367 = vadd.f32 0.0, %v1366
      %v1368 = vpop.f32.mrb[0].mxu0
      %1369 = vmatprep.mubr.bf16.mxu0 %v984
      %1370 = vmatmul.mubr.bf16.gmra.mrb[0].mxu0 %v983
      %v1371 = vpop.f32.mrb[0].mxu0
      %v1372 = vadd.f32 0.0, %v1371
      %v1373 = vpop.f32.mrb[0].mxu0
      %v1374 = vpop.f32.mrb[0].mxu0
      %v1375 = vadd.f32 0.0, %v1374
      %v1376 = vpop.f32.mrb[0].mxu0
      %1377 = vmatprep.mubr.bf16.mxu0 %v986
      %1378 = vmatmul.mubr.bf16.gmra.mrb[0].mxu0 %v985
      %v1379 = vpop.f32.mrb[0].mxu0
      %v1380 = vadd.f32 0.0, %v1379
      %v1381 = vpop.f32.mrb[0].mxu0
      %v1382 = vpop.f32.mrb[0].mxu0
      %v1383 = vadd.f32 0.0, %v1382
      %v1384 = vpop.f32.mrb[0].mxu0
      %1385 = vmatprep.mubr.bf16.mxu0 %v988
      %1386 = vmatmul.mubr.bf16.gmra.mrb[0].mxu0 %v987
      %v1387 = vpop.f32.mrb[0].mxu0
      %v1388 = vadd.f32 0.0, %v1387
      %v1389 = vpop.f32.mrb[0].mxu0
      %v1390 = vpop.f32.mrb[0].mxu0
      %v1391 = vadd.f32 0.0, %v1390
      %v1392 = vpop.f32.mrb[0].mxu0
      %1393 = vmatprep.mubr.bf16.mxu0 %v990
      %1394 = vmatmul.mubr.bf16.gmra.mrb[0].mxu0 %v989
      %v1395 = vpop.f32.mrb[0].mxu0
      %v1396 = vadd.f32 0.0, %v1395
      %v1397 = vpop.f32.mrb[0].mxu0
      %v1398 = vpop.f32.mrb[0].mxu0
      %v1399 = vadd.f32 0.0, %v1398
      %v1400 = vpop.f32.mrb[0].mxu0
      %1401 = vmatprep.mubr.bf16.mxu0 %v992
      %1402 = vmatmul.mubr.bf16.gmra.mrb[0].mxu0 %v991
      %v1403 = vpop.f32.mrb[0].mxu0
      %v1404 = vadd.f32 0.0, %v1403
      %v1405 = vpop.f32.mrb[0].mxu0
      %v1406 = vpop.f32.mrb[0].mxu0
      %v1407 = vadd.f32 0.0, %v1406
      %v1408 = vpop.f32.mrb[0].mxu0
      %1409 = vmatprep.mubr.bf16.mxu0 %v994
      %1410 = vmatmul.mubr.bf16.gmra.mrb[0].mxu0 %v993
      %v1411 = vpop.f32.mrb[0].mxu0
      %v1412 = vadd.f32 0.0, %v1411
      %v1413 = vpop.f32.mrb[0].mxu0
      %v1414 = vpop.f32.mrb[0].mxu0
      %v1415 = vadd.f32 0.0, %v1414
      %v1416 = vpop.f32.mrb[0].mxu0
      %1417 = vmatprep.mubr.bf16.mxu0 %v996
      %1418 = vmatmul.mubr.bf16.gmra.mrb[0].mxu0 %v995
      %v1419 = vpop.f32.mrb[0].mxu0
      %v1420 = vadd.f32 0.0, %v1419
      %v1421 = vpop.f32.mrb[0].mxu0
      %v1422 = vpop.f32.mrb[0].mxu0
      %v1423 = vadd.f32 0.0, %v1422
      %v1424 = vpop.f32.mrb[0].mxu0
      %1425 = vdwg.mxu0
      %v1426 = vadd.f32 %v1172, %v1175
      %v1427 = vadd.f32 %v1426, %v1180
      %v1428 = vadd.f32 %v1427, %v1183
      %v1429 = vadd.f32 %v1428, %v1188
      %v1430 = vadd.f32 %v1429, %v1191
      %v1431 = vadd.f32 %v1430, %v1196
      %v1432 = vadd.f32 %v1431, %v1199
      %v1433 = vadd.f32 %v1432, %v1204
      %v1434 = vadd.f32 %v1433, %v1207
      %v1435 = vadd.f32 %v1434, %v1212
      %v1436 = vadd.f32 %v1435, %v1215
      %v1437 = vadd.f32 %v1436, %v1220
      %v1438 = vadd.f32 %v1437, %v1223
      %v1439 = vadd.f32 %v1438, %v1228
      %v1440 = vadd.f32 %v1439, %v1231
      %v1441 = vadd.f32 %v1440, %v1236
      %v1442 = vadd.f32 %v1441, %v1239
      %v1443 = vadd.f32 %v1442, %v1244
      %v1444 = vadd.f32 %v1443, %v1247
      %v1445 = vadd.f32 %v1444, %v1252
      %v1446 = vadd.f32 %v1445, %v1255
      %v1447 = vadd.f32 %v1446, %v1260
      %v1448 = vadd.f32 %v1447, %v1263
      %v1449 = vadd.f32 %v1448, %v1268
      %v1450 = vadd.f32 %v1449, %v1271
      %v1451 = vadd.f32 %v1450, %v1276
      %v1452 = vadd.f32 %v1451, %v1279
      %v1453 = vadd.f32 %v1452, %v1284
      %v1454 = vadd.f32 %v1453, %v1287
      %v1455 = vadd.f32 %v1454, %v1292
      %v1456 = vadd.f32 %v1455, %v1295
      %v1457 = vadd.f32 %v1456, %v1300
      %v1458 = vadd.f32 %v1457, %v1303
      %v1459 = vadd.f32 %v1458, %v1308
      %v1460 = vadd.f32 %v1459, %v1311
      %v1461 = vadd.f32 %v1460, %v1316
      %v1462 = vadd.f32 %v1461, %v1319
      %v1463 = vadd.f32 %v1462, %v1324
      %v1464 = vadd.f32 %v1463, %v1327
      %v1465 = vadd.f32 %v1464, %v1332
      %v1466 = vadd.f32 %v1465, %v1335
      %v1467 = vadd.f32 %v1466, %v1340
      %v1468 = vadd.f32 %v1467, %v1343
      %v1469 = vadd.f32 %v1468, %v1348
      %v1470 = vadd.f32 %v1469, %v1351
      %v1471 = vadd.f32 %v1470, %v1356
      %v1472 = vadd.f32 %v1471, %v1359
      %v1473 = vadd.f32 %v1472, %v1364
      %v1474 = vadd.f32 %v1473, %v1367
      %v1475 = vadd.f32 %v1474, %v1372
      %v1476 = vadd.f32 %v1475, %v1375
      %v1477 = vadd.f32 %v1476, %v1380
      %v1478 = vadd.f32 %v1477, %v1383
      %v1479 = vadd.f32 %v1478, %v1388
      %v1480 = vadd.f32 %v1479, %v1391
      %v1481 = vadd.f32 %v1480, %v1396
      %v1482 = vadd.f32 %v1481, %v1399
      %v1483 = vadd.f32 %v1482, %v1404
      %v1484 = vadd.f32 %v1483, %v1407
      %v1485 = vadd.f32 %v1484, %v1412
      %v1486 = vadd.f32 %v1485, %v1415
      %v1487 = vadd.f32 %v1486, %v1420
      %v1488 = vadd.f32 %v1487, %v1423
      %v1489 = vrot.slane %v1488, 4
      %v1490 = vadd.f32 %v1488, %v1489
      %v1491 = vrot.slane %v1490, 2
      %v1492 = vadd.f32 %v1490, %v1491
      %v1493 = vrot.slane %v1492, 1
      %v1494 = vadd.f32 %v1492, %v1493
      %v1495 = vmul.f32 %v1172, %v1172
      %v1496 = vmul.f32 %v1175, %v1175
      %v1497 = vmul.f32 %v1180, %v1180
      %v1498 = vmul.f32 %v1183, %v1183
      %v1499 = vmul.f32 %v1188, %v1188
      %v1500 = vmul.f32 %v1191, %v1191
      %v1501 = vmul.f32 %v1196, %v1196
      %v1502 = vmul.f32 %v1199, %v1199
      %v1503 = vmul.f32 %v1204, %v1204
      %v1504 = vmul.f32 %v1207, %v1207
      %v1505 = vmul.f32 %v1212, %v1212
      %v1506 = vmul.f32 %v1215, %v1215
      %v1507 = vmul.f32 %v1220, %v1220
      %v1508 = vmul.f32 %v1223, %v1223
      %v1509 = vmul.f32 %v1228, %v1228
      %v1510 = vmul.f32 %v1231, %v1231
      %v1511 = vmul.f32 %v1236, %v1236
      %v1512 = vmul.f32 %v1239, %v1239
      %v1513 = vmul.f32 %v1244, %v1244
      %v1514 = vmul.f32 %v1247, %v1247
      %v1515 = vmul.f32 %v1252, %v1252
      %v1516 = vmul.f32 %v1255, %v1255
      %v1517 = vmul.f32 %v1260, %v1260
      %v1518 = vmul.f32 %v1263, %v1263
      %v1519 = vmul.f32 %v1268, %v1268
      %v1520 = vmul.f32 %v1271, %v1271
      %v1521 = vmul.f32 %v1276, %v1276
      %v1522 = vmul.f32 %v1279, %v1279
      %v1523 = vmul.f32 %v1284, %v1284
      %v1524 = vmul.f32 %v1287, %v1287
      %v1525 = vmul.f32 %v1292, %v1292
      %v1526 = vmul.f32 %v1295, %v1295
      %v1527 = vmul.f32 %v1300, %v1300
      %v1528 = vmul.f32 %v1303, %v1303
      %v1529 = vmul.f32 %v1308, %v1308
      %v1530 = vmul.f32 %v1311, %v1311
      %v1531 = vmul.f32 %v1316, %v1316
      %v1532 = vmul.f32 %v1319, %v1319
      %v1533 = vmul.f32 %v1324, %v1324
      %v1534 = vmul.f32 %v1327, %v1327
      %v1535 = vmul.f32 %v1332, %v1332
      %v1536 = vmul.f32 %v1335, %v1335
      %v1537 = vmul.f32 %v1340, %v1340
      %v1538 = vmul.f32 %v1343, %v1343
      %v1539 = vmul.f32 %v1348, %v1348
      %v1540 = vmul.f32 %v1351, %v1351
      %v1541 = vmul.f32 %v1356, %v1356
      %v1542 = vmul.f32 %v1359, %v1359
      %v1543 = vmul.f32 %v1364, %v1364
      %v1544 = vmul.f32 %v1367, %v1367
      %v1545 = vmul.f32 %v1372, %v1372
      %v1546 = vmul.f32 %v1375, %v1375
      %v1547 = vmul.f32 %v1380, %v1380
      %v1548 = vmul.f32 %v1383, %v1383
      %v1549 = vmul.f32 %v1388, %v1388
      %v1550 = vmul.f32 %v1391, %v1391
      %v1551 = vmul.f32 %v1396, %v1396
      %v1552 = vmul.f32 %v1399, %v1399
      %v1553 = vmul.f32 %v1404, %v1404
      %v1554 = vmul.f32 %v1407, %v1407
      %v1555 = vmul.f32 %v1412, %v1412
      %v1556 = vmul.f32 %v1415, %v1415
      %v1557 = vmul.f32 %v1420, %v1420
      %v1558 = vmul.f32 %v1423, %v1423
      %v1559 = vadd.f32 %v1495, %v1496
      %v1560 = vadd.f32 %v1559, %v1497
      %v1561 = vadd.f32 %v1560, %v1498
      %v1562 = vadd.f32 %v1561, %v1499
      %v1563 = vadd.f32 %v1562, %v1500
      %v1564 = vadd.f32 %v1563, %v1501
      %v1565 = vadd.f32 %v1564, %v1502
      %v1566 = vadd.f32 %v1565, %v1503
      %v1567 = vadd.f32 %v1566, %v1504
      %v1568 = vadd.f32 %v1567, %v1505
      %v1569 = vadd.f32 %v1568, %v1506
      %v1570 = vadd.f32 %v1569, %v1507
      %v1571 = vadd.f32 %v1570, %v1508
      %v1572 = vadd.f32 %v1571, %v1509
      %v1573 = vadd.f32 %v1572, %v1510
      %v1574 = vadd.f32 %v1573, %v1511
      %v1575 = vadd.f32 %v1574, %v1512
      %v1576 = vadd.f32 %v1575, %v1513
      %v1577 = vadd.f32 %v1576, %v1514
      %v1578 = vadd.f32 %v1577, %v1515
      %v1579 = vadd.f32 %v1578, %v1516
      %v1580 = vadd.f32 %v1579, %v1517
      %v1581 = vadd.f32 %v1580, %v1518
      %v1582 = vadd.f32 %v1581, %v1519
      %v1583 = vadd.f32 %v1582, %v1520
      %v1584 = vadd.f32 %v1583, %v1521
      %v1585 = vadd.f32 %v1584, %v1522
      %v1586 = vadd.f32 %v1585, %v1523
      %v1587 = vadd.f32 %v1586, %v1524
      %v1588 = vadd.f32 %v1587, %v1525
      %v1589 = vadd.f32 %v1588, %v1526
      %v1590 = vadd.f32 %v1589, %v1527
      %v1591 = vadd.f32 %v1590, %v1528
      %v1592 = vadd.f32 %v1591, %v1529
      %v1593 = vadd.f32 %v1592, %v1530
      %v1594 = vadd.f32 %v1593, %v1531
      %v1595 = vadd.f32 %v1594, %v1532
      %v1596 = vadd.f32 %v1595, %v1533
      %v1597 = vadd.f32 %v1596, %v1534
      %v1598 = vadd.f32 %v1597, %v1535
      %v1599 = vadd.f32 %v1598, %v1536
      %v1600 = vadd.f32 %v1599, %v1537
      %v1601 = vadd.f32 %v1600, %v1538
      %v1602 = vadd.f32 %v1601, %v1539
      %v1603 = vadd.f32 %v1602, %v1540
      %v1604 = vadd.f32 %v1603, %v1541
      %v1605 = vadd.f32 %v1604, %v1542
      %v1606 = vadd.f32 %v1605, %v1543
      %v1607 = vadd.f32 %v1606, %v1544
      %v1608 = vadd.f32 %v1607, %v1545
      %v1609 = vadd.f32 %v1608, %v1546
      %v1610 = vadd.f32 %v1609, %v1547
      %v1611 = vadd.f32 %v1610, %v1548
      %v1612 = vadd.f32 %v1611, %v1549
      %v1613 = vadd.f32 %v1612, %v1550
      %v1614 = vadd.f32 %v1613, %v1551
      %v1615 = vadd.f32 %v1614, %v1552
      %v1616 = vadd.f32 %v1615, %v1553
      %v1617 = vadd.f32 %v1616, %v1554
      %v1618 = vadd.f32 %v1617, %v1555
      %v1619 = vadd.f32 %v1618, %v1556
      %v1620 = vadd.f32 %v1619, %v1557
      %v1621 = vadd.f32 %v1620, %v1558
      %v1622 = vrot.slane %v1621, 4
      %v1623 = vadd.f32 %v1621, %v1622
      %v1624 = vrot.slane %v1623, 2
      %v1625 = vadd.f32 %v1623, %v1624
      %v1626 = vrot.slane %v1625, 1
      %v1627 = vadd.f32 %v1625, %v1626
      %v1628 = vmax.f32 %v1172, %v1188
      %v1629 = vmax.f32 %v1175, %v1191
      %v1630 = vmax.f32 %v1180, %v1196
      %v1631 = vmax.f32 %v1183, %v1199
      %v1632 = vmax.f32 %v1628, %v1204
      %v1633 = vmax.f32 %v1629, %v1207
      %v1634 = vmax.f32 %v1630, %v1212
      %v1635 = vmax.f32 %v1631, %v1215
      %v1636 = vmax.f32 %v1632, %v1220
      %v1637 = vmax.f32 %v1633, %v1223
      %v1638 = vmax.f32 %v1634, %v1228
      %v1639 = vmax.f32 %v1635, %v1231
      %v1640 = vmax.f32 %v1636, %v1236
      %v1641 = vmax.f32 %v1637, %v1239
      %v1642 = vmax.f32 %v1638, %v1244
      %v1643 = vmax.f32 %v1639, %v1247
      %v1644 = vmax.f32 %v1640, %v1252
      %v1645 = vmax.f32 %v1641, %v1255
      %v1646 = vmax.f32 %v1642, %v1260
      %v1647 = vmax.f32 %v1643, %v1263
      %v1648 = vmax.f32 %v1644, %v1268
      %v1649 = vmax.f32 %v1645, %v1271
      %v1650 = vmax.f32 %v1646, %v1276
      %v1651 = vmax.f32 %v1647, %v1279
      %v1652 = vmax.f32 %v1648, %v1284
      %v1653 = vmax.f32 %v1649, %v1287
      %v1654 = vmax.f32 %v1650, %v1292
      %v1655 = vmax.f32 %v1651, %v1295
      %v1656 = vmax.f32 %v1652, %v1300
      %v1657 = vmax.f32 %v1653, %v1303
      %v1658 = vmax.f32 %v1654, %v1308
      %v1659 = vmax.f32 %v1655, %v1311
      %v1660 = vmax.f32 %v1656, %v1316
      %v1661 = vmax.f32 %v1657, %v1319
      %v1662 = vmax.f32 %v1658, %v1324
      %v1663 = vmax.f32 %v1659, %v1327
      %v1664 = vmax.f32 %v1660, %v1332
      %v1665 = vmax.f32 %v1661, %v1335
      %v1666 = vmax.f32 %v1662, %v1340
      %v1667 = vmax.f32 %v1663, %v1343
      %v1668 = vmax.f32 %v1664, %v1348
      %v1669 = vmax.f32 %v1665, %v1351
      %v1670 = vmax.f32 %v1666, %v1356
      %v1671 = vmax.f32 %v1667, %v1359
      %v1672 = vmax.f32 %v1668, %v1364
      %v1673 = vmax.f32 %v1669, %v1367
      %v1674 = vmax.f32 %v1670, %v1372
      %v1675 = vmax.f32 %v1671, %v1375
      %v1676 = vmax.f32 %v1672, %v1380
      %v1677 = vmax.f32 %v1673, %v1383
      %v1678 = vmax.f32 %v1674, %v1388
      %v1679 = vmax.f32 %v1675, %v1391
      %v1680 = vmax.f32 %v1676, %v1396
      %v1681 = vmax.f32 %v1677, %v1399
      %v1682 = vmax.f32 %v1678, %v1404
      %v1683 = vmax.f32 %v1679, %v1407
      %v1684 = vmax.f32 %v1680, %v1412
      %v1685 = vmax.f32 %v1681, %v1415
      %v1686 = vmax.f32 %v1682, %v1420
      %v1687 = vmax.f32 %v1683, %v1423
      %v1688 = vmax.f32 %v1684, %v1685
      %v1689 = vmax.f32 %v1686, %v1687
      %v1690 = vmax.f32 %v1688, %v1689
      %v1691 = vrot.slane %v1690, 4
      %v1692 = vmax.f32 %v1690, %v1691
      %v1693 = vrot.slane %v1692, 2
      %v1694 = vmax.f32 %v1692, %v1693
      %v1695 = vrot.slane %v1694, 1
      %v1696 = vmax.f32 %v1694, %v1695
      %v1697 = vmin.f32 %v1172, %v1188
      %v1698 = vmin.f32 %v1175, %v1191
      %v1699 = vmin.f32 %v1180, %v1196
      %v1700 = vmin.f32 %v1183, %v1199
      %v1701 = vmin.f32 %v1697, %v1204
      %v1702 = vmin.f32 %v1698, %v1207
      %v1703 = vmin.f32 %v1699, %v1212
      %v1704 = vmin.f32 %v1700, %v1215
      %v1705 = vmin.f32 %v1701, %v1220
      %v1706 = vmin.f32 %v1702, %v1223
      %v1707 = vmin.f32 %v1703, %v1228
      %v1708 = vmin.f32 %v1704, %v1231
      %v1709 = vmin.f32 %v1705, %v1236
      %v1710 = vmin.f32 %v1706, %v1239
      %v1711 = vmin.f32 %v1707, %v1244
      %v1712 = vmin.f32 %v1708, %v1247
      %v1713 = vmin.f32 %v1709, %v1252
      %v1714 = vmin.f32 %v1710, %v1255
      %v1715 = vmin.f32 %v1711, %v1260
      %v1716 = vmin.f32 %v1712, %v1263
      %v1717 = vmin.f32 %v1713, %v1268
      %v1718 = vmin.f32 %v1714, %v1271
      %v1719 = vmin.f32 %v1715, %v1276
      %v1720 = vmin.f32 %v1716, %v1279
      %v1721 = vmin.f32 %v1717, %v1284
      %v1722 = vmin.f32 %v1718, %v1287
      %v1723 = vmin.f32 %v1719, %v1292
      %v1724 = vmin.f32 %v1720, %v1295
      %v1725 = vmin.f32 %v1721, %v1300
      %v1726 = vmin.f32 %v1722, %v1303
      %v1727 = vmin.f32 %v1723, %v1308
      %v1728 = vmin.f32 %v1724, %v1311
      %v1729 = vmin.f32 %v1725, %v1316
      %v1730 = vmin.f32 %v1726, %v1319
      %v1731 = vmin.f32 %v1727, %v1324
      %v1732 = vmin.f32 %v1728, %v1327
      %v1733 = vmin.f32 %v1729, %v1332
      %v1734 = vmin.f32 %v1730, %v1335
      %v1735 = vmin.f32 %v1731, %v1340
      %v1736 = vmin.f32 %v1732, %v1343
      %v1737 = vmin.f32 %v1733, %v1348
      %v1738 = vmin.f32 %v1734, %v1351
      %v1739 = vmin.f32 %v1735, %v1356
      %v1740 = vmin.f32 %v1736, %v1359
      %v1741 = vmin.f32 %v1737, %v1364
      %v1742 = vmin.f32 %v1738, %v1367
      %v1743 = vmin.f32 %v1739, %v1372
      %v1744 = vmin.f32 %v1740, %v1375
      %v1745 = vmin.f32 %v1741, %v1380
      %v1746 = vmin.f32 %v1742, %v1383
      %v1747 = vmin.f32 %v1743, %v1388
      %v1748 = vmin.f32 %v1744, %v1391
      %v1749 = vmin.f32 %v1745, %v1396
      %v1750 = vmin.f32 %v1746, %v1399
      %v1751 = vmin.f32 %v1747, %v1404
      %v1752 = vmin.f32 %v1748, %v1407
      %v1753 = vmin.f32 %v1749, %v1412
      %v1754 = vmin.f32 %v1750, %v1415
      %v1755 = vmin.f32 %v1751, %v1420
      %v1756 = vmin.f32 %v1752, %v1423
      %v1757 = vmin.f32 %v1753, %v1754
      %v1758 = vmin.f32 %v1755, %v1756
      %v1759 = vmin.f32 %v1757, %v1758
      %v1760 = vrot.slane %v1759, 4
      %v1761 = vmin.f32 %v1759, %v1760
      %v1762 = vrot.slane %v1761, 2
      %v1763 = vmin.f32 %v1761, %v1762
      %v1764 = vrot.slane %v1763, 1
      %v1765 = vmin.f32 %v1763, %v1764
      %v1766 = vld [vmem:[%s3 + $0x4] sm:$0xf]
      %v1767 = vld [vmem:[%s3 + $0x14] sm:$0xf]
      %v1768 = vld [vmem:[%s3 + $0x24] sm:$0xf]
      %v1769 = vld [vmem:[%s3 + $0x34] sm:$0xf]
      %v1770 = vld [vmem:[%s3 + $0x44] sm:$0xf]
      %v1771 = vld [vmem:[%s3 + $0x54] sm:$0xf]
      %v1772 = vld [vmem:[%s3 + $0x64] sm:$0xf]
      %v1773 = vld [vmem:[%s3 + $0x74] sm:$0xf]
      %v1774 = vld [vmem:[%s3 + $0x84] sm:$0xf]
      %v1775 = vld [vmem:[%s3 + $0x94] sm:$0xf]
      %v1776 = vld [vmem:[%s3 + $0xa4] sm:$0xf]
      %v1777 = vld [vmem:[%s3 + $0xb4] sm:$0xf]
      %v1778 = vld [vmem:[%s3 + $0xc4] sm:$0xf]
      %v1779 = vld [vmem:[%s3 + $0xd4] sm:$0xf]
      %v1780 = vld [vmem:[%s3 + $0xe4] sm:$0xf]
      %v1781 = vld [vmem:[%s3 + $0xf4] sm:$0xf]
      %v1782 = vld [vmem:[%s3 + $0x104] sm:$0xf]
      %v1783 = vld [vmem:[%s3 + $0x114] sm:$0xf]
      %v1784 = vld [vmem:[%s3 + $0x124] sm:$0xf]
      %v1785 = vld [vmem:[%s3 + $0x134] sm:$0xf]
      %v1786 = vld [vmem:[%s3 + $0x144] sm:$0xf]
      %v1787 = vld [vmem:[%s3 + $0x154] sm:$0xf]
      %v1788 = vld [vmem:[%s3 + $0x164] sm:$0xf]
      %v1789 = vld [vmem:[%s3 + $0x174] sm:$0xf]
      %v1790 = vld [vmem:[%s3 + $0x184] sm:$0xf]
      %v1791 = vld [vmem:[%s3 + $0x194] sm:$0xf]
      %v1792 = vld [vmem:[%s3 + $0x1a4] sm:$0xf]
      %v1793 = vld [vmem:[%s3 + $0x1b4] sm:$0xf]
      %v1794 = vld [vmem:[%s3 + $0x1c4] sm:$0xf]
      %v1795 = vld [vmem:[%s3 + $0x1d4] sm:$0xf]
      %v1796 = vld [vmem:[%s3 + $0x1e4] sm:$0xf]
      %v1797 = vld [vmem:[%s3 + $0x1f4] sm:$0xf]
      %v1830 = vunpack.c.l.b16 %v1766
      %v1831 = vunpack.c.l.b16 %v1767
      %v1832 = vunpack.c.l.b16 %v1768
      %v1833 = vunpack.c.l.b16 %v1769
      %v1834 = vunpack.c.l.b16 %v1770
      %v1835 = vunpack.c.l.b16 %v1771
      %v1836 = vunpack.c.l.b16 %v1772
      %v1837 = vunpack.c.l.b16 %v1773
      %v1838 = vunpack.c.l.b16 %v1774
      %v1839 = vunpack.c.l.b16 %v1775
      %v1840 = vunpack.c.l.b16 %v1776
      %v1841 = vunpack.c.l.b16 %v1777
      %v1842 = vunpack.c.l.b16 %v1778
      %v1843 = vunpack.c.l.b16 %v1779
      %v1844 = vunpack.c.l.b16 %v1780
      %v1845 = vunpack.c.l.b16 %v1781
      %v1846 = vunpack.c.l.b16 %v1782
      %v1847 = vunpack.c.l.b16 %v1783
      %v1848 = vunpack.c.l.b16 %v1784
      %v1849 = vunpack.c.l.b16 %v1785
      %v1850 = vunpack.c.l.b16 %v1786
      %v1851 = vunpack.c.l.b16 %v1787
      %v1852 = vunpack.c.l.b16 %v1788
      %v1853 = vunpack.c.l.b16 %v1789
      %v1854 = vunpack.c.l.b16 %v1790
      %v1855 = vunpack.c.l.b16 %v1791
      %v1856 = vunpack.c.l.b16 %v1792
      %v1857 = vunpack.c.l.b16 %v1793
      %v1858 = vunpack.c.l.b16 %v1794
      %v1859 = vunpack.c.l.b16 %v1795
      %v1860 = vunpack.c.l.b16 %v1796
      %v1861 = vunpack.c.l.b16 %v1797
      %v1862 = vpack.c.b16 %v1831, %v1830
      %v1863 = vpack.c.b16 %v1833, %v1832
      %v1864 = vpack.c.b16 %v1835, %v1834
      %v1865 = vpack.c.b16 %v1837, %v1836
      %v1866 = vpack.c.b16 %v1839, %v1838
      %v1867 = vpack.c.b16 %v1841, %v1840
      %v1868 = vpack.c.b16 %v1843, %v1842
      %v1869 = vpack.c.b16 %v1845, %v1844
      %v1870 = vpack.c.b16 %v1847, %v1846
      %v1871 = vpack.c.b16 %v1849, %v1848
      %v1872 = vpack.c.b16 %v1851, %v1850
      %v1873 = vpack.c.b16 %v1853, %v1852
      %v1874 = vpack.c.b16 %v1855, %v1854
      %v1875 = vpack.c.b16 %v1857, %v1856
      %v1876 = vpack.c.b16 %v1859, %v1858
      %v1877 = vpack.c.b16 %v1861, %v1860
      %1894 = vmatprep.subr.bf16.mxu0 0
      %1895 = vmatpush1.bf16.msra.mxu0 %v1862
      %1896 = vmatprep.subr.bf16.mxu0 0
      %1897 = vmatpush1.bf16.msra.mxu0 %v1863
      %1898 = vmatprep.subr.bf16.mxu0 0
      %1899 = vmatpush1.bf16.msra.mxu0 %v1864
      %1900 = vmatprep.subr.bf16.mxu0 0
      %1901 = vmatpush1.bf16.msra.mxu0 %v1865
      %1902 = vmatprep.subr.bf16.mxu0 0
      %1903 = vmatpush1.bf16.msra.mxu0 %v1866
      %1904 = vmatprep.subr.bf16.mxu0 0
      %1905 = vmatpush1.bf16.msra.mxu0 %v1867
      %1906 = vmatprep.subr.bf16.mxu0 0
      %1907 = vmatpush1.bf16.msra.mxu0 %v1868
      %1908 = vmatprep.subr.bf16.mxu0 0
      %1909 = vmatpush1.bf16.msra.mxu0 %v1869
      %1910 = vmatprep.subr.bf16.mxu0 0
      %1911 = vmatpush1.bf16.msra.mxu0 %v1870
      %1912 = vmatprep.subr.bf16.mxu0 0
      %1913 = vmatpush1.bf16.msra.mxu0 %v1871
      %1914 = vmatprep.subr.bf16.mxu0 0
      %1915 = vmatpush1.bf16.msra.mxu0 %v1872
      %1916 = vmatprep.subr.bf16.mxu0 0
      %1917 = vmatpush1.bf16.msra.mxu0 %v1873
      %1918 = vmatprep.subr.bf16.mxu0 0
      %1919 = vmatpush1.bf16.msra.mxu0 %v1874
      %1920 = vmatprep.subr.bf16.mxu0 0
      %1921 = vmatpush1.bf16.msra.mxu0 %v1875
      %1922 = vmatprep.subr.bf16.mxu0 0
      %1923 = vmatpush1.bf16.msra.mxu0 %v1876
      %1924 = vmatprep.subr.bf16.mxu0 0
      %1925 = vmatpush1.bf16.msra.mxu0 %v1877
      %1926 = vmatprep.mubr.bf16.mxu0 %v934
      %1927 = vmatmul.mubr.bf16.gmra.mrb[0].mxu0 %v933
      %v1928 = vpop.f32.mrb[0].mxu0
      %v1929 = vadd.f32 0.0, %v1928
      %v1930 = vpop.f32.mrb[0].mxu0
      %v1931 = vpop.f32.mrb[0].mxu0
      %v1932 = vadd.f32 0.0, %v1931
      %v1933 = vpop.f32.mrb[0].mxu0
      %1934 = vmatprep.mubr.bf16.mxu0 %v936
      %1935 = vmatmul.mubr.bf16.gmra.mrb[0].mxu0 %v935
      %v1936 = vpop.f32.mrb[0].mxu0
      %v1937 = vadd.f32 0.0, %v1936
      %v1938 = vpop.f32.mrb[0].mxu0
      %v1939 = vpop.f32.mrb[0].mxu0
      %v1940 = vadd.f32 0.0, %v1939
      %v1941 = vpop.f32.mrb[0].mxu0
      %1942 = vmatprep.mubr.bf16.mxu0 %v938
      %1943 = vmatmul.mubr.bf16.gmra.mrb[0].mxu0 %v937
      %v1944 = vpop.f32.mrb[0].mxu0
      %v1945 = vadd.f32 0.0, %v1944
      %v1946 = vpop.f32.mrb[0].mxu0
      %v1947 = vpop.f32.mrb[0].mxu0
      %v1948 = vadd.f32 0.0, %v1947
      %v1949 = vpop.f32.mrb[0].mxu0
      %1950 = vmatprep.mubr.bf16.mxu0 %v940
      %1951 = vmatmul.mubr.bf16.gmra.mrb[0].mxu0 %v939
      %v1952 = vpop.f32.mrb[0].mxu0
      %v1953 = vadd.f32 0.0, %v1952
      %v1954 = vpop.f32.mrb[0].mxu0
      %v1955 = vpop.f32.mrb[0].mxu0
      %v1956 = vadd.f32 0.0, %v1955
      %v1957 = vpop.f32.mrb[0].mxu0
      %1958 = vmatprep.mubr.bf16.mxu0 %v942
      %1959 = vmatmul.mubr.bf16.gmra.mrb[0].mxu0 %v941
      %v1960 = vpop.f32.mrb[0].mxu0
      %v1961 = vadd.f32 0.0, %v1960
      %v1962 = vpop.f32.mrb[0].mxu0
      %v1963 = vpop.f32.mrb[0].mxu0
      %v1964 = vadd.f32 0.0, %v1963
      %v1965 = vpop.f32.mrb[0].mxu0
      %1966 = vmatprep.mubr.bf16.mxu0 %v944
      %1967 = vmatmul.mubr.bf16.gmra.mrb[0].mxu0 %v943
      %v1968 = vpop.f32.mrb[0].mxu0
      %v1969 = vadd.f32 0.0, %v1968
      %v1970 = vpop.f32.mrb[0].mxu0
      %v1971 = vpop.f32.mrb[0].mxu0
      %v1972 = vadd.f32 0.0, %v1971
      %v1973 = vpop.f32.mrb[0].mxu0
      %1974 = vmatprep.mubr.bf16.mxu0 %v946
      %1975 = vmatmul.mubr.bf16.gmra.mrb[0].mxu0 %v945
      %v1976 = vpop.f32.mrb[0].mxu0
      %v1977 = vadd.f32 0.0, %v1976
      %v1978 = vpop.f32.mrb[0].mxu0
      %v1979 = vpop.f32.mrb[0].mxu0
      %v1980 = vadd.f32 0.0, %v1979
      %v1981 = vpop.f32.mrb[0].mxu0
      %1982 = vmatprep.mubr.bf16.mxu0 %v948
      %1983 = vmatmul.mubr.bf16.gmra.mrb[0].mxu0 %v947
      %v1984 = vpop.f32.mrb[0].mxu0
      %v1985 = vadd.f32 0.0, %v1984
      %v1986 = vpop.f32.mrb[0].mxu0
      %v1987 = vpop.f32.mrb[0].mxu0
      %v1988 = vadd.f32 0.0, %v1987
      %v1989 = vpop.f32.mrb[0].mxu0
      %1990 = vmatprep.mubr.bf16.mxu0 %v950
      %1991 = vmatmul.mubr.bf16.gmra.mrb[0].mxu0 %v949
      %v1992 = vpop.f32.mrb[0].mxu0
      %v1993 = vadd.f32 0.0, %v1992
      %v1994 = vpop.f32.mrb[0].mxu0
      %v1995 = vpop.f32.mrb[0].mxu0
      %v1996 = vadd.f32 0.0, %v1995
      %v1997 = vpop.f32.mrb[0].mxu0
      %1998 = vmatprep.mubr.bf16.mxu0 %v952
      %1999 = vmatmul.mubr.bf16.gmra.mrb[0].mxu0 %v951
      %v2000 = vpop.f32.mrb[0].mxu0
      %v2001 = vadd.f32 0.0, %v2000
      %v2002 = vpop.f32.mrb[0].mxu0
      %v2003 = vpop.f32.mrb[0].mxu0
      %v2004 = vadd.f32 0.0, %v2003
      %v2005 = vpop.f32.mrb[0].mxu0
      %2006 = vmatprep.mubr.bf16.mxu0 %v954
      %2007 = vmatmul.mubr.bf16.gmra.mrb[0].mxu0 %v953
      %v2008 = vpop.f32.mrb[0].mxu0
      %v2009 = vadd.f32 0.0, %v2008
      %v2010 = vpop.f32.mrb[0].mxu0
      %v2011 = vpop.f32.mrb[0].mxu0
      %v2012 = vadd.f32 0.0, %v2011
      %v2013 = vpop.f32.mrb[0].mxu0
      %2014 = vmatprep.mubr.bf16.mxu0 %v956
      %2015 = vmatmul.mubr.bf16.gmra.mrb[0].mxu0 %v955
      %v2016 = vpop.f32.mrb[0].mxu0
      %v2017 = vadd.f32 0.0, %v2016
      %v2018 = vpop.f32.mrb[0].mxu0
      %v2019 = vpop.f32.mrb[0].mxu0
      %v2020 = vadd.f32 0.0, %v2019
      %v2021 = vpop.f32.mrb[0].mxu0
      %2022 = vmatprep.mubr.bf16.mxu0 %v958
      %2023 = vmatmul.mubr.bf16.gmra.mrb[0].mxu0 %v957
      %v2024 = vpop.f32.mrb[0].mxu0
      %v2025 = vadd.f32 0.0, %v2024
      %v2026 = vpop.f32.mrb[0].mxu0
      %v2027 = vpop.f32.mrb[0].mxu0
      %v2028 = vadd.f32 0.0, %v2027
      %v2029 = vpop.f32.mrb[0].mxu0
      %2030 = vmatprep.mubr.bf16.mxu0 %v960
      %2031 = vmatmul.mubr.bf16.gmra.mrb[0].mxu0 %v959
      %v2032 = vpop.f32.mrb[0].mxu0
      %v2033 = vadd.f32 0.0, %v2032
      %v2034 = vpop.f32.mrb[0].mxu0
      %v2035 = vpop.f32.mrb[0].mxu0
      %v2036 = vadd.f32 0.0, %v2035
      %v2037 = vpop.f32.mrb[0].mxu0
      %2038 = vmatprep.mubr.bf16.mxu0 %v962
      %2039 = vmatmul.mubr.bf16.gmra.mrb[0].mxu0 %v961
      %v2040 = vpop.f32.mrb[0].mxu0
      %v2041 = vadd.f32 0.0, %v2040
      %v2042 = vpop.f32.mrb[0].mxu0
      %v2043 = vpop.f32.mrb[0].mxu0
      %v2044 = vadd.f32 0.0, %v2043
      %v2045 = vpop.f32.mrb[0].mxu0
      %2046 = vmatprep.mubr.bf16.mxu0 %v964
      %2047 = vmatmul.mubr.bf16.gmra.mrb[0].mxu0 %v963
      %v2048 = vpop.f32.mrb[0].mxu0
      %v2049 = vadd.f32 0.0, %v2048
      %v2050 = vpop.f32.mrb[0].mxu0
      %v2051 = vpop.f32.mrb[0].mxu0
      %v2052 = vadd.f32 0.0, %v2051
      %v2053 = vpop.f32.mrb[0].mxu0
      %2054 = vmatprep.mubr.bf16.mxu0 %v966
      %2055 = vmatmul.mubr.bf16.gmra.mrb[0].mxu0 %v965
      %v2056 = vpop.f32.mrb[0].mxu0
      %v2057 = vadd.f32 0.0, %v2056
      %v2058 = vpop.f32.mrb[0].mxu0
      %v2059 = vpop.f32.mrb[0].mxu0
      %v2060 = vadd.f32 0.0, %v2059
      %v2061 = vpop.f32.mrb[0].mxu0
      %2062 = vmatprep.mubr.bf16.mxu0 %v968
      %2063 = vmatmul.mubr.bf16.gmra.mrb[0].mxu0 %v967
      %v2064 = vpop.f32.mrb[0].mxu0
      %v2065 = vadd.f32 0.0, %v2064
      %v2066 = vpop.f32.mrb[0].mxu0
      %v2067 = vpop.f32.mrb[0].mxu0
      %v2068 = vadd.f32 0.0, %v2067
      %v2069 = vpop.f32.mrb[0].mxu0
      %2070 = vmatprep.mubr.bf16.mxu0 %v970
      %2071 = vmatmul.mubr.bf16.gmra.mrb[0].mxu0 %v969
      %v2072 = vpop.f32.mrb[0].mxu0
      %v2073 = vadd.f32 0.0, %v2072
      %v2074 = vpop.f32.mrb[0].mxu0
      %v2075 = vpop.f32.mrb[0].mxu0
      %v2076 = vadd.f32 0.0, %v2075
      %v2077 = vpop.f32.mrb[0].mxu0
      %2078 = vmatprep.mubr.bf16.mxu0 %v972
      %2079 = vmatmul.mubr.bf16.gmra.mrb[0].mxu0 %v971
      %v2080 = vpop.f32.mrb[0].mxu0
      %v2081 = vadd.f32 0.0, %v2080
      %v2082 = vpop.f32.mrb[0].mxu0
      %v2083 = vpop.f32.mrb[0].mxu0
      %v2084 = vadd.f32 0.0, %v2083
      %v2085 = vpop.f32.mrb[0].mxu0
      %2086 = vmatprep.mubr.bf16.mxu0 %v974
      %2087 = vmatmul.mubr.bf16.gmra.mrb[0].mxu0 %v973
      %v2088 = vpop.f32.mrb[0].mxu0
      %v2089 = vadd.f32 0.0, %v2088
      %v2090 = vpop.f32.mrb[0].mxu0
      %v2091 = vpop.f32.mrb[0].mxu0
      %v2092 = vadd.f32 0.0, %v2091
      %v2093 = vpop.f32.mrb[0].mxu0
      %2094 = vmatprep.mubr.bf16.mxu0 %v976
      %2095 = vmatmul.mubr.bf16.gmra.mrb[0].mxu0 %v975
      %v2096 = vpop.f32.mrb[0].mxu0
      %v2097 = vadd.f32 0.0, %v2096
      %v2098 = vpop.f32.mrb[0].mxu0
      %v2099 = vpop.f32.mrb[0].mxu0
      %v2100 = vadd.f32 0.0, %v2099
      %v2101 = vpop.f32.mrb[0].mxu0
      %2102 = vmatprep.mubr.bf16.mxu0 %v978
      %2103 = vmatmul.mubr.bf16.gmra.mrb[0].mxu0 %v977
      %v2104 = vpop.f32.mrb[0].mxu0
      %v2105 = vadd.f32 0.0, %v2104
      %v2106 = vpop.f32.mrb[0].mxu0
      %v2107 = vpop.f32.mrb[0].mxu0
      %v2108 = vadd.f32 0.0, %v2107
      %v2109 = vpop.f32.mrb[0].mxu0
      %2110 = vmatprep.mubr.bf16.mxu0 %v980
      %2111 = vmatmul.mubr.bf16.gmra.mrb[0].mxu0 %v979
      %v2112 = vpop.f32.mrb[0].mxu0
      %v2113 = vadd.f32 0.0, %v2112
      %v2114 = vpop.f32.mrb[0].mxu0
      %v2115 = vpop.f32.mrb[0].mxu0
      %v2116 = vadd.f32 0.0, %v2115
      %v2117 = vpop.f32.mrb[0].mxu0
      %2118 = vmatprep.mubr.bf16.mxu0 %v982
      %2119 = vmatmul.mubr.bf16.gmra.mrb[0].mxu0 %v981
      %v2120 = vpop.f32.mrb[0].mxu0
      %v2121 = vadd.f32 0.0, %v2120
      %v2122 = vpop.f32.mrb[0].mxu0
      %v2123 = vpop.f32.mrb[0].mxu0
      %v2124 = vadd.f32 0.0, %v2123
      %v2125 = vpop.f32.mrb[0].mxu0
      %2126 = vmatprep.mubr.bf16.mxu0 %v984
      %2127 = vmatmul.mubr.bf16.gmra.mrb[0].mxu0 %v983
      %v2128 = vpop.f32.mrb[0].mxu0
      %v2129 = vadd.f32 0.0, %v2128
      %v2130 = vpop.f32.mrb[0].mxu0
      %v2131 = vpop.f32.mrb[0].mxu0
      %v2132 = vadd.f32 0.0, %v2131
      %v2133 = vpop.f32.mrb[0].mxu0
      %2134 = vmatprep.mubr.bf16.mxu0 %v986
      %2135 = vmatmul.mubr.bf16.gmra.mrb[0].mxu0 %v985
      %v2136 = vpop.f32.mrb[0].mxu0
      %v2137 = vadd.f32 0.0, %v2136
      %v2138 = vpop.f32.mrb[0].mxu0
      %v2139 = vpop.f32.mrb[0].mxu0
      %v2140 = vadd.f32 0.0, %v2139
      %v2141 = vpop.f32.mrb[0].mxu0
      %2142 = vmatprep.mubr.bf16.mxu0 %v988
      %2143 = vmatmul.mubr.bf16.gmra.mrb[0].mxu0 %v987
      %v2144 = vpop.f32.mrb[0].mxu0
      %v2145 = vadd.f32 0.0, %v2144
      %v2146 = vpop.f32.mrb[0].mxu0
      %v2147 = vpop.f32.mrb[0].mxu0
      %v2148 = vadd.f32 0.0, %v2147
      %v2149 = vpop.f32.mrb[0].mxu0
      %2150 = vmatprep.mubr.bf16.mxu0 %v990
      %2151 = vmatmul.mubr.bf16.gmra.mrb[0].mxu0 %v989
      %v2152 = vpop.f32.mrb[0].mxu0
      %v2153 = vadd.f32 0.0, %v2152
      %v2154 = vpop.f32.mrb[0].mxu0
      %v2155 = vpop.f32.mrb[0].mxu0
      %v2156 = vadd.f32 0.0, %v2155
      %v2157 = vpop.f32.mrb[0].mxu0
      %2158 = vmatprep.mubr.bf16.mxu0 %v992
      %2159 = vmatmul.mubr.bf16.gmra.mrb[0].mxu0 %v991
      %v2160 = vpop.f32.mrb[0].mxu0
      %v2161 = vadd.f32 0.0, %v2160
      %v2162 = vpop.f32.mrb[0].mxu0
      %v2163 = vpop.f32.mrb[0].mxu0
      %v2164 = vadd.f32 0.0, %v2163
      %v2165 = vpop.f32.mrb[0].mxu0
      %2166 = vmatprep.mubr.bf16.mxu0 %v994
      %2167 = vmatmul.mubr.bf16.gmra.mrb[0].mxu0 %v993
      %v2168 = vpop.f32.mrb[0].mxu0
      %v2169 = vadd.f32 0.0, %v2168
      %v2170 = vpop.f32.mrb[0].mxu0
      %v2171 = vpop.f32.mrb[0].mxu0
      %v2172 = vadd.f32 0.0, %v2171
      %v2173 = vpop.f32.mrb[0].mxu0
      %2174 = vmatprep.mubr.bf16.mxu0 %v996
      %2175 = vmatmul.mubr.bf16.gmra.mrb[0].mxu0 %v995
      %v2176 = vpop.f32.mrb[0].mxu0
      %v2177 = vadd.f32 0.0, %v2176
      %v2178 = vpop.f32.mrb[0].mxu0
      %v2179 = vpop.f32.mrb[0].mxu0
      %v2180 = vadd.f32 0.0, %v2179
      %v2181 = vpop.f32.mrb[0].mxu0
      %2182 = vdwg.mxu0
      %v2183 = vadd.f32 %v1929, %v1932
      %v2184 = vadd.f32 %v2183, %v1937
      %v2185 = vadd.f32 %v2184, %v1940
      %v2186 = vadd.f32 %v2185, %v1945
      %v2187 = vadd.f32 %v2186, %v1948
      %v2188 = vadd.f32 %v2187, %v1953
      %v2189 = vadd.f32 %v2188, %v1956
      %v2190 = vadd.f32 %v2189, %v1961
      %v2191 = vadd.f32 %v2190, %v1964
      %v2192 = vadd.f32 %v2191, %v1969
      %v2193 = vadd.f32 %v2192, %v1972
      %v2194 = vadd.f32 %v2193, %v1977
      %v2195 = vadd.f32 %v2194, %v1980
      %v2196 = vadd.f32 %v2195, %v1985
      %v2197 = vadd.f32 %v2196, %v1988
      %v2198 = vadd.f32 %v2197, %v1993
      %v2199 = vadd.f32 %v2198, %v1996
      %v2200 = vadd.f32 %v2199, %v2001
      %v2201 = vadd.f32 %v2200, %v2004
      %v2202 = vadd.f32 %v2201, %v2009
      %v2203 = vadd.f32 %v2202, %v2012
      %v2204 = vadd.f32 %v2203, %v2017
      %v2205 = vadd.f32 %v2204, %v2020
      %v2206 = vadd.f32 %v2205, %v2025
      %v2207 = vadd.f32 %v2206, %v2028
      %v2208 = vadd.f32 %v2207, %v2033
      %v2209 = vadd.f32 %v2208, %v2036
      %v2210 = vadd.f32 %v2209, %v2041
      %v2211 = vadd.f32 %v2210, %v2044
      %v2212 = vadd.f32 %v2211, %v2049
      %v2213 = vadd.f32 %v2212, %v2052
      %v2214 = vadd.f32 %v2213, %v2057
      %v2215 = vadd.f32 %v2214, %v2060
      %v2216 = vadd.f32 %v2215, %v2065
      %v2217 = vadd.f32 %v2216, %v2068
      %v2218 = vadd.f32 %v2217, %v2073
      %v2219 = vadd.f32 %v2218, %v2076
      %v2220 = vadd.f32 %v2219, %v2081
      %v2221 = vadd.f32 %v2220, %v2084
      %v2222 = vadd.f32 %v2221, %v2089
      %v2223 = vadd.f32 %v2222, %v2092
      %v2224 = vadd.f32 %v2223, %v2097
      %v2225 = vadd.f32 %v2224, %v2100
      %v2226 = vadd.f32 %v2225, %v2105
      %v2227 = vadd.f32 %v2226, %v2108
      %v2228 = vadd.f32 %v2227, %v2113
      %v2229 = vadd.f32 %v2228, %v2116
      %v2230 = vadd.f32 %v2229, %v2121
      %v2231 = vadd.f32 %v2230, %v2124
      %v2232 = vadd.f32 %v2231, %v2129
      %v2233 = vadd.f32 %v2232, %v2132
      %v2234 = vadd.f32 %v2233, %v2137
      %v2235 = vadd.f32 %v2234, %v2140
      %v2236 = vadd.f32 %v2235, %v2145
      %v2237 = vadd.f32 %v2236, %v2148
      %v2238 = vadd.f32 %v2237, %v2153
      %v2239 = vadd.f32 %v2238, %v2156
      %v2240 = vadd.f32 %v2239, %v2161
      %v2241 = vadd.f32 %v2240, %v2164
      %v2242 = vadd.f32 %v2241, %v2169
      %v2243 = vadd.f32 %v2242, %v2172
      %v2244 = vadd.f32 %v2243, %v2177
      %v2245 = vadd.f32 %v2244, %v2180
      %v2246 = vrot.slane %v2245, 4
      %v2247 = vadd.f32 %v2245, %v2246
      %v2248 = vrot.slane %v2247, 2
      %v2249 = vadd.f32 %v2247, %v2248
      %v2250 = vrot.slane %v2249, 1
      %v2251 = vadd.f32 %v2249, %v2250
      %v2252 = vmul.f32 %v1929, %v1929
      %v2253 = vmul.f32 %v1932, %v1932
      %v2254 = vmul.f32 %v1937, %v1937
      %v2255 = vmul.f32 %v1940, %v1940
      %v2256 = vmul.f32 %v1945, %v1945
      %v2257 = vmul.f32 %v1948, %v1948
      %v2258 = vmul.f32 %v1953, %v1953
      %v2259 = vmul.f32 %v1956, %v1956
      %v2260 = vmul.f32 %v1961, %v1961
      %v2261 = vmul.f32 %v1964, %v1964
      %v2262 = vmul.f32 %v1969, %v1969
      %v2263 = vmul.f32 %v1972, %v1972
      %v2264 = vmul.f32 %v1977, %v1977
      %v2265 = vmul.f32 %v1980, %v1980
      %v2266 = vmul.f32 %v1985, %v1985
      %v2267 = vmul.f32 %v1988, %v1988
      %v2268 = vmul.f32 %v1993, %v1993
      %v2269 = vmul.f32 %v1996, %v1996
      %v2270 = vmul.f32 %v2001, %v2001
      %v2271 = vmul.f32 %v2004, %v2004
      %v2272 = vmul.f32 %v2009, %v2009
      %v2273 = vmul.f32 %v2012, %v2012
      %v2274 = vmul.f32 %v2017, %v2017
      %v2275 = vmul.f32 %v2020, %v2020
      %v2276 = vmul.f32 %v2025, %v2025
      %v2277 = vmul.f32 %v2028, %v2028
      %v2278 = vmul.f32 %v2033, %v2033
      %v2279 = vmul.f32 %v2036, %v2036
      %v2280 = vmul.f32 %v2041, %v2041
      %v2281 = vmul.f32 %v2044, %v2044
      %v2282 = vmul.f32 %v2049, %v2049
      %v2283 = vmul.f32 %v2052, %v2052
      %v2284 = vmul.f32 %v2057, %v2057
      %v2285 = vmul.f32 %v2060, %v2060
      %v2286 = vmul.f32 %v2065, %v2065
      %v2287 = vmul.f32 %v2068, %v2068
      %v2288 = vmul.f32 %v2073, %v2073
      %v2289 = vmul.f32 %v2076, %v2076
      %v2290 = vmul.f32 %v2081, %v2081
      %v2291 = vmul.f32 %v2084, %v2084
      %v2292 = vmul.f32 %v2089, %v2089
      %v2293 = vmul.f32 %v2092, %v2092
      %v2294 = vmul.f32 %v2097, %v2097
      %v2295 = vmul.f32 %v2100, %v2100
      %v2296 = vmul.f32 %v2105, %v2105
      %v2297 = vmul.f32 %v2108, %v2108
      %v2298 = vmul.f32 %v2113, %v2113
      %v2299 = vmul.f32 %v2116, %v2116
      %v2300 = vmul.f32 %v2121, %v2121
      %v2301 = vmul.f32 %v2124, %v2124
      %v2302 = vmul.f32 %v2129, %v2129
      %v2303 = vmul.f32 %v2132, %v2132
      %v2304 = vmul.f32 %v2137, %v2137
      %v2305 = vmul.f32 %v2140, %v2140
      %v2306 = vmul.f32 %v2145, %v2145
      %v2307 = vmul.f32 %v2148, %v2148
      %v2308 = vmul.f32 %v2153, %v2153
      %v2309 = vmul.f32 %v2156, %v2156
      %v2310 = vmul.f32 %v2161, %v2161
      %v2311 = vmul.f32 %v2164, %v2164
      %v2312 = vmul.f32 %v2169, %v2169
      %v2313 = vmul.f32 %v2172, %v2172
      %v2314 = vmul.f32 %v2177, %v2177
      %v2315 = vmul.f32 %v2180, %v2180
      %v2316 = vadd.f32 %v2252, %v2253
      %v2317 = vadd.f32 %v2316, %v2254
      %v2318 = vadd.f32 %v2317, %v2255
      %v2319 = vadd.f32 %v2318, %v2256
      %v2320 = vadd.f32 %v2319, %v2257
      %v2321 = vadd.f32 %v2320, %v2258
      %v2322 = vadd.f32 %v2321, %v2259
      %v2323 = vadd.f32 %v2322, %v2260
      %v2324 = vadd.f32 %v2323, %v2261
      %v2325 = vadd.f32 %v2324, %v2262
      %v2326 = vadd.f32 %v2325, %v2263
      %v2327 = vadd.f32 %v2326, %v2264
      %v2328 = vadd.f32 %v2327, %v2265
      %v2329 = vadd.f32 %v2328, %v2266
      %v2330 = vadd.f32 %v2329, %v2267
      %v2331 = vadd.f32 %v2330, %v2268
      %v2332 = vadd.f32 %v2331, %v2269
      %v2333 = vadd.f32 %v2332, %v2270
      %v2334 = vadd.f32 %v2333, %v2271
      %v2335 = vadd.f32 %v2334, %v2272
      %v2336 = vadd.f32 %v2335, %v2273
      %v2337 = vadd.f32 %v2336, %v2274
      %v2338 = vadd.f32 %v2337, %v2275
      %v2339 = vadd.f32 %v2338, %v2276
      %v2340 = vadd.f32 %v2339, %v2277
      %v2341 = vadd.f32 %v2340, %v2278
      %v2342 = vadd.f32 %v2341, %v2279
      %v2343 = vadd.f32 %v2342, %v2280
      %v2344 = vadd.f32 %v2343, %v2281
      %v2345 = vadd.f32 %v2344, %v2282
      %v2346 = vadd.f32 %v2345, %v2283
      %v2347 = vadd.f32 %v2346, %v2284
      %v2348 = vadd.f32 %v2347, %v2285
      %v2349 = vadd.f32 %v2348, %v2286
      %v2350 = vadd.f32 %v2349, %v2287
      %v2351 = vadd.f32 %v2350, %v2288
      %v2352 = vadd.f32 %v2351, %v2289
      %v2353 = vadd.f32 %v2352, %v2290
      %v2354 = vadd.f32 %v2353, %v2291
      %v2355 = vadd.f32 %v2354, %v2292
      %v2356 = vadd.f32 %v2355, %v2293
      %v2357 = vadd.f32 %v2356, %v2294
      %v2358 = vadd.f32 %v2357, %v2295
      %v2359 = vadd.f32 %v2358, %v2296
      %v2360 = vadd.f32 %v2359, %v2297
      %v2361 = vadd.f32 %v2360, %v2298
      %v2362 = vadd.f32 %v2361, %v2299
      %v2363 = vadd.f32 %v2362, %v2300
      %v2364 = vadd.f32 %v2363, %v2301
      %v2365 = vadd.f32 %v2364, %v2302
      %v2366 = vadd.f32 %v2365, %v2303
      %v2367 = vadd.f32 %v2366, %v2304
      %v2368 = vadd.f32 %v2367, %v2305
      %v2369 = vadd.f32 %v2368, %v2306
      %v2370 = vadd.f32 %v2369, %v2307
      %v2371 = vadd.f32 %v2370, %v2308
      %v2372 = vadd.f32 %v2371, %v2309
      %v2373 = vadd.f32 %v2372, %v2310
      %v2374 = vadd.f32 %v2373, %v2311
      %v2375 = vadd.f32 %v2374, %v2312
      %v2376 = vadd.f32 %v2375, %v2313
      %v2377 = vadd.f32 %v2376, %v2314
      %v2378 = vadd.f32 %v2377, %v2315
      %v2379 = vrot.slane %v2378, 4
      %v2380 = vadd.f32 %v2378, %v2379
      %v2381 = vrot.slane %v2380, 2
      %v2382 = vadd.f32 %v2380, %v2381
      %v2383 = vrot.slane %v2382, 1
      %v2384 = vadd.f32 %v2382, %v2383
      %v2385 = vmax.f32 %v1929, %v1945
      %v2386 = vmax.f32 %v1932, %v1948
      %v2387 = vmax.f32 %v1937, %v1953
      %v2388 = vmax.f32 %v1940, %v1956
      %v2389 = vmax.f32 %v2385, %v1961
      %v2390 = vmax.f32 %v2386, %v1964
      %v2391 = vmax.f32 %v2387, %v1969
      %v2392 = vmax.f32 %v2388, %v1972
      %v2393 = vmax.f32 %v2389, %v1977
      %v2394 = vmax.f32 %v2390, %v1980
      %v2395 = vmax.f32 %v2391, %v1985
      %v2396 = vmax.f32 %v2392, %v1988
      %v2397 = vmax.f32 %v2393, %v1993
      %v2398 = vmax.f32 %v2394, %v1996
      %v2399 = vmax.f32 %v2395, %v2001
      %v2400 = vmax.f32 %v2396, %v2004
      %v2401 = vmax.f32 %v2397, %v2009
      %v2402 = vmax.f32 %v2398, %v2012
      %v2403 = vmax.f32 %v2399, %v2017
      %v2404 = vmax.f32 %v2400, %v2020
      %v2405 = vmax.f32 %v2401, %v2025
      %v2406 = vmax.f32 %v2402, %v2028
      %v2407 = vmax.f32 %v2403, %v2033
      %v2408 = vmax.f32 %v2404, %v2036
      %v2409 = vmax.f32 %v2405, %v2041
      %v2410 = vmax.f32 %v2406, %v2044
      %v2411 = vmax.f32 %v2407, %v2049
      %v2412 = vmax.f32 %v2408, %v2052
      %v2413 = vmax.f32 %v2409, %v2057
      %v2414 = vmax.f32 %v2410, %v2060
      %v2415 = vmax.f32 %v2411, %v2065
      %v2416 = vmax.f32 %v2412, %v2068
      %v2417 = vmax.f32 %v2413, %v2073
      %v2418 = vmax.f32 %v2414, %v2076
      %v2419 = vmax.f32 %v2415, %v2081
      %v2420 = vmax.f32 %v2416, %v2084
      %v2421 = vmax.f32 %v2417, %v2089
      %v2422 = vmax.f32 %v2418, %v2092
      %v2423 = vmax.f32 %v2419, %v2097
      %v2424 = vmax.f32 %v2420, %v2100
      %v2425 = vmax.f32 %v2421, %v2105
      %v2426 = vmax.f32 %v2422, %v2108
      %v2427 = vmax.f32 %v2423, %v2113
      %v2428 = vmax.f32 %v2424, %v2116
      %v2429 = vmax.f32 %v2425, %v2121
      %v2430 = vmax.f32 %v2426, %v2124
      %v2431 = vmax.f32 %v2427, %v2129
      %v2432 = vmax.f32 %v2428, %v2132
      %v2433 = vmax.f32 %v2429, %v2137
      %v2434 = vmax.f32 %v2430, %v2140
      %v2435 = vmax.f32 %v2431, %v2145
      %v2436 = vmax.f32 %v2432, %v2148
      %v2437 = vmax.f32 %v2433, %v2153
      %v2438 = vmax.f32 %v2434, %v2156
      %v2439 = vmax.f32 %v2435, %v2161
      %v2440 = vmax.f32 %v2436, %v2164
      %v2441 = vmax.f32 %v2437, %v2169
      %v2442 = vmax.f32 %v2438, %v2172
      %v2443 = vmax.f32 %v2439, %v2177
      %v2444 = vmax.f32 %v2440, %v2180
      %v2445 = vmax.f32 %v2441, %v2442
      %v2446 = vmax.f32 %v2443, %v2444
      %v2447 = vmax.f32 %v2445, %v2446
      %v2448 = vrot.slane %v2447, 4
      %v2449 = vmax.f32 %v2447, %v2448
      %v2450 = vrot.slane %v2449, 2
      %v2451 = vmax.f32 %v2449, %v2450
      %v2452 = vrot.slane %v2451, 1
      %v2453 = vmax.f32 %v2451, %v2452
      %v2454 = vmin.f32 %v1929, %v1945
      %v2455 = vmin.f32 %v1932, %v1948
      %v2456 = vmin.f32 %v1937, %v1953
      %v2457 = vmin.f32 %v1940, %v1956
      %v2458 = vmin.f32 %v2454, %v1961
      %v2459 = vmin.f32 %v2455, %v1964
      %v2460 = vmin.f32 %v2456, %v1969
      %v2461 = vmin.f32 %v2457, %v1972
      %v2462 = vmin.f32 %v2458, %v1977
      %v2463 = vmin.f32 %v2459, %v1980
      %v2464 = vmin.f32 %v2460, %v1985
      %v2465 = vmin.f32 %v2461, %v1988
      %v2466 = vmin.f32 %v2462, %v1993
      %v2467 = vmin.f32 %v2463, %v1996
      %v2468 = vmin.f32 %v2464, %v2001
      %v2469 = vmin.f32 %v2465, %v2004
      %v2470 = vmin.f32 %v2466, %v2009
      %v2471 = vmin.f32 %v2467, %v2012
      %v2472 = vmin.f32 %v2468, %v2017
      %v2473 = vmin.f32 %v2469, %v2020
      %v2474 = vmin.f32 %v2470, %v2025
      %v2475 = vmin.f32 %v2471, %v2028
      %v2476 = vmin.f32 %v2472, %v2033
      %v2477 = vmin.f32 %v2473, %v2036
      %v2478 = vmin.f32 %v2474, %v2041
      %v2479 = vmin.f32 %v2475, %v2044
      %v2480 = vmin.f32 %v2476, %v2049
      %v2481 = vmin.f32 %v2477, %v2052
      %v2482 = vmin.f32 %v2478, %v2057
      %v2483 = vmin.f32 %v2479, %v2060
      %v2484 = vmin.f32 %v2480, %v2065
      %v2485 = vmin.f32 %v2481, %v2068
      %v2486 = vmin.f32 %v2482, %v2073
      %v2487 = vmin.f32 %v2483, %v2076
      %v2488 = vmin.f32 %v2484, %v2081
      %v2489 = vmin.f32 %v2485, %v2084
      %v2490 = vmin.f32 %v2486, %v2089
      %v2491 = vmin.f32 %v2487, %v2092
      %v2492 = vmin.f32 %v2488, %v2097
      %v2493 = vmin.f32 %v2489, %v2100
      %v2494 = vmin.f32 %v2490, %v2105
      %v2495 = vmin.f32 %v2491, %v2108
      %v2496 = vmin.f32 %v2492, %v2113
      %v2497 = vmin.f32 %v2493, %v2116
      %v2498 = vmin.f32 %v2494, %v2121
      %v2499 = vmin.f32 %v2495, %v2124
      %v2500 = vmin.f32 %v2496, %v2129
      %v2501 = vmin.f32 %v2497, %v2132
      %v2502 = vmin.f32 %v2498, %v2137
      %v2503 = vmin.f32 %v2499, %v2140
      %v2504 = vmin.f32 %v2500, %v2145
      %v2505 = vmin.f32 %v2501, %v2148
      %v2506 = vmin.f32 %v2502, %v2153
      %v2507 = vmin.f32 %v2503, %v2156
      %v2508 = vmin.f32 %v2504, %v2161
      %v2509 = vmin.f32 %v2505, %v2164
      %v2510 = vmin.f32 %v2506, %v2169
      %v2511 = vmin.f32 %v2507, %v2172
      %v2512 = vmin.f32 %v2508, %v2177
      %v2513 = vmin.f32 %v2509, %v2180
      %v2514 = vmin.f32 %v2510, %v2511
      %v2515 = vmin.f32 %v2512, %v2513
      %v2516 = vmin.f32 %v2514, %v2515
      %v2517 = vrot.slane %v2516, 4
      %v2518 = vmin.f32 %v2516, %v2517
      %v2519 = vrot.slane %v2518, 2
      %v2520 = vmin.f32 %v2518, %v2519
      %v2521 = vrot.slane %v2520, 1
      %v2522 = vmin.f32 %v2520, %v2521
      %v2523 = vld [vmem:[%s3 + $0x8] sm:$0xf]
      %v2524 = vld [vmem:[%s3 + $0x18] sm:$0xf]
      %v2525 = vld [vmem:[%s3 + $0x28] sm:$0xf]
      %v2526 = vld [vmem:[%s3 + $0x38] sm:$0xf]
      %v2527 = vld [vmem:[%s3 + $0x48] sm:$0xf]
      %v2528 = vld [vmem:[%s3 + $0x58] sm:$0xf]
      %v2529 = vld [vmem:[%s3 + $0x68] sm:$0xf]
      %v2530 = vld [vmem:[%s3 + $0x78] sm:$0xf]
      %v2531 = vld [vmem:[%s3 + $0x88] sm:$0xf]
      %v2532 = vld [vmem:[%s3 + $0x98] sm:$0xf]
      %v2533 = vld [vmem:[%s3 + $0xa8] sm:$0xf]
      %v2534 = vld [vmem:[%s3 + $0xb8] sm:$0xf]
      %v2535 = vld [vmem:[%s3 + $0xc8] sm:$0xf]
      %v2536 = vld [vmem:[%s3 + $0xd8] sm:$0xf]
      %v2537 = vld [vmem:[%s3 + $0xe8] sm:$0xf]
      %v2538 = vld [vmem:[%s3 + $0xf8] sm:$0xf]
      %v2539 = vld [vmem:[%s3 + $0x108] sm:$0xf]
      %v2540 = vld [vmem:[%s3 + $0x118] sm:$0xf]
      %v2541 = vld [vmem:[%s3 + $0x128] sm:$0xf]
      %v2542 = vld [vmem:[%s3 + $0x138] sm:$0xf]
      %v2543 = vld [vmem:[%s3 + $0x148] sm:$0xf]
      %v2544 = vld [vmem:[%s3 + $0x158] sm:$0xf]
      %v2545 = vld [vmem:[%s3 + $0x168] sm:$0xf]
      %v2546 = vld [vmem:[%s3 + $0x178] sm:$0xf]
      %v2547 = vld [vmem:[%s3 + $0x188] sm:$0xf]
      %v2548 = vld [vmem:[%s3 + $0x198] sm:$0xf]
      %v2549 = vld [vmem:[%s3 + $0x1a8] sm:$0xf]
      %v2550 = vld [vmem:[%s3 + $0x1b8] sm:$0xf]
      %v2551 = vld [vmem:[%s3 + $0x1c8] sm:$0xf]
      %v2552 = vld [vmem:[%s3 + $0x1d8] sm:$0xf]
      %v2553 = vld [vmem:[%s3 + $0x1e8] sm:$0xf]
      %v2554 = vld [vmem:[%s3 + $0x1f8] sm:$0xf]
      %v2587 = vunpack.c.l.b16 %v2523
      %v2588 = vunpack.c.l.b16 %v2524
      %v2589 = vunpack.c.l.b16 %v2525
      %v2590 = vunpack.c.l.b16 %v2526
      %v2591 = vunpack.c.l.b16 %v2527
      %v2592 = vunpack.c.l.b16 %v2528
      %v2593 = vunpack.c.l.b16 %v2529
      %v2594 = vunpack.c.l.b16 %v2530
      %v2595 = vunpack.c.l.b16 %v2531
      %v2596 = vunpack.c.l.b16 %v2532
      %v2597 = vunpack.c.l.b16 %v2533
      %v2598 = vunpack.c.l.b16 %v2534
      %v2599 = vunpack.c.l.b16 %v2535
      %v2600 = vunpack.c.l.b16 %v2536
      %v2601 = vunpack.c.l.b16 %v2537
      %v2602 = vunpack.c.l.b16 %v2538
      %v2603 = vunpack.c.l.b16 %v2539
      %v2604 = vunpack.c.l.b16 %v2540
      %v2605 = vunpack.c.l.b16 %v2541
      %v2606 = vunpack.c.l.b16 %v2542
      %v2607 = vunpack.c.l.b16 %v2543
      %v2608 = vunpack.c.l.b16 %v2544
      %v2609 = vunpack.c.l.b16 %v2545
      %v2610 = vunpack.c.l.b16 %v2546
      %v2611 = vunpack.c.l.b16 %v2547
      %v2612 = vunpack.c.l.b16 %v2548
      %v2613 = vunpack.c.l.b16 %v2549
      %v2614 = vunpack.c.l.b16 %v2550
      %v2615 = vunpack.c.l.b16 %v2551
      %v2616 = vunpack.c.l.b16 %v2552
      %v2617 = vunpack.c.l.b16 %v2553
      %v2618 = vunpack.c.l.b16 %v2554
      %v2619 = vpack.c.b16 %v2588, %v2587
      %v2620 = vpack.c.b16 %v2590, %v2589
      %v2621 = vpack.c.b16 %v2592, %v2591
      %v2622 = vpack.c.b16 %v2594, %v2593
      %v2623 = vpack.c.b16 %v2596, %v2595
      %v2624 = vpack.c.b16 %v2598, %v2597
      %v2625 = vpack.c.b16 %v2600, %v2599
      %v2626 = vpack.c.b16 %v2602, %v2601
      %v2627 = vpack.c.b16 %v2604, %v2603
      %v2628 = vpack.c.b16 %v2606, %v2605
      %v2629 = vpack.c.b16 %v2608, %v2607
      %v2630 = vpack.c.b16 %v2610, %v2609
      %v2631 = vpack.c.b16 %v2612, %v2611
      %v2632 = vpack.c.b16 %v2614, %v2613
      %v2633 = vpack.c.b16 %v2616, %v2615
      %v2634 = vpack.c.b16 %v2618, %v2617
      %2651 = vmatprep.subr.bf16.mxu0 0
      %2652 = vmatpush1.bf16.msra.mxu0 %v2619
      %2653 = vmatprep.subr.bf16.mxu0 0
      %2654 = vmatpush1.bf16.msra.mxu0 %v2620
      %2655 = vmatprep.subr.bf16.mxu0 0
      %2656 = vmatpush1.bf16.msra.mxu0 %v2621
      %2657 = vmatprep.subr.bf16.mxu0 0
      %2658 = vmatpush1.bf16.msra.mxu0 %v2622
      %2659 = vmatprep.subr.bf16.mxu0 0
      %2660 = vmatpush1.bf16.msra.mxu0 %v2623
      %2661 = vmatprep.subr.bf16.mxu0 0
      %2662 = vmatpush1.bf16.msra.mxu0 %v2624
      %2663 = vmatprep.subr.bf16.mxu0 0
      %2664 = vmatpush1.bf16.msra.mxu0 %v2625
      %2665 = vmatprep.subr.bf16.mxu0 0
      %2666 = vmatpush1.bf16.msra.mxu0 %v2626
      %2667 = vmatprep.subr.bf16.mxu0 0
      %2668 = vmatpush1.bf16.msra.mxu0 %v2627
      %2669 = vmatprep.subr.bf16.mxu0 0
      %2670 = vmatpush1.bf16.msra.mxu0 %v2628
      %2671 = vmatprep.subr.bf16.mxu0 0
      %2672 = vmatpush1.bf16.msra.mxu0 %v2629
      %2673 = vmatprep.subr.bf16.mxu0 0
      %2674 = vmatpush1.bf16.msra.mxu0 %v2630
      %2675 = vmatprep.subr.bf16.mxu0 0
      %2676 = vmatpush1.bf16.msra.mxu0 %v2631
      %2677 = vmatprep.subr.bf16.mxu0 0
      %2678 = vmatpush1.bf16.msra.mxu0 %v2632
      %2679 = vmatprep.subr.bf16.mxu0 0
      %2680 = vmatpush1.bf16.msra.mxu0 %v2633
      %2681 = vmatprep.subr.bf16.mxu0 0
      %2682 = vmatpush1.bf16.msra.mxu0 %v2634
      %2683 = vmatprep.mubr.bf16.mxu0 %v934
      %2684 = vmatmul.mubr.bf16.gmra.mrb[0].mxu0 %v933
      %v2685 = vpop.f32.mrb[0].mxu0
      %v2686 = vadd.f32 0.0, %v2685
      %v2687 = vpop.f32.mrb[0].mxu0
      %v2688 = vpop.f32.mrb[0].mxu0
      %v2689 = vadd.f32 0.0, %v2688
      %v2690 = vpop.f32.mrb[0].mxu0
      %2691 = vmatprep.mubr.bf16.mxu0 %v936
      %2692 = vmatmul.mubr.bf16.gmra.mrb[0].mxu0 %v935
      %v2693 = vpop.f32.mrb[0].mxu0
      %v2694 = vadd.f32 0.0, %v2693
      %v2695 = vpop.f32.mrb[0].mxu0
      %v2696 = vpop.f32.mrb[0].mxu0
      %v2697 = vadd.f32 0.0, %v2696
      %v2698 = vpop.f32.mrb[0].mxu0
      %2699 = vmatprep.mubr.bf16.mxu0 %v938
      %2700 = vmatmul.mubr.bf16.gmra.mrb[0].mxu0 %v937
      %v2701 = vpop.f32.mrb[0].mxu0
      %v2702 = vadd.f32 0.0, %v2701
      %v2703 = vpop.f32.mrb[0].mxu0
      %v2704 = vpop.f32.mrb[0].mxu0
      %v2705 = vadd.f32 0.0, %v2704
      %v2706 = vpop.f32.mrb[0].mxu0
      %2707 = vmatprep.mubr.bf16.mxu0 %v940
      %2708 = vmatmul.mubr.bf16.gmra.mrb[0].mxu0 %v939
      %v2709 = vpop.f32.mrb[0].mxu0
      %v2710 = vadd.f32 0.0, %v2709
      %v2711 = vpop.f32.mrb[0].mxu0
      %v2712 = vpop.f32.mrb[0].mxu0
      %v2713 = vadd.f32 0.0, %v2712
      %v2714 = vpop.f32.mrb[0].mxu0
      %2715 = vmatprep.mubr.bf16.mxu0 %v942
      %2716 = vmatmul.mubr.bf16.gmra.mrb[0].mxu0 %v941
      %v2717 = vpop.f32.mrb[0].mxu0
      %v2718 = vadd.f32 0.0, %v2717
      %v2719 = vpop.f32.mrb[0].mxu0
      %v2720 = vpop.f32.mrb[0].mxu0
      %v2721 = vadd.f32 0.0, %v2720
      %v2722 = vpop.f32.mrb[0].mxu0
      %2723 = vmatprep.mubr.bf16.mxu0 %v944
      %2724 = vmatmul.mubr.bf16.gmra.mrb[0].mxu0 %v943
      %v2725 = vpop.f32.mrb[0].mxu0
      %v2726 = vadd.f32 0.0, %v2725
      %v2727 = vpop.f32.mrb[0].mxu0
      %v2728 = vpop.f32.mrb[0].mxu0
      %v2729 = vadd.f32 0.0, %v2728
      %v2730 = vpop.f32.mrb[0].mxu0
      %2731 = vmatprep.mubr.bf16.mxu0 %v946
      %2732 = vmatmul.mubr.bf16.gmra.mrb[0].mxu0 %v945
      %v2733 = vpop.f32.mrb[0].mxu0
      %v2734 = vadd.f32 0.0, %v2733
      %v2735 = vpop.f32.mrb[0].mxu0
      %v2736 = vpop.f32.mrb[0].mxu0
      %v2737 = vadd.f32 0.0, %v2736
      %v2738 = vpop.f32.mrb[0].mxu0
      %2739 = vmatprep.mubr.bf16.mxu0 %v948
      %2740 = vmatmul.mubr.bf16.gmra.mrb[0].mxu0 %v947
      %v2741 = vpop.f32.mrb[0].mxu0
      %v2742 = vadd.f32 0.0, %v2741
      %v2743 = vpop.f32.mrb[0].mxu0
      %v2744 = vpop.f32.mrb[0].mxu0
      %v2745 = vadd.f32 0.0, %v2744
      %v2746 = vpop.f32.mrb[0].mxu0
      %2747 = vmatprep.mubr.bf16.mxu0 %v950
      %2748 = vmatmul.mubr.bf16.gmra.mrb[0].mxu0 %v949
      %v2749 = vpop.f32.mrb[0].mxu0
      %v2750 = vadd.f32 0.0, %v2749
      %v2751 = vpop.f32.mrb[0].mxu0
      %v2752 = vpop.f32.mrb[0].mxu0
      %v2753 = vadd.f32 0.0, %v2752
      %v2754 = vpop.f32.mrb[0].mxu0
      %2755 = vmatprep.mubr.bf16.mxu0 %v952
      %2756 = vmatmul.mubr.bf16.gmra.mrb[0].mxu0 %v951
      %v2757 = vpop.f32.mrb[0].mxu0
      %v2758 = vadd.f32 0.0, %v2757
      %v2759 = vpop.f32.mrb[0].mxu0
      %v2760 = vpop.f32.mrb[0].mxu0
      %v2761 = vadd.f32 0.0, %v2760
      %v2762 = vpop.f32.mrb[0].mxu0
      %2763 = vmatprep.mubr.bf16.mxu0 %v954
      %2764 = vmatmul.mubr.bf16.gmra.mrb[0].mxu0 %v953
      %v2765 = vpop.f32.mrb[0].mxu0
      %v2766 = vadd.f32 0.0, %v2765
      %v2767 = vpop.f32.mrb[0].mxu0
      %v2768 = vpop.f32.mrb[0].mxu0
      %v2769 = vadd.f32 0.0, %v2768
      %v2770 = vpop.f32.mrb[0].mxu0
      %2771 = vmatprep.mubr.bf16.mxu0 %v956
      %2772 = vmatmul.mubr.bf16.gmra.mrb[0].mxu0 %v955
      %v2773 = vpop.f32.mrb[0].mxu0
      %v2774 = vadd.f32 0.0, %v2773
      %v2775 = vpop.f32.mrb[0].mxu0
      %v2776 = vpop.f32.mrb[0].mxu0
      %v2777 = vadd.f32 0.0, %v2776
      %v2778 = vpop.f32.mrb[0].mxu0
      %2779 = vmatprep.mubr.bf16.mxu0 %v958
      %2780 = vmatmul.mubr.bf16.gmra.mrb[0].mxu0 %v957
      %v2781 = vpop.f32.mrb[0].mxu0
      %v2782 = vadd.f32 0.0, %v2781
      %v2783 = vpop.f32.mrb[0].mxu0
      %v2784 = vpop.f32.mrb[0].mxu0
      %v2785 = vadd.f32 0.0, %v2784
      %v2786 = vpop.f32.mrb[0].mxu0
      %2787 = vmatprep.mubr.bf16.mxu0 %v960
      %2788 = vmatmul.mubr.bf16.gmra.mrb[0].mxu0 %v959
      %v2789 = vpop.f32.mrb[0].mxu0
      %v2790 = vadd.f32 0.0, %v2789
      %v2791 = vpop.f32.mrb[0].mxu0
      %v2792 = vpop.f32.mrb[0].mxu0
      %v2793 = vadd.f32 0.0, %v2792
      %v2794 = vpop.f32.mrb[0].mxu0
      %2795 = vmatprep.mubr.bf16.mxu0 %v962
      %2796 = vmatmul.mubr.bf16.gmra.mrb[0].mxu0 %v961
      %v2797 = vpop.f32.mrb[0].mxu0
      %v2798 = vadd.f32 0.0, %v2797
      %v2799 = vpop.f32.mrb[0].mxu0
      %v2800 = vpop.f32.mrb[0].mxu0
      %v2801 = vadd.f32 0.0, %v2800
      %v2802 = vpop.f32.mrb[0].mxu0
      %2803 = vmatprep.mubr.bf16.mxu0 %v964
      %2804 = vmatmul.mubr.bf16.gmra.mrb[0].mxu0 %v963
      %v2805 = vpop.f32.mrb[0].mxu0
      %v2806 = vadd.f32 0.0, %v2805
      %v2807 = vpop.f32.mrb[0].mxu0
      %v2808 = vpop.f32.mrb[0].mxu0
      %v2809 = vadd.f32 0.0, %v2808
      %v2810 = vpop.f32.mrb[0].mxu0
      %2811 = vmatprep.mubr.bf16.mxu0 %v966
      %2812 = vmatmul.mubr.bf16.gmra.mrb[0].mxu0 %v965
      %v2813 = vpop.f32.mrb[0].mxu0
      %v2814 = vadd.f32 0.0, %v2813
      %v2815 = vpop.f32.mrb[0].mxu0
      %v2816 = vpop.f32.mrb[0].mxu0
      %v2817 = vadd.f32 0.0, %v2816
      %v2818 = vpop.f32.mrb[0].mxu0
      %2819 = vmatprep.mubr.bf16.mxu0 %v968
      %2820 = vmatmul.mubr.bf16.gmra.mrb[0].mxu0 %v967
      %v2821 = vpop.f32.mrb[0].mxu0
      %v2822 = vadd.f32 0.0, %v2821
      %v2823 = vpop.f32.mrb[0].mxu0
      %v2824 = vpop.f32.mrb[0].mxu0
      %v2825 = vadd.f32 0.0, %v2824
      %v2826 = vpop.f32.mrb[0].mxu0
      %2827 = vmatprep.mubr.bf16.mxu0 %v970
      %2828 = vmatmul.mubr.bf16.gmra.mrb[0].mxu0 %v969
      %v2829 = vpop.f32.mrb[0].mxu0
      %v2830 = vadd.f32 0.0, %v2829
      %v2831 = vpop.f32.mrb[0].mxu0
      %v2832 = vpop.f32.mrb[0].mxu0
      %v2833 = vadd.f32 0.0, %v2832
      %v2834 = vpop.f32.mrb[0].mxu0
      %2835 = vmatprep.mubr.bf16.mxu0 %v972
      %2836 = vmatmul.mubr.bf16.gmra.mrb[0].mxu0 %v971
      %v2837 = vpop.f32.mrb[0].mxu0
      %v2838 = vadd.f32 0.0, %v2837
      %v2839 = vpop.f32.mrb[0].mxu0
      %v2840 = vpop.f32.mrb[0].mxu0
      %v2841 = vadd.f32 0.0, %v2840
      %v2842 = vpop.f32.mrb[0].mxu0
      %2843 = vmatprep.mubr.bf16.mxu0 %v974
      %2844 = vmatmul.mubr.bf16.gmra.mrb[0].mxu0 %v973
      %v2845 = vpop.f32.mrb[0].mxu0
      %v2846 = vadd.f32 0.0, %v2845
      %v2847 = vpop.f32.mrb[0].mxu0
      %v2848 = vpop.f32.mrb[0].mxu0
      %v2849 = vadd.f32 0.0, %v2848
      %v2850 = vpop.f32.mrb[0].mxu0
      %2851 = vmatprep.mubr.bf16.mxu0 %v976
      %2852 = vmatmul.mubr.bf16.gmra.mrb[0].mxu0 %v975
      %v2853 = vpop.f32.mrb[0].mxu0
      %v2854 = vadd.f32 0.0, %v2853
      %v2855 = vpop.f32.mrb[0].mxu0
      %v2856 = vpop.f32.mrb[0].mxu0
      %v2857 = vadd.f32 0.0, %v2856
      %v2858 = vpop.f32.mrb[0].mxu0
      %2859 = vmatprep.mubr.bf16.mxu0 %v978
      %2860 = vmatmul.mubr.bf16.gmra.mrb[0].mxu0 %v977
      %v2861 = vpop.f32.mrb[0].mxu0
      %v2862 = vadd.f32 0.0, %v2861
      %v2863 = vpop.f32.mrb[0].mxu0
      %v2864 = vpop.f32.mrb[0].mxu0
      %v2865 = vadd.f32 0.0, %v2864
      %v2866 = vpop.f32.mrb[0].mxu0
      %2867 = vmatprep.mubr.bf16.mxu0 %v980
      %2868 = vmatmul.mubr.bf16.gmra.mrb[0].mxu0 %v979
      %v2869 = vpop.f32.mrb[0].mxu0
      %v2870 = vadd.f32 0.0, %v2869
      %v2871 = vpop.f32.mrb[0].mxu0
      %v2872 = vpop.f32.mrb[0].mxu0
      %v2873 = vadd.f32 0.0, %v2872
      %v2874 = vpop.f32.mrb[0].mxu0
      %2875 = vmatprep.mubr.bf16.mxu0 %v982
      %2876 = vmatmul.mubr.bf16.gmra.mrb[0].mxu0 %v981
      %v2877 = vpop.f32.mrb[0].mxu0
      %v2878 = vadd.f32 0.0, %v2877
      %v2879 = vpop.f32.mrb[0].mxu0
      %v2880 = vpop.f32.mrb[0].mxu0
      %v2881 = vadd.f32 0.0, %v2880
      %v2882 = vpop.f32.mrb[0].mxu0
      %2883 = vmatprep.mubr.bf16.mxu0 %v984
      %2884 = vmatmul.mubr.bf16.gmra.mrb[0].mxu0 %v983
      %v2885 = vpop.f32.mrb[0].mxu0
      %v2886 = vadd.f32 0.0, %v2885
      %v2887 = vpop.f32.mrb[0].mxu0
      %v2888 = vpop.f32.mrb[0].mxu0
      %v2889 = vadd.f32 0.0, %v2888
      %v2890 = vpop.f32.mrb[0].mxu0
      %2891 = vmatprep.mubr.bf16.mxu0 %v986
      %2892 = vmatmul.mubr.bf16.gmra.mrb[0].mxu0 %v985
      %v2893 = vpop.f32.mrb[0].mxu0
      %v2894 = vadd.f32 0.0, %v2893
      %v2895 = vpop.f32.mrb[0].mxu0
      %v2896 = vpop.f32.mrb[0].mxu0
      %v2897 = vadd.f32 0.0, %v2896
      %v2898 = vpop.f32.mrb[0].mxu0
      %2899 = vmatprep.mubr.bf16.mxu0 %v988
      %2900 = vmatmul.mubr.bf16.gmra.mrb[0].mxu0 %v987
      %v2901 = vpop.f32.mrb[0].mxu0
      %v2902 = vadd.f32 0.0, %v2901
      %v2903 = vpop.f32.mrb[0].mxu0
      %v2904 = vpop.f32.mrb[0].mxu0
      %v2905 = vadd.f32 0.0, %v2904
      %v2906 = vpop.f32.mrb[0].mxu0
      %2907 = vmatprep.mubr.bf16.mxu0 %v990
      %2908 = vmatmul.mubr.bf16.gmra.mrb[0].mxu0 %v989
      %v2909 = vpop.f32.mrb[0].mxu0
      %v2910 = vadd.f32 0.0, %v2909
      %v2911 = vpop.f32.mrb[0].mxu0
      %v2912 = vpop.f32.mrb[0].mxu0
      %v2913 = vadd.f32 0.0, %v2912
      %v2914 = vpop.f32.mrb[0].mxu0
      %2915 = vmatprep.mubr.bf16.mxu0 %v992
      %2916 = vmatmul.mubr.bf16.gmra.mrb[0].mxu0 %v991
      %v2917 = vpop.f32.mrb[0].mxu0
      %v2918 = vadd.f32 0.0, %v2917
      %v2919 = vpop.f32.mrb[0].mxu0
      %v2920 = vpop.f32.mrb[0].mxu0
      %v2921 = vadd.f32 0.0, %v2920
      %v2922 = vpop.f32.mrb[0].mxu0
      %2923 = vmatprep.mubr.bf16.mxu0 %v994
      %2924 = vmatmul.mubr.bf16.gmra.mrb[0].mxu0 %v993
      %v2925 = vpop.f32.mrb[0].mxu0
      %v2926 = vadd.f32 0.0, %v2925
      %v2927 = vpop.f32.mrb[0].mxu0
      %v2928 = vpop.f32.mrb[0].mxu0
      %v2929 = vadd.f32 0.0, %v2928
      %v2930 = vpop.f32.mrb[0].mxu0
      %2931 = vmatprep.mubr.bf16.mxu0 %v996
      %2932 = vmatmul.mubr.bf16.gmra.mrb[0].mxu0 %v995
      %v2933 = vpop.f32.mrb[0].mxu0
      %v2934 = vadd.f32 0.0, %v2933
      %v2935 = vpop.f32.mrb[0].mxu0
      %v2936 = vpop.f32.mrb[0].mxu0
      %v2937 = vadd.f32 0.0, %v2936
      %v2938 = vpop.f32.mrb[0].mxu0
      %2939 = vdwg.mxu0
      %v2940 = vadd.f32 %v2686, %v2689
      %v2941 = vadd.f32 %v2940, %v2694
      %v2942 = vadd.f32 %v2941, %v2697
      %v2943 = vadd.f32 %v2942, %v2702
      %v2944 = vadd.f32 %v2943, %v2705
      %v2945 = vadd.f32 %v2944, %v2710
      %v2946 = vadd.f32 %v2945, %v2713
      %v2947 = vadd.f32 %v2946, %v2718
      %v2948 = vadd.f32 %v2947, %v2721
      %v2949 = vadd.f32 %v2948, %v2726
      %v2950 = vadd.f32 %v2949, %v2729
      %v2951 = vadd.f32 %v2950, %v2734
      %v2952 = vadd.f32 %v2951, %v2737
      %v2953 = vadd.f32 %v2952, %v2742
      %v2954 = vadd.f32 %v2953, %v2745
      %v2955 = vadd.f32 %v2954, %v2750
      %v2956 = vadd.f32 %v2955, %v2753
      %v2957 = vadd.f32 %v2956, %v2758
      %v2958 = vadd.f32 %v2957, %v2761
      %v2959 = vadd.f32 %v2958, %v2766
      %v2960 = vadd.f32 %v2959, %v2769
      %v2961 = vadd.f32 %v2960, %v2774
      %v2962 = vadd.f32 %v2961, %v2777
      %v2963 = vadd.f32 %v2962, %v2782
      %v2964 = vadd.f32 %v2963, %v2785
      %v2965 = vadd.f32 %v2964, %v2790
      %v2966 = vadd.f32 %v2965, %v2793
      %v2967 = vadd.f32 %v2966, %v2798
      %v2968 = vadd.f32 %v2967, %v2801
      %v2969 = vadd.f32 %v2968, %v2806
      %v2970 = vadd.f32 %v2969, %v2809
      %v2971 = vadd.f32 %v2970, %v2814
      %v2972 = vadd.f32 %v2971, %v2817
      %v2973 = vadd.f32 %v2972, %v2822
      %v2974 = vadd.f32 %v2973, %v2825
      %v2975 = vadd.f32 %v2974, %v2830
      %v2976 = vadd.f32 %v2975, %v2833
      %v2977 = vadd.f32 %v2976, %v2838
      %v2978 = vadd.f32 %v2977, %v2841
      %v2979 = vadd.f32 %v2978, %v2846
      %v2980 = vadd.f32 %v2979, %v2849
      %v2981 = vadd.f32 %v2980, %v2854
      %v2982 = vadd.f32 %v2981, %v2857
      %v2983 = vadd.f32 %v2982, %v2862
      %v2984 = vadd.f32 %v2983, %v2865
      %v2985 = vadd.f32 %v2984, %v2870
      %v2986 = vadd.f32 %v2985, %v2873
      %v2987 = vadd.f32 %v2986, %v2878
      %v2988 = vadd.f32 %v2987, %v2881
      %v2989 = vadd.f32 %v2988, %v2886
      %v2990 = vadd.f32 %v2989, %v2889
      %v2991 = vadd.f32 %v2990, %v2894
      %v2992 = vadd.f32 %v2991, %v2897
      %v2993 = vadd.f32 %v2992, %v2902
      %v2994 = vadd.f32 %v2993, %v2905
      %v2995 = vadd.f32 %v2994, %v2910
      %v2996 = vadd.f32 %v2995, %v2913
      %v2997 = vadd.f32 %v2996, %v2918
      %v2998 = vadd.f32 %v2997, %v2921
      %v2999 = vadd.f32 %v2998, %v2926
      %v3000 = vadd.f32 %v2999, %v2929
      %v3001 = vadd.f32 %v3000, %v2934
      %v3002 = vadd.f32 %v3001, %v2937
      %v3003 = vrot.slane %v3002, 4
      %v3004 = vadd.f32 %v3002, %v3003
      %v3005 = vrot.slane %v3004, 2
      %v3006 = vadd.f32 %v3004, %v3005
      %v3007 = vrot.slane %v3006, 1
      %v3008 = vadd.f32 %v3006, %v3007
      %v3009 = vmul.f32 %v2686, %v2686
      %v3010 = vmul.f32 %v2689, %v2689
      %v3011 = vmul.f32 %v2694, %v2694
      %v3012 = vmul.f32 %v2697, %v2697
      %v3013 = vmul.f32 %v2702, %v2702
      %v3014 = vmul.f32 %v2705, %v2705
      %v3015 = vmul.f32 %v2710, %v2710
      %v3016 = vmul.f32 %v2713, %v2713
      %v3017 = vmul.f32 %v2718, %v2718
      %v3018 = vmul.f32 %v2721, %v2721
      %v3019 = vmul.f32 %v2726, %v2726
      %v3020 = vmul.f32 %v2729, %v2729
      %v3021 = vmul.f32 %v2734, %v2734
      %v3022 = vmul.f32 %v2737, %v2737
      %v3023 = vmul.f32 %v2742, %v2742
      %v3024 = vmul.f32 %v2745, %v2745
      %v3025 = vmul.f32 %v2750, %v2750
      %v3026 = vmul.f32 %v2753, %v2753
      %v3027 = vmul.f32 %v2758, %v2758
      %v3028 = vmul.f32 %v2761, %v2761
      %v3029 = vmul.f32 %v2766, %v2766
      %v3030 = vmul.f32 %v2769, %v2769
      %v3031 = vmul.f32 %v2774, %v2774
      %v3032 = vmul.f32 %v2777, %v2777
      %v3033 = vmul.f32 %v2782, %v2782
      %v3034 = vmul.f32 %v2785, %v2785
      %v3035 = vmul.f32 %v2790, %v2790
      %v3036 = vmul.f32 %v2793, %v2793
      %v3037 = vmul.f32 %v2798, %v2798
      %v3038 = vmul.f32 %v2801, %v2801
      %v3039 = vmul.f32 %v2806, %v2806
      %v3040 = vmul.f32 %v2809, %v2809
      %v3041 = vmul.f32 %v2814, %v2814
      %v3042 = vmul.f32 %v2817, %v2817
      %v3043 = vmul.f32 %v2822, %v2822
      %v3044 = vmul.f32 %v2825, %v2825
      %v3045 = vmul.f32 %v2830, %v2830
      %v3046 = vmul.f32 %v2833, %v2833
      %v3047 = vmul.f32 %v2838, %v2838
      %v3048 = vmul.f32 %v2841, %v2841
      %v3049 = vmul.f32 %v2846, %v2846
      %v3050 = vmul.f32 %v2849, %v2849
      %v3051 = vmul.f32 %v2854, %v2854
      %v3052 = vmul.f32 %v2857, %v2857
      %v3053 = vmul.f32 %v2862, %v2862
      %v3054 = vmul.f32 %v2865, %v2865
      %v3055 = vmul.f32 %v2870, %v2870
      %v3056 = vmul.f32 %v2873, %v2873
      %v3057 = vmul.f32 %v2878, %v2878
      %v3058 = vmul.f32 %v2881, %v2881
      %v3059 = vmul.f32 %v2886, %v2886
      %v3060 = vmul.f32 %v2889, %v2889
      %v3061 = vmul.f32 %v2894, %v2894
      %v3062 = vmul.f32 %v2897, %v2897
      %v3063 = vmul.f32 %v2902, %v2902
      %v3064 = vmul.f32 %v2905, %v2905
      %v3065 = vmul.f32 %v2910, %v2910
      %v3066 = vmul.f32 %v2913, %v2913
      %v3067 = vmul.f32 %v2918, %v2918
      %v3068 = vmul.f32 %v2921, %v2921
      %v3069 = vmul.f32 %v2926, %v2926
      %v3070 = vmul.f32 %v2929, %v2929
      %v3071 = vmul.f32 %v2934, %v2934
      %v3072 = vmul.f32 %v2937, %v2937
      %v3073 = vadd.f32 %v3009, %v3010
      %v3074 = vadd.f32 %v3073, %v3011
      %v3075 = vadd.f32 %v3074, %v3012
      %v3076 = vadd.f32 %v3075, %v3013
      %v3077 = vadd.f32 %v3076, %v3014
      %v3078 = vadd.f32 %v3077, %v3015
      %v3079 = vadd.f32 %v3078, %v3016
      %v3080 = vadd.f32 %v3079, %v3017
      %v3081 = vadd.f32 %v3080, %v3018
      %v3082 = vadd.f32 %v3081, %v3019
      %v3083 = vadd.f32 %v3082, %v3020
      %v3084 = vadd.f32 %v3083, %v3021
      %v3085 = vadd.f32 %v3084, %v3022
      %v3086 = vadd.f32 %v3085, %v3023
      %v3087 = vadd.f32 %v3086, %v3024
      %v3088 = vadd.f32 %v3087, %v3025
      %v3089 = vadd.f32 %v3088, %v3026
      %v3090 = vadd.f32 %v3089, %v3027
      %v3091 = vadd.f32 %v3090, %v3028
      %v3092 = vadd.f32 %v3091, %v3029
      %v3093 = vadd.f32 %v3092, %v3030
      %v3094 = vadd.f32 %v3093, %v3031
      %v3095 = vadd.f32 %v3094, %v3032
      %v3096 = vadd.f32 %v3095, %v3033
      %v3097 = vadd.f32 %v3096, %v3034
      %v3098 = vadd.f32 %v3097, %v3035
      %v3099 = vadd.f32 %v3098, %v3036
      %v3100 = vadd.f32 %v3099, %v3037
      %v3101 = vadd.f32 %v3100, %v3038
      %v3102 = vadd.f32 %v3101, %v3039
      %v3103 = vadd.f32 %v3102, %v3040
      %v3104 = vadd.f32 %v3103, %v3041
      %v3105 = vadd.f32 %v3104, %v3042
      %v3106 = vadd.f32 %v3105, %v3043
      %v3107 = vadd.f32 %v3106, %v3044
      %v3108 = vadd.f32 %v3107, %v3045
      %v3109 = vadd.f32 %v3108, %v3046
      %v3110 = vadd.f32 %v3109, %v3047
      %v3111 = vadd.f32 %v3110, %v3048
      %v3112 = vadd.f32 %v3111, %v3049
      %v3113 = vadd.f32 %v3112, %v3050
      %v3114 = vadd.f32 %v3113, %v3051
      %v3115 = vadd.f32 %v3114, %v3052
      %v3116 = vadd.f32 %v3115, %v3053
      %v3117 = vadd.f32 %v3116, %v3054
      %v3118 = vadd.f32 %v3117, %v3055
      %v3119 = vadd.f32 %v3118, %v3056
      %v3120 = vadd.f32 %v3119, %v3057
      %v3121 = vadd.f32 %v3120, %v3058
      %v3122 = vadd.f32 %v3121, %v3059
      %v3123 = vadd.f32 %v3122, %v3060
      %v3124 = vadd.f32 %v3123, %v3061
      %v3125 = vadd.f32 %v3124, %v3062
      %v3126 = vadd.f32 %v3125, %v3063
      %v3127 = vadd.f32 %v3126, %v3064
      %v3128 = vadd.f32 %v3127, %v3065
      %v3129 = vadd.f32 %v3128, %v3066
      %v3130 = vadd.f32 %v3129, %v3067
      %v3131 = vadd.f32 %v3130, %v3068
      %v3132 = vadd.f32 %v3131, %v3069
      %v3133 = vadd.f32 %v3132, %v3070
      %v3134 = vadd.f32 %v3133, %v3071
      %v3135 = vadd.f32 %v3134, %v3072
      %v3136 = vrot.slane %v3135, 4
      %v3137 = vadd.f32 %v3135, %v3136
      %v3138 = vrot.slane %v3137, 2
      %v3139 = vadd.f32 %v3137, %v3138
      %v3140 = vrot.slane %v3139, 1
      %v3141 = vadd.f32 %v3139, %v3140
      %v3142 = vmax.f32 %v2686, %v2702
      %v3143 = vmax.f32 %v2689, %v2705
      %v3144 = vmax.f32 %v2694, %v2710
      %v3145 = vmax.f32 %v2697, %v2713
      %v3146 = vmax.f32 %v3142, %v2718
      %v3147 = vmax.f32 %v3143, %v2721
      %v3148 = vmax.f32 %v3144, %v2726
      %v3149 = vmax.f32 %v3145, %v2729
      %v3150 = vmax.f32 %v3146, %v2734
      %v3151 = vmax.f32 %v3147, %v2737
      %v3152 = vmax.f32 %v3148, %v2742
      %v3153 = vmax.f32 %v3149, %v2745
      %v3154 = vmax.f32 %v3150, %v2750
      %v3155 = vmax.f32 %v3151, %v2753
      %v3156 = vmax.f32 %v3152, %v2758
      %v3157 = vmax.f32 %v3153, %v2761
      %v3158 = vmax.f32 %v3154, %v2766
      %v3159 = vmax.f32 %v3155, %v2769
      %v3160 = vmax.f32 %v3156, %v2774
      %v3161 = vmax.f32 %v3157, %v2777
      %v3162 = vmax.f32 %v3158, %v2782
      %v3163 = vmax.f32 %v3159, %v2785
      %v3164 = vmax.f32 %v3160, %v2790
      %v3165 = vmax.f32 %v3161, %v2793
      %v3166 = vmax.f32 %v3162, %v2798
      %v3167 = vmax.f32 %v3163, %v2801
      %v3168 = vmax.f32 %v3164, %v2806
      %v3169 = vmax.f32 %v3165, %v2809
      %v3170 = vmax.f32 %v3166, %v2814
      %v3171 = vmax.f32 %v3167, %v2817
      %v3172 = vmax.f32 %v3168, %v2822
      %v3173 = vmax.f32 %v3169, %v2825
      %v3174 = vmax.f32 %v3170, %v2830
      %v3175 = vmax.f32 %v3171, %v2833
      %v3176 = vmax.f32 %v3172, %v2838
      %v3177 = vmax.f32 %v3173, %v2841
      %v3178 = vmax.f32 %v3174, %v2846
      %v3179 = vmax.f32 %v3175, %v2849
      %v3180 = vmax.f32 %v3176, %v2854
      %v3181 = vmax.f32 %v3177, %v2857
      %v3182 = vmax.f32 %v3178, %v2862
      %v3183 = vmax.f32 %v3179, %v2865
      %v3184 = vmax.f32 %v3180, %v2870
      %v3185 = vmax.f32 %v3181, %v2873
      %v3186 = vmax.f32 %v3182, %v2878
      %v3187 = vmax.f32 %v3183, %v2881
      %v3188 = vmax.f32 %v3184, %v2886
      %v3189 = vmax.f32 %v3185, %v2889
      %v3190 = vmax.f32 %v3186, %v2894
      %v3191 = vmax.f32 %v3187, %v2897
      %v3192 = vmax.f32 %v3188, %v2902
      %v3193 = vmax.f32 %v3189, %v2905
      %v3194 = vmax.f32 %v3190, %v2910
      %v3195 = vmax.f32 %v3191, %v2913
      %v3196 = vmax.f32 %v3192, %v2918
      %v3197 = vmax.f32 %v3193, %v2921
      %v3198 = vmax.f32 %v3194, %v2926
      %v3199 = vmax.f32 %v3195, %v2929
      %v3200 = vmax.f32 %v3196, %v2934
      %v3201 = vmax.f32 %v3197, %v2937
      %v3202 = vmax.f32 %v3198, %v3199
      %v3203 = vmax.f32 %v3200, %v3201
      %v3204 = vmax.f32 %v3202, %v3203
      %v3205 = vrot.slane %v3204, 4
      %v3206 = vmax.f32 %v3204, %v3205
      %v3207 = vrot.slane %v3206, 2
      %v3208 = vmax.f32 %v3206, %v3207
      %v3209 = vrot.slane %v3208, 1
      %v3210 = vmax.f32 %v3208, %v3209
      %v3211 = vmin.f32 %v2686, %v2702
      %v3212 = vmin.f32 %v2689, %v2705
      %v3213 = vmin.f32 %v2694, %v2710
      %v3214 = vmin.f32 %v2697, %v2713
      %v3215 = vmin.f32 %v3211, %v2718
      %v3216 = vmin.f32 %v3212, %v2721
      %v3217 = vmin.f32 %v3213, %v2726
      %v3218 = vmin.f32 %v3214, %v2729
      %v3219 = vmin.f32 %v3215, %v2734
      %v3220 = vmin.f32 %v3216, %v2737
      %v3221 = vmin.f32 %v3217, %v2742
      %v3222 = vmin.f32 %v3218, %v2745
      %v3223 = vmin.f32 %v3219, %v2750
      %v3224 = vmin.f32 %v3220, %v2753
      %v3225 = vmin.f32 %v3221, %v2758
      %v3226 = vmin.f32 %v3222, %v2761
      %v3227 = vmin.f32 %v3223, %v2766
      %v3228 = vmin.f32 %v3224, %v2769
      %v3229 = vmin.f32 %v3225, %v2774
      %v3230 = vmin.f32 %v3226, %v2777
      %v3231 = vmin.f32 %v3227, %v2782
      %v3232 = vmin.f32 %v3228, %v2785
      %v3233 = vmin.f32 %v3229, %v2790
      %v3234 = vmin.f32 %v3230, %v2793
      %v3235 = vmin.f32 %v3231, %v2798
      %v3236 = vmin.f32 %v3232, %v2801
      %v3237 = vmin.f32 %v3233, %v2806
      %v3238 = vmin.f32 %v3234, %v2809
      %v3239 = vmin.f32 %v3235, %v2814
      %v3240 = vmin.f32 %v3236, %v2817
      %v3241 = vmin.f32 %v3237, %v2822
      %v3242 = vmin.f32 %v3238, %v2825
      %v3243 = vmin.f32 %v3239, %v2830
      %v3244 = vmin.f32 %v3240, %v2833
      %v3245 = vmin.f32 %v3241, %v2838
      %v3246 = vmin.f32 %v3242, %v2841
      %v3247 = vmin.f32 %v3243, %v2846
      %v3248 = vmin.f32 %v3244, %v2849
      %v3249 = vmin.f32 %v3245, %v2854
      %v3250 = vmin.f32 %v3246, %v2857
      %v3251 = vmin.f32 %v3247, %v2862
      %v3252 = vmin.f32 %v3248, %v2865
      %v3253 = vmin.f32 %v3249, %v2870
      %v3254 = vmin.f32 %v3250, %v2873
      %v3255 = vmin.f32 %v3251, %v2878
      %v3256 = vmin.f32 %v3252, %v2881
      %v3257 = vmin.f32 %v3253, %v2886
      %v3258 = vmin.f32 %v3254, %v2889
      %v3259 = vmin.f32 %v3255, %v2894
      %v3260 = vmin.f32 %v3256, %v2897
      %v3261 = vmin.f32 %v3257, %v2902
      %v3262 = vmin.f32 %v3258, %v2905
      %v3263 = vmin.f32 %v3259, %v2910
      %v3264 = vmin.f32 %v3260, %v2913
      %v3265 = vmin.f32 %v3261, %v2918
      %v3266 = vmin.f32 %v3262, %v2921
      %v3267 = vmin.f32 %v3263, %v2926
      %v3268 = vmin.f32 %v3264, %v2929
      %v3269 = vmin.f32 %v3265, %v2934
      %v3270 = vmin.f32 %v3266, %v2937
      %v3271 = vmin.f32 %v3267, %v3268
      %v3272 = vmin.f32 %v3269, %v3270
      %v3273 = vmin.f32 %v3271, %v3272
      %v3274 = vrot.slane %v3273, 4
      %v3275 = vmin.f32 %v3273, %v3274
      %v3276 = vrot.slane %v3275, 2
      %v3277 = vmin.f32 %v3275, %v3276
      %v3278 = vrot.slane %v3277, 1
      %v3279 = vmin.f32 %v3277, %v3278
      %v3280 = vld [vmem:[%s3 + $0xc] sm:$0xf]
      %v3281 = vld [vmem:[%s3 + $0x1c] sm:$0xf]
      %v3282 = vld [vmem:[%s3 + $0x2c] sm:$0xf]
      %v3283 = vld [vmem:[%s3 + $0x3c] sm:$0xf]
      %v3284 = vld [vmem:[%s3 + $0x4c] sm:$0xf]
      %v3285 = vld [vmem:[%s3 + $0x5c] sm:$0xf]
      %v3286 = vld [vmem:[%s3 + $0x6c] sm:$0xf]
      %v3287 = vld [vmem:[%s3 + $0x7c] sm:$0xf]
      %v3288 = vld [vmem:[%s3 + $0x8c] sm:$0xf]
      %v3289 = vld [vmem:[%s3 + $0x9c] sm:$0xf]
      %v3290 = vld [vmem:[%s3 + $0xac] sm:$0xf]
      %v3291 = vld [vmem:[%s3 + $0xbc] sm:$0xf]
      %v3292 = vld [vmem:[%s3 + $0xcc] sm:$0xf]
      %v3293 = vld [vmem:[%s3 + $0xdc] sm:$0xf]
      %v3294 = vld [vmem:[%s3 + $0xec] sm:$0xf]
      %v3295 = vld [vmem:[%s3 + $0xfc] sm:$0xf]
      %v3296 = vld [vmem:[%s3 + $0x10c] sm:$0xf]
      %v3297 = vld [vmem:[%s3 + $0x11c] sm:$0xf]
      %v3298 = vld [vmem:[%s3 + $0x12c] sm:$0xf]
      %v3299 = vld [vmem:[%s3 + $0x13c] sm:$0xf]
      %v3300 = vld [vmem:[%s3 + $0x14c] sm:$0xf]
      %v3301 = vld [vmem:[%s3 + $0x15c] sm:$0xf]
      %v3302 = vld [vmem:[%s3 + $0x16c] sm:$0xf]
      %v3303 = vld [vmem:[%s3 + $0x17c] sm:$0xf]
      %v3304 = vld [vmem:[%s3 + $0x18c] sm:$0xf]
      %v3305 = vld [vmem:[%s3 + $0x19c] sm:$0xf]
      %v3306 = vld [vmem:[%s3 + $0x1ac] sm:$0xf]
      %v3307 = vld [vmem:[%s3 + $0x1bc] sm:$0xf]
      %v3308 = vld [vmem:[%s3 + $0x1cc] sm:$0xf]
      %v3309 = vld [vmem:[%s3 + $0x1dc] sm:$0xf]
      %v3310 = vld [vmem:[%s3 + $0x1ec] sm:$0xf]
      %v3311 = vld [vmem:[%s3 + $0x1fc] sm:$0xf]
      %v3344 = vunpack.c.l.b16 %v3280
      %v3345 = vunpack.c.l.b16 %v3281
      %v3346 = vunpack.c.l.b16 %v3282
      %v3347 = vunpack.c.l.b16 %v3283
      %v3348 = vunpack.c.l.b16 %v3284
      %v3349 = vunpack.c.l.b16 %v3285
      %v3350 = vunpack.c.l.b16 %v3286
      %v3351 = vunpack.c.l.b16 %v3287
      %v3352 = vunpack.c.l.b16 %v3288
      %v3353 = vunpack.c.l.b16 %v3289
      %v3354 = vunpack.c.l.b16 %v3290
      %v3355 = vunpack.c.l.b16 %v3291
      %v3356 = vunpack.c.l.b16 %v3292
      %v3357 = vunpack.c.l.b16 %v3293
      %v3358 = vunpack.c.l.b16 %v3294
      %v3359 = vunpack.c.l.b16 %v3295
      %v3360 = vunpack.c.l.b16 %v3296
      %v3361 = vunpack.c.l.b16 %v3297
      %v3362 = vunpack.c.l.b16 %v3298
      %v3363 = vunpack.c.l.b16 %v3299
      %v3364 = vunpack.c.l.b16 %v3300
      %v3365 = vunpack.c.l.b16 %v3301
      %v3366 = vunpack.c.l.b16 %v3302
      %v3367 = vunpack.c.l.b16 %v3303
      %v3368 = vunpack.c.l.b16 %v3304
      %v3369 = vunpack.c.l.b16 %v3305
      %v3370 = vunpack.c.l.b16 %v3306
      %v3371 = vunpack.c.l.b16 %v3307
      %v3372 = vunpack.c.l.b16 %v3308
      %v3373 = vunpack.c.l.b16 %v3309
      %v3374 = vunpack.c.l.b16 %v3310
      %v3375 = vunpack.c.l.b16 %v3311
      %v3376 = vpack.c.b16 %v3345, %v3344
      %v3377 = vpack.c.b16 %v3347, %v3346
      %v3378 = vpack.c.b16 %v3349, %v3348
      %v3379 = vpack.c.b16 %v3351, %v3350
      %v3380 = vpack.c.b16 %v3353, %v3352
      %v3381 = vpack.c.b16 %v3355, %v3354
      %v3382 = vpack.c.b16 %v3357, %v3356
      %v3383 = vpack.c.b16 %v3359, %v3358
      %v3384 = vpack.c.b16 %v3361, %v3360
      %v3385 = vpack.c.b16 %v3363, %v3362
      %v3386 = vpack.c.b16 %v3365, %v3364
      %v3387 = vpack.c.b16 %v3367, %v3366
      %v3388 = vpack.c.b16 %v3369, %v3368
      %v3389 = vpack.c.b16 %v3371, %v3370
      %v3390 = vpack.c.b16 %v3373, %v3372
      %v3391 = vpack.c.b16 %v3375, %v3374
      %3408 = vmatprep.subr.bf16.mxu0 0
      %3409 = vmatpush1.bf16.msra.mxu0 %v3376
      %3410 = vmatprep.subr.bf16.mxu0 0
      %3411 = vmatpush1.bf16.msra.mxu0 %v3377
      %3412 = vmatprep.subr.bf16.mxu0 0
      %3413 = vmatpush1.bf16.msra.mxu0 %v3378
      %3414 = vmatprep.subr.bf16.mxu0 0
      %3415 = vmatpush1.bf16.msra.mxu0 %v3379
      %3416 = vmatprep.subr.bf16.mxu0 0
      %3417 = vmatpush1.bf16.msra.mxu0 %v3380
      %3418 = vmatprep.subr.bf16.mxu0 0
      %3419 = vmatpush1.bf16.msra.mxu0 %v3381
      %3420 = vmatprep.subr.bf16.mxu0 0
      %3421 = vmatpush1.bf16.msra.mxu0 %v3382
      %3422 = vmatprep.subr.bf16.mxu0 0
      %3423 = vmatpush1.bf16.msra.mxu0 %v3383
      %3424 = vmatprep.subr.bf16.mxu0 0
      %3425 = vmatpush1.bf16.msra.mxu0 %v3384
      %3426 = vmatprep.subr.bf16.mxu0 0
      %3427 = vmatpush1.bf16.msra.mxu0 %v3385
      %3428 = vmatprep.subr.bf16.mxu0 0
      %3429 = vmatpush1.bf16.msra.mxu0 %v3386
      %3430 = vmatprep.subr.bf16.mxu0 0
      %3431 = vmatpush1.bf16.msra.mxu0 %v3387
      %3432 = vmatprep.subr.bf16.mxu0 0
      %3433 = vmatpush1.bf16.msra.mxu0 %v3388
      %3434 = vmatprep.subr.bf16.mxu0 0
      %3435 = vmatpush1.bf16.msra.mxu0 %v3389
      %3436 = vmatprep.subr.bf16.mxu0 0
      %3437 = vmatpush1.bf16.msra.mxu0 %v3390
      %3438 = vmatprep.subr.bf16.mxu0 0
      %3439 = vmatpush1.bf16.msra.mxu0 %v3391
      %3440 = vmatprep.mubr.bf16.mxu0 %v934
      %3441 = vmatmul.mubr.bf16.gmra.mrb[0].mxu0 %v933
      %v3442 = vpop.f32.mrb[0].mxu0
      %v3443 = vadd.f32 0.0, %v3442
      %v3444 = vpop.f32.mrb[0].mxu0
      %v3445 = vpop.f32.mrb[0].mxu0
      %v3446 = vadd.f32 0.0, %v3445
      %v3447 = vpop.f32.mrb[0].mxu0
      %3448 = vmatprep.mubr.bf16.mxu0 %v936
      %3449 = vmatmul.mubr.bf16.gmra.mrb[0].mxu0 %v935
      %v3450 = vpop.f32.mrb[0].mxu0
      %v3451 = vadd.f32 0.0, %v3450
      %v3452 = vpop.f32.mrb[0].mxu0
      %v3453 = vpop.f32.mrb[0].mxu0
      %v3454 = vadd.f32 0.0, %v3453
      %v3455 = vpop.f32.mrb[0].mxu0
      %3456 = vmatprep.mubr.bf16.mxu0 %v938
      %3457 = vmatmul.mubr.bf16.gmra.mrb[0].mxu0 %v937
      %v3458 = vpop.f32.mrb[0].mxu0
      %v3459 = vadd.f32 0.0, %v3458
      %v3460 = vpop.f32.mrb[0].mxu0
      %v3461 = vpop.f32.mrb[0].mxu0
      %v3462 = vadd.f32 0.0, %v3461
      %v3463 = vpop.f32.mrb[0].mxu0
      %3464 = vmatprep.mubr.bf16.mxu0 %v940
      %3465 = vmatmul.mubr.bf16.gmra.mrb[0].mxu0 %v939
      %v3466 = vpop.f32.mrb[0].mxu0
      %v3467 = vadd.f32 0.0, %v3466
      %v3468 = vpop.f32.mrb[0].mxu0
      %v3469 = vpop.f32.mrb[0].mxu0
      %v3470 = vadd.f32 0.0, %v3469
      %v3471 = vpop.f32.mrb[0].mxu0
      %3472 = vmatprep.mubr.bf16.mxu0 %v942
      %3473 = vmatmul.mubr.bf16.gmra.mrb[0].mxu0 %v941
      %v3474 = vpop.f32.mrb[0].mxu0
      %v3475 = vadd.f32 0.0, %v3474
      %v3476 = vpop.f32.mrb[0].mxu0
      %v3477 = vpop.f32.mrb[0].mxu0
      %v3478 = vadd.f32 0.0, %v3477
      %v3479 = vpop.f32.mrb[0].mxu0
      %3480 = vmatprep.mubr.bf16.mxu0 %v944
      %3481 = vmatmul.mubr.bf16.gmra.mrb[0].mxu0 %v943
      %v3482 = vpop.f32.mrb[0].mxu0
      %v3483 = vadd.f32 0.0, %v3482
      %v3484 = vpop.f32.mrb[0].mxu0
      %v3485 = vpop.f32.mrb[0].mxu0
      %v3486 = vadd.f32 0.0, %v3485
      %v3487 = vpop.f32.mrb[0].mxu0
      %3488 = vmatprep.mubr.bf16.mxu0 %v946
      %3489 = vmatmul.mubr.bf16.gmra.mrb[0].mxu0 %v945
      %v3490 = vpop.f32.mrb[0].mxu0
      %v3491 = vadd.f32 0.0, %v3490
      %v3492 = vpop.f32.mrb[0].mxu0
      %v3493 = vpop.f32.mrb[0].mxu0
      %v3494 = vadd.f32 0.0, %v3493
      %v3495 = vpop.f32.mrb[0].mxu0
      %3496 = vmatprep.mubr.bf16.mxu0 %v948
      %3497 = vmatmul.mubr.bf16.gmra.mrb[0].mxu0 %v947
      %v3498 = vpop.f32.mrb[0].mxu0
      %v3499 = vadd.f32 0.0, %v3498
      %v3500 = vpop.f32.mrb[0].mxu0
      %v3501 = vpop.f32.mrb[0].mxu0
      %v3502 = vadd.f32 0.0, %v3501
      %v3503 = vpop.f32.mrb[0].mxu0
      %3504 = vmatprep.mubr.bf16.mxu0 %v950
      %3505 = vmatmul.mubr.bf16.gmra.mrb[0].mxu0 %v949
      %v3506 = vpop.f32.mrb[0].mxu0
      %v3507 = vadd.f32 0.0, %v3506
      %v3508 = vpop.f32.mrb[0].mxu0
      %v3509 = vpop.f32.mrb[0].mxu0
      %v3510 = vadd.f32 0.0, %v3509
      %v3511 = vpop.f32.mrb[0].mxu0
      %3512 = vmatprep.mubr.bf16.mxu0 %v952
      %3513 = vmatmul.mubr.bf16.gmra.mrb[0].mxu0 %v951
      %v3514 = vpop.f32.mrb[0].mxu0
      %v3515 = vadd.f32 0.0, %v3514
      %v3516 = vpop.f32.mrb[0].mxu0
      %v3517 = vpop.f32.mrb[0].mxu0
      %v3518 = vadd.f32 0.0, %v3517
      %v3519 = vpop.f32.mrb[0].mxu0
      %3520 = vmatprep.mubr.bf16.mxu0 %v954
      %3521 = vmatmul.mubr.bf16.gmra.mrb[0].mxu0 %v953
      %v3522 = vpop.f32.mrb[0].mxu0
      %v3523 = vadd.f32 0.0, %v3522
      %v3524 = vpop.f32.mrb[0].mxu0
      %v3525 = vpop.f32.mrb[0].mxu0
      %v3526 = vadd.f32 0.0, %v3525
      %v3527 = vpop.f32.mrb[0].mxu0
      %3528 = vmatprep.mubr.bf16.mxu0 %v956
      %3529 = vmatmul.mubr.bf16.gmra.mrb[0].mxu0 %v955
      %v3530 = vpop.f32.mrb[0].mxu0
      %v3531 = vadd.f32 0.0, %v3530
      %v3532 = vpop.f32.mrb[0].mxu0
      %v3533 = vpop.f32.mrb[0].mxu0
      %v3534 = vadd.f32 0.0, %v3533
      %v3535 = vpop.f32.mrb[0].mxu0
      %3536 = vmatprep.mubr.bf16.mxu0 %v958
      %3537 = vmatmul.mubr.bf16.gmra.mrb[0].mxu0 %v957
      %v3538 = vpop.f32.mrb[0].mxu0
      %v3539 = vadd.f32 0.0, %v3538
      %v3540 = vpop.f32.mrb[0].mxu0
      %v3541 = vpop.f32.mrb[0].mxu0
      %v3542 = vadd.f32 0.0, %v3541
      %v3543 = vpop.f32.mrb[0].mxu0
      %3544 = vmatprep.mubr.bf16.mxu0 %v960
      %3545 = vmatmul.mubr.bf16.gmra.mrb[0].mxu0 %v959
      %v3546 = vpop.f32.mrb[0].mxu0
      %v3547 = vadd.f32 0.0, %v3546
      %v3548 = vpop.f32.mrb[0].mxu0
      %v3549 = vpop.f32.mrb[0].mxu0
      %v3550 = vadd.f32 0.0, %v3549
      %v3551 = vpop.f32.mrb[0].mxu0
      %3552 = vmatprep.mubr.bf16.mxu0 %v962
      %3553 = vmatmul.mubr.bf16.gmra.mrb[0].mxu0 %v961
      %v3554 = vpop.f32.mrb[0].mxu0
      %v3555 = vadd.f32 0.0, %v3554
      %v3556 = vpop.f32.mrb[0].mxu0
      %v3557 = vpop.f32.mrb[0].mxu0
      %v3558 = vadd.f32 0.0, %v3557
      %v3559 = vpop.f32.mrb[0].mxu0
      %3560 = vmatprep.mubr.bf16.mxu0 %v964
      %3561 = vmatmul.mubr.bf16.gmra.mrb[0].mxu0 %v963
      %v3562 = vpop.f32.mrb[0].mxu0
      %v3563 = vadd.f32 0.0, %v3562
      %v3564 = vpop.f32.mrb[0].mxu0
      %v3565 = vpop.f32.mrb[0].mxu0
      %v3566 = vadd.f32 0.0, %v3565
      %v3567 = vpop.f32.mrb[0].mxu0
      %3568 = vmatprep.mubr.bf16.mxu0 %v966
      %3569 = vmatmul.mubr.bf16.gmra.mrb[0].mxu0 %v965
      %v3570 = vpop.f32.mrb[0].mxu0
      %v3571 = vadd.f32 0.0, %v3570
      %v3572 = vpop.f32.mrb[0].mxu0
      %v3573 = vpop.f32.mrb[0].mxu0
      %v3574 = vadd.f32 0.0, %v3573
      %v3575 = vpop.f32.mrb[0].mxu0
      %3576 = vmatprep.mubr.bf16.mxu0 %v968
      %3577 = vmatmul.mubr.bf16.gmra.mrb[0].mxu0 %v967
      %v3578 = vpop.f32.mrb[0].mxu0
      %v3579 = vadd.f32 0.0, %v3578
      %v3580 = vpop.f32.mrb[0].mxu0
      %v3581 = vpop.f32.mrb[0].mxu0
      %v3582 = vadd.f32 0.0, %v3581
      %v3583 = vpop.f32.mrb[0].mxu0
      %3584 = vmatprep.mubr.bf16.mxu0 %v970
      %3585 = vmatmul.mubr.bf16.gmra.mrb[0].mxu0 %v969
      %v3586 = vpop.f32.mrb[0].mxu0
      %v3587 = vadd.f32 0.0, %v3586
      %v3588 = vpop.f32.mrb[0].mxu0
      %v3589 = vpop.f32.mrb[0].mxu0
      %v3590 = vadd.f32 0.0, %v3589
      %v3591 = vpop.f32.mrb[0].mxu0
      %3592 = vmatprep.mubr.bf16.mxu0 %v972
      %3593 = vmatmul.mubr.bf16.gmra.mrb[0].mxu0 %v971
      %v3594 = vpop.f32.mrb[0].mxu0
      %v3595 = vadd.f32 0.0, %v3594
      %v3596 = vpop.f32.mrb[0].mxu0
      %v3597 = vpop.f32.mrb[0].mxu0
      %v3598 = vadd.f32 0.0, %v3597
      %v3599 = vpop.f32.mrb[0].mxu0
      %3600 = vmatprep.mubr.bf16.mxu0 %v974
      %3601 = vmatmul.mubr.bf16.gmra.mrb[0].mxu0 %v973
      %v3602 = vpop.f32.mrb[0].mxu0
      %v3603 = vadd.f32 0.0, %v3602
      %v3604 = vpop.f32.mrb[0].mxu0
      %v3605 = vpop.f32.mrb[0].mxu0
      %v3606 = vadd.f32 0.0, %v3605
      %v3607 = vpop.f32.mrb[0].mxu0
      %3608 = vmatprep.mubr.bf16.mxu0 %v976
      %3609 = vmatmul.mubr.bf16.gmra.mrb[0].mxu0 %v975
      %v3610 = vpop.f32.mrb[0].mxu0
      %v3611 = vadd.f32 0.0, %v3610
      %v3612 = vpop.f32.mrb[0].mxu0
      %v3613 = vpop.f32.mrb[0].mxu0
      %v3614 = vadd.f32 0.0, %v3613
      %v3615 = vpop.f32.mrb[0].mxu0
      %3616 = vmatprep.mubr.bf16.mxu0 %v978
      %3617 = vmatmul.mubr.bf16.gmra.mrb[0].mxu0 %v977
      %v3618 = vpop.f32.mrb[0].mxu0
      %v3619 = vadd.f32 0.0, %v3618
      %v3620 = vpop.f32.mrb[0].mxu0
      %v3621 = vpop.f32.mrb[0].mxu0
      %v3622 = vadd.f32 0.0, %v3621
      %v3623 = vpop.f32.mrb[0].mxu0
      %3624 = vmatprep.mubr.bf16.mxu0 %v980
      %3625 = vmatmul.mubr.bf16.gmra.mrb[0].mxu0 %v979
      %v3626 = vpop.f32.mrb[0].mxu0
      %v3627 = vadd.f32 0.0, %v3626
      %v3628 = vpop.f32.mrb[0].mxu0
      %v3629 = vpop.f32.mrb[0].mxu0
      %v3630 = vadd.f32 0.0, %v3629
      %v3631 = vpop.f32.mrb[0].mxu0
      %3632 = vmatprep.mubr.bf16.mxu0 %v982
      %3633 = vmatmul.mubr.bf16.gmra.mrb[0].mxu0 %v981
      %v3634 = vpop.f32.mrb[0].mxu0
      %v3635 = vadd.f32 0.0, %v3634
      %v3636 = vpop.f32.mrb[0].mxu0
      %v3637 = vpop.f32.mrb[0].mxu0
      %v3638 = vadd.f32 0.0, %v3637
      %v3639 = vpop.f32.mrb[0].mxu0
      %3640 = vmatprep.mubr.bf16.mxu0 %v984
      %3641 = vmatmul.mubr.bf16.gmra.mrb[0].mxu0 %v983
      %v3642 = vpop.f32.mrb[0].mxu0
      %v3643 = vadd.f32 0.0, %v3642
      %v3644 = vpop.f32.mrb[0].mxu0
      %v3645 = vpop.f32.mrb[0].mxu0
      %v3646 = vadd.f32 0.0, %v3645
      %v3647 = vpop.f32.mrb[0].mxu0
      %3648 = vmatprep.mubr.bf16.mxu0 %v986
      %3649 = vmatmul.mubr.bf16.gmra.mrb[0].mxu0 %v985
      %v3650 = vpop.f32.mrb[0].mxu0
      %v3651 = vadd.f32 0.0, %v3650
      %v3652 = vpop.f32.mrb[0].mxu0
      %v3653 = vpop.f32.mrb[0].mxu0
      %v3654 = vadd.f32 0.0, %v3653
      %v3655 = vpop.f32.mrb[0].mxu0
      %3656 = vmatprep.mubr.bf16.mxu0 %v988
      %3657 = vmatmul.mubr.bf16.gmra.mrb[0].mxu0 %v987
      %v3658 = vpop.f32.mrb[0].mxu0
      %v3659 = vadd.f32 0.0, %v3658
      %v3660 = vpop.f32.mrb[0].mxu0
      %v3661 = vpop.f32.mrb[0].mxu0
      %v3662 = vadd.f32 0.0, %v3661
      %v3663 = vpop.f32.mrb[0].mxu0
      %3664 = vmatprep.mubr.bf16.mxu0 %v990
      %3665 = vmatmul.mubr.bf16.gmra.mrb[0].mxu0 %v989
      %v3666 = vpop.f32.mrb[0].mxu0
      %v3667 = vadd.f32 0.0, %v3666
      %v3668 = vpop.f32.mrb[0].mxu0
      %v3669 = vpop.f32.mrb[0].mxu0
      %v3670 = vadd.f32 0.0, %v3669
      %v3671 = vpop.f32.mrb[0].mxu0
      %3672 = vmatprep.mubr.bf16.mxu0 %v992
      %3673 = vmatmul.mubr.bf16.gmra.mrb[0].mxu0 %v991
      %v3674 = vpop.f32.mrb[0].mxu0
      %v3675 = vadd.f32 0.0, %v3674
      %v3676 = vpop.f32.mrb[0].mxu0
      %v3677 = vpop.f32.mrb[0].mxu0
      %v3678 = vadd.f32 0.0, %v3677
      %v3679 = vpop.f32.mrb[0].mxu0
      %3680 = vmatprep.mubr.bf16.mxu0 %v994
      %3681 = vmatmul.mubr.bf16.gmra.mrb[0].mxu0 %v993
      %v3682 = vpop.f32.mrb[0].mxu0
      %v3683 = vadd.f32 0.0, %v3682
      %v3684 = vpop.f32.mrb[0].mxu0
      %v3685 = vpop.f32.mrb[0].mxu0
      %v3686 = vadd.f32 0.0, %v3685
      %v3687 = vpop.f32.mrb[0].mxu0
      %3688 = vmatprep.mubr.bf16.mxu0 %v996
      %3689 = vmatmul.mubr.bf16.gmra.mrb[0].mxu0 %v995
      %v3690 = vpop.f32.mrb[0].mxu0
      %v3691 = vadd.f32 0.0, %v3690
      %v3692 = vpop.f32.mrb[0].mxu0
      %v3693 = vpop.f32.mrb[0].mxu0
      %v3694 = vadd.f32 0.0, %v3693
      %v3695 = vpop.f32.mrb[0].mxu0
      %3696 = vdwg.mxu0
      %v3697 = vadd.f32 %v3443, %v3446
      %v3698 = vadd.f32 %v3697, %v3451
      %v3699 = vadd.f32 %v3698, %v3454
      %v3700 = vadd.f32 %v3699, %v3459
      %v3701 = vadd.f32 %v3700, %v3462
      %v3702 = vadd.f32 %v3701, %v3467
      %v3703 = vadd.f32 %v3702, %v3470
      %v3704 = vadd.f32 %v3703, %v3475
      %v3705 = vadd.f32 %v3704, %v3478
      %v3706 = vadd.f32 %v3705, %v3483
      %v3707 = vadd.f32 %v3706, %v3486
      %v3708 = vadd.f32 %v3707, %v3491
      %v3709 = vadd.f32 %v3708, %v3494
      %v3710 = vadd.f32 %v3709, %v3499
      %v3711 = vadd.f32 %v3710, %v3502
      %v3712 = vadd.f32 %v3711, %v3507
      %v3713 = vadd.f32 %v3712, %v3510
      %v3714 = vadd.f32 %v3713, %v3515
      %v3715 = vadd.f32 %v3714, %v3518
      %v3716 = vadd.f32 %v3715, %v3523
      %v3717 = vadd.f32 %v3716, %v3526
      %v3718 = vadd.f32 %v3717, %v3531
      %v3719 = vadd.f32 %v3718, %v3534
      %v3720 = vadd.f32 %v3719, %v3539
      %v3721 = vadd.f32 %v3720, %v3542
      %v3722 = vadd.f32 %v3721, %v3547
      %v3723 = vadd.f32 %v3722, %v3550
      %v3724 = vadd.f32 %v3723, %v3555
      %v3725 = vadd.f32 %v3724, %v3558
      %v3726 = vadd.f32 %v3725, %v3563
      %v3727 = vadd.f32 %v3726, %v3566
      %v3728 = vadd.f32 %v3727, %v3571
      %v3729 = vadd.f32 %v3728, %v3574
      %v3730 = vadd.f32 %v3729, %v3579
      %v3731 = vadd.f32 %v3730, %v3582
      %v3732 = vadd.f32 %v3731, %v3587
      %v3733 = vadd.f32 %v3732, %v3590
      %v3734 = vadd.f32 %v3733, %v3595
      %v3735 = vadd.f32 %v3734, %v3598
      %v3736 = vadd.f32 %v3735, %v3603
      %v3737 = vadd.f32 %v3736, %v3606
      %v3738 = vadd.f32 %v3737, %v3611
      %v3739 = vadd.f32 %v3738, %v3614
      %v3740 = vadd.f32 %v3739, %v3619
      %v3741 = vadd.f32 %v3740, %v3622
      %v3742 = vadd.f32 %v3741, %v3627
      %v3743 = vadd.f32 %v3742, %v3630
      %v3744 = vadd.f32 %v3743, %v3635
      %v3745 = vadd.f32 %v3744, %v3638
      %v3746 = vadd.f32 %v3745, %v3643
      %v3747 = vadd.f32 %v3746, %v3646
      %v3748 = vadd.f32 %v3747, %v3651
      %v3749 = vadd.f32 %v3748, %v3654
      %v3750 = vadd.f32 %v3749, %v3659
      %v3751 = vadd.f32 %v3750, %v3662
      %v3752 = vadd.f32 %v3751, %v3667
      %v3753 = vadd.f32 %v3752, %v3670
      %v3754 = vadd.f32 %v3753, %v3675
      %v3755 = vadd.f32 %v3754, %v3678
      %v3756 = vadd.f32 %v3755, %v3683
      %v3757 = vadd.f32 %v3756, %v3686
      %v3758 = vadd.f32 %v3757, %v3691
      %v3759 = vadd.f32 %v3758, %v3694
      %v3760 = vrot.slane %v3759, 4
      %v3761 = vadd.f32 %v3759, %v3760
      %v3762 = vrot.slane %v3761, 2
      %v3763 = vadd.f32 %v3761, %v3762
      %v3764 = vrot.slane %v3763, 1
      %v3765 = vadd.f32 %v3763, %v3764
      %v3766 = vmul.f32 %v3443, %v3443
      %v3767 = vmul.f32 %v3446, %v3446
      %v3768 = vmul.f32 %v3451, %v3451
      %v3769 = vmul.f32 %v3454, %v3454
      %v3770 = vmul.f32 %v3459, %v3459
      %v3771 = vmul.f32 %v3462, %v3462
      %v3772 = vmul.f32 %v3467, %v3467
      %v3773 = vmul.f32 %v3470, %v3470
      %v3774 = vmul.f32 %v3475, %v3475
      %v3775 = vmul.f32 %v3478, %v3478
      %v3776 = vmul.f32 %v3483, %v3483
      %v3777 = vmul.f32 %v3486, %v3486
      %v3778 = vmul.f32 %v3491, %v3491
      %v3779 = vmul.f32 %v3494, %v3494
      %v3780 = vmul.f32 %v3499, %v3499
      %v3781 = vmul.f32 %v3502, %v3502
      %v3782 = vmul.f32 %v3507, %v3507
      %v3783 = vmul.f32 %v3510, %v3510
      %v3784 = vmul.f32 %v3515, %v3515
      %v3785 = vmul.f32 %v3518, %v3518
      %v3786 = vmul.f32 %v3523, %v3523
      %v3787 = vmul.f32 %v3526, %v3526
      %v3788 = vmul.f32 %v3531, %v3531
      %v3789 = vmul.f32 %v3534, %v3534
      %v3790 = vmul.f32 %v3539, %v3539
      %v3791 = vmul.f32 %v3542, %v3542
      %v3792 = vmul.f32 %v3547, %v3547
      %v3793 = vmul.f32 %v3550, %v3550
      %v3794 = vmul.f32 %v3555, %v3555
      %v3795 = vmul.f32 %v3558, %v3558
      %v3796 = vmul.f32 %v3563, %v3563
      %v3797 = vmul.f32 %v3566, %v3566
      %v3798 = vmul.f32 %v3571, %v3571
      %v3799 = vmul.f32 %v3574, %v3574
      %v3800 = vmul.f32 %v3579, %v3579
      %v3801 = vmul.f32 %v3582, %v3582
      %v3802 = vmul.f32 %v3587, %v3587
      %v3803 = vmul.f32 %v3590, %v3590
      %v3804 = vmul.f32 %v3595, %v3595
      %v3805 = vmul.f32 %v3598, %v3598
      %v3806 = vmul.f32 %v3603, %v3603
      %v3807 = vmul.f32 %v3606, %v3606
      %v3808 = vmul.f32 %v3611, %v3611
      %v3809 = vmul.f32 %v3614, %v3614
      %v3810 = vmul.f32 %v3619, %v3619
      %v3811 = vmul.f32 %v3622, %v3622
      %v3812 = vmul.f32 %v3627, %v3627
      %v3813 = vmul.f32 %v3630, %v3630
      %v3814 = vmul.f32 %v3635, %v3635
      %v3815 = vmul.f32 %v3638, %v3638
      %v3816 = vmul.f32 %v3643, %v3643
      %v3817 = vmul.f32 %v3646, %v3646
      %v3818 = vmul.f32 %v3651, %v3651
      %v3819 = vmul.f32 %v3654, %v3654
      %v3820 = vmul.f32 %v3659, %v3659
      %v3821 = vmul.f32 %v3662, %v3662
      %v3822 = vmul.f32 %v3667, %v3667
      %v3823 = vmul.f32 %v3670, %v3670
      %v3824 = vmul.f32 %v3675, %v3675
      %v3825 = vmul.f32 %v3678, %v3678
      %v3826 = vmul.f32 %v3683, %v3683
      %v3827 = vmul.f32 %v3686, %v3686
      %v3828 = vmul.f32 %v3691, %v3691
      %v3829 = vmul.f32 %v3694, %v3694
      %v3830 = vadd.f32 %v3766, %v3767
      %v3831 = vadd.f32 %v3830, %v3768
      %v3832 = vadd.f32 %v3831, %v3769
      %v3833 = vadd.f32 %v3832, %v3770
      %v3834 = vadd.f32 %v3833, %v3771
      %v3835 = vadd.f32 %v3834, %v3772
      %v3836 = vadd.f32 %v3835, %v3773
      %v3837 = vadd.f32 %v3836, %v3774
      %v3838 = vadd.f32 %v3837, %v3775
      %v3839 = vadd.f32 %v3838, %v3776
      %v3840 = vadd.f32 %v3839, %v3777
      %v3841 = vadd.f32 %v3840, %v3778
      %v3842 = vadd.f32 %v3841, %v3779
      %v3843 = vadd.f32 %v3842, %v3780
      %v3844 = vadd.f32 %v3843, %v3781
      %v3845 = vadd.f32 %v3844, %v3782
      %v3846 = vadd.f32 %v3845, %v3783
      %v3847 = vadd.f32 %v3846, %v3784
      %v3848 = vadd.f32 %v3847, %v3785
      %v3849 = vadd.f32 %v3848, %v3786
      %v3850 = vadd.f32 %v3849, %v3787
      %v3851 = vadd.f32 %v3850, %v3788
      %v3852 = vadd.f32 %v3851, %v3789
      %v3853 = vadd.f32 %v3852, %v3790
      %v3854 = vadd.f32 %v3853, %v3791
      %v3855 = vadd.f32 %v3854, %v3792
      %v3856 = vadd.f32 %v3855, %v3793
      %v3857 = vadd.f32 %v3856, %v3794
      %v3858 = vadd.f32 %v3857, %v3795
      %v3859 = vadd.f32 %v3858, %v3796
      %v3860 = vadd.f32 %v3859, %v3797
      %v3861 = vadd.f32 %v3860, %v3798
      %v3862 = vadd.f32 %v3861, %v3799
      %v3863 = vadd.f32 %v3862, %v3800
      %v3864 = vadd.f32 %v3863, %v3801
      %v3865 = vadd.f32 %v3864, %v3802
      %v3866 = vadd.f32 %v3865, %v3803
      %v3867 = vadd.f32 %v3866, %v3804
      %v3868 = vadd.f32 %v3867, %v3805
      %v3869 = vadd.f32 %v3868, %v3806
      %v3870 = vadd.f32 %v3869, %v3807
      %v3871 = vadd.f32 %v3870, %v3808
      %v3872 = vadd.f32 %v3871, %v3809
      %v3873 = vadd.f32 %v3872, %v3810
      %v3874 = vadd.f32 %v3873, %v3811
      %v3875 = vadd.f32 %v3874, %v3812
      %v3876 = vadd.f32 %v3875, %v3813
      %v3877 = vadd.f32 %v3876, %v3814
      %v3878 = vadd.f32 %v3877, %v3815
      %v3879 = vadd.f32 %v3878, %v3816
      %v3880 = vadd.f32 %v3879, %v3817
      %v3881 = vadd.f32 %v3880, %v3818
      %v3882 = vadd.f32 %v3881, %v3819
      %v3883 = vadd.f32 %v3882, %v3820
      %v3884 = vadd.f32 %v3883, %v3821
      %v3885 = vadd.f32 %v3884, %v3822
      %v3886 = vadd.f32 %v3885, %v3823
      %v3887 = vadd.f32 %v3886, %v3824
      %v3888 = vadd.f32 %v3887, %v3825
      %v3889 = vadd.f32 %v3888, %v3826
      %v3890 = vadd.f32 %v3889, %v3827
      %v3891 = vadd.f32 %v3890, %v3828
      %v3892 = vadd.f32 %v3891, %v3829
      %v3893 = vrot.slane %v3892, 4
      %v3894 = vadd.f32 %v3892, %v3893
      %v3895 = vrot.slane %v3894, 2
      %v3896 = vadd.f32 %v3894, %v3895
      %v3897 = vrot.slane %v3896, 1
      %v3898 = vadd.f32 %v3896, %v3897
      %v3899 = vmax.f32 %v3443, %v3459
      %v3900 = vmax.f32 %v3446, %v3462
      %v3901 = vmax.f32 %v3451, %v3467
      %v3902 = vmax.f32 %v3454, %v3470
      %v3903 = vmax.f32 %v3899, %v3475
      %v3904 = vmax.f32 %v3900, %v3478
      %v3905 = vmax.f32 %v3901, %v3483
      %v3906 = vmax.f32 %v3902, %v3486
      %v3907 = vmax.f32 %v3903, %v3491
      %v3908 = vmax.f32 %v3904, %v3494
      %v3909 = vmax.f32 %v3905, %v3499
      %v3910 = vmax.f32 %v3906, %v3502
      %v3911 = vmax.f32 %v3907, %v3507
      %v3912 = vmax.f32 %v3908, %v3510
      %v3913 = vmax.f32 %v3909, %v3515
      %v3914 = vmax.f32 %v3910, %v3518
      %v3915 = vmax.f32 %v3911, %v3523
      %v3916 = vmax.f32 %v3912, %v3526
      %v3917 = vmax.f32 %v3913, %v3531
      %v3918 = vmax.f32 %v3914, %v3534
      %v3919 = vmax.f32 %v3915, %v3539
      %v3920 = vmax.f32 %v3916, %v3542
      %v3921 = vmax.f32 %v3917, %v3547
      %v3922 = vmax.f32 %v3918, %v3550
      %v3923 = vmax.f32 %v3919, %v3555
      %v3924 = vmax.f32 %v3920, %v3558
      %v3925 = vmax.f32 %v3921, %v3563
      %v3926 = vmax.f32 %v3922, %v3566
      %v3927 = vmax.f32 %v3923, %v3571
      %v3928 = vmax.f32 %v3924, %v3574
      %v3929 = vmax.f32 %v3925, %v3579
      %v3930 = vmax.f32 %v3926, %v3582
      %v3931 = vmax.f32 %v3927, %v3587
      %v3932 = vmax.f32 %v3928, %v3590
      %v3933 = vmax.f32 %v3929, %v3595
      %v3934 = vmax.f32 %v3930, %v3598
      %v3935 = vmax.f32 %v3931, %v3603
      %v3936 = vmax.f32 %v3932, %v3606
      %v3937 = vmax.f32 %v3933, %v3611
      %v3938 = vmax.f32 %v3934, %v3614
      %v3939 = vmax.f32 %v3935, %v3619
      %v3940 = vmax.f32 %v3936, %v3622
      %v3941 = vmax.f32 %v3937, %v3627
      %v3942 = vmax.f32 %v3938, %v3630
      %v3943 = vmax.f32 %v3939, %v3635
      %v3944 = vmax.f32 %v3940, %v3638
      %v3945 = vmax.f32 %v3941, %v3643
      %v3946 = vmax.f32 %v3942, %v3646
      %v3947 = vmax.f32 %v3943, %v3651
      %v3948 = vmax.f32 %v3944, %v3654
      %v3949 = vmax.f32 %v3945, %v3659
      %v3950 = vmax.f32 %v3946, %v3662
      %v3951 = vmax.f32 %v3947, %v3667
      %v3952 = vmax.f32 %v3948, %v3670
      %v3953 = vmax.f32 %v3949, %v3675
      %v3954 = vmax.f32 %v3950, %v3678
      %v3955 = vmax.f32 %v3951, %v3683
      %v3956 = vmax.f32 %v3952, %v3686
      %v3957 = vmax.f32 %v3953, %v3691
      %v3958 = vmax.f32 %v3954, %v3694
      %v3959 = vmax.f32 %v3955, %v3956
      %v3960 = vmax.f32 %v3957, %v3958
      %v3961 = vmax.f32 %v3959, %v3960
      %v3962 = vrot.slane %v3961, 4
      %v3963 = vmax.f32 %v3961, %v3962
      %v3964 = vrot.slane %v3963, 2
      %v3965 = vmax.f32 %v3963, %v3964
      %v3966 = vrot.slane %v3965, 1
      %v3967 = vmax.f32 %v3965, %v3966
      %v3968 = vmin.f32 %v3443, %v3459
      %v3969 = vmin.f32 %v3446, %v3462
      %v3970 = vmin.f32 %v3451, %v3467
      %v3971 = vmin.f32 %v3454, %v3470
      %v3972 = vmin.f32 %v3968, %v3475
      %v3973 = vmin.f32 %v3969, %v3478
      %v3974 = vmin.f32 %v3970, %v3483
      %v3975 = vmin.f32 %v3971, %v3486
      %v3976 = vmin.f32 %v3972, %v3491
      %v3977 = vmin.f32 %v3973, %v3494
      %v3978 = vmin.f32 %v3974, %v3499
      %v3979 = vmin.f32 %v3975, %v3502
      %v3980 = vmin.f32 %v3976, %v3507
      %v3981 = vmin.f32 %v3977, %v3510
      %v3982 = vmin.f32 %v3978, %v3515
      %v3983 = vmin.f32 %v3979, %v3518
      %v3984 = vmin.f32 %v3980, %v3523
      %v3985 = vmin.f32 %v3981, %v3526
      %v3986 = vmin.f32 %v3982, %v3531
      %v3987 = vmin.f32 %v3983, %v3534
      %v3988 = vmin.f32 %v3984, %v3539
      %v3989 = vmin.f32 %v3985, %v3542
      %v3990 = vmin.f32 %v3986, %v3547
      %v3991 = vmin.f32 %v3987, %v3550
      %v3992 = vmin.f32 %v3988, %v3555
      %v3993 = vmin.f32 %v3989, %v3558
      %v3994 = vmin.f32 %v3990, %v3563
      %v3995 = vmin.f32 %v3991, %v3566
      %v3996 = vmin.f32 %v3992, %v3571
      %v3997 = vmin.f32 %v3993, %v3574
      %v3998 = vmin.f32 %v3994, %v3579
      %v3999 = vmin.f32 %v3995, %v3582
      %v4000 = vmin.f32 %v3996, %v3587
      %v4001 = vmin.f32 %v3997, %v3590
      %v4002 = vmin.f32 %v3998, %v3595
      %v4003 = vmin.f32 %v3999, %v3598
      %v4004 = vmin.f32 %v4000, %v3603
      %v4005 = vmin.f32 %v4001, %v3606
      %v4006 = vmin.f32 %v4002, %v3611
      %v4007 = vmin.f32 %v4003, %v3614
      %v4008 = vmin.f32 %v4004, %v3619
      %v4009 = vmin.f32 %v4005, %v3622
      %v4010 = vmin.f32 %v4006, %v3627
      %v4011 = vmin.f32 %v4007, %v3630
      %v4012 = vmin.f32 %v4008, %v3635
      %v4013 = vmin.f32 %v4009, %v3638
      %v4014 = vmin.f32 %v4010, %v3643
      %v4015 = vmin.f32 %v4011, %v3646
      %v4016 = vmin.f32 %v4012, %v3651
      %v4017 = vmin.f32 %v4013, %v3654
      %v4018 = vmin.f32 %v4014, %v3659
      %v4019 = vmin.f32 %v4015, %v3662
      %v4020 = vmin.f32 %v4016, %v3667
      %v4021 = vmin.f32 %v4017, %v3670
      %v4022 = vmin.f32 %v4018, %v3675
      %v4023 = vmin.f32 %v4019, %v3678
      %v4024 = vmin.f32 %v4020, %v3683
      %v4025 = vmin.f32 %v4021, %v3686
      %v4026 = vmin.f32 %v4022, %v3691
      %v4027 = vmin.f32 %v4023, %v3694
      %v4028 = vmin.f32 %v4024, %v4025
      %v4029 = vmin.f32 %v4026, %v4027
      %v4030 = vmin.f32 %v4028, %v4029
      %v4031 = vrot.slane %v4030, 4
      %v4032 = vmin.f32 %v4030, %v4031
      %v4033 = vrot.slane %v4032, 2
      %v4034 = vmin.f32 %v4032, %v4033
      %v4035 = vrot.slane %v4034, 1
      %v4036 = vmin.f32 %v4034, %v4035
      %v4037 = vld [vmem:[%s319] sm:$0xf]
      %v4042 = vcombine.low %v1494, %v2251
      %v4043 = vcombine.low %v3008, %v3765
      %v4045 = vunpack.c.l.s4 1966171168
      %v4046 = vunpack.c.0.s8 %v4045
      %v4047 = vlaneseq
      %v4048 = vshrl.u32 %v4047, 7
      %v4049 = vsub.s32 %v4046, %v4048
      %v4050 = vrot.slane %v4042, %v4049
      %v4052 = vunpack.c.l.s4 1966171168
      %v4053 = vunpack.c.0.s8 %v4052
      %v4054 = vlaneseq
      %v4055 = vshrl.u32 %v4054, 7
      %v4056 = vsub.s32 %v4053, %v4055
      %v4057 = vrot.slane %v4043, %v4056
      %v4058 = vcombine.low %v4050, %v4057
      %v4060 = vunpack.c.l.s4 1966171168
      %v4061 = vunpack.c.0.s8 %v4060
      %v4062 = vlaneseq
      %v4063 = vshrl.u32 %v4062, 7
      %v4064 = vsub.s32 %v4061, %v4063
      %v4065 = vrot.slane %v4058, %v4064
      %v4067 = vadd.f32 %v4037, %v4065
      %v4068 = vlaneseq
      %vm4069 = vcmp.ge.s32.totalorder %v4068, 0
      %vm4070 = vcmp.lt.s32.totalorder %v4068, 512
      %vm4071 = vmand %vm4069, %vm4070
      %4072 = vst.msk [vmem:[%s319] sm:$0xf] %vm4071, %v4067
      %v4073 = vld [vmem:[%s323] sm:$0xf]
      %v4078 = vcombine.low %v1627, %v2384
      %v4079 = vcombine.low %v3141, %v3898
      %v4081 = vunpack.c.l.s4 1966171168
      %v4082 = vunpack.c.0.s8 %v4081
      %v4083 = vlaneseq
      %v4084 = vshrl.u32 %v4083, 7
      %v4085 = vsub.s32 %v4082, %v4084
      %v4086 = vrot.slane %v4078, %v4085
      %v4088 = vunpack.c.l.s4 1966171168
      %v4089 = vunpack.c.0.s8 %v4088
      %v4090 = vlaneseq
      %v4091 = vshrl.u32 %v4090, 7
      %v4092 = vsub.s32 %v4089, %v4091
      %v4093 = vrot.slane %v4079, %v4092
      %v4094 = vcombine.low %v4086, %v4093
      %v4096 = vunpack.c.l.s4 1966171168
      %v4097 = vunpack.c.0.s8 %v4096
      %v4098 = vlaneseq
      %v4099 = vshrl.u32 %v4098, 7
      %v4100 = vsub.s32 %v4097, %v4099
      %v4101 = vrot.slane %v4094, %v4100
      %v4103 = vadd.f32 %v4073, %v4101
      %4104 = vst.msk [vmem:[%s323] sm:$0xf] %vm4071, %v4103
      %v4105 = vld [vmem:[%s327] sm:$0xf]
      %v4110 = vcombine.low %v1696, %v2453
      %v4111 = vcombine.low %v3210, %v3967
      %v4113 = vunpack.c.l.s4 1966171168
      %v4114 = vunpack.c.0.s8 %v4113
      %v4115 = vlaneseq
      %v4116 = vshrl.u32 %v4115, 7
      %v4117 = vsub.s32 %v4114, %v4116
      %v4118 = vrot.slane %v4110, %v4117
      %v4120 = vunpack.c.l.s4 1966171168
      %v4121 = vunpack.c.0.s8 %v4120
      %v4122 = vlaneseq
      %v4123 = vshrl.u32 %v4122, 7
      %v4124 = vsub.s32 %v4121, %v4123
      %v4125 = vrot.slane %v4111, %v4124
      %v4126 = vcombine.low %v4118, %v4125
      %v4128 = vunpack.c.l.s4 1966171168
      %v4129 = vunpack.c.0.s8 %v4128
      %v4130 = vlaneseq
      %v4131 = vshrl.u32 %v4130, 7
      %v4132 = vsub.s32 %v4129, %v4131
      %v4133 = vrot.slane %v4126, %v4132
      %v4135 = vmax.f32 %v4105, %v4133
      %4136 = vst.msk [vmem:[%s327] sm:$0xf] %vm4071, %v4135
      %v4137 = vld [vmem:[%s331] sm:$0xf]
      %v4142 = vcombine.low %v1765, %v2522
      %v4143 = vcombine.low %v3279, %v4036
      %v4145 = vunpack.c.l.s4 1966171168
      %v4146 = vunpack.c.0.s8 %v4145
      %v4147 = vlaneseq
      %v4148 = vshrl.u32 %v4147, 7
      %v4149 = vsub.s32 %v4146, %v4148
      %v4150 = vrot.slane %v4142, %v4149
      %v4152 = vunpack.c.l.s4 1966171168
      %v4153 = vunpack.c.0.s8 %v4152
      %v4154 = vlaneseq
      %v4155 = vshrl.u32 %v4154, 7
      %v4156 = vsub.s32 %v4153, %v4155
      %v4157 = vrot.slane %v4143, %v4156
      %v4158 = vcombine.low %v4150, %v4157
      %v4160 = vunpack.c.l.s4 1966171168
      %v4161 = vunpack.c.0.s8 %v4160
      %v4162 = vlaneseq
      %v4163 = vshrl.u32 %v4162, 7
      %v4164 = vsub.s32 %v4161, %v4163
      %v4165 = vrot.slane %v4158, %v4164
      %v4167 = vmin.f32 %v4137, %v4165
      %4168 = vst.msk [vmem:[%s331] sm:$0xf] %vm4071, %v4167
      %p4169 = scmp.lt.s32.totalorder %s23, 3
      %s4170 = scalar_select %p4169, %s23, 3
      %s4171 = smul.addr %s4170, 4
      %s4172 = scalar_lea.vmem %s4, %s4171
      %p4173 = scmp.lt.s32.totalorder %s23, 3
      %s4174 = scalar_select %p4173, %s23, 3
      %s4175 = smul.addr %s4174, 4
      %s4176 = scalar_lea.vmem %s5, %s4175
      %p4177 = scmp.lt.s32.totalorder %s23, 3
      %s4178 = scalar_select %p4177, %s23, 3
      %s4179 = smul.addr %s4178, 4
      %s4180 = scalar_lea.vmem %s6, %s4179
      %p4181 = scmp.lt.s32.totalorder %s23, 3
      %s4182 = scalar_select %p4181, %s23, 3
      %s4183 = smul.addr %s4182, 4
      %s4184 = scalar_lea.vmem %s7, %s4183
      // Predicated region
      $region41: #{encoder_forward.6} parent=35 // pred_check
        %p4185 = pneg %p140
      $region42: #{encoder_forward.6} parent=35 // pred_check_branch
        %4187 = sbr.rel (%p4185) target = $region44
      $region43: #{encoder_forward.6} parent=35 // pred_region
        _
      $region44: #{encoder_forward.6} parent=35 // pred_fallthru
        _
      // Predicated region
      $region45: #{encoder_forward.6} parent=35 // pred_check
        %p4188 = pneg %p166
      $region46: #{encoder_forward.6} parent=35 // pred_check_branch
        %4190 = sbr.rel (%p4188) target = $region48
      $region47: #{encoder_forward.6} parent=35 // pred_region
        _
      $region48: #{encoder_forward.6} parent=35 // pred_fallthru
        _
      // Predicated region
      $region49: #{encoder_forward.6} parent=35 // pred_check
        %p4191 = pneg %p192
      $region50: #{encoder_forward.6} parent=35 // pred_check_branch
        %4193 = sbr.rel (%p4191) target = $region52
      $region51: #{encoder_forward.6} parent=35 // pred_region
        _
      $region52: #{encoder_forward.6} parent=35 // pred_fallthru
        _
      // Predicated region
      $region53: #{encoder_forward.6} parent=35 // pred_check
        %p4194 = pneg %p218
      $region54: #{encoder_forward.6} parent=35 // pred_check_branch
        %4196 = sbr.rel (%p4194) target = $region56
      $region55: #{encoder_forward.6} parent=35 // pred_region
        _
      $region56: #{encoder_forward.6} parent=35 // pred_fallthru
        _
    $region36: #{encoder_forward.6} parent=5 // pred_fallthru
      _
    %p4197 = scmp.le.s32.totalorder 2, %s14
    // Predicated region
    $region57: #{encoder_forward.6} parent=5 // pred_check
      %p4198 = pneg %p4197
    $region58: #{encoder_forward.6} parent=5 // pred_check_branch
      %4200 = sbr.rel (%p4198) target = $region60
    $region59: #{encoder_forward.6} parent=5 // pred_region
      %s4201 = ssub.s32 %s14, 2
      // Predicated region
      $region61: #{encoder_forward.6} parent=59 // pred_check
        %p4202 = pneg %p146
      $region62: #{encoder_forward.6} parent=59 // pred_check_branch
        %4204 = sbr.rel (%p4202) target = $region64
      $region63: #{encoder_forward.6} parent=59 // pred_region
        %p4205 = scmp.lt.s32.totalorder %s25, 3
        %s4206 = scalar_select %p4205, %s25, 3
        %s4207 = smul.addr %s4206, 4
        %s4208 = scalar_lea.vmem %s4, %s4207
      $region64: #{encoder_forward.6} parent=59 // pred_fallthru
        _
      // Predicated region
      $region65: #{encoder_forward.6} parent=59 // pred_check
        %p4209 = pneg %p172
      $region66: #{encoder_forward.6} parent=59 // pred_check_branch
        %4211 = sbr.rel (%p4209) target = $region68
      $region67: #{encoder_forward.6} parent=59 // pred_region
        %p4212 = scmp.lt.s32.totalorder %s25, 3
        %s4213 = scalar_select %p4212, %s25, 3
        %s4214 = smul.addr %s4213, 4
        %s4215 = scalar_lea.vmem %s5, %s4214
      $region68: #{encoder_forward.6} parent=59 // pred_fallthru
        _
      // Predicated region
      $region69: #{encoder_forward.6} parent=59 // pred_check
        %p4216 = pneg %p198
      $region70: #{encoder_forward.6} parent=59 // pred_check_branch
        %4218 = sbr.rel (%p4216) target = $region72
      $region71: #{encoder_forward.6} parent=59 // pred_region
        %p4219 = scmp.lt.s32.totalorder %s25, 3
        %s4220 = scalar_select %p4219, %s25, 3
        %s4221 = smul.addr %s4220, 4
        %s4222 = scalar_lea.vmem %s6, %s4221
      $region72: #{encoder_forward.6} parent=59 // pred_fallthru
        _
      // Predicated region
      $region73: #{encoder_forward.6} parent=59 // pred_check
        %p4223 = pneg %p224
      $region74: #{encoder_forward.6} parent=59 // pred_check_branch
        %4225 = sbr.rel (%p4223) target = $region76
      $region75: #{encoder_forward.6} parent=59 // pred_region
        %p4226 = scmp.lt.s32.totalorder %s25, 3
        %s4227 = scalar_select %p4226, %s25, 3
        %s4228 = smul.addr %s4227, 4
        %s4229 = scalar_lea.vmem %s7, %s4228
      $region76: #{encoder_forward.6} parent=59 // pred_fallthru
        _
    $region60: #{encoder_forward.6} parent=5 // pred_fallthru
      _
  $region6: #{encoder_forward.6} parent=0 // loop_footer
    %s18 = sadd.s32 1, %s14
  $region7: #{encoder_forward.6} parent=0 // loop_footer_branch
    %13 = sbr.rel target = $region3
  $region8: #{encoder_forward.6} parent=0 // loop_exit
    _

// kernel: encoder_forward.7
$region0: #{encoder_forward.7}
  #allocation0 [shape = 'u32[]', space=smem, size = 0x4, offset = 0x4, fixed_abs, tag = 'smem constant byte address 0x4 - core index']
  #allocation1 [shape = 'u32[144,128]{1,0:T(1,128)}', space=vmem, size = 0x12000, scoped, tag = 'internal scratch']
  %s0 = inlined_call_operand.vmem [shape: f32[4,512], index: 0, kind: input, shape index: {}]
  %s1 = inlined_call_operand.vmem [shape: f32[4,512], index: 1, kind: input, shape index: {}]
  %s2 = inlined_call_operand.vmem [shape: f32[1,512], index: 2, kind: input, shape index: {}]
  %s3 = inlined_call_operand.vmem [shape: f32[512,256], index: 3, kind: input, shape index: {}]
  %s4 = inlined_call_operand.vmem [shape: f32[1,256], index: 4, kind: input, shape index: {}]
  %s5 = inlined_call_operand.vmem [shape: f32[1,256], index: 5, kind: input, shape index: {}]
  %s6 = inlined_call_operand.vmem [shape: f32[256,128], index: 6, kind: input, shape index: {}]
  %s7 = inlined_call_operand.vmem [shape: f32[1,128], index: 7, kind: input, shape index: {}]
  %s8 = inlined_call_operand.vmem [shape: f32[1,128], index: 8, kind: input, shape index: {}]
  %s9 = inlined_call_operand.vmem [shape: f32[128,128], index: 9, kind: input, shape index: {}]
  %s10 = inlined_call_operand.vmem [shape: f32[1,128], index: 10, kind: input, shape index: {}]
  %s11 = inlined_call_operand.hbm [shape: f32[4,128], index: 11, kind: output, shape index: {}]
  %s12 = sld [smem:[#allocation0]]
  $region54: #{encoder_forward.7} parent=0
    _
  %s14 = ssub.s32 1, %s12
  %s15 = scalar_select 0, %s14, %s12
  $region1: #{encoder_forward.7} parent=0
    #allocation2 [shape = 'u8[2048]{0}', space=vmem, size = 0x800, scoped, tag = 'output window, operand 0, single buffered']
    #allocation3 [shape = 's32[1]{0}', space=sflag, size = 0x4, scoped, tag = 'scoped memory for encoder_forward.7']
    %16 = vsyncpa [#allocation3], 0
    // Predicated region
    $region2: #{encoder_forward.7} parent=1 // pred_check
      _
    $region3: #{encoder_forward.7} parent=1 // pred_check_branch
      %18 = sbr.rel (0) target = $region5
    $region4: #{encoder_forward.7} parent=1 // pred_region
      _
    $region5: #{encoder_forward.7} parent=1 // pred_fallthru
      _
    // Predicated region
    $region6: #{encoder_forward.7} parent=1 // pred_check
      _
    $region7: #{encoder_forward.7} parent=1 // pred_check_branch
      %20 = sbr.rel (0) target = $region9
    $region8: #{encoder_forward.7} parent=1 // pred_region
      _
    $region9: #{encoder_forward.7} parent=1 // pred_fallthru
      _
    // Predicated region
    $region10: #{encoder_forward.7} parent=1 // pred_check
      _
    $region11: #{encoder_forward.7} parent=1 // pred_check_branch
      %22 = sbr.rel (0) target = $region13
    $region12: #{encoder_forward.7} parent=1 // pred_region
      _
    $region13: #{encoder_forward.7} parent=1 // pred_fallthru
      _
    // Predicated region
    $region14: #{encoder_forward.7} parent=1 // pred_check
      _
    $region15: #{encoder_forward.7} parent=1 // pred_check_branch
      %24 = sbr.rel (0) target = $region17
    $region16: #{encoder_forward.7} parent=1 // pred_region
      _
    $region17: #{encoder_forward.7} parent=1 // pred_fallthru
      _
    // Predicated region
    $region18: #{encoder_forward.7} parent=1 // pred_check
      _
    $region19: #{encoder_forward.7} parent=1 // pred_check_branch
      %26 = sbr.rel (0) target = $region21
    $region20: #{encoder_forward.7} parent=1 // pred_region
      _
    $region21: #{encoder_forward.7} parent=1 // pred_fallthru
      _
    // Predicated region
    $region22: #{encoder_forward.7} parent=1 // pred_check
      _
    $region23: #{encoder_forward.7} parent=1 // pred_check_branch
      %28 = sbr.rel (0) target = $region25
    $region24: #{encoder_forward.7} parent=1 // pred_region
      _
    $region25: #{encoder_forward.7} parent=1 // pred_fallthru
      _
    // Predicated region
    $region26: #{encoder_forward.7} parent=1 // pred_check
      _
    $region27: #{encoder_forward.7} parent=1 // pred_check_branch
      %30 = sbr.rel (0) target = $region29
    $region28: #{encoder_forward.7} parent=1 // pred_region
      _
    $region29: #{encoder_forward.7} parent=1 // pred_fallthru
      _
    // Predicated region
    $region30: #{encoder_forward.7} parent=1 // pred_check
      _
    $region31: #{encoder_forward.7} parent=1 // pred_check_branch
      %32 = sbr.rel (0) target = $region33
    $region32: #{encoder_forward.7} parent=1 // pred_region
      _
    $region33: #{encoder_forward.7} parent=1 // pred_fallthru
      _
    // Predicated region
    $region34: #{encoder_forward.7} parent=1 // pred_check
      _
    $region35: #{encoder_forward.7} parent=1 // pred_check_branch
      %34 = sbr.rel (0) target = $region37
    $region36: #{encoder_forward.7} parent=1 // pred_region
      _
    $region37: #{encoder_forward.7} parent=1 // pred_fallthru
      _
    // Predicated region
    $region38: #{encoder_forward.7} parent=1 // pred_check
      _
    $region39: #{encoder_forward.7} parent=1 // pred_check_branch
      %36 = sbr.rel (0) target = $region41
    $region40: #{encoder_forward.7} parent=1 // pred_region
      _
    $region41: #{encoder_forward.7} parent=1 // pred_fallthru
      _
    // Predicated region
    $region42: #{encoder_forward.7} parent=1 // pred_check
      _
    $region43: #{encoder_forward.7} parent=1 // pred_check_branch
      %38 = sbr.rel (0) target = $region45
    $region44: #{encoder_forward.7} parent=1 // pred_region
      _
    $region45: #{encoder_forward.7} parent=1 // pred_fallthru
      _
    %v39 = vld [vmem:[%s2] sm:$0xf]
    %vm40 = vcmp.ge.f32.partialorder %v39, 0.0
    %v41 = vld [vmem:[%s0] sm:$0xff]
    %v42 = vld [vmem:[%s0 + $0x8] sm:$0xff]
    %v43 = vld [vmem:[%s1] sm:$0xff]
    %v44 = vld [vmem:[%s1 + $0x8] sm:$0xff]
    %v45 = vsel %vm40, 1, 0
    %v46 = vlaneseq
    %v47 = vshrl.u32 %v46, 7
    %v48 = vsub.s32 0, %v47
    %v49 = vrot.slane %v45, %v48
    %v50 = vlaneseq
    %v51 = vshrl.u32 %v50, 7
    %v52 = vsub.s32 1, %v51
    %v53 = vrot.slane %v45, %v52
    %v54 = vlaneseq
    %v55 = vshrl.u32 %v54, 7
    %v56 = vsub.s32 2, %v55
    %v57 = vrot.slane %v45, %v56
    %v58 = vlaneseq
    %v59 = vshrl.u32 %v58, 7
    %v60 = vsub.s32 3, %v59
    %v61 = vrot.slane %v45, %v60
    %vm62 = vcmp.eq.s32.totalorder %v49, 1
    %vm63 = vcmp.eq.s32.totalorder %v53, 1
    %vm64 = vcmp.eq.s32.totalorder %v57, 1
    %vm65 = vcmp.eq.s32.totalorder %v61, 1
    %v68 = vcombine.high %v41, %v41
    %v69 = vcombine.high %v42, %v42
    %v74 = vcombine.high %v43, %v43
    %v75 = vcombine.high %v44, %v44
    %v78 = vsel %vm62, %v41, %v43
    %v79 = vsel %vm63, %v68, %v74
    %v80 = vsel %vm64, %v42, %v44
    %v81 = vsel %vm65, %v69, %v75
    %v82 = vld [vmem:[%s3] sm:$0xff]
    %v83 = vld [vmem:[%s3 + $0x8] sm:$0xff]
    %v84 = vld [vmem:[%s3 + $0x10] sm:$0xff]
    %v85 = vld [vmem:[%s3 + $0x18] sm:$0xff]
    %v86 = vld [vmem:[%s3 + $0x20] sm:$0xff]
    %v87 = vld [vmem:[%s3 + $0x28] sm:$0xff]
    %v88 = vld [vmem:[%s3 + $0x30] sm:$0xff]
    %v89 = vld [vmem:[%s3 + $0x38] sm:$0xff]
    %v90 = vld [vmem:[%s3 + $0x40] sm:$0xff]
    %v91 = vld [vmem:[%s3 + $0x48] sm:$0xff]
    %v92 = vld [vmem:[%s3 + $0x50] sm:$0xff]
    %v93 = vld [vmem:[%s3 + $0x58] sm:$0xff]
    %v94 = vld [vmem:[%s3 + $0x60] sm:$0xff]
    %v95 = vld [vmem:[%s3 + $0x68] sm:$0xff]
    %v96 = vld [vmem:[%s3 + $0x70] sm:$0xff]
    %v97 = vld [vmem:[%s3 + $0x78] sm:$0xff]
    %v98 = vld [vmem:[%s3 + $0x80] sm:$0xff]
    %v99 = vld [vmem:[%s3 + $0x88] sm:$0xff]
    %v100 = vld [vmem:[%s3 + $0x90] sm:$0xff]
    %v101 = vld [vmem:[%s3 + $0x98] sm:$0xff]
    %v102 = vld [vmem:[%s3 + $0xa0] sm:$0xff]
    %v103 = vld [vmem:[%s3 + $0xa8] sm:$0xff]
    %v104 = vld [vmem:[%s3 + $0xb0] sm:$0xff]
    %v105 = vld [vmem:[%s3 + $0xb8] sm:$0xff]
    %v106 = vld [vmem:[%s3 + $0xc0] sm:$0xff]
    %v107 = vld [vmem:[%s3 + $0xc8] sm:$0xff]
    %v108 = vld [vmem:[%s3 + $0xd0] sm:$0xff]
    %v109 = vld [vmem:[%s3 + $0xd8] sm:$0xff]
    %v110 = vld [vmem:[%s3 + $0xe0] sm:$0xff]
    %v111 = vld [vmem:[%s3 + $0xe8] sm:$0xff]
    %v112 = vld [vmem:[%s3 + $0xf0] sm:$0xff]
    %v113 = vld [vmem:[%s3 + $0xf8] sm:$0xff]
    %v114 = vld [vmem:[%s3 + $0x100] sm:$0xff]
    %v115 = vld [vmem:[%s3 + $0x108] sm:$0xff]
    %v116 = vld [vmem:[%s3 + $0x110] sm:$0xff]
    %v117 = vld [vmem:[%s3 + $0x118] sm:$0xff]
    %v118 = vld [vmem:[%s3 + $0x120] sm:$0xff]
    %v119 = vld [vmem:[%s3 + $0x128] sm:$0xff]
    %v120 = vld [vmem:[%s3 + $0x130] sm:$0xff]
    %v121 = vld [vmem:[%s3 + $0x138] sm:$0xff]
    %v122 = vld [vmem:[%s3 + $0x140] sm:$0xff]
    %v123 = vld [vmem:[%s3 + $0x148] sm:$0xff]
    %v124 = vld [vmem:[%s3 + $0x150] sm:$0xff]
    %v125 = vld [vmem:[%s3 + $0x158] sm:$0xff]
    %v126 = vld [vmem:[%s3 + $0x160] sm:$0xff]
    %v127 = vld [vmem:[%s3 + $0x168] sm:$0xff]
    %v128 = vld [vmem:[%s3 + $0x170] sm:$0xff]
    %v129 = vld [vmem:[%s3 + $0x178] sm:$0xff]
    %v130 = vld [vmem:[%s3 + $0x180] sm:$0xff]
    %v131 = vld [vmem:[%s3 + $0x188] sm:$0xff]
    %v132 = vld [vmem:[%s3 + $0x190] sm:$0xff]
    %v133 = vld [vmem:[%s3 + $0x198] sm:$0xff]
    %v134 = vld [vmem:[%s3 + $0x1a0] sm:$0xff]
    %v135 = vld [vmem:[%s3 + $0x1a8] sm:$0xff]
    %v136 = vld [vmem:[%s3 + $0x1b0] sm:$0xff]
    %v137 = vld [vmem:[%s3 + $0x1b8] sm:$0xff]
    %v138 = vld [vmem:[%s3 + $0x1c0] sm:$0xff]
    %v139 = vld [vmem:[%s3 + $0x1c8] sm:$0xff]
    %v140 = vld [vmem:[%s3 + $0x1d0] sm:$0xff]
    %v141 = vld [vmem:[%s3 + $0x1d8] sm:$0xff]
    %v142 = vld [vmem:[%s3 + $0x1e0] sm:$0xff]
    %v143 = vld [vmem:[%s3 + $0x1e8] sm:$0xff]
    %v144 = vld [vmem:[%s3 + $0x1f0] sm:$0xff]
    %v145 = vld [vmem:[%s3 + $0x1f8] sm:$0xff]
    %v146 = vld [vmem:[%s3 + $0x200] sm:$0xff]
    %v147 = vld [vmem:[%s3 + $0x208] sm:$0xff]
    %v148 = vld [vmem:[%s3 + $0x210] sm:$0xff]
    %v149 = vld [vmem:[%s3 + $0x218] sm:$0xff]
    %v150 = vld [vmem:[%s3 + $0x220] sm:$0xff]
    %v151 = vld [vmem:[%s3 + $0x228] sm:$0xff]
    %v152 = vld [vmem:[%s3 + $0x230] sm:$0xff]
    %v153 = vld [vmem:[%s3 + $0x238] sm:$0xff]
    %v154 = vld [vmem:[%s3 + $0x240] sm:$0xff]
    %v155 = vld [vmem:[%s3 + $0x248] sm:$0xff]
    %v156 = vld [vmem:[%s3 + $0x250] sm:$0xff]
    %v157 = vld [vmem:[%s3 + $0x258] sm:$0xff]
    %v158 = vld [vmem:[%s3 + $0x260] sm:$0xff]
    %v159 = vld [vmem:[%s3 + $0x268] sm:$0xff]
    %v160 = vld [vmem:[%s3 + $0x270] sm:$0xff]
    %v161 = vld [vmem:[%s3 + $0x278] sm:$0xff]
    %v162 = vld [vmem:[%s3 + $0x280] sm:$0xff]
    %v163 = vld [vmem:[%s3 + $0x288] sm:$0xff]
    %v164 = vld [vmem:[%s3 + $0x290] sm:$0xff]
    %v165 = vld [vmem:[%s3 + $0x298] sm:$0xff]
    %v166 = vld [vmem:[%s3 + $0x2a0] sm:$0xff]
    %v167 = vld [vmem:[%s3 + $0x2a8] sm:$0xff]
    %v168 = vld [vmem:[%s3 + $0x2b0] sm:$0xff]
    %v169 = vld [vmem:[%s3 + $0x2b8] sm:$0xff]
    %v170 = vld [vmem:[%s3 + $0x2c0] sm:$0xff]
    %v171 = vld [vmem:[%s3 + $0x2c8] sm:$0xff]
    %v172 = vld [vmem:[%s3 + $0x2d0] sm:$0xff]
    %v173 = vld [vmem:[%s3 + $0x2d8] sm:$0xff]
    %v174 = vld [vmem:[%s3 + $0x2e0] sm:$0xff]
    %v175 = vld [vmem:[%s3 + $0x2e8] sm:$0xff]
    %v176 = vld [vmem:[%s3 + $0x2f0] sm:$0xff]
    %v177 = vld [vmem:[%s3 + $0x2f8] sm:$0xff]
    %v178 = vld [vmem:[%s3 + $0x300] sm:$0xff]
    %v179 = vld [vmem:[%s3 + $0x308] sm:$0xff]
    %v180 = vld [vmem:[%s3 + $0x310] sm:$0xff]
    %v181 = vld [vmem:[%s3 + $0x318] sm:$0xff]
    %v182 = vld [vmem:[%s3 + $0x320] sm:$0xff]
    %v183 = vld [vmem:[%s3 + $0x328] sm:$0xff]
    %v184 = vld [vmem:[%s3 + $0x330] sm:$0xff]
    %v185 = vld [vmem:[%s3 + $0x338] sm:$0xff]
    %v186 = vld [vmem:[%s3 + $0x340] sm:$0xff]
    %v187 = vld [vmem:[%s3 + $0x348] sm:$0xff]
    %v188 = vld [vmem:[%s3 + $0x350] sm:$0xff]
    %v189 = vld [vmem:[%s3 + $0x358] sm:$0xff]
    %v190 = vld [vmem:[%s3 + $0x360] sm:$0xff]
    %v191 = vld [vmem:[%s3 + $0x368] sm:$0xff]
    %v192 = vld [vmem:[%s3 + $0x370] sm:$0xff]
    %v193 = vld [vmem:[%s3 + $0x378] sm:$0xff]
    %v194 = vld [vmem:[%s3 + $0x380] sm:$0xff]
    %v195 = vld [vmem:[%s3 + $0x388] sm:$0xff]
    %v196 = vld [vmem:[%s3 + $0x390] sm:$0xff]
    %v197 = vld [vmem:[%s3 + $0x398] sm:$0xff]
    %v198 = vld [vmem:[%s3 + $0x3a0] sm:$0xff]
    %v199 = vld [vmem:[%s3 + $0x3a8] sm:$0xff]
    %v200 = vld [vmem:[%s3 + $0x3b0] sm:$0xff]
    %v201 = vld [vmem:[%s3 + $0x3b8] sm:$0xff]
    %v202 = vld [vmem:[%s3 + $0x3c0] sm:$0xff]
    %v203 = vld [vmem:[%s3 + $0x3c8] sm:$0xff]
    %v204 = vld [vmem:[%s3 + $0x3d0] sm:$0xff]
    %v205 = vld [vmem:[%s3 + $0x3d8] sm:$0xff]
    %v206 = vld [vmem:[%s3 + $0x3e0] sm:$0xff]
    %v207 = vld [vmem:[%s3 + $0x3e8] sm:$0xff]
    %v208 = vld [vmem:[%s3 + $0x3f0] sm:$0xff]
    %v209 = vld [vmem:[%s3 + $0x3f8] sm:$0xff]
    %210 = vmatprep.subr.mxu0 %v83
    %211 = vmatpush1.msra.mxu0 %v82
    %212 = vmatprep.subr.mxu0 %v85
    %213 = vmatpush1.msra.mxu0 %v84
    %214 = vmatprep.subr.mxu0 %v87
    %215 = vmatpush1.msra.mxu0 %v86
    %216 = vmatprep.subr.mxu0 %v89
    %217 = vmatpush1.msra.mxu0 %v88
    %218 = vmatprep.subr.mxu0 %v91
    %219 = vmatpush1.msra.mxu0 %v90
    %220 = vmatprep.subr.mxu0 %v93
    %221 = vmatpush1.msra.mxu0 %v92
    %222 = vmatprep.subr.mxu0 %v95
    %223 = vmatpush1.msra.mxu0 %v94
    %224 = vmatprep.subr.mxu0 %v97
    %225 = vmatpush1.msra.mxu0 %v96
    %226 = vmatprep.subr.mxu0 %v99
    %227 = vmatpush1.msra.mxu0 %v98
    %228 = vmatprep.subr.mxu0 %v101
    %229 = vmatpush1.msra.mxu0 %v100
    %230 = vmatprep.subr.mxu0 %v103
    %231 = vmatpush1.msra.mxu0 %v102
    %232 = vmatprep.subr.mxu0 %v105
    %233 = vmatpush1.msra.mxu0 %v104
    %234 = vmatprep.subr.mxu0 %v107
    %235 = vmatpush1.msra.mxu0 %v106
    %236 = vmatprep.subr.mxu0 %v109
    %237 = vmatpush1.msra.mxu0 %v108
    %238 = vmatprep.subr.mxu0 %v111
    %239 = vmatpush1.msra.mxu0 %v110
    %240 = vmatprep.subr.mxu0 %v113
    %241 = vmatpush1.msra.mxu0 %v112
    %242 = vmatprep.subr.mxu0 %v115
    %243 = vmatpush1.msra.mxu0 %v114
    %244 = vmatprep.subr.mxu0 %v117
    %245 = vmatpush1.msra.mxu0 %v116
    %246 = vmatprep.subr.mxu0 %v119
    %247 = vmatpush1.msra.mxu0 %v118
    %248 = vmatprep.subr.mxu0 %v121
    %249 = vmatpush1.msra.mxu0 %v120
    %250 = vmatprep.subr.mxu0 %v123
    %251 = vmatpush1.msra.mxu0 %v122
    %252 = vmatprep.subr.mxu0 %v125
    %253 = vmatpush1.msra.mxu0 %v124
    %254 = vmatprep.subr.mxu0 %v127
    %255 = vmatpush1.msra.mxu0 %v126
    %256 = vmatprep.subr.mxu0 %v129
    %257 = vmatpush1.msra.mxu0 %v128
    %258 = vmatprep.subr.mxu0 %v131
    %259 = vmatpush1.msra.mxu0 %v130
    %260 = vmatprep.subr.mxu0 %v133
    %261 = vmatpush1.msra.mxu0 %v132
    %262 = vmatprep.subr.mxu0 %v135
    %263 = vmatpush1.msra.mxu0 %v134
    %264 = vmatprep.subr.mxu0 %v137
    %265 = vmatpush1.msra.mxu0 %v136
    %266 = vmatprep.subr.mxu0 %v139
    %267 = vmatpush1.msra.mxu0 %v138
    %268 = vmatprep.subr.mxu0 %v141
    %269 = vmatpush1.msra.mxu0 %v140
    %270 = vmatprep.subr.mxu0 %v143
    %271 = vmatpush1.msra.mxu0 %v142
    %272 = vmatprep.subr.mxu0 %v145
    %273 = vmatpush1.msra.mxu0 %v144
    %274 = vmatprep.mubr.f32.mxu0 %v79
    %275 = vmatmul.mubr.f32.gmra.mrb[0].mxu0 %v78
    %v276 = vpop.f32.mrb[0].mxu0
    %v277 = vadd.f32 0.0, %v276
    %v278 = vpop.f32.mrb[0].mxu0
    %v279 = vadd.f32 0.0, %v278
    %280 = vdwg.mxu0
    %281 = vmatprep.subr.mxu0 %v147
    %282 = vmatpush1.msra.mxu0 %v146
    %283 = vmatprep.subr.mxu0 %v149
    %284 = vmatpush1.msra.mxu0 %v148
    %285 = vmatprep.subr.mxu0 %v151
    %286 = vmatpush1.msra.mxu0 %v150
    %287 = vmatprep.subr.mxu0 %v153
    %288 = vmatpush1.msra.mxu0 %v152
    %289 = vmatprep.subr.mxu0 %v155
    %290 = vmatpush1.msra.mxu0 %v154
    %291 = vmatprep.subr.mxu0 %v157
    %292 = vmatpush1.msra.mxu0 %v156
    %293 = vmatprep.subr.mxu0 %v159
    %294 = vmatpush1.msra.mxu0 %v158
    %295 = vmatprep.subr.mxu0 %v161
    %296 = vmatpush1.msra.mxu0 %v160
    %297 = vmatprep.subr.mxu0 %v163
    %298 = vmatpush1.msra.mxu0 %v162
    %299 = vmatprep.subr.mxu0 %v165
    %300 = vmatpush1.msra.mxu0 %v164
    %301 = vmatprep.subr.mxu0 %v167
    %302 = vmatpush1.msra.mxu0 %v166
    %303 = vmatprep.subr.mxu0 %v169
    %304 = vmatpush1.msra.mxu0 %v168
    %305 = vmatprep.subr.mxu0 %v171
    %306 = vmatpush1.msra.mxu0 %v170
    %307 = vmatprep.subr.mxu0 %v173
    %308 = vmatpush1.msra.mxu0 %v172
    %309 = vmatprep.subr.mxu0 %v175
    %310 = vmatpush1.msra.mxu0 %v174
    %311 = vmatprep.subr.mxu0 %v177
    %312 = vmatpush1.msra.mxu0 %v176
    %313 = vmatprep.subr.mxu0 %v179
    %314 = vmatpush1.msra.mxu0 %v178
    %315 = vmatprep.subr.mxu0 %v181
    %316 = vmatpush1.msra.mxu0 %v180
    %317 = vmatprep.subr.mxu0 %v183
    %318 = vmatpush1.msra.mxu0 %v182
    %319 = vmatprep.subr.mxu0 %v185
    %320 = vmatpush1.msra.mxu0 %v184
    %321 = vmatprep.subr.mxu0 %v187
    %322 = vmatpush1.msra.mxu0 %v186
    %323 = vmatprep.subr.mxu0 %v189
    %324 = vmatpush1.msra.mxu0 %v188
    %325 = vmatprep.subr.mxu0 %v191
    %326 = vmatpush1.msra.mxu0 %v190
    %327 = vmatprep.subr.mxu0 %v193
    %328 = vmatpush1.msra.mxu0 %v192
    %329 = vmatprep.subr.mxu0 %v195
    %330 = vmatpush1.msra.mxu0 %v194
    %331 = vmatprep.subr.mxu0 %v197
    %332 = vmatpush1.msra.mxu0 %v196
    %333 = vmatprep.subr.mxu0 %v199
    %334 = vmatpush1.msra.mxu0 %v198
    %335 = vmatprep.subr.mxu0 %v201
    %336 = vmatpush1.msra.mxu0 %v200
    %337 = vmatprep.subr.mxu0 %v203
    %338 = vmatpush1.msra.mxu0 %v202
    %339 = vmatprep.subr.mxu0 %v205
    %340 = vmatpush1.msra.mxu0 %v204
    %341 = vmatprep.subr.mxu0 %v207
    %342 = vmatpush1.msra.mxu0 %v206
    %343 = vmatprep.subr.mxu0 %v209
    %344 = vmatpush1.msra.mxu0 %v208
    %345 = vmatprep.mubr.f32.mxu0 %v81
    %346 = vmatmul.mubr.f32.gmra.mrb[0].mxu0 %v80
    %v347 = vpop.f32.mrb[0].mxu0
    %v348 = vadd.f32 %v277, %v347
    %v349 = vpop.f32.mrb[0].mxu0
    %v350 = vadd.f32 %v279, %v349
    %351 = vdwg.mxu0
    %v352 = vld [vmem:[%s4] sm:$0x3]
    %v353 = vld [vmem:[%s5] sm:$0x3]
    %vm354 = vcmask 1043456
    %v355 = vsel %vm354, %v348, 0.0
    %v356 = vrot.slane %v355, 4
    %v357 = vadd.f32 %v355, %v356
    %v358 = vrot.slane %v357, 2
    %v359 = vadd.f32 %v357, %v358
    %v360 = vrot.slane %v359, 1
    %v361 = vadd.f32 %v359, %v360
    %v362 = vsel %vm354, %v350, 0.0
    %v363 = vrot.slane %v362, 4
    %v364 = vadd.f32 %v362, %v363
    %v365 = vrot.slane %v364, 2
    %v366 = vadd.f32 %v364, %v365
    %v367 = vrot.slane %v366, 1
    %v368 = vadd.f32 %v366, %v367
    %v369 = vrcp.pop 4.0
    %v370 = vmul.f32 %v361, %v369
    %v371 = vmul.f32 %v368, %v369
    %v372 = vsub.f32 %v348, %v370
    %v373 = vsub.f32 %v350, %v371
    %v374 = vmul.f32 %v372, %v372
    %v375 = vmul.f32 %v373, %v373
    %v376 = vsel %vm354, %v374, 0.0
    %v377 = vrot.slane %v376, 4
    %v378 = vadd.f32 %v376, %v377
    %v379 = vrot.slane %v378, 2
    %v380 = vadd.f32 %v378, %v379
    %v381 = vrot.slane %v380, 1
    %v382 = vadd.f32 %v380, %v381
    %v383 = vsel %vm354, %v375, 0.0
    %v384 = vrot.slane %v383, 4
    %v385 = vadd.f32 %v383, %v384
    %v386 = vrot.slane %v385, 2
    %v387 = vadd.f32 %v385, %v386
    %v388 = vrot.slane %v387, 1
    %v389 = vadd.f32 %v387, %v388
    %v390 = vmul.f32 %v382, %v369
    %v391 = vmul.f32 %v389, %v369
    %v392 = vadd.f32 %v390, 1e-05
    %v393 = vadd.f32 %v391, 1e-05
    %v394 = vrsqrt.pop %v392
    %v395 = vrsqrt.pop %v393
    %v396 = vmul.f32 %v372, %v394
    %v397 = vmul.f32 %v373, %v395
    %v399 = vlaneseq
    %v400 = vshrl.u32 %v399, 7
    %v401 = vsub.s32 0, %v400
    %v402 = vrot.slane %v352, %v401
    %v403 = vlaneseq
    %v404 = vshrl.u32 %v403, 7
    %v405 = vsub.s32 1, %v404
    %v406 = vrot.slane %v352, %v405
    %v409 = vmul.f32 %v396, %v402
    %v410 = vmul.f32 %v397, %v406
    %v412 = vlaneseq
    %v413 = vshrl.u32 %v412, 7
    %v414 = vsub.s32 0, %v413
    %v415 = vrot.slane %v353, %v414
    %v416 = vlaneseq
    %v417 = vshrl.u32 %v416, 7
    %v418 = vsub.s32 1, %v417
    %v419 = vrot.slane %v353, %v418
    %v422 = vadd.f32 %v409, %v415
    %v423 = vadd.f32 %v410, %v419
    %v424 = vmax.f32 %v422, 0.0
    %v425 = vmax.f32 %v423, 0.0
    %v426 = vld [vmem:[%s6] sm:$0xff]
    %v427 = vld [vmem:[%s6 + $0x8] sm:$0xff]
    %v428 = vld [vmem:[%s6 + $0x10] sm:$0xff]
    %v429 = vld [vmem:[%s6 + $0x18] sm:$0xff]
    %v430 = vld [vmem:[%s6 + $0x20] sm:$0xff]
    %v431 = vld [vmem:[%s6 + $0x28] sm:$0xff]
    %v432 = vld [vmem:[%s6 + $0x30] sm:$0xff]
    %v433 = vld [vmem:[%s6 + $0x38] sm:$0xff]
    %v434 = vld [vmem:[%s6 + $0x40] sm:$0xff]
    %v435 = vld [vmem:[%s6 + $0x48] sm:$0xff]
    %v436 = vld [vmem:[%s6 + $0x50] sm:$0xff]
    %v437 = vld [vmem:[%s6 + $0x58] sm:$0xff]
    %v438 = vld [vmem:[%s6 + $0x60] sm:$0xff]
    %v439 = vld [vmem:[%s6 + $0x68] sm:$0xff]
    %v440 = vld [vmem:[%s6 + $0x70] sm:$0xff]
    %v441 = vld [vmem:[%s6 + $0x78] sm:$0xff]
    %v442 = vld [vmem:[%s6 + $0x80] sm:$0xff]
    %v443 = vld [vmem:[%s6 + $0x88] sm:$0xff]
    %v444 = vld [vmem:[%s6 + $0x90] sm:$0xff]
    %v445 = vld [vmem:[%s6 + $0x98] sm:$0xff]
    %v446 = vld [vmem:[%s6 + $0xa0] sm:$0xff]
    %v447 = vld [vmem:[%s6 + $0xa8] sm:$0xff]
    %v448 = vld [vmem:[%s6 + $0xb0] sm:$0xff]
    %v449 = vld [vmem:[%s6 + $0xb8] sm:$0xff]
    %v450 = vld [vmem:[%s6 + $0xc0] sm:$0xff]
    %v451 = vld [vmem:[%s6 + $0xc8] sm:$0xff]
    %v452 = vld [vmem:[%s6 + $0xd0] sm:$0xff]
    %v453 = vld [vmem:[%s6 + $0xd8] sm:$0xff]
    %v454 = vld [vmem:[%s6 + $0xe0] sm:$0xff]
    %v455 = vld [vmem:[%s6 + $0xe8] sm:$0xff]
    %v456 = vld [vmem:[%s6 + $0xf0] sm:$0xff]
    %v457 = vld [vmem:[%s6 + $0xf8] sm:$0xff]
    %458 = vmatprep.subr.mxu0 0.0
    %459 = vmatpush1.msra.mxu0 %v426
    %460 = vmatprep.subr.mxu0 0.0
    %461 = vmatpush1.msra.mxu0 %v427
    %462 = vmatprep.subr.mxu0 0.0
    %463 = vmatpush1.msra.mxu0 %v428
    %464 = vmatprep.subr.mxu0 0.0
    %465 = vmatpush1.msra.mxu0 %v429
    %466 = vmatprep.subr.mxu0 0.0
    %467 = vmatpush1.msra.mxu0 %v430
    %468 = vmatprep.subr.mxu0 0.0
    %469 = vmatpush1.msra.mxu0 %v431
    %470 = vmatprep.subr.mxu0 0.0
    %471 = vmatpush1.msra.mxu0 %v432
    %472 = vmatprep.subr.mxu0 0.0
    %473 = vmatpush1.msra.mxu0 %v433
    %474 = vmatprep.subr.mxu0 0.0
    %475 = vmatpush1.msra.mxu0 %v434
    %476 = vmatprep.subr.mxu0 0.0
    %477 = vmatpush1.msra.mxu0 %v435
    %478 = vmatprep.subr.mxu0 0.0
    %479 = vmatpush1.msra.mxu0 %v436
    %480 = vmatprep.subr.mxu0 0.0
    %481 = vmatpush1.msra.mxu0 %v437
    %482 = vmatprep.subr.mxu0 0.0
    %483 = vmatpush1.msra.mxu0 %v438
    %484 = vmatprep.subr.mxu0 0.0
    %485 = vmatpush1.msra.mxu0 %v439
    %486 = vmatprep.subr.mxu0 0.0
    %487 = vmatpush1.msra.mxu0 %v440
    %488 = vmatprep.subr.mxu0 0.0
    %489 = vmatpush1.msra.mxu0 %v441
    %490 = vmatprep.subr.mxu0 0.0
    %491 = vmatpush1.msra.mxu0 %v442
    %492 = vmatprep.subr.mxu0 0.0
    %493 = vmatpush1.msra.mxu0 %v443
    %494 = vmatprep.subr.mxu0 0.0
    %495 = vmatpush1.msra.mxu0 %v444
    %496 = vmatprep.subr.mxu0 0.0
    %497 = vmatpush1.msra.mxu0 %v445
    %498 = vmatprep.subr.mxu0 0.0
    %499 = vmatpush1.msra.mxu0 %v446
    %500 = vmatprep.subr.mxu0 0.0
    %501 = vmatpush1.msra.mxu0 %v447
    %502 = vmatprep.subr.mxu0 0.0
    %503 = vmatpush1.msra.mxu0 %v448
    %504 = vmatprep.subr.mxu0 0.0
    %505 = vmatpush1.msra.mxu0 %v449
    %506 = vmatprep.subr.mxu0 0.0
    %507 = vmatpush1.msra.mxu0 %v450
    %508 = vmatprep.subr.mxu0 0.0
    %509 = vmatpush1.msra.mxu0 %v451
    %510 = vmatprep.subr.mxu0 0.0
    %511 = vmatpush1.msra.mxu0 %v452
    %512 = vmatprep.subr.mxu0 0.0
    %513 = vmatpush1.msra.mxu0 %v453
    %514 = vmatprep.subr.mxu0 0.0
    %515 = vmatpush1.msra.mxu0 %v454
    %516 = vmatprep.subr.mxu0 0.0
    %517 = vmatpush1.msra.mxu0 %v455
    %518 = vmatprep.subr.mxu0 0.0
    %519 = vmatpush1.msra.mxu0 %v456
    %520 = vmatprep.subr.mxu0 0.0
    %521 = vmatpush1.msra.mxu0 %v457
    %522 = vmatprep.mubr.f32.mxu0 %v425
    %523 = vmatmul.mubr.f32.gmra.mrb[0].mxu0 %v424
    %v524 = vpop.f32.mrb[0].mxu0
    %v525 = vadd.f32 0.0, %v524
    %v526 = vpop.f32.mrb[0].mxu0
    %527 = vdwg.mxu0
    %v528 = vld [vmem:[%s7] sm:$0x1]
    %v529 = vld [vmem:[%s8] sm:$0x1]
    %v530 = vsel %vm354, %v525, 0.0
    %v531 = vrot.slane %v530, 4
    %v532 = vadd.f32 %v530, %v531
    %v533 = vrot.slane %v532, 2
    %v534 = vadd.f32 %v532, %v533
    %v535 = vrot.slane %v534, 1
    %v536 = vadd.f32 %v534, %v535
    %v537 = vmul.f32 %v536, %v369
    %v538 = vsub.f32 %v525, %v537
    %v539 = vmul.f32 %v538, %v538
    %v540 = vsel %vm354, %v539, 0.0
    %v541 = vrot.slane %v540, 4
    %v542 = vadd.f32 %v540, %v541
    %v543 = vrot.slane %v542, 2
    %v544 = vadd.f32 %v542, %v543
    %v545 = vrot.slane %v544, 1
    %v546 = vadd.f32 %v544, %v545
    %v547 = vmul.f32 %v546, %v369
    %v548 = vadd.f32 %v547, 1e-05
    %v549 = vrsqrt.pop %v548
    %v550 = vmul.f32 %v538, %v549
    %v552 = vlaneseq
    %v553 = vshrl.u32 %v552, 7
    %v554 = vsub.s32 0, %v553
    %v555 = vrot.slane %v528, %v554
    %v557 = vmul.f32 %v550, %v555
    %v559 = vlaneseq
    %v560 = vshrl.u32 %v559, 7
    %v561 = vsub.s32 0, %v560
    %v562 = vrot.slane %v529, %v561
    %v564 = vadd.f32 %v557, %v562
    %v565 = vmax.f32 %v564, 0.0
    %v566 = vld [vmem:[%s9] sm:$0xff]
    %v567 = vld [vmem:[%s9 + $0x8] sm:$0xff]
    %v568 = vld [vmem:[%s9 + $0x10] sm:$0xff]
    %v569 = vld [vmem:[%s9 + $0x18] sm:$0xff]
    %v570 = vld [vmem:[%s9 + $0x20] sm:$0xff]
    %v571 = vld [vmem:[%s9 + $0x28] sm:$0xff]
    %v572 = vld [vmem:[%s9 + $0x30] sm:$0xff]
    %v573 = vld [vmem:[%s9 + $0x38] sm:$0xff]
    %v574 = vld [vmem:[%s9 + $0x40] sm:$0xff]
    %v575 = vld [vmem:[%s9 + $0x48] sm:$0xff]
    %v576 = vld [vmem:[%s9 + $0x50] sm:$0xff]
    %v577 = vld [vmem:[%s9 + $0x58] sm:$0xff]
    %v578 = vld [vmem:[%s9 + $0x60] sm:$0xff]
    %v579 = vld [vmem:[%s9 + $0x68] sm:$0xff]
    %v580 = vld [vmem:[%s9 + $0x70] sm:$0xff]
    %v581 = vld [vmem:[%s9 + $0x78] sm:$0xff]
    %v582 = vld [vmem:[%s10] sm:$0x1]
    %v584 = vlaneseq
    %v585 = vshrl.u32 %v584, 7
    %v586 = vsub.s32 0, %v585
    %v587 = vrot.slane %v582, %v586
    %589 = vmatprep.subr.mxu0 0.0
    %590 = vmatpush1.msra.mxu0 %v566
    %591 = vmatprep.subr.mxu0 0.0
    %592 = vmatpush1.msra.mxu0 %v567
    %593 = vmatprep.subr.mxu0 0.0
    %594 = vmatpush1.msra.mxu0 %v568
    %595 = vmatprep.subr.mxu0 0.0
    %596 = vmatpush1.msra.mxu0 %v569
    %597 = vmatprep.subr.mxu0 0.0
    %598 = vmatpush1.msra.mxu0 %v570
    %599 = vmatprep.subr.mxu0 0.0
    %600 = vmatpush1.msra.mxu0 %v571
    %601 = vmatprep.subr.mxu0 0.0
    %602 = vmatpush1.msra.mxu0 %v572
    %603 = vmatprep.subr.mxu0 0.0
    %604 = vmatpush1.msra.mxu0 %v573
    %605 = vmatprep.subr.mxu0 0.0
    %606 = vmatpush1.msra.mxu0 %v574
    %607 = vmatprep.subr.mxu0 0.0
    %608 = vmatpush1.msra.mxu0 %v575
    %609 = vmatprep.subr.mxu0 0.0
    %610 = vmatpush1.msra.mxu0 %v576
    %611 = vmatprep.subr.mxu0 0.0
    %612 = vmatpush1.msra.mxu0 %v577
    %613 = vmatprep.subr.mxu0 0.0
    %614 = vmatpush1.msra.mxu0 %v578
    %615 = vmatprep.subr.mxu0 0.0
    %616 = vmatpush1.msra.mxu0 %v579
    %617 = vmatprep.subr.mxu0 0.0
    %618 = vmatpush1.msra.mxu0 %v580
    %619 = vmatprep.subr.mxu0 0.0
    %620 = vmatpush1.msra.mxu0 %v581
    %621 = vmatprep.subr.mxu0 0.0
    %622 = vmatpush1.msra.mxu0 0.0
    %623 = vmatprep.subr.mxu0 0.0
    %624 = vmatpush1.msra.mxu0 0.0
    %625 = vmatprep.subr.mxu0 0.0
    %626 = vmatpush1.msra.mxu0 0.0
    %627 = vmatprep.subr.mxu0 0.0
    %628 = vmatpush1.msra.mxu0 0.0
    %629 = vmatprep.subr.mxu0 0.0
    %630 = vmatpush1.msra.mxu0 0.0
    %631 = vmatprep.subr.mxu0 0.0
    %632 = vmatpush1.msra.mxu0 0.0
    %633 = vmatprep.subr.mxu0 0.0
    %634 = vmatpush1.msra.mxu0 0.0
    %635 = vmatprep.subr.mxu0 0.0
    %636 = vmatpush1.msra.mxu0 0.0
    %637 = vmatprep.subr.mxu0 0.0
    %638 = vmatpush1.msra.mxu0 0.0
    %639 = vmatprep.subr.mxu0 0.0
    %640 = vmatpush1.msra.mxu0 0.0
    %641 = vmatprep.subr.mxu0 0.0
    %642 = vmatpush1.msra.mxu0 0.0
    %643 = vmatprep.subr.mxu0 0.0
    %644 = vmatpush1.msra.mxu0 0.0
    %645 = vmatprep.subr.mxu0 0.0
    %646 = vmatpush1.msra.mxu0 0.0
    %647 = vmatprep.subr.mxu0 0.0
    %648 = vmatpush1.msra.mxu0 0.0
    %649 = vmatprep.subr.mxu0 0.0
    %650 = vmatpush1.msra.mxu0 0.0
    %651 = vmatprep.subr.mxu0 0.0
    %652 = vmatpush1.msra.mxu0 0.0
    %653 = vmatprep.mubr.f32.mxu0 0.0
    %654 = vmatmul.mubr.f32.gmra.mrb[0].mxu0 %v565
    %v655 = vpop.f32.mrb[0].mxu0
    %v656 = vadd.f32 %v587, %v655
    %v657 = vpop.f32.mrb[0].mxu0
    %658 = vdwg.mxu0
    %659 = vst [vmem:[#allocation2] sm:$0xf] %v656
    // Predicated region
    $region46: #{encoder_forward.7} parent=1 // pred_check
      _
    $region47: #{encoder_forward.7} parent=1 // pred_check_branch
      %661 = sbr.rel (0) target = $region49
    $region48: #{encoder_forward.7} parent=1 // pred_region
      %s663 = ssub.s32 64, 64
      %664 = vsyncadd [#allocation3], %s663
      %s666 = sshll.u32 [#allocation2], 4
      %s667 = int_to_ptr.vmem [resolvable:$true] %s666
      %669 = dma.vmem_to_hbm [thread:$0]  %s667, 64, %s11, [#allocation3]
    $region49: #{encoder_forward.7} parent=1 // pred_fallthru
      _
    // Predicated region
    $region50: #{encoder_forward.7} parent=1 // pred_check
      _
    $region51: #{encoder_forward.7} parent=1 // pred_check_branch
      %671 = sbr.rel (0) target = $region53
    $region52: #{encoder_forward.7} parent=1 // pred_region
      %672 = dma.done [#allocation3], 64
    $region53: #{encoder_forward.7} parent=1 // pred_fallthru
      _
    %673 = vsyncpa [#allocation3], 1

</llo_original>
